<compile_context>
chip_gen: v5e
topology: v5e:2x2
jax: 0.10.0
libtpu: 0.0.40
codegen_flags: <defaults>
</compile_context>

<pallas_src>
import jax
import jax.numpy as jnp
from jax.experimental import pallas as pl
from jax.experimental.pallas import tpu as pltpu


# ------------------------------- fused kernel -------------------------------

def simplenet_kernel(x_ref, w1_ref, b1_ref, m1_ref, w2_ref, b2_ref,
                     wfc_ref, mfc_ref, g_ref, bfc_ref, out_ref,
                     acc1_ref, db_ref, rhs_ref, out2_ref):
    # ---------------- stage 1: conv(1->16, 5x5, pad 2) + BN + ReLU ----------
    # conv1 output lane: lam = 32*h + w + 132 (h, w in [0,28)); tap (dh, dw)
    # reads the flattened image at lane lam + 32*dh + dw.  Two 640-lane halves
    # keep the unrolled accumulator small enough for the 64-entry vreg file.
    for half in range(2):
        lo = 640 * half
        acc = None
        for dh in range(5):
            for dw in range(5):
                t = 5 * dh + dw
                off = lo + 32 * dh + dw
                xs = x_ref[0, :, off: off + 640]          # (1, 640) lane-shifted slab
                term = xs * w1_ref[t]                     # (16, 640) VPU FMA (bcast)
                acc = term if acc is None else acc + term
        acc1_ref[:, lo:lo + 640] = jnp.maximum(acc + b1_ref[...], 0.0)

    # ---------------- pool1 (2x2 max) + pad mask -> dilated conv2 input -----
    # pooled value for (h2, w2) sits at lane 64*h2 + 2*w2 + 132; the 0/1 mask
    # zeroes every other lane, which is exactly conv2's zero padding in this
    # (dilated) coordinate system.  Single bf16 cast of the whole buffer.
    p1 = jnp.maximum(
        jnp.maximum(acc1_ref[:, 0:1152], acc1_ref[:, 1:1153]),
        jnp.maximum(acc1_ref[:, 32:1184], acc1_ref[:, 33:1185]))
    db_ref[:, 0:1152] = (p1 * m1_ref[:, 0:1152]).astype(jnp.bfloat16)
    db_ref[:, 1152:1280] = jnp.zeros((16, 128), jnp.bfloat16)

    # ---------------- conv2 im2col RHS: row 16*t + ci, lane 64*h' + 2*w' ----
    # Tap (dh, dw) is just a lane shift of 64*dh + 2*dw of the pooled map.
    for t in range(25):
        dh, dw = t // 5, t % 5
        s = 64 * dh + 2 * dw
        rhs_ref[16 * t: 16 * t + 16, :] = db_ref[:, s: s + 896]

    # ---------------- stage 2: conv(16->32, 5x5, pad 2) as ONE MXU matmul ---
    o2 = jnp.dot(w2_ref[...], rhs_ref[...],
                 preferred_element_type=jnp.float32)            # (32, 896) f32
    out2_ref[:, 0:896] = jnp.maximum(o2 + b2_ref[...], 0.0)
    out2_ref[:, 896:1024] = jnp.zeros((32, 128), jnp.float32)   # NaN-free pool reads

    # ---------------- pool2 (2x2 max), still dilated: lane = 128*h2 + 4*w2 --
    m2 = jnp.maximum(
        jnp.maximum(out2_ref[:, 0:896], out2_ref[:, 2:898]),
        jnp.maximum(out2_ref[:, 64:960], out2_ref[:, 66:962]))  # (32, 896)

    # ---------------- fc: two matmuls + block-diagonal mask ------------------
    # r[c, 32*o + co] = sum_lane m2[c, lane] * Wfc_dilated[lane, 32*o + co]
    # logits[o]       = sum_c r[c, 32*o + c]   (mask keeps co == c, g sums the
    #                   32-column group per class, sublane sum over c)
    r = jnp.dot(m2.astype(jnp.bfloat16), wfc_ref[...],
                preferred_element_type=jnp.float32)             # (32, 320)
    t16 = jnp.dot(r * mfc_ref[...], g_ref[...],
                  preferred_element_type=jnp.float32)           # (32, 16)
    out_ref[0] = jnp.sum(t16, axis=0, keepdims=True) + bfc_ref[...]


# ------------------------------ wrapper / glue -------------------------------

def simple_net_forward(x_nchw, p):
    eps = 1e-5
    f32 = jnp.float32
    B = x_nchw.shape[0]

    # Image: zero-pad to 32x32 and flatten to one lane row (lane = 32*h+w+132),
    # with zero headroom so every lane-shifted conv1 slab stays in bounds.
    x = x_nchw[:, 0, :, :]                                        # (B, 28, 28)
    xpad = jnp.pad(x, ((0, 0), (2, 2), (2, 2)))                   # (B, 32, 32)
    xrow = jnp.pad(xpad.reshape(B, 1, 1024),
                   ((0, 0), (0, 0), (132, 380)))                  # (B, 1, 1536)

    # Fold eval-mode BatchNorm into conv weights / biases.
    s1 = p['g1'] * jax.lax.rsqrt(p['v1'] + eps)                   # (16,)
    w1f = p['w1'][:, 0] * s1[:, None, None]                       # (16, 5, 5)
    w1_r = jnp.transpose(w1f, (1, 2, 0)).reshape(25, 16, 1)       # [tap, c, 1]
    b1_r = ((p['b1'] - p['m1']) * s1 + p['beta1']).reshape(16, 1)

    s2 = p['g2'] * jax.lax.rsqrt(p['v2'] + eps)                   # (32,)
    w2f = p['w2'] * s2[:, None, None, None]                       # (32, 16, 5, 5)
    w2_r = jnp.transpose(w2f, (0, 2, 3, 1)).reshape(32, 400).astype(jnp.bfloat16)
    b2_r = ((p['b2'] - p['m2']) * s2 + p['beta2']).reshape(32, 1)

    # pool1 validity mask: 1 at lanes 64*h2 + 2*w2 + 132, 0 elsewhere (= pad).
    l1 = (64 * jnp.arange(14)[:, None] + 2 * jnp.arange(14)[None, :] + 132).reshape(-1)
    m1 = jnp.zeros((1, 1280), f32).at[0, l1].set(1.0)

    # FC weight scattered onto the dilated pool2 lane grid (lane = 128*h2+4*w2),
    # columns ordered as 32*o + co.  PyTorch flattens (co, h2, w2).
    wf4 = p['wf'].reshape(10, 32, 7, 7)
    w49 = jnp.transpose(wf4, (2, 3, 0, 1)).reshape(49, 320)       # [h2*7+w2, 32*o+co]
    l2 = (128 * jnp.arange(7)[:, None] + 4 * jnp.arange(7)[None, :]).reshape(-1)
    wfc1 = jnp.zeros((896, 320), f32).at[l2, :].set(w49).astype(jnp.bfloat16)

    mfc = (jnp.arange(320)[None, :] % 32 == jnp.arange(32)[:, None]).astype(f32)   # (32, 320)
    gmat = (jnp.arange(320)[:, None] // 32 == jnp.arange(16)[None, :]).astype(f32)  # (320, 16)
    bfc = jnp.zeros((1, 16), f32).at[0, :10].set(p['bf'])

    out = pl.pallas_call(
        simplenet_kernel,
        out_shape=jax.ShapeDtypeStruct((B, 1, 16), f32),
        grid=(B,),
        in_specs=[
            pl.BlockSpec((1, 1, 1536), lambda b: (b, 0, 0)),      # flattened image
            pl.BlockSpec((25, 16, 1), lambda b: (0, 0, 0)),       # conv1 w (per tap)
            pl.BlockSpec((16, 1), lambda b: (0, 0)),              # conv1 bias (folded BN)
            pl.BlockSpec((1, 1280), lambda b: (0, 0)),            # pool1 lane mask
            pl.BlockSpec((32, 400), lambda b: (0, 0)),            # conv2 w (merged K, bf16)
            pl.BlockSpec((32, 1), lambda b: (0, 0)),              # conv2 bias (folded BN)
            pl.BlockSpec((896, 320), lambda b: (0, 0)),           # fc w (dilated, bf16)
            pl.BlockSpec((32, 320), lambda b: (0, 0)),            # fc block-diag mask
            pl.BlockSpec((320, 16), lambda b: (0, 0)),            # fc group-sum matrix
            pl.BlockSpec((1, 16), lambda b: (0, 0)),              # fc bias
        ],
        out_specs=pl.BlockSpec((1, 1, 16), lambda b: (b, 0, 0)),
        scratch_shapes=[
            pltpu.VMEM((16, 1280), jnp.float32),    # acc1: conv1 output (lane-dense)
            pltpu.VMEM((16, 1280), jnp.bfloat16),   # db:  masked/pooled conv2 input
            pltpu.VMEM((400, 896), jnp.bfloat16),   # rhs: conv2 im2col (merged K=400)
            pltpu.VMEM((32, 1024), jnp.float32),    # out2: conv2 output + zero tail
        ],
        compiler_params=pltpu.CompilerParams(dimension_semantics=("parallel",)),
    )(xrow, w1_r, b1_r, m1, w2_r, b2_r, wfc1, mfc, gmat, bfc)
    return out[:, 0, :10]


# ------------------------------ parameter init -------------------------------

def init_params(key):
    ks = jax.random.split(key, 6)

    def u(k, shape, fan_in):
        bound = 1.0 / (fan_in ** 0.5)
        return jax.random.uniform(k, shape, jnp.float32, -bound, bound)

    p = {}
    # conv1: Conv2d(1, 16, kernel_size=5, padding=2) + BatchNorm2d(16)
    p['w1'] = u(ks[0], (16, 1, 5, 5), 1 * 5 * 5)
    p['b1'] = u(ks[1], (16,), 1 * 5 * 5)
    p['g1'], p['beta1'] = jnp.ones((16,)), jnp.zeros((16,))
    p['m1'], p['v1'] = jnp.zeros((16,)), jnp.ones((16,))
    # conv2: Conv2d(16, 32, kernel_size=5, padding=2) + BatchNorm2d(32)
    p['w2'] = u(ks[2], (32, 16, 5, 5), 16 * 5 * 5)
    p['b2'] = u(ks[3], (32,), 16 * 5 * 5)
    p['g2'], p['beta2'] = jnp.ones((32,)), jnp.zeros((32,))
    p['m2'], p['v2'] = jnp.zeros((32,)), jnp.ones((32,))
    # fc: Linear(7*7*32, 10)
    p['wf'] = u(ks[4], (10, 7 * 7 * 32), 7 * 7 * 32)
    p['bf'] = u(ks[5], (10,), 7 * 7 * 32)
    return p


if __name__ == "__main__":
    key = jax.random.PRNGKey(0)
    k_x, k_p = jax.random.split(key)
    # Input consistent with the module: fc expects 7*7*32 => spatial must be 28.
    x = jax.random.normal(k_x, (2, 1, 28, 28), dtype=jnp.float32)   # NCHW
    params = init_params(k_p)

    out = jax.jit(simple_net_forward)(x, params)
    out = jax.block_until_ready(out)
    assert out.shape == (2, 10) and out.dtype == jnp.float32
    print("KERNEL_OK")
</pallas_src>

<mosaic_0001>
module attributes {stable_mosaic.version = 11 : i64} {
  func.func @simplenet_kernel(%arg0: i32, %arg1: memref<1x1x1536xf32, #tpu.memory_space<vmem>>, %arg2: memref<25x16x1xf32, #tpu.memory_space<vmem>>, %arg3: memref<16x1xf32, #tpu.memory_space<vmem>>, %arg4: memref<1x1280xf32, #tpu.memory_space<vmem>>, %arg5: memref<32x400xbf16, #tpu.memory_space<vmem>>, %arg6: memref<32x1xf32, #tpu.memory_space<vmem>>, %arg7: memref<896x320xbf16, #tpu.memory_space<vmem>>, %arg8: memref<32x320xf32, #tpu.memory_space<vmem>>, %arg9: memref<320x16xf32, #tpu.memory_space<vmem>>, %arg10: memref<1x16xf32, #tpu.memory_space<vmem>>, %arg11: memref<1x1x16xf32, #tpu.memory_space<vmem>>, %arg12: memref<16x1280xf32, #tpu.memory_space<vmem>>, %arg13: memref<16x1280xbf16, #tpu.memory_space<vmem>>, %arg14: memref<400x896xbf16, #tpu.memory_space<vmem>>, %arg15: memref<32x1024xf32, #tpu.memory_space<vmem>>) attributes {dimension_semantics = [#tpu.dimension_semantics<parallel>], iteration_bounds = array<i64: 2>, scalar_prefetch = 0 : i64, scratch_operands = 4 : i64, tpu.core_type = #tpu.core_type<tc>, window_params = [{transform_indices = @transform_0, window_bounds = array<i64: 1, 1, 1536>}, {pipeline_mode = #tpu.pipeline_mode<synchronous>, transform_indices = @transform_1, window_bounds = array<i64: 25, 16, 1>}, {pipeline_mode = #tpu.pipeline_mode<synchronous>, transform_indices = @transform_2, window_bounds = array<i64: 16, 1>}, {pipeline_mode = #tpu.pipeline_mode<synchronous>, transform_indices = @transform_3, window_bounds = array<i64: 1, 1280>}, {pipeline_mode = #tpu.pipeline_mode<synchronous>, transform_indices = @transform_4, window_bounds = array<i64: 32, 400>}, {pipeline_mode = #tpu.pipeline_mode<synchronous>, transform_indices = @transform_5, window_bounds = array<i64: 32, 1>}, {pipeline_mode = #tpu.pipeline_mode<synchronous>, transform_indices = @transform_6, window_bounds = array<i64: 896, 320>}, {pipeline_mode = #tpu.pipeline_mode<synchronous>, transform_indices = @transform_7, window_bounds = array<i64: 32, 320>}, {pipeline_mode = #tpu.pipeline_mode<synchronous>, transform_indices = @transform_8, window_bounds = array<i64: 320, 16>}, {pipeline_mode = #tpu.pipeline_mode<synchronous>, transform_indices = @transform_9, window_bounds = array<i64: 1, 16>}, {transform_indices = @transform_10, window_bounds = array<i64: 1, 1, 16>}]} {
    %c0 = arith.constant 0 : index
    %c0_0 = arith.constant 0 : index
    %c0_1 = arith.constant 0 : index
    %0 = vector.load %arg1[%c0, %c0_0, %c0_1] : memref<1x1x1536xf32, #tpu.memory_space<vmem>>, vector<1x1x640xf32>
    %1 = vector.shape_cast %0 : vector<1x1x640xf32> to vector<1x640xf32>
    %c0_2 = arith.constant 0 : index
    %c0_3 = arith.constant 0 : index
    %c0_4 = arith.constant 0 : index
    %2 = vector.load %arg2[%c0_2, %c0_3, %c0_4] : memref<25x16x1xf32, #tpu.memory_space<vmem>>, vector<1x16x1xf32>
    %3 = vector.shape_cast %2 : vector<1x16x1xf32> to vector<16x1xf32>
    %4 = vector.broadcast %1 : vector<1x640xf32> to vector<16x640xf32>
    %5 = vector.broadcast %3 : vector<16x1xf32> to vector<16x640xf32>
    %6 = arith.mulf %4, %5 : vector<16x640xf32>
    %c0_5 = arith.constant 0 : index
    %c0_6 = arith.constant 0 : index
    %c1 = arith.constant 1 : index
    %7 = vector.load %arg1[%c0_5, %c0_6, %c1] : memref<1x1x1536xf32, #tpu.memory_space<vmem>>, vector<1x1x640xf32>
    %8 = vector.shape_cast %7 : vector<1x1x640xf32> to vector<1x640xf32>
    %c1_7 = arith.constant 1 : index
    %c0_8 = arith.constant 0 : index
    %c0_9 = arith.constant 0 : index
    %9 = vector.load %arg2[%c1_7, %c0_8, %c0_9] : memref<25x16x1xf32, #tpu.memory_space<vmem>>, vector<1x16x1xf32>
    %10 = vector.shape_cast %9 : vector<1x16x1xf32> to vector<16x1xf32>
    %11 = vector.broadcast %8 : vector<1x640xf32> to vector<16x640xf32>
    %12 = vector.broadcast %10 : vector<16x1xf32> to vector<16x640xf32>
    %13 = arith.mulf %11, %12 : vector<16x640xf32>
    %14 = arith.addf %6, %13 : vector<16x640xf32>
    %c0_10 = arith.constant 0 : index
    %c0_11 = arith.constant 0 : index
    %c2 = arith.constant 2 : index
    %15 = vector.load %arg1[%c0_10, %c0_11, %c2] : memref<1x1x1536xf32, #tpu.memory_space<vmem>>, vector<1x1x640xf32>
    %16 = vector.shape_cast %15 : vector<1x1x640xf32> to vector<1x640xf32>
    %c2_12 = arith.constant 2 : index
    %c0_13 = arith.constant 0 : index
    %c0_14 = arith.constant 0 : index
    %17 = vector.load %arg2[%c2_12, %c0_13, %c0_14] : memref<25x16x1xf32, #tpu.memory_space<vmem>>, vector<1x16x1xf32>
    %18 = vector.shape_cast %17 : vector<1x16x1xf32> to vector<16x1xf32>
    %19 = vector.broadcast %16 : vector<1x640xf32> to vector<16x640xf32>
    %20 = vector.broadcast %18 : vector<16x1xf32> to vector<16x640xf32>
    %21 = arith.mulf %19, %20 : vector<16x640xf32>
    %22 = arith.addf %14, %21 : vector<16x640xf32>
    %c0_15 = arith.constant 0 : index
    %c0_16 = arith.constant 0 : index
    %c3 = arith.constant 3 : index
    %23 = vector.load %arg1[%c0_15, %c0_16, %c3] : memref<1x1x1536xf32, #tpu.memory_space<vmem>>, vector<1x1x640xf32>
    %24 = vector.shape_cast %23 : vector<1x1x640xf32> to vector<1x640xf32>
    %c3_17 = arith.constant 3 : index
    %c0_18 = arith.constant 0 : index
    %c0_19 = arith.constant 0 : index
    %25 = vector.load %arg2[%c3_17, %c0_18, %c0_19] : memref<25x16x1xf32, #tpu.memory_space<vmem>>, vector<1x16x1xf32>
    %26 = vector.shape_cast %25 : vector<1x16x1xf32> to vector<16x1xf32>
    %27 = vector.broadcast %24 : vector<1x640xf32> to vector<16x640xf32>
    %28 = vector.broadcast %26 : vector<16x1xf32> to vector<16x640xf32>
    %29 = arith.mulf %27, %28 : vector<16x640xf32>
    %30 = arith.addf %22, %29 : vector<16x640xf32>
    %c0_20 = arith.constant 0 : index
    %c0_21 = arith.constant 0 : index
    %c4 = arith.constant 4 : index
    %31 = vector.load %arg1[%c0_20, %c0_21, %c4] : memref<1x1x1536xf32, #tpu.memory_space<vmem>>, vector<1x1x640xf32>
    %32 = vector.shape_cast %31 : vector<1x1x640xf32> to vector<1x640xf32>
    %c4_22 = arith.constant 4 : index
    %c0_23 = arith.constant 0 : index
    %c0_24 = arith.constant 0 : index
    %33 = vector.load %arg2[%c4_22, %c0_23, %c0_24] : memref<25x16x1xf32, #tpu.memory_space<vmem>>, vector<1x16x1xf32>
    %34 = vector.shape_cast %33 : vector<1x16x1xf32> to vector<16x1xf32>
    %35 = vector.broadcast %32 : vector<1x640xf32> to vector<16x640xf32>
    %36 = vector.broadcast %34 : vector<16x1xf32> to vector<16x640xf32>
    %37 = arith.mulf %35, %36 : vector<16x640xf32>
    %38 = arith.addf %30, %37 : vector<16x640xf32>
    %c0_25 = arith.constant 0 : index
    %c0_26 = arith.constant 0 : index
    %c32 = arith.constant 32 : index
    %39 = vector.load %arg1[%c0_25, %c0_26, %c32] : memref<1x1x1536xf32, #tpu.memory_space<vmem>>, vector<1x1x640xf32>
    %40 = vector.shape_cast %39 : vector<1x1x640xf32> to vector<1x640xf32>
    %c5 = arith.constant 5 : index
    %c0_27 = arith.constant 0 : index
    %c0_28 = arith.constant 0 : index
    %41 = vector.load %arg2[%c5, %c0_27, %c0_28] : memref<25x16x1xf32, #tpu.memory_space<vmem>>, vector<1x16x1xf32>
    %42 = vector.shape_cast %41 : vector<1x16x1xf32> to vector<16x1xf32>
    %43 = vector.broadcast %40 : vector<1x640xf32> to vector<16x640xf32>
    %44 = vector.broadcast %42 : vector<16x1xf32> to vector<16x640xf32>
    %45 = arith.mulf %43, %44 : vector<16x640xf32>
    %46 = arith.addf %38, %45 : vector<16x640xf32>
    %c0_29 = arith.constant 0 : index
    %c0_30 = arith.constant 0 : index
    %c33 = arith.constant 33 : index
    %47 = vector.load %arg1[%c0_29, %c0_30, %c33] : memref<1x1x1536xf32, #tpu.memory_space<vmem>>, vector<1x1x640xf32>
    %48 = vector.shape_cast %47 : vector<1x1x640xf32> to vector<1x640xf32>
    %c6 = arith.constant 6 : index
    %c0_31 = arith.constant 0 : index
    %c0_32 = arith.constant 0 : index
    %49 = vector.load %arg2[%c6, %c0_31, %c0_32] : memref<25x16x1xf32, #tpu.memory_space<vmem>>, vector<1x16x1xf32>
    %50 = vector.shape_cast %49 : vector<1x16x1xf32> to vector<16x1xf32>
    %51 = vector.broadcast %48 : vector<1x640xf32> to vector<16x640xf32>
    %52 = vector.broadcast %50 : vector<16x1xf32> to vector<16x640xf32>
    %53 = arith.mulf %51, %52 : vector<16x640xf32>
    %54 = arith.addf %46, %53 : vector<16x640xf32>
    %c0_33 = arith.constant 0 : index
    %c0_34 = arith.constant 0 : index
    %c34 = arith.constant 34 : index
    %55 = vector.load %arg1[%c0_33, %c0_34, %c34] : memref<1x1x1536xf32, #tpu.memory_space<vmem>>, vector<1x1x640xf32>
    %56 = vector.shape_cast %55 : vector<1x1x640xf32> to vector<1x640xf32>
    %c7 = arith.constant 7 : index
    %c0_35 = arith.constant 0 : index
    %c0_36 = arith.constant 0 : index
    %57 = vector.load %arg2[%c7, %c0_35, %c0_36] : memref<25x16x1xf32, #tpu.memory_space<vmem>>, vector<1x16x1xf32>
    %58 = vector.shape_cast %57 : vector<1x16x1xf32> to vector<16x1xf32>
    %59 = vector.broadcast %56 : vector<1x640xf32> to vector<16x640xf32>
    %60 = vector.broadcast %58 : vector<16x1xf32> to vector<16x640xf32>
    %61 = arith.mulf %59, %60 : vector<16x640xf32>
    %62 = arith.addf %54, %61 : vector<16x640xf32>
    %c0_37 = arith.constant 0 : index
    %c0_38 = arith.constant 0 : index
    %c35 = arith.constant 35 : index
    %63 = vector.load %arg1[%c0_37, %c0_38, %c35] : memref<1x1x1536xf32, #tpu.memory_space<vmem>>, vector<1x1x640xf32>
    %64 = vector.shape_cast %63 : vector<1x1x640xf32> to vector<1x640xf32>
    %c8 = arith.constant 8 : index
    %c0_39 = arith.constant 0 : index
    %c0_40 = arith.constant 0 : index
    %65 = vector.load %arg2[%c8, %c0_39, %c0_40] : memref<25x16x1xf32, #tpu.memory_space<vmem>>, vector<1x16x1xf32>
    %66 = vector.shape_cast %65 : vector<1x16x1xf32> to vector<16x1xf32>
    %67 = vector.broadcast %64 : vector<1x640xf32> to vector<16x640xf32>
    %68 = vector.broadcast %66 : vector<16x1xf32> to vector<16x640xf32>
    %69 = arith.mulf %67, %68 : vector<16x640xf32>
    %70 = arith.addf %62, %69 : vector<16x640xf32>
    %c0_41 = arith.constant 0 : index
    %c0_42 = arith.constant 0 : index
    %c36 = arith.constant 36 : index
    %71 = vector.load %arg1[%c0_41, %c0_42, %c36] : memref<1x1x1536xf32, #tpu.memory_space<vmem>>, vector<1x1x640xf32>
    %72 = vector.shape_cast %71 : vector<1x1x640xf32> to vector<1x640xf32>
    %c9 = arith.constant 9 : index
    %c0_43 = arith.constant 0 : index
    %c0_44 = arith.constant 0 : index
    %73 = vector.load %arg2[%c9, %c0_43, %c0_44] : memref<25x16x1xf32, #tpu.memory_space<vmem>>, vector<1x16x1xf32>
    %74 = vector.shape_cast %73 : vector<1x16x1xf32> to vector<16x1xf32>
    %75 = vector.broadcast %72 : vector<1x640xf32> to vector<16x640xf32>
    %76 = vector.broadcast %74 : vector<16x1xf32> to vector<16x640xf32>
    %77 = arith.mulf %75, %76 : vector<16x640xf32>
    %78 = arith.addf %70, %77 : vector<16x640xf32>
    %c0_45 = arith.constant 0 : index
    %c0_46 = arith.constant 0 : index
    %c64 = arith.constant 64 : index
    %79 = vector.load %arg1[%c0_45, %c0_46, %c64] : memref<1x1x1536xf32, #tpu.memory_space<vmem>>, vector<1x1x640xf32>
    %80 = vector.shape_cast %79 : vector<1x1x640xf32> to vector<1x640xf32>
    %c10 = arith.constant 10 : index
    %c0_47 = arith.constant 0 : index
    %c0_48 = arith.constant 0 : index
    %81 = vector.load %arg2[%c10, %c0_47, %c0_48] : memref<25x16x1xf32, #tpu.memory_space<vmem>>, vector<1x16x1xf32>
    %82 = vector.shape_cast %81 : vector<1x16x1xf32> to vector<16x1xf32>
    %83 = vector.broadcast %80 : vector<1x640xf32> to vector<16x640xf32>
    %84 = vector.broadcast %82 : vector<16x1xf32> to vector<16x640xf32>
    %85 = arith.mulf %83, %84 : vector<16x640xf32>
    %86 = arith.addf %78, %85 : vector<16x640xf32>
    %c0_49 = arith.constant 0 : index
    %c0_50 = arith.constant 0 : index
    %c65 = arith.constant 65 : index
    %87 = vector.load %arg1[%c0_49, %c0_50, %c65] : memref<1x1x1536xf32, #tpu.memory_space<vmem>>, vector<1x1x640xf32>
    %88 = vector.shape_cast %87 : vector<1x1x640xf32> to vector<1x640xf32>
    %c11 = arith.constant 11 : index
    %c0_51 = arith.constant 0 : index
    %c0_52 = arith.constant 0 : index
    %89 = vector.load %arg2[%c11, %c0_51, %c0_52] : memref<25x16x1xf32, #tpu.memory_space<vmem>>, vector<1x16x1xf32>
    %90 = vector.shape_cast %89 : vector<1x16x1xf32> to vector<16x1xf32>
    %91 = vector.broadcast %88 : vector<1x640xf32> to vector<16x640xf32>
    %92 = vector.broadcast %90 : vector<16x1xf32> to vector<16x640xf32>
    %93 = arith.mulf %91, %92 : vector<16x640xf32>
    %94 = arith.addf %86, %93 : vector<16x640xf32>
    %c0_53 = arith.constant 0 : index
    %c0_54 = arith.constant 0 : index
    %c66 = arith.constant 66 : index
    %95 = vector.load %arg1[%c0_53, %c0_54, %c66] : memref<1x1x1536xf32, #tpu.memory_space<vmem>>, vector<1x1x640xf32>
    %96 = vector.shape_cast %95 : vector<1x1x640xf32> to vector<1x640xf32>
    %c12 = arith.constant 12 : index
    %c0_55 = arith.constant 0 : index
    %c0_56 = arith.constant 0 : index
    %97 = vector.load %arg2[%c12, %c0_55, %c0_56] : memref<25x16x1xf32, #tpu.memory_space<vmem>>, vector<1x16x1xf32>
    %98 = vector.shape_cast %97 : vector<1x16x1xf32> to vector<16x1xf32>
    %99 = vector.broadcast %96 : vector<1x640xf32> to vector<16x640xf32>
    %100 = vector.broadcast %98 : vector<16x1xf32> to vector<16x640xf32>
    %101 = arith.mulf %99, %100 : vector<16x640xf32>
    %102 = arith.addf %94, %101 : vector<16x640xf32>
    %c0_57 = arith.constant 0 : index
    %c0_58 = arith.constant 0 : index
    %c67 = arith.constant 67 : index
    %103 = vector.load %arg1[%c0_57, %c0_58, %c67] : memref<1x1x1536xf32, #tpu.memory_space<vmem>>, vector<1x1x640xf32>
    %104 = vector.shape_cast %103 : vector<1x1x640xf32> to vector<1x640xf32>
    %c13 = arith.constant 13 : index
    %c0_59 = arith.constant 0 : index
    %c0_60 = arith.constant 0 : index
    %105 = vector.load %arg2[%c13, %c0_59, %c0_60] : memref<25x16x1xf32, #tpu.memory_space<vmem>>, vector<1x16x1xf32>
    %106 = vector.shape_cast %105 : vector<1x16x1xf32> to vector<16x1xf32>
    %107 = vector.broadcast %104 : vector<1x640xf32> to vector<16x640xf32>
    %108 = vector.broadcast %106 : vector<16x1xf32> to vector<16x640xf32>
    %109 = arith.mulf %107, %108 : vector<16x640xf32>
    %110 = arith.addf %102, %109 : vector<16x640xf32>
    %c0_61 = arith.constant 0 : index
    %c0_62 = arith.constant 0 : index
    %c68 = arith.constant 68 : index
    %111 = vector.load %arg1[%c0_61, %c0_62, %c68] : memref<1x1x1536xf32, #tpu.memory_space<vmem>>, vector<1x1x640xf32>
    %112 = vector.shape_cast %111 : vector<1x1x640xf32> to vector<1x640xf32>
    %c14 = arith.constant 14 : index
    %c0_63 = arith.constant 0 : index
    %c0_64 = arith.constant 0 : index
    %113 = vector.load %arg2[%c14, %c0_63, %c0_64] : memref<25x16x1xf32, #tpu.memory_space<vmem>>, vector<1x16x1xf32>
    %114 = vector.shape_cast %113 : vector<1x16x1xf32> to vector<16x1xf32>
    %115 = vector.broadcast %112 : vector<1x640xf32> to vector<16x640xf32>
    %116 = vector.broadcast %114 : vector<16x1xf32> to vector<16x640xf32>
    %117 = arith.mulf %115, %116 : vector<16x640xf32>
    %118 = arith.addf %110, %117 : vector<16x640xf32>
    %c0_65 = arith.constant 0 : index
    %c0_66 = arith.constant 0 : index
    %c96 = arith.constant 96 : index
    %119 = vector.load %arg1[%c0_65, %c0_66, %c96] : memref<1x1x1536xf32, #tpu.memory_space<vmem>>, vector<1x1x640xf32>
    %120 = vector.shape_cast %119 : vector<1x1x640xf32> to vector<1x640xf32>
    %c15 = arith.constant 15 : index
    %c0_67 = arith.constant 0 : index
    %c0_68 = arith.constant 0 : index
    %121 = vector.load %arg2[%c15, %c0_67, %c0_68] : memref<25x16x1xf32, #tpu.memory_space<vmem>>, vector<1x16x1xf32>
    %122 = vector.shape_cast %121 : vector<1x16x1xf32> to vector<16x1xf32>
    %123 = vector.broadcast %120 : vector<1x640xf32> to vector<16x640xf32>
    %124 = vector.broadcast %122 : vector<16x1xf32> to vector<16x640xf32>
    %125 = arith.mulf %123, %124 : vector<16x640xf32>
    %126 = arith.addf %118, %125 : vector<16x640xf32>
    %c0_69 = arith.constant 0 : index
    %c0_70 = arith.constant 0 : index
    %c97 = arith.constant 97 : index
    %127 = vector.load %arg1[%c0_69, %c0_70, %c97] : memref<1x1x1536xf32, #tpu.memory_space<vmem>>, vector<1x1x640xf32>
    %128 = vector.shape_cast %127 : vector<1x1x640xf32> to vector<1x640xf32>
    %c16 = arith.constant 16 : index
    %c0_71 = arith.constant 0 : index
    %c0_72 = arith.constant 0 : index
    %129 = vector.load %arg2[%c16, %c0_71, %c0_72] : memref<25x16x1xf32, #tpu.memory_space<vmem>>, vector<1x16x1xf32>
    %130 = vector.shape_cast %129 : vector<1x16x1xf32> to vector<16x1xf32>
    %131 = vector.broadcast %128 : vector<1x640xf32> to vector<16x640xf32>
    %132 = vector.broadcast %130 : vector<16x1xf32> to vector<16x640xf32>
    %133 = arith.mulf %131, %132 : vector<16x640xf32>
    %134 = arith.addf %126, %133 : vector<16x640xf32>
    %c0_73 = arith.constant 0 : index
    %c0_74 = arith.constant 0 : index
    %c98 = arith.constant 98 : index
    %135 = vector.load %arg1[%c0_73, %c0_74, %c98] : memref<1x1x1536xf32, #tpu.memory_space<vmem>>, vector<1x1x640xf32>
    %136 = vector.shape_cast %135 : vector<1x1x640xf32> to vector<1x640xf32>
    %c17 = arith.constant 17 : index
    %c0_75 = arith.constant 0 : index
    %c0_76 = arith.constant 0 : index
    %137 = vector.load %arg2[%c17, %c0_75, %c0_76] : memref<25x16x1xf32, #tpu.memory_space<vmem>>, vector<1x16x1xf32>
    %138 = vector.shape_cast %137 : vector<1x16x1xf32> to vector<16x1xf32>
    %139 = vector.broadcast %136 : vector<1x640xf32> to vector<16x640xf32>
    %140 = vector.broadcast %138 : vector<16x1xf32> to vector<16x640xf32>
    %141 = arith.mulf %139, %140 : vector<16x640xf32>
    %142 = arith.addf %134, %141 : vector<16x640xf32>
    %c0_77 = arith.constant 0 : index
    %c0_78 = arith.constant 0 : index
    %c99 = arith.constant 99 : index
    %143 = vector.load %arg1[%c0_77, %c0_78, %c99] : memref<1x1x1536xf32, #tpu.memory_space<vmem>>, vector<1x1x640xf32>
    %144 = vector.shape_cast %143 : vector<1x1x640xf32> to vector<1x640xf32>
    %c18 = arith.constant 18 : index
    %c0_79 = arith.constant 0 : index
    %c0_80 = arith.constant 0 : index
    %145 = vector.load %arg2[%c18, %c0_79, %c0_80] : memref<25x16x1xf32, #tpu.memory_space<vmem>>, vector<1x16x1xf32>
    %146 = vector.shape_cast %145 : vector<1x16x1xf32> to vector<16x1xf32>
    %147 = vector.broadcast %144 : vector<1x640xf32> to vector<16x640xf32>
    %148 = vector.broadcast %146 : vector<16x1xf32> to vector<16x640xf32>
    %149 = arith.mulf %147, %148 : vector<16x640xf32>
    %150 = arith.addf %142, %149 : vector<16x640xf32>
    %c0_81 = arith.constant 0 : index
    %c0_82 = arith.constant 0 : index
    %c100 = arith.constant 100 : index
    %151 = vector.load %arg1[%c0_81, %c0_82, %c100] : memref<1x1x1536xf32, #tpu.memory_space<vmem>>, vector<1x1x640xf32>
    %152 = vector.shape_cast %151 : vector<1x1x640xf32> to vector<1x640xf32>
    %c19 = arith.constant 19 : index
    %c0_83 = arith.constant 0 : index
    %c0_84 = arith.constant 0 : index
    %153 = vector.load %arg2[%c19, %c0_83, %c0_84] : memref<25x16x1xf32, #tpu.memory_space<vmem>>, vector<1x16x1xf32>
    %154 = vector.shape_cast %153 : vector<1x16x1xf32> to vector<16x1xf32>
    %155 = vector.broadcast %152 : vector<1x640xf32> to vector<16x640xf32>
    %156 = vector.broadcast %154 : vector<16x1xf32> to vector<16x640xf32>
    %157 = arith.mulf %155, %156 : vector<16x640xf32>
    %158 = arith.addf %150, %157 : vector<16x640xf32>
    %c0_85 = arith.constant 0 : index
    %c0_86 = arith.constant 0 : index
    %c128 = arith.constant 128 : index
    %159 = vector.load %arg1[%c0_85, %c0_86, %c128] : memref<1x1x1536xf32, #tpu.memory_space<vmem>>, vector<1x1x640xf32>
    %160 = vector.shape_cast %159 : vector<1x1x640xf32> to vector<1x640xf32>
    %c20 = arith.constant 20 : index
    %c0_87 = arith.constant 0 : index
    %c0_88 = arith.constant 0 : index
    %161 = vector.load %arg2[%c20, %c0_87, %c0_88] : memref<25x16x1xf32, #tpu.memory_space<vmem>>, vector<1x16x1xf32>
    %162 = vector.shape_cast %161 : vector<1x16x1xf32> to vector<16x1xf32>
    %163 = vector.broadcast %160 : vector<1x640xf32> to vector<16x640xf32>
    %164 = vector.broadcast %162 : vector<16x1xf32> to vector<16x640xf32>
    %165 = arith.mulf %163, %164 : vector<16x640xf32>
    %166 = arith.addf %158, %165 : vector<16x640xf32>
    %c0_89 = arith.constant 0 : index
    %c0_90 = arith.constant 0 : index
    %c129 = arith.constant 129 : index
    %167 = vector.load %arg1[%c0_89, %c0_90, %c129] : memref<1x1x1536xf32, #tpu.memory_space<vmem>>, vector<1x1x640xf32>
    %168 = vector.shape_cast %167 : vector<1x1x640xf32> to vector<1x640xf32>
    %c21 = arith.constant 21 : index
    %c0_91 = arith.constant 0 : index
    %c0_92 = arith.constant 0 : index
    %169 = vector.load %arg2[%c21, %c0_91, %c0_92] : memref<25x16x1xf32, #tpu.memory_space<vmem>>, vector<1x16x1xf32>
    %170 = vector.shape_cast %169 : vector<1x16x1xf32> to vector<16x1xf32>
    %171 = vector.broadcast %168 : vector<1x640xf32> to vector<16x640xf32>
    %172 = vector.broadcast %170 : vector<16x1xf32> to vector<16x640xf32>
    %173 = arith.mulf %171, %172 : vector<16x640xf32>
    %174 = arith.addf %166, %173 : vector<16x640xf32>
    %c0_93 = arith.constant 0 : index
    %c0_94 = arith.constant 0 : index
    %c130 = arith.constant 130 : index
    %175 = vector.load %arg1[%c0_93, %c0_94, %c130] : memref<1x1x1536xf32, #tpu.memory_space<vmem>>, vector<1x1x640xf32>
    %176 = vector.shape_cast %175 : vector<1x1x640xf32> to vector<1x640xf32>
    %c22 = arith.constant 22 : index
    %c0_95 = arith.constant 0 : index
    %c0_96 = arith.constant 0 : index
    %177 = vector.load %arg2[%c22, %c0_95, %c0_96] : memref<25x16x1xf32, #tpu.memory_space<vmem>>, vector<1x16x1xf32>
    %178 = vector.shape_cast %177 : vector<1x16x1xf32> to vector<16x1xf32>
    %179 = vector.broadcast %176 : vector<1x640xf32> to vector<16x640xf32>
    %180 = vector.broadcast %178 : vector<16x1xf32> to vector<16x640xf32>
    %181 = arith.mulf %179, %180 : vector<16x640xf32>
    %182 = arith.addf %174, %181 : vector<16x640xf32>
    %c0_97 = arith.constant 0 : index
    %c0_98 = arith.constant 0 : index
    %c131 = arith.constant 131 : index
    %183 = vector.load %arg1[%c0_97, %c0_98, %c131] : memref<1x1x1536xf32, #tpu.memory_space<vmem>>, vector<1x1x640xf32>
    %184 = vector.shape_cast %183 : vector<1x1x640xf32> to vector<1x640xf32>
    %c23 = arith.constant 23 : index
    %c0_99 = arith.constant 0 : index
    %c0_100 = arith.constant 0 : index
    %185 = vector.load %arg2[%c23, %c0_99, %c0_100] : memref<25x16x1xf32, #tpu.memory_space<vmem>>, vector<1x16x1xf32>
    %186 = vector.shape_cast %185 : vector<1x16x1xf32> to vector<16x1xf32>
    %187 = vector.broadcast %184 : vector<1x640xf32> to vector<16x640xf32>
    %188 = vector.broadcast %186 : vector<16x1xf32> to vector<16x640xf32>
    %189 = arith.mulf %187, %188 : vector<16x640xf32>
    %190 = arith.addf %182, %189 : vector<16x640xf32>
    %c0_101 = arith.constant 0 : index
    %c0_102 = arith.constant 0 : index
    %c132 = arith.constant 132 : index
    %191 = vector.load %arg1[%c0_101, %c0_102, %c132] : memref<1x1x1536xf32, #tpu.memory_space<vmem>>, vector<1x1x640xf32>
    %192 = vector.shape_cast %191 : vector<1x1x640xf32> to vector<1x640xf32>
    %c24 = arith.constant 24 : index
    %c0_103 = arith.constant 0 : index
    %c0_104 = arith.constant 0 : index
    %193 = vector.load %arg2[%c24, %c0_103, %c0_104] : memref<25x16x1xf32, #tpu.memory_space<vmem>>, vector<1x16x1xf32>
    %194 = vector.shape_cast %193 : vector<1x16x1xf32> to vector<16x1xf32>
    %195 = vector.broadcast %192 : vector<1x640xf32> to vector<16x640xf32>
    %196 = vector.broadcast %194 : vector<16x1xf32> to vector<16x640xf32>
    %197 = arith.mulf %195, %196 : vector<16x640xf32>
    %198 = arith.addf %190, %197 : vector<16x640xf32>
    %c0_105 = arith.constant 0 : index
    %c0_106 = arith.constant 0 : index
    %199 = vector.load %arg3[%c0_105, %c0_106] : memref<16x1xf32, #tpu.memory_space<vmem>>, vector<16x1xf32>
    %200 = vector.broadcast %199 : vector<16x1xf32> to vector<16x640xf32>
    %201 = arith.addf %198, %200 : vector<16x640xf32>
    %cst = arith.constant 0.000000e+00 : f32
    %202 = vector.broadcast %cst : f32 to vector<16x640xf32>
    %203 = arith.maximumf %201, %202 : vector<16x640xf32>
    %c0_107 = arith.constant 0 : index
    %c0_108 = arith.constant 0 : index
    %204 = vector.load %arg12[%c0_107, %c0_108] : memref<16x1280xf32, #tpu.memory_space<vmem>>, vector<16x640xf32>
    tpu.vector_store %arg12[%c0_107, %c0_108], %203 {strides = array<i32>} : memref<16x1280xf32, #tpu.memory_space<vmem>>, vector<16x640xf32>,
    %c0_109 = arith.constant 0 : index
    %c0_110 = arith.constant 0 : index
    %c640 = arith.constant 640 : index
    %205 = vector.load %arg1[%c0_109, %c0_110, %c640] : memref<1x1x1536xf32, #tpu.memory_space<vmem>>, vector<1x1x640xf32>
    %206 = vector.shape_cast %205 : vector<1x1x640xf32> to vector<1x640xf32>
    %c0_111 = arith.constant 0 : index
    %c0_112 = arith.constant 0 : index
    %c0_113 = arith.constant 0 : index
    %207 = vector.load %arg2[%c0_111, %c0_112, %c0_113] : memref<25x16x1xf32, #tpu.memory_space<vmem>>, vector<1x16x1xf32>
    %208 = vector.shape_cast %207 : vector<1x16x1xf32> to vector<16x1xf32>
    %209 = vector.broadcast %206 : vector<1x640xf32> to vector<16x640xf32>
    %210 = vector.broadcast %208 : vector<16x1xf32> to vector<16x640xf32>
    %211 = arith.mulf %209, %210 : vector<16x640xf32>
    %c0_114 = arith.constant 0 : index
    %c0_115 = arith.constant 0 : index
    %c641 = arith.constant 641 : index
    %212 = vector.load %arg1[%c0_114, %c0_115, %c641] : memref<1x1x1536xf32, #tpu.memory_space<vmem>>, vector<1x1x640xf32>
    %213 = vector.shape_cast %212 : vector<1x1x640xf32> to vector<1x640xf32>
    %c1_116 = arith.constant 1 : index
    %c0_117 = arith.constant 0 : index
    %c0_118 = arith.constant 0 : index
    %214 = vector.load %arg2[%c1_116, %c0_117, %c0_118] : memref<25x16x1xf32, #tpu.memory_space<vmem>>, vector<1x16x1xf32>
    %215 = vector.shape_cast %214 : vector<1x16x1xf32> to vector<16x1xf32>
    %216 = vector.broadcast %213 : vector<1x640xf32> to vector<16x640xf32>
    %217 = vector.broadcast %215 : vector<16x1xf32> to vector<16x640xf32>
    %218 = arith.mulf %216, %217 : vector<16x640xf32>
    %219 = arith.addf %211, %218 : vector<16x640xf32>
    %c0_119 = arith.constant 0 : index
    %c0_120 = arith.constant 0 : index
    %c642 = arith.constant 642 : index
    %220 = vector.load %arg1[%c0_119, %c0_120, %c642] : memref<1x1x1536xf32, #tpu.memory_space<vmem>>, vector<1x1x640xf32>
    %221 = vector.shape_cast %220 : vector<1x1x640xf32> to vector<1x640xf32>
    %c2_121 = arith.constant 2 : index
    %c0_122 = arith.constant 0 : index
    %c0_123 = arith.constant 0 : index
    %222 = vector.load %arg2[%c2_121, %c0_122, %c0_123] : memref<25x16x1xf32, #tpu.memory_space<vmem>>, vector<1x16x1xf32>
    %223 = vector.shape_cast %222 : vector<1x16x1xf32> to vector<16x1xf32>
    %224 = vector.broadcast %221 : vector<1x640xf32> to vector<16x640xf32>
    %225 = vector.broadcast %223 : vector<16x1xf32> to vector<16x640xf32>
    %226 = arith.mulf %224, %225 : vector<16x640xf32>
    %227 = arith.addf %219, %226 : vector<16x640xf32>
    %c0_124 = arith.constant 0 : index
    %c0_125 = arith.constant 0 : index
    %c643 = arith.constant 643 : index
    %228 = vector.load %arg1[%c0_124, %c0_125, %c643] : memref<1x1x1536xf32, #tpu.memory_space<vmem>>, vector<1x1x640xf32>
    %229 = vector.shape_cast %228 : vector<1x1x640xf32> to vector<1x640xf32>
    %c3_126 = arith.constant 3 : index
    %c0_127 = arith.constant 0 : index
    %c0_128 = arith.constant 0 : index
    %230 = vector.load %arg2[%c3_126, %c0_127, %c0_128] : memref<25x16x1xf32, #tpu.memory_space<vmem>>, vector<1x16x1xf32>
    %231 = vector.shape_cast %230 : vector<1x16x1xf32> to vector<16x1xf32>
    %232 = vector.broadcast %229 : vector<1x640xf32> to vector<16x640xf32>
    %233 = vector.broadcast %231 : vector<16x1xf32> to vector<16x640xf32>
    %234 = arith.mulf %232, %233 : vector<16x640xf32>
    %235 = arith.addf %227, %234 : vector<16x640xf32>
    %c0_129 = arith.constant 0 : index
    %c0_130 = arith.constant 0 : index
    %c644 = arith.constant 644 : index
    %236 = vector.load %arg1[%c0_129, %c0_130, %c644] : memref<1x1x1536xf32, #tpu.memory_space<vmem>>, vector<1x1x640xf32>
    %237 = vector.shape_cast %236 : vector<1x1x640xf32> to vector<1x640xf32>
    %c4_131 = arith.constant 4 : index
    %c0_132 = arith.constant 0 : index
    %c0_133 = arith.constant 0 : index
    %238 = vector.load %arg2[%c4_131, %c0_132, %c0_133] : memref<25x16x1xf32, #tpu.memory_space<vmem>>, vector<1x16x1xf32>
    %239 = vector.shape_cast %238 : vector<1x16x1xf32> to vector<16x1xf32>
    %240 = vector.broadcast %237 : vector<1x640xf32> to vector<16x640xf32>
    %241 = vector.broadcast %239 : vector<16x1xf32> to vector<16x640xf32>
    %242 = arith.mulf %240, %241 : vector<16x640xf32>
    %243 = arith.addf %235, %242 : vector<16x640xf32>
    %c0_134 = arith.constant 0 : index
    %c0_135 = arith.constant 0 : index
    %c672 = arith.constant 672 : index
    %244 = vector.load %arg1[%c0_134, %c0_135, %c672] : memref<1x1x1536xf32, #tpu.memory_space<vmem>>, vector<1x1x640xf32>
    %245 = vector.shape_cast %244 : vector<1x1x640xf32> to vector<1x640xf32>
    %c5_136 = arith.constant 5 : index
    %c0_137 = arith.constant 0 : index
    %c0_138 = arith.constant 0 : index
    %246 = vector.load %arg2[%c5_136, %c0_137, %c0_138] : memref<25x16x1xf32, #tpu.memory_space<vmem>>, vector<1x16x1xf32>
    %247 = vector.shape_cast %246 : vector<1x16x1xf32> to vector<16x1xf32>
    %248 = vector.broadcast %245 : vector<1x640xf32> to vector<16x640xf32>
    %249 = vector.broadcast %247 : vector<16x1xf32> to vector<16x640xf32>
    %250 = arith.mulf %248, %249 : vector<16x640xf32>
    %251 = arith.addf %243, %250 : vector<16x640xf32>
    %c0_139 = arith.constant 0 : index
    %c0_140 = arith.constant 0 : index
    %c673 = arith.constant 673 : index
    %252 = vector.load %arg1[%c0_139, %c0_140, %c673] : memref<1x1x1536xf32, #tpu.memory_space<vmem>>, vector<1x1x640xf32>
    %253 = vector.shape_cast %252 : vector<1x1x640xf32> to vector<1x640xf32>
    %c6_141 = arith.constant 6 : index
    %c0_142 = arith.constant 0 : index
    %c0_143 = arith.constant 0 : index
    %254 = vector.load %arg2[%c6_141, %c0_142, %c0_143] : memref<25x16x1xf32, #tpu.memory_space<vmem>>, vector<1x16x1xf32>
    %255 = vector.shape_cast %254 : vector<1x16x1xf32> to vector<16x1xf32>
    %256 = vector.broadcast %253 : vector<1x640xf32> to vector<16x640xf32>
    %257 = vector.broadcast %255 : vector<16x1xf32> to vector<16x640xf32>
    %258 = arith.mulf %256, %257 : vector<16x640xf32>
    %259 = arith.addf %251, %258 : vector<16x640xf32>
    %c0_144 = arith.constant 0 : index
    %c0_145 = arith.constant 0 : index
    %c674 = arith.constant 674 : index
    %260 = vector.load %arg1[%c0_144, %c0_145, %c674] : memref<1x1x1536xf32, #tpu.memory_space<vmem>>, vector<1x1x640xf32>
    %261 = vector.shape_cast %260 : vector<1x1x640xf32> to vector<1x640xf32>
    %c7_146 = arith.constant 7 : index
    %c0_147 = arith.constant 0 : index
    %c0_148 = arith.constant 0 : index
    %262 = vector.load %arg2[%c7_146, %c0_147, %c0_148] : memref<25x16x1xf32, #tpu.memory_space<vmem>>, vector<1x16x1xf32>
    %263 = vector.shape_cast %262 : vector<1x16x1xf32> to vector<16x1xf32>
    %264 = vector.broadcast %261 : vector<1x640xf32> to vector<16x640xf32>
    %265 = vector.broadcast %263 : vector<16x1xf32> to vector<16x640xf32>
    %266 = arith.mulf %264, %265 : vector<16x640xf32>
    %267 = arith.addf %259, %266 : vector<16x640xf32>
    %c0_149 = arith.constant 0 : index
    %c0_150 = arith.constant 0 : index
    %c675 = arith.constant 675 : index
    %268 = vector.load %arg1[%c0_149, %c0_150, %c675] : memref<1x1x1536xf32, #tpu.memory_space<vmem>>, vector<1x1x640xf32>
    %269 = vector.shape_cast %268 : vector<1x1x640xf32> to vector<1x640xf32>
    %c8_151 = arith.constant 8 : index
    %c0_152 = arith.constant 0 : index
    %c0_153 = arith.constant 0 : index
    %270 = vector.load %arg2[%c8_151, %c0_152, %c0_153] : memref<25x16x1xf32, #tpu.memory_space<vmem>>, vector<1x16x1xf32>
    %271 = vector.shape_cast %270 : vector<1x16x1xf32> to vector<16x1xf32>
    %272 = vector.broadcast %269 : vector<1x640xf32> to vector<16x640xf32>
    %273 = vector.broadcast %271 : vector<16x1xf32> to vector<16x640xf32>
    %274 = arith.mulf %272, %273 : vector<16x640xf32>
    %275 = arith.addf %267, %274 : vector<16x640xf32>
    %c0_154 = arith.constant 0 : index
    %c0_155 = arith.constant 0 : index
    %c676 = arith.constant 676 : index
    %276 = vector.load %arg1[%c0_154, %c0_155, %c676] : memref<1x1x1536xf32, #tpu.memory_space<vmem>>, vector<1x1x640xf32>
    %277 = vector.shape_cast %276 : vector<1x1x640xf32> to vector<1x640xf32>
    %c9_156 = arith.constant 9 : index
    %c0_157 = arith.constant 0 : index
    %c0_158 = arith.constant 0 : index
    %278 = vector.load %arg2[%c9_156, %c0_157, %c0_158] : memref<25x16x1xf32, #tpu.memory_space<vmem>>, vector<1x16x1xf32>
    %279 = vector.shape_cast %278 : vector<1x16x1xf32> to vector<16x1xf32>
    %280 = vector.broadcast %277 : vector<1x640xf32> to vector<16x640xf32>
    %281 = vector.broadcast %279 : vector<16x1xf32> to vector<16x640xf32>
    %282 = arith.mulf %280, %281 : vector<16x640xf32>
    %283 = arith.addf %275, %282 : vector<16x640xf32>
    %c0_159 = arith.constant 0 : index
    %c0_160 = arith.constant 0 : index
    %c704 = arith.constant 704 : index
    %284 = vector.load %arg1[%c0_159, %c0_160, %c704] : memref<1x1x1536xf32, #tpu.memory_space<vmem>>, vector<1x1x640xf32>
    %285 = vector.shape_cast %284 : vector<1x1x640xf32> to vector<1x640xf32>
    %c10_161 = arith.constant 10 : index
    %c0_162 = arith.constant 0 : index
    %c0_163 = arith.constant 0 : index
    %286 = vector.load %arg2[%c10_161, %c0_162, %c0_163] : memref<25x16x1xf32, #tpu.memory_space<vmem>>, vector<1x16x1xf32>
    %287 = vector.shape_cast %286 : vector<1x16x1xf32> to vector<16x1xf32>
    %288 = vector.broadcast %285 : vector<1x640xf32> to vector<16x640xf32>
    %289 = vector.broadcast %287 : vector<16x1xf32> to vector<16x640xf32>
    %290 = arith.mulf %288, %289 : vector<16x640xf32>
    %291 = arith.addf %283, %290 : vector<16x640xf32>
    %c0_164 = arith.constant 0 : index
    %c0_165 = arith.constant 0 : index
    %c705 = arith.constant 705 : index
    %292 = vector.load %arg1[%c0_164, %c0_165, %c705] : memref<1x1x1536xf32, #tpu.memory_space<vmem>>, vector<1x1x640xf32>
    %293 = vector.shape_cast %292 : vector<1x1x640xf32> to vector<1x640xf32>
    %c11_166 = arith.constant 11 : index
    %c0_167 = arith.constant 0 : index
    %c0_168 = arith.constant 0 : index
    %294 = vector.load %arg2[%c11_166, %c0_167, %c0_168] : memref<25x16x1xf32, #tpu.memory_space<vmem>>, vector<1x16x1xf32>
    %295 = vector.shape_cast %294 : vector<1x16x1xf32> to vector<16x1xf32>
    %296 = vector.broadcast %293 : vector<1x640xf32> to vector<16x640xf32>
    %297 = vector.broadcast %295 : vector<16x1xf32> to vector<16x640xf32>
    %298 = arith.mulf %296, %297 : vector<16x640xf32>
    %299 = arith.addf %291, %298 : vector<16x640xf32>
    %c0_169 = arith.constant 0 : index
    %c0_170 = arith.constant 0 : index
    %c706 = arith.constant 706 : index
    %300 = vector.load %arg1[%c0_169, %c0_170, %c706] : memref<1x1x1536xf32, #tpu.memory_space<vmem>>, vector<1x1x640xf32>
    %301 = vector.shape_cast %300 : vector<1x1x640xf32> to vector<1x640xf32>
    %c12_171 = arith.constant 12 : index
    %c0_172 = arith.constant 0 : index
    %c0_173 = arith.constant 0 : index
    %302 = vector.load %arg2[%c12_171, %c0_172, %c0_173] : memref<25x16x1xf32, #tpu.memory_space<vmem>>, vector<1x16x1xf32>
    %303 = vector.shape_cast %302 : vector<1x16x1xf32> to vector<16x1xf32>
    %304 = vector.broadcast %301 : vector<1x640xf32> to vector<16x640xf32>
    %305 = vector.broadcast %303 : vector<16x1xf32> to vector<16x640xf32>
    %306 = arith.mulf %304, %305 : vector<16x640xf32>
    %307 = arith.addf %299, %306 : vector<16x640xf32>
    %c0_174 = arith.constant 0 : index
    %c0_175 = arith.constant 0 : index
    %c707 = arith.constant 707 : index
    %308 = vector.load %arg1[%c0_174, %c0_175, %c707] : memref<1x1x1536xf32, #tpu.memory_space<vmem>>, vector<1x1x640xf32>
    %309 = vector.shape_cast %308 : vector<1x1x640xf32> to vector<1x640xf32>
    %c13_176 = arith.constant 13 : index
    %c0_177 = arith.constant 0 : index
    %c0_178 = arith.constant 0 : index
    %310 = vector.load %arg2[%c13_176, %c0_177, %c0_178] : memref<25x16x1xf32, #tpu.memory_space<vmem>>, vector<1x16x1xf32>
    %311 = vector.shape_cast %310 : vector<1x16x1xf32> to vector<16x1xf32>
    %312 = vector.broadcast %309 : vector<1x640xf32> to vector<16x640xf32>
    %313 = vector.broadcast %311 : vector<16x1xf32> to vector<16x640xf32>
    %314 = arith.mulf %312, %313 : vector<16x640xf32>
    %315 = arith.addf %307, %314 : vector<16x640xf32>
    %c0_179 = arith.constant 0 : index
    %c0_180 = arith.constant 0 : index
    %c708 = arith.constant 708 : index
    %316 = vector.load %arg1[%c0_179, %c0_180, %c708] : memref<1x1x1536xf32, #tpu.memory_space<vmem>>, vector<1x1x640xf32>
    %317 = vector.shape_cast %316 : vector<1x1x640xf32> to vector<1x640xf32>
    %c14_181 = arith.constant 14 : index
    %c0_182 = arith.constant 0 : index
    %c0_183 = arith.constant 0 : index
    %318 = vector.load %arg2[%c14_181, %c0_182, %c0_183] : memref<25x16x1xf32, #tpu.memory_space<vmem>>, vector<1x16x1xf32>
    %319 = vector.shape_cast %318 : vector<1x16x1xf32> to vector<16x1xf32>
    %320 = vector.broadcast %317 : vector<1x640xf32> to vector<16x640xf32>
    %321 = vector.broadcast %319 : vector<16x1xf32> to vector<16x640xf32>
    %322 = arith.mulf %320, %321 : vector<16x640xf32>
    %323 = arith.addf %315, %322 : vector<16x640xf32>
    %c0_184 = arith.constant 0 : index
    %c0_185 = arith.constant 0 : index
    %c736 = arith.constant 736 : index
    %324 = vector.load %arg1[%c0_184, %c0_185, %c736] : memref<1x1x1536xf32, #tpu.memory_space<vmem>>, vector<1x1x640xf32>
    %325 = vector.shape_cast %324 : vector<1x1x640xf32> to vector<1x640xf32>
    %c15_186 = arith.constant 15 : index
    %c0_187 = arith.constant 0 : index
    %c0_188 = arith.constant 0 : index
    %326 = vector.load %arg2[%c15_186, %c0_187, %c0_188] : memref<25x16x1xf32, #tpu.memory_space<vmem>>, vector<1x16x1xf32>
    %327 = vector.shape_cast %326 : vector<1x16x1xf32> to vector<16x1xf32>
    %328 = vector.broadcast %325 : vector<1x640xf32> to vector<16x640xf32>
    %329 = vector.broadcast %327 : vector<16x1xf32> to vector<16x640xf32>
    %330 = arith.mulf %328, %329 : vector<16x640xf32>
    %331 = arith.addf %323, %330 : vector<16x640xf32>
    %c0_189 = arith.constant 0 : index
    %c0_190 = arith.constant 0 : index
    %c737 = arith.constant 737 : index
    %332 = vector.load %arg1[%c0_189, %c0_190, %c737] : memref<1x1x1536xf32, #tpu.memory_space<vmem>>, vector<1x1x640xf32>
    %333 = vector.shape_cast %332 : vector<1x1x640xf32> to vector<1x640xf32>
    %c16_191 = arith.constant 16 : index
    %c0_192 = arith.constant 0 : index
    %c0_193 = arith.constant 0 : index
    %334 = vector.load %arg2[%c16_191, %c0_192, %c0_193] : memref<25x16x1xf32, #tpu.memory_space<vmem>>, vector<1x16x1xf32>
    %335 = vector.shape_cast %334 : vector<1x16x1xf32> to vector<16x1xf32>
    %336 = vector.broadcast %333 : vector<1x640xf32> to vector<16x640xf32>
    %337 = vector.broadcast %335 : vector<16x1xf32> to vector<16x640xf32>
    %338 = arith.mulf %336, %337 : vector<16x640xf32>
    %339 = arith.addf %331, %338 : vector<16x640xf32>
    %c0_194 = arith.constant 0 : index
    %c0_195 = arith.constant 0 : index
    %c738 = arith.constant 738 : index
    %340 = vector.load %arg1[%c0_194, %c0_195, %c738] : memref<1x1x1536xf32, #tpu.memory_space<vmem>>, vector<1x1x640xf32>
    %341 = vector.shape_cast %340 : vector<1x1x640xf32> to vector<1x640xf32>
    %c17_196 = arith.constant 17 : index
    %c0_197 = arith.constant 0 : index
    %c0_198 = arith.constant 0 : index
    %342 = vector.load %arg2[%c17_196, %c0_197, %c0_198] : memref<25x16x1xf32, #tpu.memory_space<vmem>>, vector<1x16x1xf32>
    %343 = vector.shape_cast %342 : vector<1x16x1xf32> to vector<16x1xf32>
    %344 = vector.broadcast %341 : vector<1x640xf32> to vector<16x640xf32>
    %345 = vector.broadcast %343 : vector<16x1xf32> to vector<16x640xf32>
    %346 = arith.mulf %344, %345 : vector<16x640xf32>
    %347 = arith.addf %339, %346 : vector<16x640xf32>
    %c0_199 = arith.constant 0 : index
    %c0_200 = arith.constant 0 : index
    %c739 = arith.constant 739 : index
    %348 = vector.load %arg1[%c0_199, %c0_200, %c739] : memref<1x1x1536xf32, #tpu.memory_space<vmem>>, vector<1x1x640xf32>
    %349 = vector.shape_cast %348 : vector<1x1x640xf32> to vector<1x640xf32>
    %c18_201 = arith.constant 18 : index
    %c0_202 = arith.constant 0 : index
    %c0_203 = arith.constant 0 : index
    %350 = vector.load %arg2[%c18_201, %c0_202, %c0_203] : memref<25x16x1xf32, #tpu.memory_space<vmem>>, vector<1x16x1xf32>
    %351 = vector.shape_cast %350 : vector<1x16x1xf32> to vector<16x1xf32>
    %352 = vector.broadcast %349 : vector<1x640xf32> to vector<16x640xf32>
    %353 = vector.broadcast %351 : vector<16x1xf32> to vector<16x640xf32>
    %354 = arith.mulf %352, %353 : vector<16x640xf32>
    %355 = arith.addf %347, %354 : vector<16x640xf32>
    %c0_204 = arith.constant 0 : index
    %c0_205 = arith.constant 0 : index
    %c740 = arith.constant 740 : index
    %356 = vector.load %arg1[%c0_204, %c0_205, %c740] : memref<1x1x1536xf32, #tpu.memory_space<vmem>>, vector<1x1x640xf32>
    %357 = vector.shape_cast %356 : vector<1x1x640xf32> to vector<1x640xf32>
    %c19_206 = arith.constant 19 : index
    %c0_207 = arith.constant 0 : index
    %c0_208 = arith.constant 0 : index
    %358 = vector.load %arg2[%c19_206, %c0_207, %c0_208] : memref<25x16x1xf32, #tpu.memory_space<vmem>>, vector<1x16x1xf32>
    %359 = vector.shape_cast %358 : vector<1x16x1xf32> to vector<16x1xf32>
    %360 = vector.broadcast %357 : vector<1x640xf32> to vector<16x640xf32>
    %361 = vector.broadcast %359 : vector<16x1xf32> to vector<16x640xf32>
    %362 = arith.mulf %360, %361 : vector<16x640xf32>
    %363 = arith.addf %355, %362 : vector<16x640xf32>
    %c0_209 = arith.constant 0 : index
    %c0_210 = arith.constant 0 : index
    %c768 = arith.constant 768 : index
    %364 = vector.load %arg1[%c0_209, %c0_210, %c768] : memref<1x1x1536xf32, #tpu.memory_space<vmem>>, vector<1x1x640xf32>
    %365 = vector.shape_cast %364 : vector<1x1x640xf32> to vector<1x640xf32>
    %c20_211 = arith.constant 20 : index
    %c0_212 = arith.constant 0 : index
    %c0_213 = arith.constant 0 : index
    %366 = vector.load %arg2[%c20_211, %c0_212, %c0_213] : memref<25x16x1xf32, #tpu.memory_space<vmem>>, vector<1x16x1xf32>
    %367 = vector.shape_cast %366 : vector<1x16x1xf32> to vector<16x1xf32>
    %368 = vector.broadcast %365 : vector<1x640xf32> to vector<16x640xf32>
    %369 = vector.broadcast %367 : vector<16x1xf32> to vector<16x640xf32>
    %370 = arith.mulf %368, %369 : vector<16x640xf32>
    %371 = arith.addf %363, %370 : vector<16x640xf32>
    %c0_214 = arith.constant 0 : index
    %c0_215 = arith.constant 0 : index
    %c769 = arith.constant 769 : index
    %372 = vector.load %arg1[%c0_214, %c0_215, %c769] : memref<1x1x1536xf32, #tpu.memory_space<vmem>>, vector<1x1x640xf32>
    %373 = vector.shape_cast %372 : vector<1x1x640xf32> to vector<1x640xf32>
    %c21_216 = arith.constant 21 : index
    %c0_217 = arith.constant 0 : index
    %c0_218 = arith.constant 0 : index
    %374 = vector.load %arg2[%c21_216, %c0_217, %c0_218] : memref<25x16x1xf32, #tpu.memory_space<vmem>>, vector<1x16x1xf32>
    %375 = vector.shape_cast %374 : vector<1x16x1xf32> to vector<16x1xf32>
    %376 = vector.broadcast %373 : vector<1x640xf32> to vector<16x640xf32>
    %377 = vector.broadcast %375 : vector<16x1xf32> to vector<16x640xf32>
    %378 = arith.mulf %376, %377 : vector<16x640xf32>
    %379 = arith.addf %371, %378 : vector<16x640xf32>
    %c0_219 = arith.constant 0 : index
    %c0_220 = arith.constant 0 : index
    %c770 = arith.constant 770 : index
    %380 = vector.load %arg1[%c0_219, %c0_220, %c770] : memref<1x1x1536xf32, #tpu.memory_space<vmem>>, vector<1x1x640xf32>
    %381 = vector.shape_cast %380 : vector<1x1x640xf32> to vector<1x640xf32>
    %c22_221 = arith.constant 22 : index
    %c0_222 = arith.constant 0 : index
    %c0_223 = arith.constant 0 : index
    %382 = vector.load %arg2[%c22_221, %c0_222, %c0_223] : memref<25x16x1xf32, #tpu.memory_space<vmem>>, vector<1x16x1xf32>
    %383 = vector.shape_cast %382 : vector<1x16x1xf32> to vector<16x1xf32>
    %384 = vector.broadcast %381 : vector<1x640xf32> to vector<16x640xf32>
    %385 = vector.broadcast %383 : vector<16x1xf32> to vector<16x640xf32>
    %386 = arith.mulf %384, %385 : vector<16x640xf32>
    %387 = arith.addf %379, %386 : vector<16x640xf32>
    %c0_224 = arith.constant 0 : index
    %c0_225 = arith.constant 0 : index
    %c771 = arith.constant 771 : index
    %388 = vector.load %arg1[%c0_224, %c0_225, %c771] : memref<1x1x1536xf32, #tpu.memory_space<vmem>>, vector<1x1x640xf32>
    %389 = vector.shape_cast %388 : vector<1x1x640xf32> to vector<1x640xf32>
    %c23_226 = arith.constant 23 : index
    %c0_227 = arith.constant 0 : index
    %c0_228 = arith.constant 0 : index
    %390 = vector.load %arg2[%c23_226, %c0_227, %c0_228] : memref<25x16x1xf32, #tpu.memory_space<vmem>>, vector<1x16x1xf32>
    %391 = vector.shape_cast %390 : vector<1x16x1xf32> to vector<16x1xf32>
    %392 = vector.broadcast %389 : vector<1x640xf32> to vector<16x640xf32>
    %393 = vector.broadcast %391 : vector<16x1xf32> to vector<16x640xf32>
    %394 = arith.mulf %392, %393 : vector<16x640xf32>
    %395 = arith.addf %387, %394 : vector<16x640xf32>
    %c0_229 = arith.constant 0 : index
    %c0_230 = arith.constant 0 : index
    %c772 = arith.constant 772 : index
    %396 = vector.load %arg1[%c0_229, %c0_230, %c772] : memref<1x1x1536xf32, #tpu.memory_space<vmem>>, vector<1x1x640xf32>
    %397 = vector.shape_cast %396 : vector<1x1x640xf32> to vector<1x640xf32>
    %c24_231 = arith.constant 24 : index
    %c0_232 = arith.constant 0 : index
    %c0_233 = arith.constant 0 : index
    %398 = vector.load %arg2[%c24_231, %c0_232, %c0_233] : memref<25x16x1xf32, #tpu.memory_space<vmem>>, vector<1x16x1xf32>
    %399 = vector.shape_cast %398 : vector<1x16x1xf32> to vector<16x1xf32>
    %400 = vector.broadcast %397 : vector<1x640xf32> to vector<16x640xf32>
    %401 = vector.broadcast %399 : vector<16x1xf32> to vector<16x640xf32>
    %402 = arith.mulf %400, %401 : vector<16x640xf32>
    %403 = arith.addf %395, %402 : vector<16x640xf32>
    %c0_234 = arith.constant 0 : index
    %c0_235 = arith.constant 0 : index
    %404 = vector.load %arg3[%c0_234, %c0_235] : memref<16x1xf32, #tpu.memory_space<vmem>>, vector<16x1xf32>
    %405 = vector.broadcast %404 : vector<16x1xf32> to vector<16x640xf32>
    %406 = arith.addf %403, %405 : vector<16x640xf32>
    %cst_236 = arith.constant 0.000000e+00 : f32
    %407 = vector.broadcast %cst_236 : f32 to vector<16x640xf32>
    %408 = arith.maximumf %406, %407 : vector<16x640xf32>
    %c0_237 = arith.constant 0 : index
    %c640_238 = arith.constant 640 : index
    %409 = vector.load %arg12[%c0_237, %c640_238] : memref<16x1280xf32, #tpu.memory_space<vmem>>, vector<16x640xf32>
    tpu.vector_store %arg12[%c0_237, %c640_238], %408 {strides = array<i32>} : memref<16x1280xf32, #tpu.memory_space<vmem>>, vector<16x640xf32>,
    %c0_239 = arith.constant 0 : index
    %c0_240 = arith.constant 0 : index
    %410 = vector.load %arg12[%c0_239, %c0_240] : memref<16x1280xf32, #tpu.memory_space<vmem>>, vector<16x1152xf32>
    %c0_241 = arith.constant 0 : index
    %c1_242 = arith.constant 1 : index
    %411 = vector.load %arg12[%c0_241, %c1_242] : memref<16x1280xf32, #tpu.memory_space<vmem>>, vector<16x1152xf32>
    %412 = arith.maximumf %410, %411 : vector<16x1152xf32>
    %c0_243 = arith.constant 0 : index
    %c32_244 = arith.constant 32 : index
    %413 = vector.load %arg12[%c0_243, %c32_244] : memref<16x1280xf32, #tpu.memory_space<vmem>>, vector<16x1152xf32>
    %c0_245 = arith.constant 0 : index
    %c33_246 = arith.constant 33 : index
    %414 = vector.load %arg12[%c0_245, %c33_246] : memref<16x1280xf32, #tpu.memory_space<vmem>>, vector<16x1152xf32>
    %415 = arith.maximumf %413, %414 : vector<16x1152xf32>
    %416 = arith.maximumf %412, %415 : vector<16x1152xf32>
    %c0_247 = arith.constant 0 : index
    %c0_248 = arith.constant 0 : index
    %417 = vector.load %arg4[%c0_247, %c0_248] : memref<1x1280xf32, #tpu.memory_space<vmem>>, vector<1x1152xf32>
    %418 = vector.broadcast %417 : vector<1x1152xf32> to vector<16x1152xf32>
    %419 = arith.mulf %416, %418 : vector<16x1152xf32>
    %420 = arith.truncf %419 : vector<16x1152xf32> to vector<16x1152xbf16>
    %c0_249 = arith.constant 0 : index
    %c0_250 = arith.constant 0 : index
    %421 = vector.load %arg13[%c0_249, %c0_250] : memref<16x1280xbf16, #tpu.memory_space<vmem>>, vector<16x1152xbf16>
    tpu.vector_store %arg13[%c0_249, %c0_250], %420 {strides = array<i32>} : memref<16x1280xbf16, #tpu.memory_space<vmem>>, vector<16x1152xbf16>,
    %cst_251 = arith.constant 0.000000e+00 : bf16
    %422 = vector.broadcast %cst_251 : bf16 to vector<16x128xbf16>
    %c0_252 = arith.constant 0 : index
    %c1152 = arith.constant 1152 : index
    %423 = vector.load %arg13[%c0_252, %c1152] : memref<16x1280xbf16, #tpu.memory_space<vmem>>, vector<16x128xbf16>
    tpu.vector_store %arg13[%c0_252, %c1152], %422 {strides = array<i32>} : memref<16x1280xbf16, #tpu.memory_space<vmem>>, vector<16x128xbf16>,
    %c0_253 = arith.constant 0 : index
    %c0_254 = arith.constant 0 : index
    %424 = vector.load %arg13[%c0_253, %c0_254] : memref<16x1280xbf16, #tpu.memory_space<vmem>>, vector<16x896xbf16>
    %c0_255 = arith.constant 0 : index
    %c0_256 = arith.constant 0 : index
    %425 = vector.load %arg14[%c0_255, %c0_256] : memref<400x896xbf16, #tpu.memory_space<vmem>>, vector<16x896xbf16>
    tpu.vector_store %arg14[%c0_255, %c0_256], %424 {strides = array<i32>} : memref<400x896xbf16, #tpu.memory_space<vmem>>, vector<16x896xbf16>,
    %c0_257 = arith.constant 0 : index
    %c2_258 = arith.constant 2 : index
    %426 = vector.load %arg13[%c0_257, %c2_258] : memref<16x1280xbf16, #tpu.memory_space<vmem>>, vector<16x896xbf16>
    %c16_259 = arith.constant 16 : index
    %c0_260 = arith.constant 0 : index
    %427 = vector.load %arg14[%c16_259, %c0_260] : memref<400x896xbf16, #tpu.memory_space<vmem>>, vector<16x896xbf16>
    tpu.vector_store %arg14[%c16_259, %c0_260], %426 {strides = array<i32>} : memref<400x896xbf16, #tpu.memory_space<vmem>>, vector<16x896xbf16>,
    %c0_261 = arith.constant 0 : index
    %c4_262 = arith.constant 4 : index
    %428 = vector.load %arg13[%c0_261, %c4_262] : memref<16x1280xbf16, #tpu.memory_space<vmem>>, vector<16x896xbf16>
    %c32_263 = arith.constant 32 : index
    %c0_264 = arith.constant 0 : index
    %429 = vector.load %arg14[%c32_263, %c0_264] : memref<400x896xbf16, #tpu.memory_space<vmem>>, vector<16x896xbf16>
    tpu.vector_store %arg14[%c32_263, %c0_264], %428 {strides = array<i32>} : memref<400x896xbf16, #tpu.memory_space<vmem>>, vector<16x896xbf16>,
    %c0_265 = arith.constant 0 : index
    %c6_266 = arith.constant 6 : index
    %430 = vector.load %arg13[%c0_265, %c6_266] : memref<16x1280xbf16, #tpu.memory_space<vmem>>, vector<16x896xbf16>
    %c48 = arith.constant 48 : index
    %c0_267 = arith.constant 0 : index
    %431 = vector.load %arg14[%c48, %c0_267] : memref<400x896xbf16, #tpu.memory_space<vmem>>, vector<16x896xbf16>
    tpu.vector_store %arg14[%c48, %c0_267], %430 {strides = array<i32>} : memref<400x896xbf16, #tpu.memory_space<vmem>>, vector<16x896xbf16>,
    %c0_268 = arith.constant 0 : index
    %c8_269 = arith.constant 8 : index
    %432 = vector.load %arg13[%c0_268, %c8_269] : memref<16x1280xbf16, #tpu.memory_space<vmem>>, vector<16x896xbf16>
    %c64_270 = arith.constant 64 : index
    %c0_271 = arith.constant 0 : index
    %433 = vector.load %arg14[%c64_270, %c0_271] : memref<400x896xbf16, #tpu.memory_space<vmem>>, vector<16x896xbf16>
    tpu.vector_store %arg14[%c64_270, %c0_271], %432 {strides = array<i32>} : memref<400x896xbf16, #tpu.memory_space<vmem>>, vector<16x896xbf16>,
    %c0_272 = arith.constant 0 : index
    %c64_273 = arith.constant 64 : index
    %434 = vector.load %arg13[%c0_272, %c64_273] : memref<16x1280xbf16, #tpu.memory_space<vmem>>, vector<16x896xbf16>
    %c80 = arith.constant 80 : index
    %c0_274 = arith.constant 0 : index
    %435 = vector.load %arg14[%c80, %c0_274] : memref<400x896xbf16, #tpu.memory_space<vmem>>, vector<16x896xbf16>
    tpu.vector_store %arg14[%c80, %c0_274], %434 {strides = array<i32>} : memref<400x896xbf16, #tpu.memory_space<vmem>>, vector<16x896xbf16>,
    %c0_275 = arith.constant 0 : index
    %c66_276 = arith.constant 66 : index
    %436 = vector.load %arg13[%c0_275, %c66_276] : memref<16x1280xbf16, #tpu.memory_space<vmem>>, vector<16x896xbf16>
    %c96_277 = arith.constant 96 : index
    %c0_278 = arith.constant 0 : index
    %437 = vector.load %arg14[%c96_277, %c0_278] : memref<400x896xbf16, #tpu.memory_space<vmem>>, vector<16x896xbf16>
    tpu.vector_store %arg14[%c96_277, %c0_278], %436 {strides = array<i32>} : memref<400x896xbf16, #tpu.memory_space<vmem>>, vector<16x896xbf16>,
    %c0_279 = arith.constant 0 : index
    %c68_280 = arith.constant 68 : index
    %438 = vector.load %arg13[%c0_279, %c68_280] : memref<16x1280xbf16, #tpu.memory_space<vmem>>, vector<16x896xbf16>
    %c112 = arith.constant 112 : index
    %c0_281 = arith.constant 0 : index
    %439 = vector.load %arg14[%c112, %c0_281] : memref<400x896xbf16, #tpu.memory_space<vmem>>, vector<16x896xbf16>
    tpu.vector_store %arg14[%c112, %c0_281], %438 {strides = array<i32>} : memref<400x896xbf16, #tpu.memory_space<vmem>>, vector<16x896xbf16>,
    %c0_282 = arith.constant 0 : index
    %c70 = arith.constant 70 : index
    %440 = vector.load %arg13[%c0_282, %c70] : memref<16x1280xbf16, #tpu.memory_space<vmem>>, vector<16x896xbf16>
    %c128_283 = arith.constant 128 : index
    %c0_284 = arith.constant 0 : index
    %441 = vector.load %arg14[%c128_283, %c0_284] : memref<400x896xbf16, #tpu.memory_space<vmem>>, vector<16x896xbf16>
    tpu.vector_store %arg14[%c128_283, %c0_284], %440 {strides = array<i32>} : memref<400x896xbf16, #tpu.memory_space<vmem>>, vector<16x896xbf16>,
    %c0_285 = arith.constant 0 : index
    %c72 = arith.constant 72 : index
    %442 = vector.load %arg13[%c0_285, %c72] : memref<16x1280xbf16, #tpu.memory_space<vmem>>, vector<16x896xbf16>
    %c144 = arith.constant 144 : index
    %c0_286 = arith.constant 0 : index
    %443 = vector.load %arg14[%c144, %c0_286] : memref<400x896xbf16, #tpu.memory_space<vmem>>, vector<16x896xbf16>
    tpu.vector_store %arg14[%c144, %c0_286], %442 {strides = array<i32>} : memref<400x896xbf16, #tpu.memory_space<vmem>>, vector<16x896xbf16>,
    %c0_287 = arith.constant 0 : index
    %c128_288 = arith.constant 128 : index
    %444 = vector.load %arg13[%c0_287, %c128_288] : memref<16x1280xbf16, #tpu.memory_space<vmem>>, vector<16x896xbf16>
    %c160 = arith.constant 160 : index
    %c0_289 = arith.constant 0 : index
    %445 = vector.load %arg14[%c160, %c0_289] : memref<400x896xbf16, #tpu.memory_space<vmem>>, vector<16x896xbf16>
    tpu.vector_store %arg14[%c160, %c0_289], %444 {strides = array<i32>} : memref<400x896xbf16, #tpu.memory_space<vmem>>, vector<16x896xbf16>,
    %c0_290 = arith.constant 0 : index
    %c130_291 = arith.constant 130 : index
    %446 = vector.load %arg13[%c0_290, %c130_291] : memref<16x1280xbf16, #tpu.memory_space<vmem>>, vector<16x896xbf16>
    %c176 = arith.constant 176 : index
    %c0_292 = arith.constant 0 : index
    %447 = vector.load %arg14[%c176, %c0_292] : memref<400x896xbf16, #tpu.memory_space<vmem>>, vector<16x896xbf16>
    tpu.vector_store %arg14[%c176, %c0_292], %446 {strides = array<i32>} : memref<400x896xbf16, #tpu.memory_space<vmem>>, vector<16x896xbf16>,
    %c0_293 = arith.constant 0 : index
    %c132_294 = arith.constant 132 : index
    %448 = vector.load %arg13[%c0_293, %c132_294] : memref<16x1280xbf16, #tpu.memory_space<vmem>>, vector<16x896xbf16>
    %c192 = arith.constant 192 : index
    %c0_295 = arith.constant 0 : index
    %449 = vector.load %arg14[%c192, %c0_295] : memref<400x896xbf16, #tpu.memory_space<vmem>>, vector<16x896xbf16>
    tpu.vector_store %arg14[%c192, %c0_295], %448 {strides = array<i32>} : memref<400x896xbf16, #tpu.memory_space<vmem>>, vector<16x896xbf16>,
    %c0_296 = arith.constant 0 : index
    %c134 = arith.constant 134 : index
    %450 = vector.load %arg13[%c0_296, %c134] : memref<16x1280xbf16, #tpu.memory_space<vmem>>, vector<16x896xbf16>
    %c208 = arith.constant 208 : index
    %c0_297 = arith.constant 0 : index
    %451 = vector.load %arg14[%c208, %c0_297] : memref<400x896xbf16, #tpu.memory_space<vmem>>, vector<16x896xbf16>
    tpu.vector_store %arg14[%c208, %c0_297], %450 {strides = array<i32>} : memref<400x896xbf16, #tpu.memory_space<vmem>>, vector<16x896xbf16>,
    %c0_298 = arith.constant 0 : index
    %c136 = arith.constant 136 : index
    %452 = vector.load %arg13[%c0_298, %c136] : memref<16x1280xbf16, #tpu.memory_space<vmem>>, vector<16x896xbf16>
    %c224 = arith.constant 224 : index
    %c0_299 = arith.constant 0 : index
    %453 = vector.load %arg14[%c224, %c0_299] : memref<400x896xbf16, #tpu.memory_space<vmem>>, vector<16x896xbf16>
    tpu.vector_store %arg14[%c224, %c0_299], %452 {strides = array<i32>} : memref<400x896xbf16, #tpu.memory_space<vmem>>, vector<16x896xbf16>,
    %c0_300 = arith.constant 0 : index
    %c192_301 = arith.constant 192 : index
    %454 = vector.load %arg13[%c0_300, %c192_301] : memref<16x1280xbf16, #tpu.memory_space<vmem>>, vector<16x896xbf16>
    %c240 = arith.constant 240 : index
    %c0_302 = arith.constant 0 : index
    %455 = vector.load %arg14[%c240, %c0_302] : memref<400x896xbf16, #tpu.memory_space<vmem>>, vector<16x896xbf16>
    tpu.vector_store %arg14[%c240, %c0_302], %454 {strides = array<i32>} : memref<400x896xbf16, #tpu.memory_space<vmem>>, vector<16x896xbf16>,
    %c0_303 = arith.constant 0 : index
    %c194 = arith.constant 194 : index
    %456 = vector.load %arg13[%c0_303, %c194] : memref<16x1280xbf16, #tpu.memory_space<vmem>>, vector<16x896xbf16>
    %c256 = arith.constant 256 : index
    %c0_304 = arith.constant 0 : index
    %457 = vector.load %arg14[%c256, %c0_304] : memref<400x896xbf16, #tpu.memory_space<vmem>>, vector<16x896xbf16>
    tpu.vector_store %arg14[%c256, %c0_304], %456 {strides = array<i32>} : memref<400x896xbf16, #tpu.memory_space<vmem>>, vector<16x896xbf16>,
    %c0_305 = arith.constant 0 : index
    %c196 = arith.constant 196 : index
    %458 = vector.load %arg13[%c0_305, %c196] : memref<16x1280xbf16, #tpu.memory_space<vmem>>, vector<16x896xbf16>
    %c272 = arith.constant 272 : index
    %c0_306 = arith.constant 0 : index
    %459 = vector.load %arg14[%c272, %c0_306] : memref<400x896xbf16, #tpu.memory_space<vmem>>, vector<16x896xbf16>
    tpu.vector_store %arg14[%c272, %c0_306], %458 {strides = array<i32>} : memref<400x896xbf16, #tpu.memory_space<vmem>>, vector<16x896xbf16>,
    %c0_307 = arith.constant 0 : index
    %c198 = arith.constant 198 : index
    %460 = vector.load %arg13[%c0_307, %c198] : memref<16x1280xbf16, #tpu.memory_space<vmem>>, vector<16x896xbf16>
    %c288 = arith.constant 288 : index
    %c0_308 = arith.constant 0 : index
    %461 = vector.load %arg14[%c288, %c0_308] : memref<400x896xbf16, #tpu.memory_space<vmem>>, vector<16x896xbf16>
    tpu.vector_store %arg14[%c288, %c0_308], %460 {strides = array<i32>} : memref<400x896xbf16, #tpu.memory_space<vmem>>, vector<16x896xbf16>,
    %c0_309 = arith.constant 0 : index
    %c200 = arith.constant 200 : index
    %462 = vector.load %arg13[%c0_309, %c200] : memref<16x1280xbf16, #tpu.memory_space<vmem>>, vector<16x896xbf16>
    %c304 = arith.constant 304 : index
    %c0_310 = arith.constant 0 : index
    %463 = vector.load %arg14[%c304, %c0_310] : memref<400x896xbf16, #tpu.memory_space<vmem>>, vector<16x896xbf16>
    tpu.vector_store %arg14[%c304, %c0_310], %462 {strides = array<i32>} : memref<400x896xbf16, #tpu.memory_space<vmem>>, vector<16x896xbf16>,
    %c0_311 = arith.constant 0 : index
    %c256_312 = arith.constant 256 : index
    %464 = vector.load %arg13[%c0_311, %c256_312] : memref<16x1280xbf16, #tpu.memory_space<vmem>>, vector<16x896xbf16>
    %c320 = arith.constant 320 : index
    %c0_313 = arith.constant 0 : index
    %465 = vector.load %arg14[%c320, %c0_313] : memref<400x896xbf16, #tpu.memory_space<vmem>>, vector<16x896xbf16>
    tpu.vector_store %arg14[%c320, %c0_313], %464 {strides = array<i32>} : memref<400x896xbf16, #tpu.memory_space<vmem>>, vector<16x896xbf16>,
    %c0_314 = arith.constant 0 : index
    %c258 = arith.constant 258 : index
    %466 = vector.load %arg13[%c0_314, %c258] : memref<16x1280xbf16, #tpu.memory_space<vmem>>, vector<16x896xbf16>
    %c336 = arith.constant 336 : index
    %c0_315 = arith.constant 0 : index
    %467 = vector.load %arg14[%c336, %c0_315] : memref<400x896xbf16, #tpu.memory_space<vmem>>, vector<16x896xbf16>
    tpu.vector_store %arg14[%c336, %c0_315], %466 {strides = array<i32>} : memref<400x896xbf16, #tpu.memory_space<vmem>>, vector<16x896xbf16>,
    %c0_316 = arith.constant 0 : index
    %c260 = arith.constant 260 : index
    %468 = vector.load %arg13[%c0_316, %c260] : memref<16x1280xbf16, #tpu.memory_space<vmem>>, vector<16x896xbf16>
    %c352 = arith.constant 352 : index
    %c0_317 = arith.constant 0 : index
    %469 = vector.load %arg14[%c352, %c0_317] : memref<400x896xbf16, #tpu.memory_space<vmem>>, vector<16x896xbf16>
    tpu.vector_store %arg14[%c352, %c0_317], %468 {strides = array<i32>} : memref<400x896xbf16, #tpu.memory_space<vmem>>, vector<16x896xbf16>,
    %c0_318 = arith.constant 0 : index
    %c262 = arith.constant 262 : index
    %470 = vector.load %arg13[%c0_318, %c262] : memref<16x1280xbf16, #tpu.memory_space<vmem>>, vector<16x896xbf16>
    %c368 = arith.constant 368 : index
    %c0_319 = arith.constant 0 : index
    %471 = vector.load %arg14[%c368, %c0_319] : memref<400x896xbf16, #tpu.memory_space<vmem>>, vector<16x896xbf16>
    tpu.vector_store %arg14[%c368, %c0_319], %470 {strides = array<i32>} : memref<400x896xbf16, #tpu.memory_space<vmem>>, vector<16x896xbf16>,
    %c0_320 = arith.constant 0 : index
    %c264 = arith.constant 264 : index
    %472 = vector.load %arg13[%c0_320, %c264] : memref<16x1280xbf16, #tpu.memory_space<vmem>>, vector<16x896xbf16>
    %c384 = arith.constant 384 : index
    %c0_321 = arith.constant 0 : index
    %473 = vector.load %arg14[%c384, %c0_321] : memref<400x896xbf16, #tpu.memory_space<vmem>>, vector<16x896xbf16>
    tpu.vector_store %arg14[%c384, %c0_321], %472 {strides = array<i32>} : memref<400x896xbf16, #tpu.memory_space<vmem>>, vector<16x896xbf16>,
    %c0_322 = arith.constant 0 : index
    %c0_323 = arith.constant 0 : index
    %474 = vector.load %arg5[%c0_322, %c0_323] : memref<32x400xbf16, #tpu.memory_space<vmem>>, vector<32x400xbf16>
    %c0_324 = arith.constant 0 : index
    %c0_325 = arith.constant 0 : index
    %475 = vector.load %arg14[%c0_324, %c0_325] : memref<400x896xbf16, #tpu.memory_space<vmem>>, vector<400x896xbf16>
    %cst_326 = arith.constant dense<0.000000e+00> : vector<32x896xf32>
    %476 = tpu.matmul %474, %475, %cst_326 {dimension_numbers = #tpu.dot_dimension_numbers<[1], [0], [0], [1], [0, 0, 1, 1], [], []>} : vector<32x400xbf16>, vector<400x896xbf16>, vector<32x896xf32> -> vector<32x896xf32>
    %c0_327 = arith.constant 0 : index
    %c0_328 = arith.constant 0 : index
    %477 = vector.load %arg6[%c0_327, %c0_328] : memref<32x1xf32, #tpu.memory_space<vmem>>, vector<32x1xf32>
    %478 = vector.broadcast %477 : vector<32x1xf32> to vector<32x896xf32>
    %479 = arith.addf %476, %478 : vector<32x896xf32>
    %cst_329 = arith.constant 0.000000e+00 : f32
    %480 = vector.broadcast %cst_329 : f32 to vector<32x896xf32>
    %481 = arith.maximumf %479, %480 : vector<32x896xf32>
    %c0_330 = arith.constant 0 : index
    %c0_331 = arith.constant 0 : index
    %482 = vector.load %arg15[%c0_330, %c0_331] : memref<32x1024xf32, #tpu.memory_space<vmem>>, vector<32x896xf32>
    tpu.vector_store %arg15[%c0_330, %c0_331], %481 {strides = array<i32>} : memref<32x1024xf32, #tpu.memory_space<vmem>>, vector<32x896xf32>,
    %cst_332 = arith.constant 0.000000e+00 : f32
    %483 = vector.broadcast %cst_332 : f32 to vector<32x128xf32>
    %c0_333 = arith.constant 0 : index
    %c896 = arith.constant 896 : index
    %484 = vector.load %arg15[%c0_333, %c896] : memref<32x1024xf32, #tpu.memory_space<vmem>>, vector<32x128xf32>
    tpu.vector_store %arg15[%c0_333, %c896], %483 {strides = array<i32>} : memref<32x1024xf32, #tpu.memory_space<vmem>>, vector<32x128xf32>,
    %c0_334 = arith.constant 0 : index
    %c0_335 = arith.constant 0 : index
    %485 = vector.load %arg15[%c0_334, %c0_335] : memref<32x1024xf32, #tpu.memory_space<vmem>>, vector<32x896xf32>
    %c0_336 = arith.constant 0 : index
    %c2_337 = arith.constant 2 : index
    %486 = vector.load %arg15[%c0_336, %c2_337] : memref<32x1024xf32, #tpu.memory_space<vmem>>, vector<32x896xf32>
    %487 = arith.maximumf %485, %486 : vector<32x896xf32>
    %c0_338 = arith.constant 0 : index
    %c64_339 = arith.constant 64 : index
    %488 = vector.load %arg15[%c0_338, %c64_339] : memref<32x1024xf32, #tpu.memory_space<vmem>>, vector<32x896xf32>
    %c0_340 = arith.constant 0 : index
    %c66_341 = arith.constant 66 : index
    %489 = vector.load %arg15[%c0_340, %c66_341] : memref<32x1024xf32, #tpu.memory_space<vmem>>, vector<32x896xf32>
    %490 = arith.maximumf %488, %489 : vector<32x896xf32>
    %491 = arith.maximumf %487, %490 : vector<32x896xf32>
    %492 = arith.truncf %491 : vector<32x896xf32> to vector<32x896xbf16>
    %c0_342 = arith.constant 0 : index
    %c0_343 = arith.constant 0 : index
    %493 = vector.load %arg7[%c0_342, %c0_343] : memref<896x320xbf16, #tpu.memory_space<vmem>>, vector<896x320xbf16>
    %cst_344 = arith.constant dense<0.000000e+00> : vector<32x320xf32>
    %494 = tpu.matmul %492, %493, %cst_344 {dimension_numbers = #tpu.dot_dimension_numbers<[1], [0], [0], [1], [0, 0, 1, 1], [], []>} : vector<32x896xbf16>, vector<896x320xbf16>, vector<32x320xf32> -> vector<32x320xf32>
    %c0_345 = arith.constant 0 : index
    %c0_346 = arith.constant 0 : index
    %495 = vector.load %arg8[%c0_345, %c0_346] : memref<32x320xf32, #tpu.memory_space<vmem>>, vector<32x320xf32>
    %496 = arith.mulf %494, %495 : vector<32x320xf32>
    %c0_347 = arith.constant 0 : index
    %c0_348 = arith.constant 0 : index
    %497 = vector.load %arg9[%c0_347, %c0_348] : memref<320x16xf32, #tpu.memory_space<vmem>>, vector<320x16xf32>
    %cst_349 = arith.constant dense<0.000000e+00> : vector<32x16xf32>
    %498 = tpu.matmul %496, %497, %cst_349 {dimension_numbers = #tpu.dot_dimension_numbers<[1], [0], [0], [1], [0, 0, 1, 1], [], []>} : vector<32x320xf32>, vector<320x16xf32>, vector<32x16xf32> -> vector<32x16xf32>
    %cst_350 = arith.constant dense<0.000000e+00> : vector<16xf32>
    %499 = vector.multi_reduction <add>, %498, %cst_350 [0] : vector<32x16xf32> to vector<16xf32>
    %500 = vector.shape_cast %499 : vector<16xf32> to vector<1x16xf32>
    %c0_351 = arith.constant 0 : index
    %c0_352 = arith.constant 0 : index
    %501 = vector.load %arg10[%c0_351, %c0_352] : memref<1x16xf32, #tpu.memory_space<vmem>>, vector<1x16xf32>
    %502 = arith.addf %500, %501 : vector<1x16xf32>
    %c0_353 = arith.constant 0 : index
    %c0_354 = arith.constant 0 : index
    %c0_355 = arith.constant 0 : index
    %503 = vector.load %arg11[%c0_353, %c0_354, %c0_355] : memref<1x1x16xf32, #tpu.memory_space<vmem>>, vector<1x1x16xf32>
    %504 = vector.shape_cast %503 : vector<1x1x16xf32> to vector<1x16xf32>
    %505 = vector.shape_cast %502 : vector<1x16xf32> to vector<1x1x16xf32>
    tpu.vector_store %arg11[%c0_353, %c0_354, %c0_355], %505 {strides = array<i32>} : memref<1x1x16xf32, #tpu.memory_space<vmem>>, vector<1x1x16xf32>,
    return
  }
  func.func @transform_0(%arg0: i32) -> (i32, i32, i32) {
    %c0_i32 = arith.constant 0 : i32
    %c0_i32_0 = arith.constant 0 : i32
    %c0_i32_1 = arith.constant 0 : i32
    return %arg0, %c0_i32, %c0_i32_0 : i32, i32, i32
  }
  func.func @transform_1(%arg0: i32) -> (i32, i32, i32) {
    %c0_i32 = arith.constant 0 : i32
    %c0_i32_0 = arith.constant 0 : i32
    %c0_i32_1 = arith.constant 0 : i32
    %c0_i32_2 = arith.constant 0 : i32
    return %c0_i32, %c0_i32_0, %c0_i32_1 : i32, i32, i32
  }
  func.func @transform_2(%arg0: i32) -> (i32, i32) {
    %c0_i32 = arith.constant 0 : i32
    %c0_i32_0 = arith.constant 0 : i32
    %c0_i32_1 = arith.constant 0 : i32
    return %c0_i32, %c0_i32_0 : i32, i32
  }
  func.func @transform_3(%arg0: i32) -> (i32, i32) {
    %c0_i32 = arith.constant 0 : i32
    %c0_i32_0 = arith.constant 0 : i32
    %c0_i32_1 = arith.constant 0 : i32
    return %c0_i32, %c0_i32_0 : i32, i32
  }
  func.func @transform_4(%arg0: i32) -> (i32, i32) {
    %c0_i32 = arith.constant 0 : i32
    %c0_i32_0 = arith.constant 0 : i32
    %c0_i32_1 = arith.constant 0 : i32
    return %c0_i32, %c0_i32_0 : i32, i32
  }
  func.func @transform_5(%arg0: i32) -> (i32, i32) {
    %c0_i32 = arith.constant 0 : i32
    %c0_i32_0 = arith.constant 0 : i32
    %c0_i32_1 = arith.constant 0 : i32
    return %c0_i32, %c0_i32_0 : i32, i32
  }
  func.func @transform_6(%arg0: i32) -> (i32, i32) {
    %c0_i32 = arith.constant 0 : i32
    %c0_i32_0 = arith.constant 0 : i32
    %c0_i32_1 = arith.constant 0 : i32
    return %c0_i32, %c0_i32_0 : i32, i32
  }
  func.func @transform_7(%arg0: i32) -> (i32, i32) {
    %c0_i32 = arith.constant 0 : i32
    %c0_i32_0 = arith.constant 0 : i32
    %c0_i32_1 = arith.constant 0 : i32
    return %c0_i32, %c0_i32_0 : i32, i32
  }
  func.func @transform_8(%arg0: i32) -> (i32, i32) {
    %c0_i32 = arith.constant 0 : i32
    %c0_i32_0 = arith.constant 0 : i32
    %c0_i32_1 = arith.constant 0 : i32
    return %c0_i32, %c0_i32_0 : i32, i32
  }
  func.func @transform_9(%arg0: i32) -> (i32, i32) {
    %c0_i32 = arith.constant 0 : i32
    %c0_i32_0 = arith.constant 0 : i32
    %c0_i32_1 = arith.constant 0 : i32
    return %c0_i32, %c0_i32_0 : i32, i32
  }
  func.func @transform_10(%arg0: i32) -> (i32, i32, i32) {
    %c0_i32 = arith.constant 0 : i32
    %c0_i32_0 = arith.constant 0 : i32
    %c0_i32_1 = arith.constant 0 : i32
    return %arg0, %c0_i32, %c0_i32_0 : i32, i32, i32
  }
}

</mosaic_0001>

<llo_original>
// kernel: simple_net_forward.1
$region0: #{simple_net_forward.1}
  #allocation0 [shape = 'u32[]', space=smem, size = 0x4, offset = 0x4, fixed_abs, tag = 'smem constant byte address 0x4 - core index']
  #allocation1 [shape = 'u32[72,128]{1,0:T(1,128)}', space=vmem, size = 0x9000, scoped, tag = 'internal scratch']
  #allocation2 [shape = 'f32[16,1280]{1,0:T(8,128)}', space=vmem, size = 0x14000, scoped, tag = 'scratch operand']
  #allocation3 [shape = 'bf16[16,1280]{1,0:T(8,128)(2,1)}', space=vmem, size = 0xa000, scoped, tag = 'scratch operand']
  #allocation4 [shape = 'bf16[400,896]{1,0:T(8,128)(2,1)}', space=vmem, size = 0xaf000, scoped, tag = 'scratch operand']
  #allocation5 [shape = 'f32[32,1024]{1,0:T(8,128)}', space=vmem, size = 0x20000, scoped, tag = 'scratch operand']
  %s0 = inlined_call_operand.vmem [shape: f32[2,1,1536], index: 0, kind: input, shape index: {}]
  %s1 = inlined_call_operand.vmem [shape: f32[25,16,1], index: 1, kind: input, shape index: {}]
  %s2 = inlined_call_operand.vmem [shape: f32[16,1], index: 2, kind: input, shape index: {}]
  %s3 = inlined_call_operand.vmem [shape: f32[1,1280], index: 3, kind: input, shape index: {}]
  %s4 = inlined_call_operand.vmem [shape: bf16[32,400], index: 4, kind: input, shape index: {}]
  %s5 = inlined_call_operand.vmem [shape: f32[32,1], index: 5, kind: input, shape index: {}]
  %s6 = inlined_call_operand.vmem [shape: bf16[896,320], index: 6, kind: input, shape index: {}]
  %s7 = inlined_call_operand.vmem [shape: f32[32,320], index: 7, kind: input, shape index: {}]
  %s8 = inlined_call_operand.vmem [shape: f32[320,16], index: 8, kind: input, shape index: {}]
  %s9 = inlined_call_operand.vmem [shape: f32[1,16], index: 9, kind: input, shape index: {}]
  %s10 = inlined_call_operand.hbm [shape: f32[2,1,16], index: 10, kind: output, shape index: {}]
  %s11 = sld [smem:[#allocation0]]
  $region73: #{simple_net_forward.1} parent=0
    _
  %s13 = ssub.s32 1, %s11
  %s14 = scalar_select 0, %s13, %s11
  $region1: #{simple_net_forward.1} parent=0
    #allocation6 [shape = 'u8[1024]{0}', space=vmem, size = 0x400, scoped, tag = 'output window, operand 0']
    #allocation7 [shape = 's32[2]{0}', space=sflag, size = 0x8, scoped, tag = 'scoped memory for simple_net_forward.1']
    %15 = vsyncpa [#allocation7], 0
    %s16 = scalar_lea.sflag [#allocation7], 1
    %17 = vsyncpa %s16, 0
    loop: start=0, step=1, limit=4
    $region2: #{simple_net_forward.1} parent=1 // loop_pre_header
      _
    $region3: #{simple_net_forward.1} parent=1 // loop_header
      %s19 = sphi 0, %s23
      %p20 = scmp.ge.s32.totalorder %s19, 4
      %s29 = sphi 0, %s31
      %s32 = sphi 0, %s29
      %s33 = sphi 0, %s32
      %s49 = sphi 0, %s33
      %s53 = sphi 0, %s53
      %s55 = sphi 0, %s53
      %s56 = sphi 0, %s55
      %s70 = sphi 0, %s56
      %s74 = sphi 0, %s74
      %s76 = sphi 0, %s74
      %s77 = sphi 0, %s76
      %s91 = sphi 0, %s77
      %s95 = sphi 0, %s95
      %s97 = sphi 0, %s95
      %s98 = sphi 0, %s97
      %s112 = sphi 0, %s98
      %s116 = sphi 0, %s116
      %s118 = sphi 0, %s116
      %s119 = sphi 0, %s118
      %s133 = sphi 0, %s119
      %s137 = sphi 0, %s137
      %s139 = sphi 0, %s137
      %s140 = sphi 0, %s139
      %s154 = sphi 0, %s140
      %s158 = sphi 0, %s158
      %s160 = sphi 0, %s158
      %s161 = sphi 0, %s160
      %s175 = sphi 0, %s161
      %s179 = sphi 0, %s179
      %s181 = sphi 0, %s179
      %s182 = sphi 0, %s181
      %s196 = sphi 0, %s182
      %s200 = sphi 0, %s200
      %s202 = sphi 0, %s200
      %s203 = sphi 0, %s202
      %s217 = sphi 0, %s203
      %s221 = sphi 0, %s221
      %s223 = sphi 0, %s221
      %s224 = sphi 0, %s223
      %s238 = sphi 0, %s224
      %s244 = sphi 0, %s246
      %s247 = sphi 0, %s244
      %s248 = sphi 0, %s247
      %s264 = sphi 0, %s248
    $region4: #{simple_net_forward.1} parent=1 // loop_header_branch
      %22 = sbr.rel (%p20) target = $region8
    $region5: #{simple_net_forward.1} parent=1 // loop_body
      %s24 = ssub.s32 %s19, 1
      %s25 = ssub.s32 %s19, 2
      %s26 = sadd.s32 %s19, 1
      %s27 = ssub.s32 %s19, %s26
      %p28 = scmp.eq.s32.totalorder %s27, 0
      %s30 = sadd.s32 %s29, 1
      %s31 = scalar_select %p28, %s29, %s30
      %p34 = pneg %p28
      %p35 = scmp.eq.s32.totalorder %s19, 1
      %p36 = por %p34, %p35
      %p37 = scmp.ne.s32.totalorder %s29, %s32
      %p38 = scmp.eq.s32.totalorder %s19, 0
      %p39 = por %p37, %p38
      %p40 = scmp.ne.s32.totalorder %s29, %s32
      %p41 = scmp.eq.s32.totalorder %s24, 1
      %p42 = por %p40, %p41
      %p43 = scmp.ne.s32.totalorder %s32, %s33
      %p44 = scmp.eq.s32.totalorder %s24, 0
      %p45 = por %p43, %p44
      %p46 = scmp.ne.s32.totalorder %s32, %s33
      %p47 = scmp.eq.s32.totalorder %s25, 1
      %p48 = por %p46, %p47
      %p50 = scmp.ne.s32.totalorder %s33, %s49
      %p51 = scmp.eq.s32.totalorder %s25, 0
      %p52 = por %p50, %p51
      %s54 = sadd.s32 %s53, 1
      %p57 = scmp.eq.s32.totalorder %s19, 1
      %p58 = scmp.ne.s32.totalorder %s53, %s55
      %p59 = scmp.eq.s32.totalorder %s19, 0
      %p60 = por %p58, %p59
      %p61 = scmp.ne.s32.totalorder %s53, %s55
      %p62 = scmp.eq.s32.totalorder %s24, 1
      %p63 = por %p61, %p62
      %p64 = scmp.ne.s32.totalorder %s55, %s56
      %p65 = scmp.eq.s32.totalorder %s24, 0
      %p66 = por %p64, %p65
      %p67 = scmp.ne.s32.totalorder %s55, %s56
      %p68 = scmp.eq.s32.totalorder %s25, 1
      %p69 = por %p67, %p68
      %p71 = scmp.ne.s32.totalorder %s56, %s70
      %p72 = scmp.eq.s32.totalorder %s25, 0
      %p73 = por %p71, %p72
      %s75 = sadd.s32 %s74, 1
      %p78 = scmp.eq.s32.totalorder %s19, 1
      %p79 = scmp.ne.s32.totalorder %s74, %s76
      %p80 = scmp.eq.s32.totalorder %s19, 0
      %p81 = por %p79, %p80
      %p82 = scmp.ne.s32.totalorder %s74, %s76
      %p83 = scmp.eq.s32.totalorder %s24, 1
      %p84 = por %p82, %p83
      %p85 = scmp.ne.s32.totalorder %s76, %s77
      %p86 = scmp.eq.s32.totalorder %s24, 0
      %p87 = por %p85, %p86
      %p88 = scmp.ne.s32.totalorder %s76, %s77
      %p89 = scmp.eq.s32.totalorder %s25, 1
      %p90 = por %p88, %p89
      %p92 = scmp.ne.s32.totalorder %s77, %s91
      %p93 = scmp.eq.s32.totalorder %s25, 0
      %p94 = por %p92, %p93
      %s96 = sadd.s32 %s95, 1
      %p99 = scmp.eq.s32.totalorder %s19, 1
      %p100 = scmp.ne.s32.totalorder %s95, %s97
      %p101 = scmp.eq.s32.totalorder %s19, 0
      %p102 = por %p100, %p101
      %p103 = scmp.ne.s32.totalorder %s95, %s97
      %p104 = scmp.eq.s32.totalorder %s24, 1
      %p105 = por %p103, %p104
      %p106 = scmp.ne.s32.totalorder %s97, %s98
      %p107 = scmp.eq.s32.totalorder %s24, 0
      %p108 = por %p106, %p107
      %p109 = scmp.ne.s32.totalorder %s97, %s98
      %p110 = scmp.eq.s32.totalorder %s25, 1
      %p111 = por %p109, %p110
      %p113 = scmp.ne.s32.totalorder %s98, %s112
      %p114 = scmp.eq.s32.totalorder %s25, 0
      %p115 = por %p113, %p114
      %s117 = sadd.s32 %s116, 1
      %p120 = scmp.eq.s32.totalorder %s19, 1
      %p121 = scmp.ne.s32.totalorder %s116, %s118
      %p122 = scmp.eq.s32.totalorder %s19, 0
      %p123 = por %p121, %p122
      %p124 = scmp.ne.s32.totalorder %s116, %s118
      %p125 = scmp.eq.s32.totalorder %s24, 1
      %p126 = por %p124, %p125
      %p127 = scmp.ne.s32.totalorder %s118, %s119
      %p128 = scmp.eq.s32.totalorder %s24, 0
      %p129 = por %p127, %p128
      %p130 = scmp.ne.s32.totalorder %s118, %s119
      %p131 = scmp.eq.s32.totalorder %s25, 1
      %p132 = por %p130, %p131
      %p134 = scmp.ne.s32.totalorder %s119, %s133
      %p135 = scmp.eq.s32.totalorder %s25, 0
      %p136 = por %p134, %p135
      %s138 = sadd.s32 %s137, 1
      %p141 = scmp.eq.s32.totalorder %s19, 1
      %p142 = scmp.ne.s32.totalorder %s137, %s139
      %p143 = scmp.eq.s32.totalorder %s19, 0
      %p144 = por %p142, %p143
      %p145 = scmp.ne.s32.totalorder %s137, %s139
      %p146 = scmp.eq.s32.totalorder %s24, 1
      %p147 = por %p145, %p146
      %p148 = scmp.ne.s32.totalorder %s139, %s140
      %p149 = scmp.eq.s32.totalorder %s24, 0
      %p150 = por %p148, %p149
      %p151 = scmp.ne.s32.totalorder %s139, %s140
      %p152 = scmp.eq.s32.totalorder %s25, 1
      %p153 = por %p151, %p152
      %p155 = scmp.ne.s32.totalorder %s140, %s154
      %p156 = scmp.eq.s32.totalorder %s25, 0
      %p157 = por %p155, %p156
      %s159 = sadd.s32 %s158, 1
      %p162 = scmp.eq.s32.totalorder %s19, 1
      %p163 = scmp.ne.s32.totalorder %s158, %s160
      %p164 = scmp.eq.s32.totalorder %s19, 0
      %p165 = por %p163, %p164
      %p166 = scmp.ne.s32.totalorder %s158, %s160
      %p167 = scmp.eq.s32.totalorder %s24, 1
      %p168 = por %p166, %p167
      %p169 = scmp.ne.s32.totalorder %s160, %s161
      %p170 = scmp.eq.s32.totalorder %s24, 0
      %p171 = por %p169, %p170
      %p172 = scmp.ne.s32.totalorder %s160, %s161
      %p173 = scmp.eq.s32.totalorder %s25, 1
      %p174 = por %p172, %p173
      %p176 = scmp.ne.s32.totalorder %s161, %s175
      %p177 = scmp.eq.s32.totalorder %s25, 0
      %p178 = por %p176, %p177
      %s180 = sadd.s32 %s179, 1
      %p183 = scmp.eq.s32.totalorder %s19, 1
      %p184 = scmp.ne.s32.totalorder %s179, %s181
      %p185 = scmp.eq.s32.totalorder %s19, 0
      %p186 = por %p184, %p185
      %p187 = scmp.ne.s32.totalorder %s179, %s181
      %p188 = scmp.eq.s32.totalorder %s24, 1
      %p189 = por %p187, %p188
      %p190 = scmp.ne.s32.totalorder %s181, %s182
      %p191 = scmp.eq.s32.totalorder %s24, 0
      %p192 = por %p190, %p191
      %p193 = scmp.ne.s32.totalorder %s181, %s182
      %p194 = scmp.eq.s32.totalorder %s25, 1
      %p195 = por %p193, %p194
      %p197 = scmp.ne.s32.totalorder %s182, %s196
      %p198 = scmp.eq.s32.totalorder %s25, 0
      %p199 = por %p197, %p198
      %s201 = sadd.s32 %s200, 1
      %p204 = scmp.eq.s32.totalorder %s19, 1
      %p205 = scmp.ne.s32.totalorder %s200, %s202
      %p206 = scmp.eq.s32.totalorder %s19, 0
      %p207 = por %p205, %p206
      %p208 = scmp.ne.s32.totalorder %s200, %s202
      %p209 = scmp.eq.s32.totalorder %s24, 1
      %p210 = por %p208, %p209
      %p211 = scmp.ne.s32.totalorder %s202, %s203
      %p212 = scmp.eq.s32.totalorder %s24, 0
      %p213 = por %p211, %p212
      %p214 = scmp.ne.s32.totalorder %s202, %s203
      %p215 = scmp.eq.s32.totalorder %s25, 1
      %p216 = por %p214, %p215
      %p218 = scmp.ne.s32.totalorder %s203, %s217
      %p219 = scmp.eq.s32.totalorder %s25, 0
      %p220 = por %p218, %p219
      %s222 = sadd.s32 %s221, 1
      %p225 = scmp.eq.s32.totalorder %s19, 1
      %p226 = scmp.ne.s32.totalorder %s221, %s223
      %p227 = scmp.eq.s32.totalorder %s19, 0
      %p228 = por %p226, %p227
      %p229 = scmp.ne.s32.totalorder %s221, %s223
      %p230 = scmp.eq.s32.totalorder %s24, 1
      %p231 = por %p229, %p230
      %p232 = scmp.ne.s32.totalorder %s223, %s224
      %p233 = scmp.eq.s32.totalorder %s24, 0
      %p234 = por %p232, %p233
      %p235 = scmp.ne.s32.totalorder %s223, %s224
      %p236 = scmp.eq.s32.totalorder %s25, 1
      %p237 = por %p235, %p236
      %p239 = scmp.ne.s32.totalorder %s224, %s238
      %p240 = scmp.eq.s32.totalorder %s25, 0
      %p241 = por %p239, %p240
      %s242 = ssub.s32 %s19, %s26
      %p243 = scmp.eq.s32.totalorder %s242, 0
      %s245 = sadd.s32 %s244, 1
      %s246 = scalar_select %p243, %s244, %s245
      %p249 = pneg %p243
      %p250 = scmp.eq.s32.totalorder %s19, 1
      %p251 = por %p249, %p250
      %p252 = scmp.ne.s32.totalorder %s244, %s247
      %p253 = scmp.eq.s32.totalorder %s19, 0
      %p254 = por %p252, %p253
      %p255 = scmp.ne.s32.totalorder %s244, %s247
      %p256 = scmp.eq.s32.totalorder %s24, 1
      %p257 = por %p255, %p256
      %p258 = scmp.ne.s32.totalorder %s247, %s248
      %p259 = scmp.eq.s32.totalorder %s24, 0
      %p260 = por %p258, %p259
      %p261 = scmp.ne.s32.totalorder %s247, %s248
      %p262 = scmp.eq.s32.totalorder %s25, 1
      %p263 = por %p261, %p262
      %p265 = scmp.ne.s32.totalorder %s248, %s264
      %p266 = scmp.eq.s32.totalorder %s25, 0
      %p267 = por %p265, %p266
      %p268 = scmp.le.s32.totalorder 1, %s19
      %p269 = scmp.lt.s32.totalorder %s19, 3
      %p270 = pnand %p268, %p269
      %p271 = pneg %p270
      // Predicated region
      $region9: #{simple_net_forward.1} parent=5 // pred_check
        _
      $region10: #{simple_net_forward.1} parent=5 // pred_check_branch
        %273 = sbr.rel (%p270) target = $region12
      $region11: #{simple_net_forward.1} parent=5 // pred_region
        %s274 = ssub.s32 %s19, 1
        // Predicated region
        $region13: #{simple_net_forward.1} parent=11 // pred_check
          %p275 = pneg %p66
        $region14: #{simple_net_forward.1} parent=11 // pred_check_branch
          %277 = sbr.rel (%p275) target = $region16
        $region15: #{simple_net_forward.1} parent=11 // pred_region
          _
        $region16: #{simple_net_forward.1} parent=11 // pred_fallthru
          _
        // Predicated region
        $region17: #{simple_net_forward.1} parent=11 // pred_check
          %p278 = pneg %p87
        $region18: #{simple_net_forward.1} parent=11 // pred_check_branch
          %280 = sbr.rel (%p278) target = $region20
        $region19: #{simple_net_forward.1} parent=11 // pred_region
          _
        $region20: #{simple_net_forward.1} parent=11 // pred_fallthru
          _
        // Predicated region
        $region21: #{simple_net_forward.1} parent=11 // pred_check
          %p281 = pneg %p108
        $region22: #{simple_net_forward.1} parent=11 // pred_check_branch
          %283 = sbr.rel (%p281) target = $region24
        $region23: #{simple_net_forward.1} parent=11 // pred_region
          _
        $region24: #{simple_net_forward.1} parent=11 // pred_fallthru
          _
        // Predicated region
        $region25: #{simple_net_forward.1} parent=11 // pred_check
          %p284 = pneg %p129
        $region26: #{simple_net_forward.1} parent=11 // pred_check_branch
          %286 = sbr.rel (%p284) target = $region28
        $region27: #{simple_net_forward.1} parent=11 // pred_region
          _
        $region28: #{simple_net_forward.1} parent=11 // pred_fallthru
          _
        // Predicated region
        $region29: #{simple_net_forward.1} parent=11 // pred_check
          %p287 = pneg %p150
        $region30: #{simple_net_forward.1} parent=11 // pred_check_branch
          %289 = sbr.rel (%p287) target = $region32
        $region31: #{simple_net_forward.1} parent=11 // pred_region
          _
        $region32: #{simple_net_forward.1} parent=11 // pred_fallthru
          _
        // Predicated region
        $region33: #{simple_net_forward.1} parent=11 // pred_check
          %p290 = pneg %p171
        $region34: #{simple_net_forward.1} parent=11 // pred_check_branch
          %292 = sbr.rel (%p290) target = $region36
        $region35: #{simple_net_forward.1} parent=11 // pred_region
          _
        $region36: #{simple_net_forward.1} parent=11 // pred_fallthru
          _
        // Predicated region
        $region37: #{simple_net_forward.1} parent=11 // pred_check
          %p293 = pneg %p192
        $region38: #{simple_net_forward.1} parent=11 // pred_check_branch
          %295 = sbr.rel (%p293) target = $region40
        $region39: #{simple_net_forward.1} parent=11 // pred_region
          _
        $region40: #{simple_net_forward.1} parent=11 // pred_fallthru
          _
        // Predicated region
        $region41: #{simple_net_forward.1} parent=11 // pred_check
          %p296 = pneg %p213
        $region42: #{simple_net_forward.1} parent=11 // pred_check_branch
          %298 = sbr.rel (%p296) target = $region44
        $region43: #{simple_net_forward.1} parent=11 // pred_region
          _
        $region44: #{simple_net_forward.1} parent=11 // pred_fallthru
          _
        // Predicated region
        $region45: #{simple_net_forward.1} parent=11 // pred_check
          %p299 = pneg %p234
        $region46: #{simple_net_forward.1} parent=11 // pred_check_branch
          %301 = sbr.rel (%p299) target = $region48
        $region47: #{simple_net_forward.1} parent=11 // pred_region
          _
        $region48: #{simple_net_forward.1} parent=11 // pred_fallthru
          _
      $region12: #{simple_net_forward.1} parent=5 // pred_fallthru
        _
      %p302 = scmp.lt.s32.totalorder %s19, 2
      // Predicated region
      $region49: #{simple_net_forward.1} parent=5 // pred_check
        %p303 = pneg %p302
      $region50: #{simple_net_forward.1} parent=5 // pred_check_branch
        %305 = sbr.rel (%p303) target = $region52
      $region51: #{simple_net_forward.1} parent=5 // pred_region
        // Predicated region
        $region53: #{simple_net_forward.1} parent=51 // pred_check
          %p306 = pneg %p39
        $region54: #{simple_net_forward.1} parent=51 // pred_check_branch
          %308 = sbr.rel (%p306) target = $region56
        $region55: #{simple_net_forward.1} parent=51 // pred_region
          %p309 = scmp.lt.s32.totalorder %s19, 1
          %s310 = scalar_select %p309, %s19, 1
          %s311 = smul.addr %s310, 12
          %s312 = scalar_lea.vmem %s0, %s311
        $region56: #{simple_net_forward.1} parent=51 // pred_fallthru
          _
      $region52: #{simple_net_forward.1} parent=5 // pred_fallthru
        _
      %p313 = scmp.le.s32.totalorder 1, %s19
      %p314 = scmp.lt.s32.totalorder %s19, 3
      %p315 = pnand %p313, %p314
      %p316 = pneg %p315
      // Predicated region
      $region57: #{simple_net_forward.1} parent=5 // pred_check
        _
      $region58: #{simple_net_forward.1} parent=5 // pred_check_branch
        %318 = sbr.rel (%p315) target = $region60
      $region59: #{simple_net_forward.1} parent=5 // pred_region
        %s319 = ssub.s32 %s19, 1
        %p320 = scmp.lt.s32.totalorder %s24, 1
        %s321 = scalar_select %p320, %s24, 1
        %s322 = smul.addr %s321, 12
        %s323 = scalar_lea.vmem %s0, %s322
        %p324 = pneg %p45
        %p325 = pneg %p42
        %p326 = pneg %p66
        %p327 = pneg %p63
        %p328 = pneg %p87
        %p329 = pneg %p84
        %p330 = pneg %p108
        %p331 = pneg %p105
        %p332 = pneg %p129
        %p333 = pneg %p126
        %p334 = pneg %p150
        %p335 = pneg %p147
        %p336 = pneg %p171
        %p337 = pneg %p168
        %p338 = pneg %p192
        %p339 = pneg %p189
        %p340 = pneg %p213
        %p341 = pneg %p210
        %p342 = pneg %p234
        %p343 = pneg %p231
        %p344 = pneg %p260
        %p345 = pneg %p257
        %s346 = sand.u32 %s247, 1
        %s347 = scalar_lea.sflag [#allocation7], %s346
        %s348 = sand.u32 %s247, 1
        %s349 = scalar_lea.vmem [#allocation6], %s348
        %p350 = scmp.lt.s32.totalorder %s24, 1
        %s351 = scalar_select %p350, %s24, 1
        %s352 = smul.addr %s351, 12
        %s353 = scalar_lea.vmem %s0, %s352
        %v355 = vld [vmem:[%s353] sm:$0x1f]
        %v356 = vld [vmem:[%s1] sm:$0xff]
        %v357 = vld [vmem:[%s1 + $0x8] sm:$0xff]
        %v359 = vperm.slane %v355, 0
        %v360 = vperm.slane %v355, 1
        %v361 = vperm.slane %v355, 2
        %v362 = vperm.slane %v355, 3
        %v363 = vperm.slane %v355, 4
        %370 = vset.pattern.permute.xlu0 0
        %371 = vperm.xlu0 %370, %v356
        %v372 = vpop.permute.xlu0 %371
        %375 = vset.pattern.permute.xlu0 0
        %376 = vperm.xlu0 %375, %v357
        %v377 = vpop.permute.xlu0 %376
        %v379 = vmul.f32 %v359, %v372
        %v380 = vmul.f32 %v360, %v372
        %v381 = vmul.f32 %v361, %v372
        %v382 = vmul.f32 %v362, %v372
        %v383 = vmul.f32 %v363, %v372
        %v384 = vmul.f32 %v359, %v377
        %v385 = vmul.f32 %v360, %v377
        %v386 = vmul.f32 %v361, %v377
        %v387 = vmul.f32 %v362, %v377
        %v388 = vmul.f32 %v363, %v377
        %v389 = vld [vmem:[%s353] sm:$0x3f]
        %s390 = scalar_lea.vmem %s1, 16
        %v391 = vld [vmem:[%s390] sm:$0xff]
        %v392 = vld [vmem:[%s390 + $0x8] sm:$0xff]
        %v394 = vperm.slane %v389, 0
        %v395 = vperm.slane %v389, 1
        %v396 = vperm.slane %v389, 2
        %v397 = vperm.slane %v389, 3
        %v398 = vperm.slane %v389, 4
        %v399 = vperm.slane %v389, 5
        %407 = vset.pattern.permute.xlu0 0
        %408 = vperm.xlu0 %407, %v391
        %v409 = vpop.permute.xlu0 %408
        %412 = vset.pattern.permute.xlu0 0
        %413 = vperm.xlu0 %412, %v392
        %v414 = vpop.permute.xlu0 %413
        %v416 = vmul.f32 %v394, %v409
        %v417 = vmul.f32 %v395, %v409
        %v418 = vmul.f32 %v396, %v409
        %v419 = vmul.f32 %v397, %v409
        %v420 = vmul.f32 %v398, %v409
        %v421 = vmul.f32 %v399, %v409
        %v422 = vmul.f32 %v394, %v414
        %v423 = vmul.f32 %v395, %v414
        %v424 = vmul.f32 %v396, %v414
        %v425 = vmul.f32 %v397, %v414
        %v426 = vmul.f32 %v398, %v414
        %v427 = vmul.f32 %v399, %v414
        %440 = vrot.lane.b32.xlu0 %v416, 127
        %v441 = vpop.permute.xlu0 %440
        %442 = vrot.lane.b32.xlu0 %v417, 127
        %v443 = vpop.permute.xlu0 %442
        %444 = vrot.lane.b32.xlu0 %v418, 127
        %v445 = vpop.permute.xlu0 %444
        %446 = vrot.lane.b32.xlu0 %v419, 127
        %v447 = vpop.permute.xlu0 %446
        %448 = vrot.lane.b32.xlu0 %v420, 127
        %v449 = vpop.permute.xlu0 %448
        %450 = vrot.lane.b32.xlu0 %v421, 127
        %v451 = vpop.permute.xlu0 %450
        %452 = vrot.lane.b32.xlu0 %v422, 127
        %v453 = vpop.permute.xlu0 %452
        %454 = vrot.lane.b32.xlu0 %v423, 127
        %v455 = vpop.permute.xlu0 %454
        %456 = vrot.lane.b32.xlu0 %v424, 127
        %v457 = vpop.permute.xlu0 %456
        %458 = vrot.lane.b32.xlu0 %v425, 127
        %v459 = vpop.permute.xlu0 %458
        %460 = vrot.lane.b32.xlu0 %v426, 127
        %v461 = vpop.permute.xlu0 %460
        %462 = vrot.lane.b32.xlu0 %v427, 127
        %v463 = vpop.permute.xlu0 %462
        %vm464 = vcmask 1039360
        %v465 = vsel %vm464, %v441, %v443
        %v466 = vsel %vm464, %v443, %v445
        %v467 = vsel %vm464, %v445, %v447
        %v468 = vsel %vm464, %v447, %v449
        %v469 = vsel %vm464, %v449, %v451
        %v470 = vsel %vm464, %v453, %v455
        %v471 = vsel %vm464, %v455, %v457
        %v472 = vsel %vm464, %v457, %v459
        %v473 = vsel %vm464, %v459, %v461
        %v474 = vsel %vm464, %v461, %v463
        %v485 = vadd.f32 %v379, %v465
        %v486 = vadd.f32 %v380, %v466
        %v487 = vadd.f32 %v381, %v467
        %v488 = vadd.f32 %v382, %v468
        %v489 = vadd.f32 %v383, %v469
        %v490 = vadd.f32 %v384, %v470
        %v491 = vadd.f32 %v385, %v471
        %v492 = vadd.f32 %v386, %v472
        %v493 = vadd.f32 %v387, %v473
        %v494 = vadd.f32 %v388, %v474
        %s495 = scalar_lea.vmem %s1, 32
        %v496 = vld [vmem:[%s495] sm:$0xff]
        %v497 = vld [vmem:[%s495 + $0x8] sm:$0xff]
        %499 = vset.pattern.permute.xlu0 0
        %500 = vperm.xlu0 %499, %v496
        %v501 = vpop.permute.xlu0 %500
        %504 = vset.pattern.permute.xlu0 0
        %505 = vperm.xlu0 %504, %v497
        %v506 = vpop.permute.xlu0 %505
        %v508 = vmul.f32 %v394, %v501
        %v509 = vmul.f32 %v395, %v501
        %v510 = vmul.f32 %v396, %v501
        %v511 = vmul.f32 %v397, %v501
        %v512 = vmul.f32 %v398, %v501
        %v513 = vmul.f32 %v399, %v501
        %v514 = vmul.f32 %v394, %v506
        %v515 = vmul.f32 %v395, %v506
        %v516 = vmul.f32 %v396, %v506
        %v517 = vmul.f32 %v397, %v506
        %v518 = vmul.f32 %v398, %v506
        %v519 = vmul.f32 %v399, %v506
        %532 = vrot.lane.b32.xlu0 %v508, 126
        %v533 = vpop.permute.xlu0 %532
        %534 = vrot.lane.b32.xlu0 %v509, 126
        %v535 = vpop.permute.xlu0 %534
        %536 = vrot.lane.b32.xlu0 %v510, 126
        %v537 = vpop.permute.xlu0 %536
        %538 = vrot.lane.b32.xlu0 %v511, 126
        %v539 = vpop.permute.xlu0 %538
        %540 = vrot.lane.b32.xlu0 %v512, 126
        %v541 = vpop.permute.xlu0 %540
        %542 = vrot.lane.b32.xlu0 %v513, 126
        %v543 = vpop.permute.xlu0 %542
        %544 = vrot.lane.b32.xlu0 %v514, 126
        %v545 = vpop.permute.xlu0 %544
        %546 = vrot.lane.b32.xlu0 %v515, 126
        %v547 = vpop.permute.xlu0 %546
        %548 = vrot.lane.b32.xlu0 %v516, 126
        %v549 = vpop.permute.xlu0 %548
        %550 = vrot.lane.b32.xlu0 %v517, 126
        %v551 = vpop.permute.xlu0 %550
        %552 = vrot.lane.b32.xlu0 %v518, 126
        %v553 = vpop.permute.xlu0 %552
        %554 = vrot.lane.b32.xlu0 %v519, 126
        %v555 = vpop.permute.xlu0 %554
        %vm556 = vcmask 1031168
        %v557 = vsel %vm556, %v533, %v535
        %v558 = vsel %vm556, %v535, %v537
        %v559 = vsel %vm556, %v537, %v539
        %v560 = vsel %vm556, %v539, %v541
        %v561 = vsel %vm556, %v541, %v543
        %v562 = vsel %vm556, %v545, %v547
        %v563 = vsel %vm556, %v547, %v549
        %v564 = vsel %vm556, %v549, %v551
        %v565 = vsel %vm556, %v551, %v553
        %v566 = vsel %vm556, %v553, %v555
        %v577 = vadd.f32 %v485, %v557
        %v578 = vadd.f32 %v486, %v558
        %v579 = vadd.f32 %v487, %v559
        %v580 = vadd.f32 %v488, %v560
        %v581 = vadd.f32 %v489, %v561
        %v582 = vadd.f32 %v490, %v562
        %v583 = vadd.f32 %v491, %v563
        %v584 = vadd.f32 %v492, %v564
        %v585 = vadd.f32 %v493, %v565
        %v586 = vadd.f32 %v494, %v566
        %s587 = scalar_lea.vmem %s1, 48
        %v588 = vld [vmem:[%s587] sm:$0xff]
        %v589 = vld [vmem:[%s587 + $0x8] sm:$0xff]
        %591 = vset.pattern.permute.xlu0 0
        %592 = vperm.xlu0 %591, %v588
        %v593 = vpop.permute.xlu0 %592
        %596 = vset.pattern.permute.xlu0 0
        %597 = vperm.xlu0 %596, %v589
        %v598 = vpop.permute.xlu0 %597
        %v600 = vmul.f32 %v394, %v593
        %v601 = vmul.f32 %v395, %v593
        %v602 = vmul.f32 %v396, %v593
        %v603 = vmul.f32 %v397, %v593
        %v604 = vmul.f32 %v398, %v593
        %v605 = vmul.f32 %v399, %v593
        %v606 = vmul.f32 %v394, %v598
        %v607 = vmul.f32 %v395, %v598
        %v608 = vmul.f32 %v396, %v598
        %v609 = vmul.f32 %v397, %v598
        %v610 = vmul.f32 %v398, %v598
        %v611 = vmul.f32 %v399, %v598
        %624 = vrot.lane.b32.xlu0 %v600, 125
        %v625 = vpop.permute.xlu0 %624
        %626 = vrot.lane.b32.xlu0 %v601, 125
        %v627 = vpop.permute.xlu0 %626
        %628 = vrot.lane.b32.xlu0 %v602, 125
        %v629 = vpop.permute.xlu0 %628
        %630 = vrot.lane.b32.xlu0 %v603, 125
        %v631 = vpop.permute.xlu0 %630
        %632 = vrot.lane.b32.xlu0 %v604, 125
        %v633 = vpop.permute.xlu0 %632
        %634 = vrot.lane.b32.xlu0 %v605, 125
        %v635 = vpop.permute.xlu0 %634
        %636 = vrot.lane.b32.xlu0 %v606, 125
        %v637 = vpop.permute.xlu0 %636
        %638 = vrot.lane.b32.xlu0 %v607, 125
        %v639 = vpop.permute.xlu0 %638
        %640 = vrot.lane.b32.xlu0 %v608, 125
        %v641 = vpop.permute.xlu0 %640
        %642 = vrot.lane.b32.xlu0 %v609, 125
        %v643 = vpop.permute.xlu0 %642
        %644 = vrot.lane.b32.xlu0 %v610, 125
        %v645 = vpop.permute.xlu0 %644
        %646 = vrot.lane.b32.xlu0 %v611, 125
        %v647 = vpop.permute.xlu0 %646
        %vm648 = vcmask 1022976
        %v649 = vsel %vm648, %v625, %v627
        %v650 = vsel %vm648, %v627, %v629
        %v651 = vsel %vm648, %v629, %v631
        %v652 = vsel %vm648, %v631, %v633
        %v653 = vsel %vm648, %v633, %v635
        %v654 = vsel %vm648, %v637, %v639
        %v655 = vsel %vm648, %v639, %v641
        %v656 = vsel %vm648, %v641, %v643
        %v657 = vsel %vm648, %v643, %v645
        %v658 = vsel %vm648, %v645, %v647
        %v669 = vadd.f32 %v577, %v649
        %v670 = vadd.f32 %v578, %v650
        %v671 = vadd.f32 %v579, %v651
        %v672 = vadd.f32 %v580, %v652
        %v673 = vadd.f32 %v581, %v653
        %v674 = vadd.f32 %v582, %v654
        %v675 = vadd.f32 %v583, %v655
        %v676 = vadd.f32 %v584, %v656
        %v677 = vadd.f32 %v585, %v657
        %v678 = vadd.f32 %v586, %v658
        %s679 = scalar_lea.vmem %s1, 64
        %v680 = vld [vmem:[%s679] sm:$0xff]
        %v681 = vld [vmem:[%s679 + $0x8] sm:$0xff]
        %683 = vset.pattern.permute.xlu0 0
        %684 = vperm.xlu0 %683, %v680
        %v685 = vpop.permute.xlu0 %684
        %688 = vset.pattern.permute.xlu0 0
        %689 = vperm.xlu0 %688, %v681
        %v690 = vpop.permute.xlu0 %689
        %v692 = vmul.f32 %v394, %v685
        %v693 = vmul.f32 %v395, %v685
        %v694 = vmul.f32 %v396, %v685
        %v695 = vmul.f32 %v397, %v685
        %v696 = vmul.f32 %v398, %v685
        %v697 = vmul.f32 %v399, %v685
        %v698 = vmul.f32 %v394, %v690
        %v699 = vmul.f32 %v395, %v690
        %v700 = vmul.f32 %v396, %v690
        %v701 = vmul.f32 %v397, %v690
        %v702 = vmul.f32 %v398, %v690
        %v703 = vmul.f32 %v399, %v690
        %716 = vrot.lane.b32.xlu0 %v692, 124
        %v717 = vpop.permute.xlu0 %716
        %718 = vrot.lane.b32.xlu0 %v693, 124
        %v719 = vpop.permute.xlu0 %718
        %720 = vrot.lane.b32.xlu0 %v694, 124
        %v721 = vpop.permute.xlu0 %720
        %722 = vrot.lane.b32.xlu0 %v695, 124
        %v723 = vpop.permute.xlu0 %722
        %724 = vrot.lane.b32.xlu0 %v696, 124
        %v725 = vpop.permute.xlu0 %724
        %726 = vrot.lane.b32.xlu0 %v697, 124
        %v727 = vpop.permute.xlu0 %726
        %728 = vrot.lane.b32.xlu0 %v698, 124
        %v729 = vpop.permute.xlu0 %728
        %730 = vrot.lane.b32.xlu0 %v699, 124
        %v731 = vpop.permute.xlu0 %730
        %732 = vrot.lane.b32.xlu0 %v700, 124
        %v733 = vpop.permute.xlu0 %732
        %734 = vrot.lane.b32.xlu0 %v701, 124
        %v735 = vpop.permute.xlu0 %734
        %736 = vrot.lane.b32.xlu0 %v702, 124
        %v737 = vpop.permute.xlu0 %736
        %738 = vrot.lane.b32.xlu0 %v703, 124
        %v739 = vpop.permute.xlu0 %738
        %vm740 = vcmask 1014784
        %v741 = vsel %vm740, %v717, %v719
        %v742 = vsel %vm740, %v719, %v721
        %v743 = vsel %vm740, %v721, %v723
        %v744 = vsel %vm740, %v723, %v725
        %v745 = vsel %vm740, %v725, %v727
        %v746 = vsel %vm740, %v729, %v731
        %v747 = vsel %vm740, %v731, %v733
        %v748 = vsel %vm740, %v733, %v735
        %v749 = vsel %vm740, %v735, %v737
        %v750 = vsel %vm740, %v737, %v739
        %v761 = vadd.f32 %v669, %v741
        %v762 = vadd.f32 %v670, %v742
        %v763 = vadd.f32 %v671, %v743
        %v764 = vadd.f32 %v672, %v744
        %v765 = vadd.f32 %v673, %v745
        %v766 = vadd.f32 %v674, %v746
        %v767 = vadd.f32 %v675, %v747
        %v768 = vadd.f32 %v676, %v748
        %v769 = vadd.f32 %v677, %v749
        %v770 = vadd.f32 %v678, %v750
        %s771 = scalar_lea.vmem %s1, 80
        %v772 = vld [vmem:[%s771] sm:$0xff]
        %v773 = vld [vmem:[%s771 + $0x8] sm:$0xff]
        %775 = vset.pattern.permute.xlu0 0
        %776 = vperm.xlu0 %775, %v772
        %v777 = vpop.permute.xlu0 %776
        %780 = vset.pattern.permute.xlu0 0
        %781 = vperm.xlu0 %780, %v773
        %v782 = vpop.permute.xlu0 %781
        %v784 = vmul.f32 %v394, %v777
        %v785 = vmul.f32 %v395, %v777
        %v786 = vmul.f32 %v396, %v777
        %v787 = vmul.f32 %v397, %v777
        %v788 = vmul.f32 %v398, %v777
        %v789 = vmul.f32 %v399, %v777
        %v790 = vmul.f32 %v394, %v782
        %v791 = vmul.f32 %v395, %v782
        %v792 = vmul.f32 %v396, %v782
        %v793 = vmul.f32 %v397, %v782
        %v794 = vmul.f32 %v398, %v782
        %v795 = vmul.f32 %v399, %v782
        %808 = vrot.lane.b32.xlu0 %v784, 96
        %v809 = vpop.permute.xlu0 %808
        %810 = vrot.lane.b32.xlu0 %v785, 96
        %v811 = vpop.permute.xlu0 %810
        %812 = vrot.lane.b32.xlu0 %v786, 96
        %v813 = vpop.permute.xlu0 %812
        %814 = vrot.lane.b32.xlu0 %v787, 96
        %v815 = vpop.permute.xlu0 %814
        %816 = vrot.lane.b32.xlu0 %v788, 96
        %v817 = vpop.permute.xlu0 %816
        %818 = vrot.lane.b32.xlu0 %v789, 96
        %v819 = vpop.permute.xlu0 %818
        %820 = vrot.lane.b32.xlu0 %v790, 96
        %v821 = vpop.permute.xlu0 %820
        %822 = vrot.lane.b32.xlu0 %v791, 96
        %v823 = vpop.permute.xlu0 %822
        %824 = vrot.lane.b32.xlu0 %v792, 96
        %v825 = vpop.permute.xlu0 %824
        %826 = vrot.lane.b32.xlu0 %v793, 96
        %v827 = vpop.permute.xlu0 %826
        %828 = vrot.lane.b32.xlu0 %v794, 96
        %v829 = vpop.permute.xlu0 %828
        %830 = vrot.lane.b32.xlu0 %v795, 96
        %v831 = vpop.permute.xlu0 %830
        %vm832 = vcmask 785408
        %v833 = vsel %vm832, %v809, %v811
        %v834 = vsel %vm832, %v811, %v813
        %v835 = vsel %vm832, %v813, %v815
        %v836 = vsel %vm832, %v815, %v817
        %v837 = vsel %vm832, %v817, %v819
        %v838 = vsel %vm832, %v821, %v823
        %v839 = vsel %vm832, %v823, %v825
        %v840 = vsel %vm832, %v825, %v827
        %v841 = vsel %vm832, %v827, %v829
        %v842 = vsel %vm832, %v829, %v831
        %v853 = vadd.f32 %v761, %v833
        %v854 = vadd.f32 %v762, %v834
        %v855 = vadd.f32 %v763, %v835
        %v856 = vadd.f32 %v764, %v836
        %v857 = vadd.f32 %v765, %v837
        %v858 = vadd.f32 %v766, %v838
        %v859 = vadd.f32 %v767, %v839
        %v860 = vadd.f32 %v768, %v840
        %v861 = vadd.f32 %v769, %v841
        %v862 = vadd.f32 %v770, %v842
        %s863 = scalar_lea.vmem %s1, 96
        %v864 = vld [vmem:[%s863] sm:$0xff]
        %v865 = vld [vmem:[%s863 + $0x8] sm:$0xff]
        %867 = vset.pattern.permute.xlu0 0
        %868 = vperm.xlu0 %867, %v864
        %v869 = vpop.permute.xlu0 %868
        %872 = vset.pattern.permute.xlu0 0
        %873 = vperm.xlu0 %872, %v865
        %v874 = vpop.permute.xlu0 %873
        %v876 = vmul.f32 %v394, %v869
        %v877 = vmul.f32 %v395, %v869
        %v878 = vmul.f32 %v396, %v869
        %v879 = vmul.f32 %v397, %v869
        %v880 = vmul.f32 %v398, %v869
        %v881 = vmul.f32 %v399, %v869
        %v882 = vmul.f32 %v394, %v874
        %v883 = vmul.f32 %v395, %v874
        %v884 = vmul.f32 %v396, %v874
        %v885 = vmul.f32 %v397, %v874
        %v886 = vmul.f32 %v398, %v874
        %v887 = vmul.f32 %v399, %v874
        %900 = vrot.lane.b32.xlu0 %v876, 95
        %v901 = vpop.permute.xlu0 %900
        %902 = vrot.lane.b32.xlu0 %v877, 95
        %v903 = vpop.permute.xlu0 %902
        %904 = vrot.lane.b32.xlu0 %v878, 95
        %v905 = vpop.permute.xlu0 %904
        %906 = vrot.lane.b32.xlu0 %v879, 95
        %v907 = vpop.permute.xlu0 %906
        %908 = vrot.lane.b32.xlu0 %v880, 95
        %v909 = vpop.permute.xlu0 %908
        %910 = vrot.lane.b32.xlu0 %v881, 95
        %v911 = vpop.permute.xlu0 %910
        %912 = vrot.lane.b32.xlu0 %v882, 95
        %v913 = vpop.permute.xlu0 %912
        %914 = vrot.lane.b32.xlu0 %v883, 95
        %v915 = vpop.permute.xlu0 %914
        %916 = vrot.lane.b32.xlu0 %v884, 95
        %v917 = vpop.permute.xlu0 %916
        %918 = vrot.lane.b32.xlu0 %v885, 95
        %v919 = vpop.permute.xlu0 %918
        %920 = vrot.lane.b32.xlu0 %v886, 95
        %v921 = vpop.permute.xlu0 %920
        %922 = vrot.lane.b32.xlu0 %v887, 95
        %v923 = vpop.permute.xlu0 %922
        %vm924 = vcmask 777216
        %v925 = vsel %vm924, %v901, %v903
        %v926 = vsel %vm924, %v903, %v905
        %v927 = vsel %vm924, %v905, %v907
        %v928 = vsel %vm924, %v907, %v909
        %v929 = vsel %vm924, %v909, %v911
        %v930 = vsel %vm924, %v913, %v915
        %v931 = vsel %vm924, %v915, %v917
        %v932 = vsel %vm924, %v917, %v919
        %v933 = vsel %vm924, %v919, %v921
        %v934 = vsel %vm924, %v921, %v923
        %v945 = vadd.f32 %v853, %v925
        %v946 = vadd.f32 %v854, %v926
        %v947 = vadd.f32 %v855, %v927
        %v948 = vadd.f32 %v856, %v928
        %v949 = vadd.f32 %v857, %v929
        %v950 = vadd.f32 %v858, %v930
        %v951 = vadd.f32 %v859, %v931
        %v952 = vadd.f32 %v860, %v932
        %v953 = vadd.f32 %v861, %v933
        %v954 = vadd.f32 %v862, %v934
        %s955 = scalar_lea.vmem %s1, 112
        %v956 = vld [vmem:[%s955] sm:$0xff]
        %v957 = vld [vmem:[%s955 + $0x8] sm:$0xff]
        %959 = vset.pattern.permute.xlu0 0
        %960 = vperm.xlu0 %959, %v956
        %v961 = vpop.permute.xlu0 %960
        %964 = vset.pattern.permute.xlu0 0
        %965 = vperm.xlu0 %964, %v957
        %v966 = vpop.permute.xlu0 %965
        %v968 = vmul.f32 %v394, %v961
        %v969 = vmul.f32 %v395, %v961
        %v970 = vmul.f32 %v396, %v961
        %v971 = vmul.f32 %v397, %v961
        %v972 = vmul.f32 %v398, %v961
        %v973 = vmul.f32 %v399, %v961
        %v974 = vmul.f32 %v394, %v966
        %v975 = vmul.f32 %v395, %v966
        %v976 = vmul.f32 %v396, %v966
        %v977 = vmul.f32 %v397, %v966
        %v978 = vmul.f32 %v398, %v966
        %v979 = vmul.f32 %v399, %v966
        %992 = vrot.lane.b32.xlu0 %v968, 94
        %v993 = vpop.permute.xlu0 %992
        %994 = vrot.lane.b32.xlu0 %v969, 94
        %v995 = vpop.permute.xlu0 %994
        %996 = vrot.lane.b32.xlu0 %v970, 94
        %v997 = vpop.permute.xlu0 %996
        %998 = vrot.lane.b32.xlu0 %v971, 94
        %v999 = vpop.permute.xlu0 %998
        %1000 = vrot.lane.b32.xlu0 %v972, 94
        %v1001 = vpop.permute.xlu0 %1000
        %1002 = vrot.lane.b32.xlu0 %v973, 94
        %v1003 = vpop.permute.xlu0 %1002
        %1004 = vrot.lane.b32.xlu0 %v974, 94
        %v1005 = vpop.permute.xlu0 %1004
        %1006 = vrot.lane.b32.xlu0 %v975, 94
        %v1007 = vpop.permute.xlu0 %1006
        %1008 = vrot.lane.b32.xlu0 %v976, 94
        %v1009 = vpop.permute.xlu0 %1008
        %1010 = vrot.lane.b32.xlu0 %v977, 94
        %v1011 = vpop.permute.xlu0 %1010
        %1012 = vrot.lane.b32.xlu0 %v978, 94
        %v1013 = vpop.permute.xlu0 %1012
        %1014 = vrot.lane.b32.xlu0 %v979, 94
        %v1015 = vpop.permute.xlu0 %1014
        %vm1016 = vcmask 769024
        %v1017 = vsel %vm1016, %v993, %v995
        %v1018 = vsel %vm1016, %v995, %v997
        %v1019 = vsel %vm1016, %v997, %v999
        %v1020 = vsel %vm1016, %v999, %v1001
        %v1021 = vsel %vm1016, %v1001, %v1003
        %v1022 = vsel %vm1016, %v1005, %v1007
        %v1023 = vsel %vm1016, %v1007, %v1009
        %v1024 = vsel %vm1016, %v1009, %v1011
        %v1025 = vsel %vm1016, %v1011, %v1013
        %v1026 = vsel %vm1016, %v1013, %v1015
        %v1037 = vadd.f32 %v945, %v1017
        %v1038 = vadd.f32 %v946, %v1018
        %v1039 = vadd.f32 %v947, %v1019
        %v1040 = vadd.f32 %v948, %v1020
        %v1041 = vadd.f32 %v949, %v1021
        %v1042 = vadd.f32 %v950, %v1022
        %v1043 = vadd.f32 %v951, %v1023
        %v1044 = vadd.f32 %v952, %v1024
        %v1045 = vadd.f32 %v953, %v1025
        %v1046 = vadd.f32 %v954, %v1026
        %s1047 = scalar_lea.vmem %s1, 128
        %v1048 = vld [vmem:[%s1047] sm:$0xff]
        %v1049 = vld [vmem:[%s1047 + $0x8] sm:$0xff]
        %1051 = vset.pattern.permute.xlu0 0
        %1052 = vperm.xlu0 %1051, %v1048
        %v1053 = vpop.permute.xlu0 %1052
        %1056 = vset.pattern.permute.xlu0 0
        %1057 = vperm.xlu0 %1056, %v1049
        %v1058 = vpop.permute.xlu0 %1057
        %v1060 = vmul.f32 %v394, %v1053
        %v1061 = vmul.f32 %v395, %v1053
        %v1062 = vmul.f32 %v396, %v1053
        %v1063 = vmul.f32 %v397, %v1053
        %v1064 = vmul.f32 %v398, %v1053
        %v1065 = vmul.f32 %v399, %v1053
        %v1066 = vmul.f32 %v394, %v1058
        %v1067 = vmul.f32 %v395, %v1058
        %v1068 = vmul.f32 %v396, %v1058
        %v1069 = vmul.f32 %v397, %v1058
        %v1070 = vmul.f32 %v398, %v1058
        %v1071 = vmul.f32 %v399, %v1058
        %1084 = vrot.lane.b32.xlu0 %v1060, 93
        %v1085 = vpop.permute.xlu0 %1084
        %1086 = vrot.lane.b32.xlu0 %v1061, 93
        %v1087 = vpop.permute.xlu0 %1086
        %1088 = vrot.lane.b32.xlu0 %v1062, 93
        %v1089 = vpop.permute.xlu0 %1088
        %1090 = vrot.lane.b32.xlu0 %v1063, 93
        %v1091 = vpop.permute.xlu0 %1090
        %1092 = vrot.lane.b32.xlu0 %v1064, 93
        %v1093 = vpop.permute.xlu0 %1092
        %1094 = vrot.lane.b32.xlu0 %v1065, 93
        %v1095 = vpop.permute.xlu0 %1094
        %1096 = vrot.lane.b32.xlu0 %v1066, 93
        %v1097 = vpop.permute.xlu0 %1096
        %1098 = vrot.lane.b32.xlu0 %v1067, 93
        %v1099 = vpop.permute.xlu0 %1098
        %1100 = vrot.lane.b32.xlu0 %v1068, 93
        %v1101 = vpop.permute.xlu0 %1100
        %1102 = vrot.lane.b32.xlu0 %v1069, 93
        %v1103 = vpop.permute.xlu0 %1102
        %1104 = vrot.lane.b32.xlu0 %v1070, 93
        %v1105 = vpop.permute.xlu0 %1104
        %1106 = vrot.lane.b32.xlu0 %v1071, 93
        %v1107 = vpop.permute.xlu0 %1106
        %vm1108 = vcmask 760832
        %v1109 = vsel %vm1108, %v1085, %v1087
        %v1110 = vsel %vm1108, %v1087, %v1089
        %v1111 = vsel %vm1108, %v1089, %v1091
        %v1112 = vsel %vm1108, %v1091, %v1093
        %v1113 = vsel %vm1108, %v1093, %v1095
        %v1114 = vsel %vm1108, %v1097, %v1099
        %v1115 = vsel %vm1108, %v1099, %v1101
        %v1116 = vsel %vm1108, %v1101, %v1103
        %v1117 = vsel %vm1108, %v1103, %v1105
        %v1118 = vsel %vm1108, %v1105, %v1107
        %v1129 = vadd.f32 %v1037, %v1109
        %v1130 = vadd.f32 %v1038, %v1110
        %v1131 = vadd.f32 %v1039, %v1111
        %v1132 = vadd.f32 %v1040, %v1112
        %v1133 = vadd.f32 %v1041, %v1113
        %v1134 = vadd.f32 %v1042, %v1114
        %v1135 = vadd.f32 %v1043, %v1115
        %v1136 = vadd.f32 %v1044, %v1116
        %v1137 = vadd.f32 %v1045, %v1117
        %v1138 = vadd.f32 %v1046, %v1118
        %s1139 = scalar_lea.vmem %s1, 144
        %v1140 = vld [vmem:[%s1139] sm:$0xff]
        %v1141 = vld [vmem:[%s1139 + $0x8] sm:$0xff]
        %1143 = vset.pattern.permute.xlu0 0
        %1144 = vperm.xlu0 %1143, %v1140
        %v1145 = vpop.permute.xlu0 %1144
        %1148 = vset.pattern.permute.xlu0 0
        %1149 = vperm.xlu0 %1148, %v1141
        %v1150 = vpop.permute.xlu0 %1149
        %v1152 = vmul.f32 %v394, %v1145
        %v1153 = vmul.f32 %v395, %v1145
        %v1154 = vmul.f32 %v396, %v1145
        %v1155 = vmul.f32 %v397, %v1145
        %v1156 = vmul.f32 %v398, %v1145
        %v1157 = vmul.f32 %v399, %v1145
        %v1158 = vmul.f32 %v394, %v1150
        %v1159 = vmul.f32 %v395, %v1150
        %v1160 = vmul.f32 %v396, %v1150
        %v1161 = vmul.f32 %v397, %v1150
        %v1162 = vmul.f32 %v398, %v1150
        %v1163 = vmul.f32 %v399, %v1150
        %1176 = vrot.lane.b32.xlu0 %v1152, 92
        %v1177 = vpop.permute.xlu0 %1176
        %1178 = vrot.lane.b32.xlu0 %v1153, 92
        %v1179 = vpop.permute.xlu0 %1178
        %1180 = vrot.lane.b32.xlu0 %v1154, 92
        %v1181 = vpop.permute.xlu0 %1180
        %1182 = vrot.lane.b32.xlu0 %v1155, 92
        %v1183 = vpop.permute.xlu0 %1182
        %1184 = vrot.lane.b32.xlu0 %v1156, 92
        %v1185 = vpop.permute.xlu0 %1184
        %1186 = vrot.lane.b32.xlu0 %v1157, 92
        %v1187 = vpop.permute.xlu0 %1186
        %1188 = vrot.lane.b32.xlu0 %v1158, 92
        %v1189 = vpop.permute.xlu0 %1188
        %1190 = vrot.lane.b32.xlu0 %v1159, 92
        %v1191 = vpop.permute.xlu0 %1190
        %1192 = vrot.lane.b32.xlu0 %v1160, 92
        %v1193 = vpop.permute.xlu0 %1192
        %1194 = vrot.lane.b32.xlu0 %v1161, 92
        %v1195 = vpop.permute.xlu0 %1194
        %1196 = vrot.lane.b32.xlu0 %v1162, 92
        %v1197 = vpop.permute.xlu0 %1196
        %1198 = vrot.lane.b32.xlu0 %v1163, 92
        %v1199 = vpop.permute.xlu0 %1198
        %vm1200 = vcmask 752640
        %v1201 = vsel %vm1200, %v1177, %v1179
        %v1202 = vsel %vm1200, %v1179, %v1181
        %v1203 = vsel %vm1200, %v1181, %v1183
        %v1204 = vsel %vm1200, %v1183, %v1185
        %v1205 = vsel %vm1200, %v1185, %v1187
        %v1206 = vsel %vm1200, %v1189, %v1191
        %v1207 = vsel %vm1200, %v1191, %v1193
        %v1208 = vsel %vm1200, %v1193, %v1195
        %v1209 = vsel %vm1200, %v1195, %v1197
        %v1210 = vsel %vm1200, %v1197, %v1199
        %v1221 = vadd.f32 %v1129, %v1201
        %v1222 = vadd.f32 %v1130, %v1202
        %v1223 = vadd.f32 %v1131, %v1203
        %v1224 = vadd.f32 %v1132, %v1204
        %v1225 = vadd.f32 %v1133, %v1205
        %v1226 = vadd.f32 %v1134, %v1206
        %v1227 = vadd.f32 %v1135, %v1207
        %v1228 = vadd.f32 %v1136, %v1208
        %v1229 = vadd.f32 %v1137, %v1209
        %v1230 = vadd.f32 %v1138, %v1210
        %s1231 = scalar_lea.vmem %s1, 160
        %v1232 = vld [vmem:[%s1231] sm:$0xff]
        %v1233 = vld [vmem:[%s1231 + $0x8] sm:$0xff]
        %1235 = vset.pattern.permute.xlu0 0
        %1236 = vperm.xlu0 %1235, %v1232
        %v1237 = vpop.permute.xlu0 %1236
        %1240 = vset.pattern.permute.xlu0 0
        %1241 = vperm.xlu0 %1240, %v1233
        %v1242 = vpop.permute.xlu0 %1241
        %v1244 = vmul.f32 %v394, %v1237
        %v1245 = vmul.f32 %v395, %v1237
        %v1246 = vmul.f32 %v396, %v1237
        %v1247 = vmul.f32 %v397, %v1237
        %v1248 = vmul.f32 %v398, %v1237
        %v1249 = vmul.f32 %v399, %v1237
        %v1250 = vmul.f32 %v394, %v1242
        %v1251 = vmul.f32 %v395, %v1242
        %v1252 = vmul.f32 %v396, %v1242
        %v1253 = vmul.f32 %v397, %v1242
        %v1254 = vmul.f32 %v398, %v1242
        %v1255 = vmul.f32 %v399, %v1242
        %1268 = vrot.lane.b32.xlu0 %v1244, 64
        %v1269 = vpop.permute.xlu0 %1268
        %1270 = vrot.lane.b32.xlu0 %v1245, 64
        %v1271 = vpop.permute.xlu0 %1270
        %1272 = vrot.lane.b32.xlu0 %v1246, 64
        %v1273 = vpop.permute.xlu0 %1272
        %1274 = vrot.lane.b32.xlu0 %v1247, 64
        %v1275 = vpop.permute.xlu0 %1274
        %1276 = vrot.lane.b32.xlu0 %v1248, 64
        %v1277 = vpop.permute.xlu0 %1276
        %1278 = vrot.lane.b32.xlu0 %v1249, 64
        %v1279 = vpop.permute.xlu0 %1278
        %1280 = vrot.lane.b32.xlu0 %v1250, 64
        %v1281 = vpop.permute.xlu0 %1280
        %1282 = vrot.lane.b32.xlu0 %v1251, 64
        %v1283 = vpop.permute.xlu0 %1282
        %1284 = vrot.lane.b32.xlu0 %v1252, 64
        %v1285 = vpop.permute.xlu0 %1284
        %1286 = vrot.lane.b32.xlu0 %v1253, 64
        %v1287 = vpop.permute.xlu0 %1286
        %1288 = vrot.lane.b32.xlu0 %v1254, 64
        %v1289 = vpop.permute.xlu0 %1288
        %1290 = vrot.lane.b32.xlu0 %v1255, 64
        %v1291 = vpop.permute.xlu0 %1290
        %vm1292 = vcmask 523264
        %v1293 = vsel %vm1292, %v1269, %v1271
        %v1294 = vsel %vm1292, %v1271, %v1273
        %v1295 = vsel %vm1292, %v1273, %v1275
        %v1296 = vsel %vm1292, %v1275, %v1277
        %v1297 = vsel %vm1292, %v1277, %v1279
        %v1298 = vsel %vm1292, %v1281, %v1283
        %v1299 = vsel %vm1292, %v1283, %v1285
        %v1300 = vsel %vm1292, %v1285, %v1287
        %v1301 = vsel %vm1292, %v1287, %v1289
        %v1302 = vsel %vm1292, %v1289, %v1291
        %v1313 = vadd.f32 %v1221, %v1293
        %v1314 = vadd.f32 %v1222, %v1294
        %v1315 = vadd.f32 %v1223, %v1295
        %v1316 = vadd.f32 %v1224, %v1296
        %v1317 = vadd.f32 %v1225, %v1297
        %v1318 = vadd.f32 %v1226, %v1298
        %v1319 = vadd.f32 %v1227, %v1299
        %v1320 = vadd.f32 %v1228, %v1300
        %v1321 = vadd.f32 %v1229, %v1301
        %v1322 = vadd.f32 %v1230, %v1302
        %s1323 = scalar_lea.vmem %s1, 176
        %v1324 = vld [vmem:[%s1323] sm:$0xff]
        %v1325 = vld [vmem:[%s1323 + $0x8] sm:$0xff]
        %1327 = vset.pattern.permute.xlu0 0
        %1328 = vperm.xlu0 %1327, %v1324
        %v1329 = vpop.permute.xlu0 %1328
        %1332 = vset.pattern.permute.xlu0 0
        %1333 = vperm.xlu0 %1332, %v1325
        %v1334 = vpop.permute.xlu0 %1333
        %v1336 = vmul.f32 %v394, %v1329
        %v1337 = vmul.f32 %v395, %v1329
        %v1338 = vmul.f32 %v396, %v1329
        %v1339 = vmul.f32 %v397, %v1329
        %v1340 = vmul.f32 %v398, %v1329
        %v1341 = vmul.f32 %v399, %v1329
        %v1342 = vmul.f32 %v394, %v1334
        %v1343 = vmul.f32 %v395, %v1334
        %v1344 = vmul.f32 %v396, %v1334
        %v1345 = vmul.f32 %v397, %v1334
        %v1346 = vmul.f32 %v398, %v1334
        %v1347 = vmul.f32 %v399, %v1334
        %1360 = vrot.lane.b32.xlu0 %v1336, 63
        %v1361 = vpop.permute.xlu0 %1360
        %1362 = vrot.lane.b32.xlu0 %v1337, 63
        %v1363 = vpop.permute.xlu0 %1362
        %1364 = vrot.lane.b32.xlu0 %v1338, 63
        %v1365 = vpop.permute.xlu0 %1364
        %1366 = vrot.lane.b32.xlu0 %v1339, 63
        %v1367 = vpop.permute.xlu0 %1366
        %1368 = vrot.lane.b32.xlu0 %v1340, 63
        %v1369 = vpop.permute.xlu0 %1368
        %1370 = vrot.lane.b32.xlu0 %v1341, 63
        %v1371 = vpop.permute.xlu0 %1370
        %1372 = vrot.lane.b32.xlu0 %v1342, 63
        %v1373 = vpop.permute.xlu0 %1372
        %1374 = vrot.lane.b32.xlu0 %v1343, 63
        %v1375 = vpop.permute.xlu0 %1374
        %1376 = vrot.lane.b32.xlu0 %v1344, 63
        %v1377 = vpop.permute.xlu0 %1376
        %1378 = vrot.lane.b32.xlu0 %v1345, 63
        %v1379 = vpop.permute.xlu0 %1378
        %1380 = vrot.lane.b32.xlu0 %v1346, 63
        %v1381 = vpop.permute.xlu0 %1380
        %1382 = vrot.lane.b32.xlu0 %v1347, 63
        %v1383 = vpop.permute.xlu0 %1382
        %vm1384 = vcmask 515072
        %v1385 = vsel %vm1384, %v1361, %v1363
        %v1386 = vsel %vm1384, %v1363, %v1365
        %v1387 = vsel %vm1384, %v1365, %v1367
        %v1388 = vsel %vm1384, %v1367, %v1369
        %v1389 = vsel %vm1384, %v1369, %v1371
        %v1390 = vsel %vm1384, %v1373, %v1375
        %v1391 = vsel %vm1384, %v1375, %v1377
        %v1392 = vsel %vm1384, %v1377, %v1379
        %v1393 = vsel %vm1384, %v1379, %v1381
        %v1394 = vsel %vm1384, %v1381, %v1383
        %v1405 = vadd.f32 %v1313, %v1385
        %v1406 = vadd.f32 %v1314, %v1386
        %v1407 = vadd.f32 %v1315, %v1387
        %v1408 = vadd.f32 %v1316, %v1388
        %v1409 = vadd.f32 %v1317, %v1389
        %v1410 = vadd.f32 %v1318, %v1390
        %v1411 = vadd.f32 %v1319, %v1391
        %v1412 = vadd.f32 %v1320, %v1392
        %v1413 = vadd.f32 %v1321, %v1393
        %v1414 = vadd.f32 %v1322, %v1394
        %s1415 = scalar_lea.vmem %s1, 192
        %v1416 = vld [vmem:[%s1415] sm:$0xff]
        %v1417 = vld [vmem:[%s1415 + $0x8] sm:$0xff]
        %1419 = vset.pattern.permute.xlu0 0
        %1420 = vperm.xlu0 %1419, %v1416
        %v1421 = vpop.permute.xlu0 %1420
        %1424 = vset.pattern.permute.xlu0 0
        %1425 = vperm.xlu0 %1424, %v1417
        %v1426 = vpop.permute.xlu0 %1425
        %v1428 = vmul.f32 %v394, %v1421
        %v1429 = vmul.f32 %v395, %v1421
        %v1430 = vmul.f32 %v396, %v1421
        %v1431 = vmul.f32 %v397, %v1421
        %v1432 = vmul.f32 %v398, %v1421
        %v1433 = vmul.f32 %v399, %v1421
        %v1434 = vmul.f32 %v394, %v1426
        %v1435 = vmul.f32 %v395, %v1426
        %v1436 = vmul.f32 %v396, %v1426
        %v1437 = vmul.f32 %v397, %v1426
        %v1438 = vmul.f32 %v398, %v1426
        %v1439 = vmul.f32 %v399, %v1426
        %1452 = vrot.lane.b32.xlu0 %v1428, 62
        %v1453 = vpop.permute.xlu0 %1452
        %1454 = vrot.lane.b32.xlu0 %v1429, 62
        %v1455 = vpop.permute.xlu0 %1454
        %1456 = vrot.lane.b32.xlu0 %v1430, 62
        %v1457 = vpop.permute.xlu0 %1456
        %1458 = vrot.lane.b32.xlu0 %v1431, 62
        %v1459 = vpop.permute.xlu0 %1458
        %1460 = vrot.lane.b32.xlu0 %v1432, 62
        %v1461 = vpop.permute.xlu0 %1460
        %1462 = vrot.lane.b32.xlu0 %v1433, 62
        %v1463 = vpop.permute.xlu0 %1462
        %1464 = vrot.lane.b32.xlu0 %v1434, 62
        %v1465 = vpop.permute.xlu0 %1464
        %1466 = vrot.lane.b32.xlu0 %v1435, 62
        %v1467 = vpop.permute.xlu0 %1466
        %1468 = vrot.lane.b32.xlu0 %v1436, 62
        %v1469 = vpop.permute.xlu0 %1468
        %1470 = vrot.lane.b32.xlu0 %v1437, 62
        %v1471 = vpop.permute.xlu0 %1470
        %1472 = vrot.lane.b32.xlu0 %v1438, 62
        %v1473 = vpop.permute.xlu0 %1472
        %1474 = vrot.lane.b32.xlu0 %v1439, 62
        %v1475 = vpop.permute.xlu0 %1474
        %vm1476 = vcmask 506880
        %v1477 = vsel %vm1476, %v1453, %v1455
        %v1478 = vsel %vm1476, %v1455, %v1457
        %v1479 = vsel %vm1476, %v1457, %v1459
        %v1480 = vsel %vm1476, %v1459, %v1461
        %v1481 = vsel %vm1476, %v1461, %v1463
        %v1482 = vsel %vm1476, %v1465, %v1467
        %v1483 = vsel %vm1476, %v1467, %v1469
        %v1484 = vsel %vm1476, %v1469, %v1471
        %v1485 = vsel %vm1476, %v1471, %v1473
        %v1486 = vsel %vm1476, %v1473, %v1475
        %v1497 = vadd.f32 %v1405, %v1477
        %v1498 = vadd.f32 %v1406, %v1478
        %v1499 = vadd.f32 %v1407, %v1479
        %v1500 = vadd.f32 %v1408, %v1480
        %v1501 = vadd.f32 %v1409, %v1481
        %v1502 = vadd.f32 %v1410, %v1482
        %v1503 = vadd.f32 %v1411, %v1483
        %v1504 = vadd.f32 %v1412, %v1484
        %v1505 = vadd.f32 %v1413, %v1485
        %v1506 = vadd.f32 %v1414, %v1486
        %s1507 = scalar_lea.vmem %s1, 208
        %v1508 = vld [vmem:[%s1507] sm:$0xff]
        %v1509 = vld [vmem:[%s1507 + $0x8] sm:$0xff]
        %1511 = vset.pattern.permute.xlu0 0
        %1512 = vperm.xlu0 %1511, %v1508
        %v1513 = vpop.permute.xlu0 %1512
        %1516 = vset.pattern.permute.xlu0 0
        %1517 = vperm.xlu0 %1516, %v1509
        %v1518 = vpop.permute.xlu0 %1517
        %v1520 = vmul.f32 %v394, %v1513
        %v1521 = vmul.f32 %v395, %v1513
        %v1522 = vmul.f32 %v396, %v1513
        %v1523 = vmul.f32 %v397, %v1513
        %v1524 = vmul.f32 %v398, %v1513
        %v1525 = vmul.f32 %v399, %v1513
        %v1526 = vmul.f32 %v394, %v1518
        %v1527 = vmul.f32 %v395, %v1518
        %v1528 = vmul.f32 %v396, %v1518
        %v1529 = vmul.f32 %v397, %v1518
        %v1530 = vmul.f32 %v398, %v1518
        %v1531 = vmul.f32 %v399, %v1518
        %1544 = vrot.lane.b32.xlu0 %v1520, 61
        %v1545 = vpop.permute.xlu0 %1544
        %1546 = vrot.lane.b32.xlu0 %v1521, 61
        %v1547 = vpop.permute.xlu0 %1546
        %1548 = vrot.lane.b32.xlu0 %v1522, 61
        %v1549 = vpop.permute.xlu0 %1548
        %1550 = vrot.lane.b32.xlu0 %v1523, 61
        %v1551 = vpop.permute.xlu0 %1550
        %1552 = vrot.lane.b32.xlu0 %v1524, 61
        %v1553 = vpop.permute.xlu0 %1552
        %1554 = vrot.lane.b32.xlu0 %v1525, 61
        %v1555 = vpop.permute.xlu0 %1554
        %1556 = vrot.lane.b32.xlu0 %v1526, 61
        %v1557 = vpop.permute.xlu0 %1556
        %1558 = vrot.lane.b32.xlu0 %v1527, 61
        %v1559 = vpop.permute.xlu0 %1558
        %1560 = vrot.lane.b32.xlu0 %v1528, 61
        %v1561 = vpop.permute.xlu0 %1560
        %1562 = vrot.lane.b32.xlu0 %v1529, 61
        %v1563 = vpop.permute.xlu0 %1562
        %1564 = vrot.lane.b32.xlu0 %v1530, 61
        %v1565 = vpop.permute.xlu0 %1564
        %1566 = vrot.lane.b32.xlu0 %v1531, 61
        %v1567 = vpop.permute.xlu0 %1566
        %vm1568 = vcmask 498688
        %v1569 = vsel %vm1568, %v1545, %v1547
        %v1570 = vsel %vm1568, %v1547, %v1549
        %v1571 = vsel %vm1568, %v1549, %v1551
        %v1572 = vsel %vm1568, %v1551, %v1553
        %v1573 = vsel %vm1568, %v1553, %v1555
        %v1574 = vsel %vm1568, %v1557, %v1559
        %v1575 = vsel %vm1568, %v1559, %v1561
        %v1576 = vsel %vm1568, %v1561, %v1563
        %v1577 = vsel %vm1568, %v1563, %v1565
        %v1578 = vsel %vm1568, %v1565, %v1567
        %v1589 = vadd.f32 %v1497, %v1569
        %v1590 = vadd.f32 %v1498, %v1570
        %v1591 = vadd.f32 %v1499, %v1571
        %v1592 = vadd.f32 %v1500, %v1572
        %v1593 = vadd.f32 %v1501, %v1573
        %v1594 = vadd.f32 %v1502, %v1574
        %v1595 = vadd.f32 %v1503, %v1575
        %v1596 = vadd.f32 %v1504, %v1576
        %v1597 = vadd.f32 %v1505, %v1577
        %v1598 = vadd.f32 %v1506, %v1578
        %s1599 = scalar_lea.vmem %s1, 224
        %v1600 = vld [vmem:[%s1599] sm:$0xff]
        %v1601 = vld [vmem:[%s1599 + $0x8] sm:$0xff]
        %1603 = vset.pattern.permute.xlu0 0
        %1604 = vperm.xlu0 %1603, %v1600
        %v1605 = vpop.permute.xlu0 %1604
        %1608 = vset.pattern.permute.xlu0 0
        %1609 = vperm.xlu0 %1608, %v1601
        %v1610 = vpop.permute.xlu0 %1609
        %v1612 = vmul.f32 %v394, %v1605
        %v1613 = vmul.f32 %v395, %v1605
        %v1614 = vmul.f32 %v396, %v1605
        %v1615 = vmul.f32 %v397, %v1605
        %v1616 = vmul.f32 %v398, %v1605
        %v1617 = vmul.f32 %v399, %v1605
        %v1618 = vmul.f32 %v394, %v1610
        %v1619 = vmul.f32 %v395, %v1610
        %v1620 = vmul.f32 %v396, %v1610
        %v1621 = vmul.f32 %v397, %v1610
        %v1622 = vmul.f32 %v398, %v1610
        %v1623 = vmul.f32 %v399, %v1610
        %1636 = vrot.lane.b32.xlu0 %v1612, 60
        %v1637 = vpop.permute.xlu0 %1636
        %1638 = vrot.lane.b32.xlu0 %v1613, 60
        %v1639 = vpop.permute.xlu0 %1638
        %1640 = vrot.lane.b32.xlu0 %v1614, 60
        %v1641 = vpop.permute.xlu0 %1640
        %1642 = vrot.lane.b32.xlu0 %v1615, 60
        %v1643 = vpop.permute.xlu0 %1642
        %1644 = vrot.lane.b32.xlu0 %v1616, 60
        %v1645 = vpop.permute.xlu0 %1644
        %1646 = vrot.lane.b32.xlu0 %v1617, 60
        %v1647 = vpop.permute.xlu0 %1646
        %1648 = vrot.lane.b32.xlu0 %v1618, 60
        %v1649 = vpop.permute.xlu0 %1648
        %1650 = vrot.lane.b32.xlu0 %v1619, 60
        %v1651 = vpop.permute.xlu0 %1650
        %1652 = vrot.lane.b32.xlu0 %v1620, 60
        %v1653 = vpop.permute.xlu0 %1652
        %1654 = vrot.lane.b32.xlu0 %v1621, 60
        %v1655 = vpop.permute.xlu0 %1654
        %1656 = vrot.lane.b32.xlu0 %v1622, 60
        %v1657 = vpop.permute.xlu0 %1656
        %1658 = vrot.lane.b32.xlu0 %v1623, 60
        %v1659 = vpop.permute.xlu0 %1658
        %vm1660 = vcmask 490496
        %v1661 = vsel %vm1660, %v1637, %v1639
        %v1662 = vsel %vm1660, %v1639, %v1641
        %v1663 = vsel %vm1660, %v1641, %v1643
        %v1664 = vsel %vm1660, %v1643, %v1645
        %v1665 = vsel %vm1660, %v1645, %v1647
        %v1666 = vsel %vm1660, %v1649, %v1651
        %v1667 = vsel %vm1660, %v1651, %v1653
        %v1668 = vsel %vm1660, %v1653, %v1655
        %v1669 = vsel %vm1660, %v1655, %v1657
        %v1670 = vsel %vm1660, %v1657, %v1659
        %v1681 = vadd.f32 %v1589, %v1661
        %v1682 = vadd.f32 %v1590, %v1662
        %v1683 = vadd.f32 %v1591, %v1663
        %v1684 = vadd.f32 %v1592, %v1664
        %v1685 = vadd.f32 %v1593, %v1665
        %v1686 = vadd.f32 %v1594, %v1666
        %v1687 = vadd.f32 %v1595, %v1667
        %v1688 = vadd.f32 %v1596, %v1668
        %v1689 = vadd.f32 %v1597, %v1669
        %v1690 = vadd.f32 %v1598, %v1670
        %s1691 = scalar_lea.vmem %s1, 240
        %v1692 = vld [vmem:[%s1691] sm:$0xff]
        %v1693 = vld [vmem:[%s1691 + $0x8] sm:$0xff]
        %1695 = vset.pattern.permute.xlu0 0
        %1696 = vperm.xlu0 %1695, %v1692
        %v1697 = vpop.permute.xlu0 %1696
        %1700 = vset.pattern.permute.xlu0 0
        %1701 = vperm.xlu0 %1700, %v1693
        %v1702 = vpop.permute.xlu0 %1701
        %v1704 = vmul.f32 %v394, %v1697
        %v1705 = vmul.f32 %v395, %v1697
        %v1706 = vmul.f32 %v396, %v1697
        %v1707 = vmul.f32 %v397, %v1697
        %v1708 = vmul.f32 %v398, %v1697
        %v1709 = vmul.f32 %v399, %v1697
        %v1710 = vmul.f32 %v394, %v1702
        %v1711 = vmul.f32 %v395, %v1702
        %v1712 = vmul.f32 %v396, %v1702
        %v1713 = vmul.f32 %v397, %v1702
        %v1714 = vmul.f32 %v398, %v1702
        %v1715 = vmul.f32 %v399, %v1702
        %1728 = vrot.lane.b32.xlu0 %v1704, 32
        %v1729 = vpop.permute.xlu0 %1728
        %1730 = vrot.lane.b32.xlu0 %v1705, 32
        %v1731 = vpop.permute.xlu0 %1730
        %1732 = vrot.lane.b32.xlu0 %v1706, 32
        %v1733 = vpop.permute.xlu0 %1732
        %1734 = vrot.lane.b32.xlu0 %v1707, 32
        %v1735 = vpop.permute.xlu0 %1734
        %1736 = vrot.lane.b32.xlu0 %v1708, 32
        %v1737 = vpop.permute.xlu0 %1736
        %1738 = vrot.lane.b32.xlu0 %v1709, 32
        %v1739 = vpop.permute.xlu0 %1738
        %1740 = vrot.lane.b32.xlu0 %v1710, 32
        %v1741 = vpop.permute.xlu0 %1740
        %1742 = vrot.lane.b32.xlu0 %v1711, 32
        %v1743 = vpop.permute.xlu0 %1742
        %1744 = vrot.lane.b32.xlu0 %v1712, 32
        %v1745 = vpop.permute.xlu0 %1744
        %1746 = vrot.lane.b32.xlu0 %v1713, 32
        %v1747 = vpop.permute.xlu0 %1746
        %1748 = vrot.lane.b32.xlu0 %v1714, 32
        %v1749 = vpop.permute.xlu0 %1748
        %1750 = vrot.lane.b32.xlu0 %v1715, 32
        %v1751 = vpop.permute.xlu0 %1750
        %vm1752 = vcmask 261120
        %v1753 = vsel %vm1752, %v1729, %v1731
        %v1754 = vsel %vm1752, %v1731, %v1733
        %v1755 = vsel %vm1752, %v1733, %v1735
        %v1756 = vsel %vm1752, %v1735, %v1737
        %v1757 = vsel %vm1752, %v1737, %v1739
        %v1758 = vsel %vm1752, %v1741, %v1743
        %v1759 = vsel %vm1752, %v1743, %v1745
        %v1760 = vsel %vm1752, %v1745, %v1747
        %v1761 = vsel %vm1752, %v1747, %v1749
        %v1762 = vsel %vm1752, %v1749, %v1751
        %v1773 = vadd.f32 %v1681, %v1753
        %v1774 = vadd.f32 %v1682, %v1754
        %v1775 = vadd.f32 %v1683, %v1755
        %v1776 = vadd.f32 %v1684, %v1756
        %v1777 = vadd.f32 %v1685, %v1757
        %v1778 = vadd.f32 %v1686, %v1758
        %v1779 = vadd.f32 %v1687, %v1759
        %v1780 = vadd.f32 %v1688, %v1760
        %v1781 = vadd.f32 %v1689, %v1761
        %v1782 = vadd.f32 %v1690, %v1762
        %s1783 = scalar_lea.vmem %s1, 256
        %v1784 = vld [vmem:[%s1783] sm:$0xff]
        %v1785 = vld [vmem:[%s1783 + $0x8] sm:$0xff]
        %1787 = vset.pattern.permute.xlu0 0
        %1788 = vperm.xlu0 %1787, %v1784
        %v1789 = vpop.permute.xlu0 %1788
        %1792 = vset.pattern.permute.xlu0 0
        %1793 = vperm.xlu0 %1792, %v1785
        %v1794 = vpop.permute.xlu0 %1793
        %v1796 = vmul.f32 %v394, %v1789
        %v1797 = vmul.f32 %v395, %v1789
        %v1798 = vmul.f32 %v396, %v1789
        %v1799 = vmul.f32 %v397, %v1789
        %v1800 = vmul.f32 %v398, %v1789
        %v1801 = vmul.f32 %v399, %v1789
        %v1802 = vmul.f32 %v394, %v1794
        %v1803 = vmul.f32 %v395, %v1794
        %v1804 = vmul.f32 %v396, %v1794
        %v1805 = vmul.f32 %v397, %v1794
        %v1806 = vmul.f32 %v398, %v1794
        %v1807 = vmul.f32 %v399, %v1794
        %1820 = vrot.lane.b32.xlu0 %v1796, 31
        %v1821 = vpop.permute.xlu0 %1820
        %1822 = vrot.lane.b32.xlu0 %v1797, 31
        %v1823 = vpop.permute.xlu0 %1822
        %1824 = vrot.lane.b32.xlu0 %v1798, 31
        %v1825 = vpop.permute.xlu0 %1824
        %1826 = vrot.lane.b32.xlu0 %v1799, 31
        %v1827 = vpop.permute.xlu0 %1826
        %1828 = vrot.lane.b32.xlu0 %v1800, 31
        %v1829 = vpop.permute.xlu0 %1828
        %1830 = vrot.lane.b32.xlu0 %v1801, 31
        %v1831 = vpop.permute.xlu0 %1830
        %1832 = vrot.lane.b32.xlu0 %v1802, 31
        %v1833 = vpop.permute.xlu0 %1832
        %1834 = vrot.lane.b32.xlu0 %v1803, 31
        %v1835 = vpop.permute.xlu0 %1834
        %1836 = vrot.lane.b32.xlu0 %v1804, 31
        %v1837 = vpop.permute.xlu0 %1836
        %1838 = vrot.lane.b32.xlu0 %v1805, 31
        %v1839 = vpop.permute.xlu0 %1838
        %1840 = vrot.lane.b32.xlu0 %v1806, 31
        %v1841 = vpop.permute.xlu0 %1840
        %1842 = vrot.lane.b32.xlu0 %v1807, 31
        %v1843 = vpop.permute.xlu0 %1842
        %vm1844 = vcmask 252928
        %v1845 = vsel %vm1844, %v1821, %v1823
        %v1846 = vsel %vm1844, %v1823, %v1825
        %v1847 = vsel %vm1844, %v1825, %v1827
        %v1848 = vsel %vm1844, %v1827, %v1829
        %v1849 = vsel %vm1844, %v1829, %v1831
        %v1850 = vsel %vm1844, %v1833, %v1835
        %v1851 = vsel %vm1844, %v1835, %v1837
        %v1852 = vsel %vm1844, %v1837, %v1839
        %v1853 = vsel %vm1844, %v1839, %v1841
        %v1854 = vsel %vm1844, %v1841, %v1843
        %v1865 = vadd.f32 %v1773, %v1845
        %v1866 = vadd.f32 %v1774, %v1846
        %v1867 = vadd.f32 %v1775, %v1847
        %v1868 = vadd.f32 %v1776, %v1848
        %v1869 = vadd.f32 %v1777, %v1849
        %v1870 = vadd.f32 %v1778, %v1850
        %v1871 = vadd.f32 %v1779, %v1851
        %v1872 = vadd.f32 %v1780, %v1852
        %v1873 = vadd.f32 %v1781, %v1853
        %v1874 = vadd.f32 %v1782, %v1854
        %s1875 = scalar_lea.vmem %s1, 272
        %v1876 = vld [vmem:[%s1875] sm:$0xff]
        %v1877 = vld [vmem:[%s1875 + $0x8] sm:$0xff]
        %1879 = vset.pattern.permute.xlu0 0
        %1880 = vperm.xlu0 %1879, %v1876
        %v1881 = vpop.permute.xlu0 %1880
        %1884 = vset.pattern.permute.xlu0 0
        %1885 = vperm.xlu0 %1884, %v1877
        %v1886 = vpop.permute.xlu0 %1885
        %v1888 = vmul.f32 %v394, %v1881
        %v1889 = vmul.f32 %v395, %v1881
        %v1890 = vmul.f32 %v396, %v1881
        %v1891 = vmul.f32 %v397, %v1881
        %v1892 = vmul.f32 %v398, %v1881
        %v1893 = vmul.f32 %v399, %v1881
        %v1894 = vmul.f32 %v394, %v1886
        %v1895 = vmul.f32 %v395, %v1886
        %v1896 = vmul.f32 %v396, %v1886
        %v1897 = vmul.f32 %v397, %v1886
        %v1898 = vmul.f32 %v398, %v1886
        %v1899 = vmul.f32 %v399, %v1886
        %1912 = vrot.lane.b32.xlu0 %v1888, 30
        %v1913 = vpop.permute.xlu0 %1912
        %1914 = vrot.lane.b32.xlu0 %v1889, 30
        %v1915 = vpop.permute.xlu0 %1914
        %1916 = vrot.lane.b32.xlu0 %v1890, 30
        %v1917 = vpop.permute.xlu0 %1916
        %1918 = vrot.lane.b32.xlu0 %v1891, 30
        %v1919 = vpop.permute.xlu0 %1918
        %1920 = vrot.lane.b32.xlu0 %v1892, 30
        %v1921 = vpop.permute.xlu0 %1920
        %1922 = vrot.lane.b32.xlu0 %v1893, 30
        %v1923 = vpop.permute.xlu0 %1922
        %1924 = vrot.lane.b32.xlu0 %v1894, 30
        %v1925 = vpop.permute.xlu0 %1924
        %1926 = vrot.lane.b32.xlu0 %v1895, 30
        %v1927 = vpop.permute.xlu0 %1926
        %1928 = vrot.lane.b32.xlu0 %v1896, 30
        %v1929 = vpop.permute.xlu0 %1928
        %1930 = vrot.lane.b32.xlu0 %v1897, 30
        %v1931 = vpop.permute.xlu0 %1930
        %1932 = vrot.lane.b32.xlu0 %v1898, 30
        %v1933 = vpop.permute.xlu0 %1932
        %1934 = vrot.lane.b32.xlu0 %v1899, 30
        %v1935 = vpop.permute.xlu0 %1934
        %vm1936 = vcmask 244736
        %v1937 = vsel %vm1936, %v1913, %v1915
        %v1938 = vsel %vm1936, %v1915, %v1917
        %v1939 = vsel %vm1936, %v1917, %v1919
        %v1940 = vsel %vm1936, %v1919, %v1921
        %v1941 = vsel %vm1936, %v1921, %v1923
        %v1942 = vsel %vm1936, %v1925, %v1927
        %v1943 = vsel %vm1936, %v1927, %v1929
        %v1944 = vsel %vm1936, %v1929, %v1931
        %v1945 = vsel %vm1936, %v1931, %v1933
        %v1946 = vsel %vm1936, %v1933, %v1935
        %v1957 = vadd.f32 %v1865, %v1937
        %v1958 = vadd.f32 %v1866, %v1938
        %v1959 = vadd.f32 %v1867, %v1939
        %v1960 = vadd.f32 %v1868, %v1940
        %v1961 = vadd.f32 %v1869, %v1941
        %v1962 = vadd.f32 %v1870, %v1942
        %v1963 = vadd.f32 %v1871, %v1943
        %v1964 = vadd.f32 %v1872, %v1944
        %v1965 = vadd.f32 %v1873, %v1945
        %v1966 = vadd.f32 %v1874, %v1946
        %s1967 = scalar_lea.vmem %s1, 288
        %v1968 = vld [vmem:[%s1967] sm:$0xff]
        %v1969 = vld [vmem:[%s1967 + $0x8] sm:$0xff]
        %1971 = vset.pattern.permute.xlu0 0
        %1972 = vperm.xlu0 %1971, %v1968
        %v1973 = vpop.permute.xlu0 %1972
        %1976 = vset.pattern.permute.xlu0 0
        %1977 = vperm.xlu0 %1976, %v1969
        %v1978 = vpop.permute.xlu0 %1977
        %v1980 = vmul.f32 %v394, %v1973
        %v1981 = vmul.f32 %v395, %v1973
        %v1982 = vmul.f32 %v396, %v1973
        %v1983 = vmul.f32 %v397, %v1973
        %v1984 = vmul.f32 %v398, %v1973
        %v1985 = vmul.f32 %v399, %v1973
        %v1986 = vmul.f32 %v394, %v1978
        %v1987 = vmul.f32 %v395, %v1978
        %v1988 = vmul.f32 %v396, %v1978
        %v1989 = vmul.f32 %v397, %v1978
        %v1990 = vmul.f32 %v398, %v1978
        %v1991 = vmul.f32 %v399, %v1978
        %2004 = vrot.lane.b32.xlu0 %v1980, 29
        %v2005 = vpop.permute.xlu0 %2004
        %2006 = vrot.lane.b32.xlu0 %v1981, 29
        %v2007 = vpop.permute.xlu0 %2006
        %2008 = vrot.lane.b32.xlu0 %v1982, 29
        %v2009 = vpop.permute.xlu0 %2008
        %2010 = vrot.lane.b32.xlu0 %v1983, 29
        %v2011 = vpop.permute.xlu0 %2010
        %2012 = vrot.lane.b32.xlu0 %v1984, 29
        %v2013 = vpop.permute.xlu0 %2012
        %2014 = vrot.lane.b32.xlu0 %v1985, 29
        %v2015 = vpop.permute.xlu0 %2014
        %2016 = vrot.lane.b32.xlu0 %v1986, 29
        %v2017 = vpop.permute.xlu0 %2016
        %2018 = vrot.lane.b32.xlu0 %v1987, 29
        %v2019 = vpop.permute.xlu0 %2018
        %2020 = vrot.lane.b32.xlu0 %v1988, 29
        %v2021 = vpop.permute.xlu0 %2020
        %2022 = vrot.lane.b32.xlu0 %v1989, 29
        %v2023 = vpop.permute.xlu0 %2022
        %2024 = vrot.lane.b32.xlu0 %v1990, 29
        %v2025 = vpop.permute.xlu0 %2024
        %2026 = vrot.lane.b32.xlu0 %v1991, 29
        %v2027 = vpop.permute.xlu0 %2026
        %vm2028 = vcmask 236544
        %v2029 = vsel %vm2028, %v2005, %v2007
        %v2030 = vsel %vm2028, %v2007, %v2009
        %v2031 = vsel %vm2028, %v2009, %v2011
        %v2032 = vsel %vm2028, %v2011, %v2013
        %v2033 = vsel %vm2028, %v2013, %v2015
        %v2034 = vsel %vm2028, %v2017, %v2019
        %v2035 = vsel %vm2028, %v2019, %v2021
        %v2036 = vsel %vm2028, %v2021, %v2023
        %v2037 = vsel %vm2028, %v2023, %v2025
        %v2038 = vsel %vm2028, %v2025, %v2027
        %v2049 = vadd.f32 %v1957, %v2029
        %v2050 = vadd.f32 %v1958, %v2030
        %v2051 = vadd.f32 %v1959, %v2031
        %v2052 = vadd.f32 %v1960, %v2032
        %v2053 = vadd.f32 %v1961, %v2033
        %v2054 = vadd.f32 %v1962, %v2034
        %v2055 = vadd.f32 %v1963, %v2035
        %v2056 = vadd.f32 %v1964, %v2036
        %v2057 = vadd.f32 %v1965, %v2037
        %v2058 = vadd.f32 %v1966, %v2038
        %s2059 = scalar_lea.vmem %s1, 304
        %v2060 = vld [vmem:[%s2059] sm:$0xff]
        %v2061 = vld [vmem:[%s2059 + $0x8] sm:$0xff]
        %2063 = vset.pattern.permute.xlu0 0
        %2064 = vperm.xlu0 %2063, %v2060
        %v2065 = vpop.permute.xlu0 %2064
        %2068 = vset.pattern.permute.xlu0 0
        %2069 = vperm.xlu0 %2068, %v2061
        %v2070 = vpop.permute.xlu0 %2069
        %v2072 = vmul.f32 %v394, %v2065
        %v2073 = vmul.f32 %v395, %v2065
        %v2074 = vmul.f32 %v396, %v2065
        %v2075 = vmul.f32 %v397, %v2065
        %v2076 = vmul.f32 %v398, %v2065
        %v2077 = vmul.f32 %v399, %v2065
        %v2078 = vmul.f32 %v394, %v2070
        %v2079 = vmul.f32 %v395, %v2070
        %v2080 = vmul.f32 %v396, %v2070
        %v2081 = vmul.f32 %v397, %v2070
        %v2082 = vmul.f32 %v398, %v2070
        %v2083 = vmul.f32 %v399, %v2070
        %2096 = vrot.lane.b32.xlu0 %v2072, 28
        %v2097 = vpop.permute.xlu0 %2096
        %2098 = vrot.lane.b32.xlu0 %v2073, 28
        %v2099 = vpop.permute.xlu0 %2098
        %2100 = vrot.lane.b32.xlu0 %v2074, 28
        %v2101 = vpop.permute.xlu0 %2100
        %2102 = vrot.lane.b32.xlu0 %v2075, 28
        %v2103 = vpop.permute.xlu0 %2102
        %2104 = vrot.lane.b32.xlu0 %v2076, 28
        %v2105 = vpop.permute.xlu0 %2104
        %2106 = vrot.lane.b32.xlu0 %v2077, 28
        %v2107 = vpop.permute.xlu0 %2106
        %2108 = vrot.lane.b32.xlu0 %v2078, 28
        %v2109 = vpop.permute.xlu0 %2108
        %2110 = vrot.lane.b32.xlu0 %v2079, 28
        %v2111 = vpop.permute.xlu0 %2110
        %2112 = vrot.lane.b32.xlu0 %v2080, 28
        %v2113 = vpop.permute.xlu0 %2112
        %2114 = vrot.lane.b32.xlu0 %v2081, 28
        %v2115 = vpop.permute.xlu0 %2114
        %2116 = vrot.lane.b32.xlu0 %v2082, 28
        %v2117 = vpop.permute.xlu0 %2116
        %2118 = vrot.lane.b32.xlu0 %v2083, 28
        %v2119 = vpop.permute.xlu0 %2118
        %vm2120 = vcmask 228352
        %v2121 = vsel %vm2120, %v2097, %v2099
        %v2122 = vsel %vm2120, %v2099, %v2101
        %v2123 = vsel %vm2120, %v2101, %v2103
        %v2124 = vsel %vm2120, %v2103, %v2105
        %v2125 = vsel %vm2120, %v2105, %v2107
        %v2126 = vsel %vm2120, %v2109, %v2111
        %v2127 = vsel %vm2120, %v2111, %v2113
        %v2128 = vsel %vm2120, %v2113, %v2115
        %v2129 = vsel %vm2120, %v2115, %v2117
        %v2130 = vsel %vm2120, %v2117, %v2119
        %v2141 = vadd.f32 %v2049, %v2121
        %v2142 = vadd.f32 %v2050, %v2122
        %v2143 = vadd.f32 %v2051, %v2123
        %v2144 = vadd.f32 %v2052, %v2124
        %v2145 = vadd.f32 %v2053, %v2125
        %v2146 = vadd.f32 %v2054, %v2126
        %v2147 = vadd.f32 %v2055, %v2127
        %v2148 = vadd.f32 %v2056, %v2128
        %v2149 = vadd.f32 %v2057, %v2129
        %v2150 = vadd.f32 %v2058, %v2130
        %v2151 = vld [vmem:[%s353 + $0x1] sm:$0x1f]
        %s2152 = scalar_lea.vmem %s1, 320
        %v2153 = vld [vmem:[%s2152] sm:$0xff]
        %v2154 = vld [vmem:[%s2152 + $0x8] sm:$0xff]
        %v2156 = vperm.slane %v2151, 0
        %v2157 = vperm.slane %v2151, 1
        %v2158 = vperm.slane %v2151, 2
        %v2159 = vperm.slane %v2151, 3
        %v2160 = vperm.slane %v2151, 4
        %2167 = vset.pattern.permute.xlu0 0
        %2168 = vperm.xlu0 %2167, %v2153
        %v2169 = vpop.permute.xlu0 %2168
        %2172 = vset.pattern.permute.xlu0 0
        %2173 = vperm.xlu0 %2172, %v2154
        %v2174 = vpop.permute.xlu0 %2173
        %v2176 = vmul.f32 %v2156, %v2169
        %v2177 = vmul.f32 %v2157, %v2169
        %v2178 = vmul.f32 %v2158, %v2169
        %v2179 = vmul.f32 %v2159, %v2169
        %v2180 = vmul.f32 %v2160, %v2169
        %v2181 = vmul.f32 %v2156, %v2174
        %v2182 = vmul.f32 %v2157, %v2174
        %v2183 = vmul.f32 %v2158, %v2174
        %v2184 = vmul.f32 %v2159, %v2174
        %v2185 = vmul.f32 %v2160, %v2174
        %v2186 = vadd.f32 %v2141, %v2176
        %v2187 = vadd.f32 %v2142, %v2177
        %v2188 = vadd.f32 %v2143, %v2178
        %v2189 = vadd.f32 %v2144, %v2179
        %v2190 = vadd.f32 %v2145, %v2180
        %v2191 = vadd.f32 %v2146, %v2181
        %v2192 = vadd.f32 %v2147, %v2182
        %v2193 = vadd.f32 %v2148, %v2183
        %v2194 = vadd.f32 %v2149, %v2184
        %v2195 = vadd.f32 %v2150, %v2185
        %v2196 = vld [vmem:[%s353 + $0x1] sm:$0x3f]
        %s2197 = scalar_lea.vmem %s1, 336
        %v2198 = vld [vmem:[%s2197] sm:$0xff]
        %v2199 = vld [vmem:[%s2197 + $0x8] sm:$0xff]
        %v2201 = vperm.slane %v2196, 0
        %v2202 = vperm.slane %v2196, 1
        %v2203 = vperm.slane %v2196, 2
        %v2204 = vperm.slane %v2196, 3
        %v2205 = vperm.slane %v2196, 4
        %v2206 = vperm.slane %v2196, 5
        %2214 = vset.pattern.permute.xlu0 0
        %2215 = vperm.xlu0 %2214, %v2198
        %v2216 = vpop.permute.xlu0 %2215
        %2219 = vset.pattern.permute.xlu0 0
        %2220 = vperm.xlu0 %2219, %v2199
        %v2221 = vpop.permute.xlu0 %2220
        %v2223 = vmul.f32 %v2201, %v2216
        %v2224 = vmul.f32 %v2202, %v2216
        %v2225 = vmul.f32 %v2203, %v2216
        %v2226 = vmul.f32 %v2204, %v2216
        %v2227 = vmul.f32 %v2205, %v2216
        %v2228 = vmul.f32 %v2206, %v2216
        %v2229 = vmul.f32 %v2201, %v2221
        %v2230 = vmul.f32 %v2202, %v2221
        %v2231 = vmul.f32 %v2203, %v2221
        %v2232 = vmul.f32 %v2204, %v2221
        %v2233 = vmul.f32 %v2205, %v2221
        %v2234 = vmul.f32 %v2206, %v2221
        %2247 = vrot.lane.b32.xlu0 %v2223, 127
        %v2248 = vpop.permute.xlu0 %2247
        %2249 = vrot.lane.b32.xlu0 %v2224, 127
        %v2250 = vpop.permute.xlu0 %2249
        %2251 = vrot.lane.b32.xlu0 %v2225, 127
        %v2252 = vpop.permute.xlu0 %2251
        %2253 = vrot.lane.b32.xlu0 %v2226, 127
        %v2254 = vpop.permute.xlu0 %2253
        %2255 = vrot.lane.b32.xlu0 %v2227, 127
        %v2256 = vpop.permute.xlu0 %2255
        %2257 = vrot.lane.b32.xlu0 %v2228, 127
        %v2258 = vpop.permute.xlu0 %2257
        %2259 = vrot.lane.b32.xlu0 %v2229, 127
        %v2260 = vpop.permute.xlu0 %2259
        %2261 = vrot.lane.b32.xlu0 %v2230, 127
        %v2262 = vpop.permute.xlu0 %2261
        %2263 = vrot.lane.b32.xlu0 %v2231, 127
        %v2264 = vpop.permute.xlu0 %2263
        %2265 = vrot.lane.b32.xlu0 %v2232, 127
        %v2266 = vpop.permute.xlu0 %2265
        %2267 = vrot.lane.b32.xlu0 %v2233, 127
        %v2268 = vpop.permute.xlu0 %2267
        %2269 = vrot.lane.b32.xlu0 %v2234, 127
        %v2270 = vpop.permute.xlu0 %2269
        %v2271 = vsel %vm464, %v2248, %v2250
        %v2272 = vsel %vm464, %v2250, %v2252
        %v2273 = vsel %vm464, %v2252, %v2254
        %v2274 = vsel %vm464, %v2254, %v2256
        %v2275 = vsel %vm464, %v2256, %v2258
        %v2276 = vsel %vm464, %v2260, %v2262
        %v2277 = vsel %vm464, %v2262, %v2264
        %v2278 = vsel %vm464, %v2264, %v2266
        %v2279 = vsel %vm464, %v2266, %v2268
        %v2280 = vsel %vm464, %v2268, %v2270
        %v2291 = vadd.f32 %v2186, %v2271
        %v2292 = vadd.f32 %v2187, %v2272
        %v2293 = vadd.f32 %v2188, %v2273
        %v2294 = vadd.f32 %v2189, %v2274
        %v2295 = vadd.f32 %v2190, %v2275
        %v2296 = vadd.f32 %v2191, %v2276
        %v2297 = vadd.f32 %v2192, %v2277
        %v2298 = vadd.f32 %v2193, %v2278
        %v2299 = vadd.f32 %v2194, %v2279
        %v2300 = vadd.f32 %v2195, %v2280
        %s2301 = scalar_lea.vmem %s1, 352
        %v2302 = vld [vmem:[%s2301] sm:$0xff]
        %v2303 = vld [vmem:[%s2301 + $0x8] sm:$0xff]
        %2305 = vset.pattern.permute.xlu0 0
        %2306 = vperm.xlu0 %2305, %v2302
        %v2307 = vpop.permute.xlu0 %2306
        %2310 = vset.pattern.permute.xlu0 0
        %2311 = vperm.xlu0 %2310, %v2303
        %v2312 = vpop.permute.xlu0 %2311
        %v2314 = vmul.f32 %v2201, %v2307
        %v2315 = vmul.f32 %v2202, %v2307
        %v2316 = vmul.f32 %v2203, %v2307
        %v2317 = vmul.f32 %v2204, %v2307
        %v2318 = vmul.f32 %v2205, %v2307
        %v2319 = vmul.f32 %v2206, %v2307
        %v2320 = vmul.f32 %v2201, %v2312
        %v2321 = vmul.f32 %v2202, %v2312
        %v2322 = vmul.f32 %v2203, %v2312
        %v2323 = vmul.f32 %v2204, %v2312
        %v2324 = vmul.f32 %v2205, %v2312
        %v2325 = vmul.f32 %v2206, %v2312
        %2338 = vrot.lane.b32.xlu0 %v2314, 126
        %v2339 = vpop.permute.xlu0 %2338
        %2340 = vrot.lane.b32.xlu0 %v2315, 126
        %v2341 = vpop.permute.xlu0 %2340
        %2342 = vrot.lane.b32.xlu0 %v2316, 126
        %v2343 = vpop.permute.xlu0 %2342
        %2344 = vrot.lane.b32.xlu0 %v2317, 126
        %v2345 = vpop.permute.xlu0 %2344
        %2346 = vrot.lane.b32.xlu0 %v2318, 126
        %v2347 = vpop.permute.xlu0 %2346
        %2348 = vrot.lane.b32.xlu0 %v2319, 126
        %v2349 = vpop.permute.xlu0 %2348
        %2350 = vrot.lane.b32.xlu0 %v2320, 126
        %v2351 = vpop.permute.xlu0 %2350
        %2352 = vrot.lane.b32.xlu0 %v2321, 126
        %v2353 = vpop.permute.xlu0 %2352
        %2354 = vrot.lane.b32.xlu0 %v2322, 126
        %v2355 = vpop.permute.xlu0 %2354
        %2356 = vrot.lane.b32.xlu0 %v2323, 126
        %v2357 = vpop.permute.xlu0 %2356
        %2358 = vrot.lane.b32.xlu0 %v2324, 126
        %v2359 = vpop.permute.xlu0 %2358
        %2360 = vrot.lane.b32.xlu0 %v2325, 126
        %v2361 = vpop.permute.xlu0 %2360
        %v2362 = vsel %vm556, %v2339, %v2341
        %v2363 = vsel %vm556, %v2341, %v2343
        %v2364 = vsel %vm556, %v2343, %v2345
        %v2365 = vsel %vm556, %v2345, %v2347
        %v2366 = vsel %vm556, %v2347, %v2349
        %v2367 = vsel %vm556, %v2351, %v2353
        %v2368 = vsel %vm556, %v2353, %v2355
        %v2369 = vsel %vm556, %v2355, %v2357
        %v2370 = vsel %vm556, %v2357, %v2359
        %v2371 = vsel %vm556, %v2359, %v2361
        %v2382 = vadd.f32 %v2291, %v2362
        %v2383 = vadd.f32 %v2292, %v2363
        %v2384 = vadd.f32 %v2293, %v2364
        %v2385 = vadd.f32 %v2294, %v2365
        %v2386 = vadd.f32 %v2295, %v2366
        %v2387 = vadd.f32 %v2296, %v2367
        %v2388 = vadd.f32 %v2297, %v2368
        %v2389 = vadd.f32 %v2298, %v2369
        %v2390 = vadd.f32 %v2299, %v2370
        %v2391 = vadd.f32 %v2300, %v2371
        %s2392 = scalar_lea.vmem %s1, 368
        %v2393 = vld [vmem:[%s2392] sm:$0xff]
        %v2394 = vld [vmem:[%s2392 + $0x8] sm:$0xff]
        %2396 = vset.pattern.permute.xlu0 0
        %2397 = vperm.xlu0 %2396, %v2393
        %v2398 = vpop.permute.xlu0 %2397
        %2401 = vset.pattern.permute.xlu0 0
        %2402 = vperm.xlu0 %2401, %v2394
        %v2403 = vpop.permute.xlu0 %2402
        %v2405 = vmul.f32 %v2201, %v2398
        %v2406 = vmul.f32 %v2202, %v2398
        %v2407 = vmul.f32 %v2203, %v2398
        %v2408 = vmul.f32 %v2204, %v2398
        %v2409 = vmul.f32 %v2205, %v2398
        %v2410 = vmul.f32 %v2206, %v2398
        %v2411 = vmul.f32 %v2201, %v2403
        %v2412 = vmul.f32 %v2202, %v2403
        %v2413 = vmul.f32 %v2203, %v2403
        %v2414 = vmul.f32 %v2204, %v2403
        %v2415 = vmul.f32 %v2205, %v2403
        %v2416 = vmul.f32 %v2206, %v2403
        %2429 = vrot.lane.b32.xlu0 %v2405, 125
        %v2430 = vpop.permute.xlu0 %2429
        %2431 = vrot.lane.b32.xlu0 %v2406, 125
        %v2432 = vpop.permute.xlu0 %2431
        %2433 = vrot.lane.b32.xlu0 %v2407, 125
        %v2434 = vpop.permute.xlu0 %2433
        %2435 = vrot.lane.b32.xlu0 %v2408, 125
        %v2436 = vpop.permute.xlu0 %2435
        %2437 = vrot.lane.b32.xlu0 %v2409, 125
        %v2438 = vpop.permute.xlu0 %2437
        %2439 = vrot.lane.b32.xlu0 %v2410, 125
        %v2440 = vpop.permute.xlu0 %2439
        %2441 = vrot.lane.b32.xlu0 %v2411, 125
        %v2442 = vpop.permute.xlu0 %2441
        %2443 = vrot.lane.b32.xlu0 %v2412, 125
        %v2444 = vpop.permute.xlu0 %2443
        %2445 = vrot.lane.b32.xlu0 %v2413, 125
        %v2446 = vpop.permute.xlu0 %2445
        %2447 = vrot.lane.b32.xlu0 %v2414, 125
        %v2448 = vpop.permute.xlu0 %2447
        %2449 = vrot.lane.b32.xlu0 %v2415, 125
        %v2450 = vpop.permute.xlu0 %2449
        %2451 = vrot.lane.b32.xlu0 %v2416, 125
        %v2452 = vpop.permute.xlu0 %2451
        %v2453 = vsel %vm648, %v2430, %v2432
        %v2454 = vsel %vm648, %v2432, %v2434
        %v2455 = vsel %vm648, %v2434, %v2436
        %v2456 = vsel %vm648, %v2436, %v2438
        %v2457 = vsel %vm648, %v2438, %v2440
        %v2458 = vsel %vm648, %v2442, %v2444
        %v2459 = vsel %vm648, %v2444, %v2446
        %v2460 = vsel %vm648, %v2446, %v2448
        %v2461 = vsel %vm648, %v2448, %v2450
        %v2462 = vsel %vm648, %v2450, %v2452
        %v2473 = vadd.f32 %v2382, %v2453
        %v2474 = vadd.f32 %v2383, %v2454
        %v2475 = vadd.f32 %v2384, %v2455
        %v2476 = vadd.f32 %v2385, %v2456
        %v2477 = vadd.f32 %v2386, %v2457
        %v2478 = vadd.f32 %v2387, %v2458
        %v2479 = vadd.f32 %v2388, %v2459
        %v2480 = vadd.f32 %v2389, %v2460
        %v2481 = vadd.f32 %v2390, %v2461
        %v2482 = vadd.f32 %v2391, %v2462
        %s2483 = scalar_lea.vmem %s1, 384
        %v2484 = vld [vmem:[%s2483] sm:$0xff]
        %v2485 = vld [vmem:[%s2483 + $0x8] sm:$0xff]
        %2487 = vset.pattern.permute.xlu0 0
        %2488 = vperm.xlu0 %2487, %v2484
        %v2489 = vpop.permute.xlu0 %2488
        %2492 = vset.pattern.permute.xlu0 0
        %2493 = vperm.xlu0 %2492, %v2485
        %v2494 = vpop.permute.xlu0 %2493
        %v2496 = vmul.f32 %v2201, %v2489
        %v2497 = vmul.f32 %v2202, %v2489
        %v2498 = vmul.f32 %v2203, %v2489
        %v2499 = vmul.f32 %v2204, %v2489
        %v2500 = vmul.f32 %v2205, %v2489
        %v2501 = vmul.f32 %v2206, %v2489
        %v2502 = vmul.f32 %v2201, %v2494
        %v2503 = vmul.f32 %v2202, %v2494
        %v2504 = vmul.f32 %v2203, %v2494
        %v2505 = vmul.f32 %v2204, %v2494
        %v2506 = vmul.f32 %v2205, %v2494
        %v2507 = vmul.f32 %v2206, %v2494
        %2520 = vrot.lane.b32.xlu0 %v2496, 124
        %v2521 = vpop.permute.xlu0 %2520
        %2522 = vrot.lane.b32.xlu0 %v2497, 124
        %v2523 = vpop.permute.xlu0 %2522
        %2524 = vrot.lane.b32.xlu0 %v2498, 124
        %v2525 = vpop.permute.xlu0 %2524
        %2526 = vrot.lane.b32.xlu0 %v2499, 124
        %v2527 = vpop.permute.xlu0 %2526
        %2528 = vrot.lane.b32.xlu0 %v2500, 124
        %v2529 = vpop.permute.xlu0 %2528
        %2530 = vrot.lane.b32.xlu0 %v2501, 124
        %v2531 = vpop.permute.xlu0 %2530
        %2532 = vrot.lane.b32.xlu0 %v2502, 124
        %v2533 = vpop.permute.xlu0 %2532
        %2534 = vrot.lane.b32.xlu0 %v2503, 124
        %v2535 = vpop.permute.xlu0 %2534
        %2536 = vrot.lane.b32.xlu0 %v2504, 124
        %v2537 = vpop.permute.xlu0 %2536
        %2538 = vrot.lane.b32.xlu0 %v2505, 124
        %v2539 = vpop.permute.xlu0 %2538
        %2540 = vrot.lane.b32.xlu0 %v2506, 124
        %v2541 = vpop.permute.xlu0 %2540
        %2542 = vrot.lane.b32.xlu0 %v2507, 124
        %v2543 = vpop.permute.xlu0 %2542
        %v2544 = vsel %vm740, %v2521, %v2523
        %v2545 = vsel %vm740, %v2523, %v2525
        %v2546 = vsel %vm740, %v2525, %v2527
        %v2547 = vsel %vm740, %v2527, %v2529
        %v2548 = vsel %vm740, %v2529, %v2531
        %v2549 = vsel %vm740, %v2533, %v2535
        %v2550 = vsel %vm740, %v2535, %v2537
        %v2551 = vsel %vm740, %v2537, %v2539
        %v2552 = vsel %vm740, %v2539, %v2541
        %v2553 = vsel %vm740, %v2541, %v2543
        %v2564 = vadd.f32 %v2473, %v2544
        %v2565 = vadd.f32 %v2474, %v2545
        %v2566 = vadd.f32 %v2475, %v2546
        %v2567 = vadd.f32 %v2476, %v2547
        %v2568 = vadd.f32 %v2477, %v2548
        %v2569 = vadd.f32 %v2478, %v2549
        %v2570 = vadd.f32 %v2479, %v2550
        %v2571 = vadd.f32 %v2480, %v2551
        %v2572 = vadd.f32 %v2481, %v2552
        %v2573 = vadd.f32 %v2482, %v2553
        %v2574 = vld [vmem:[%s2] sm:$0xff]
        %v2575 = vld [vmem:[%s2 + $0x8] sm:$0xff]
        %2577 = vset.pattern.permute.xlu0 0
        %2578 = vperm.xlu0 %2577, %v2574
        %v2579 = vpop.permute.xlu0 %2578
        %2582 = vset.pattern.permute.xlu0 0
        %2583 = vperm.xlu0 %2582, %v2575
        %v2584 = vpop.permute.xlu0 %2583
        %v2586 = vadd.f32 %v2564, %v2579
        %v2587 = vadd.f32 %v2565, %v2579
        %v2588 = vadd.f32 %v2566, %v2579
        %v2589 = vadd.f32 %v2567, %v2579
        %v2590 = vadd.f32 %v2568, %v2579
        %v2591 = vadd.f32 %v2569, %v2584
        %v2592 = vadd.f32 %v2570, %v2584
        %v2593 = vadd.f32 %v2571, %v2584
        %v2594 = vadd.f32 %v2572, %v2584
        %v2595 = vadd.f32 %v2573, %v2584
        %v2596 = vmax.f32 %v2586, 0.0
        %v2597 = vmax.f32 %v2587, 0.0
        %v2598 = vmax.f32 %v2588, 0.0
        %v2599 = vmax.f32 %v2589, 0.0
        %v2600 = vmax.f32 %v2590, 0.0
        %v2601 = vmax.f32 %v2591, 0.0
        %v2602 = vmax.f32 %v2592, 0.0
        %v2603 = vmax.f32 %v2593, 0.0
        %v2604 = vmax.f32 %v2594, 0.0
        %v2605 = vmax.f32 %v2595, 0.0
        %2606 = vst [vmem:[#allocation2] sm:$0xff] %v2596
        %2607 = vst [vmem:[#allocation2 + $0x8] sm:$0xff] %v2597
        %2608 = vst [vmem:[#allocation2 + $0x10] sm:$0xff] %v2598
        %2609 = vst [vmem:[#allocation2 + $0x18] sm:$0xff] %v2599
        %2610 = vst [vmem:[#allocation2 + $0x20] sm:$0xff] %v2600
        %2611 = vst [vmem:[#allocation2 + $0x50] sm:$0xff] %v2601
        %2612 = vst [vmem:[#allocation2 + $0x58] sm:$0xff] %v2602
        %2613 = vst [vmem:[#allocation2 + $0x60] sm:$0xff] %v2603
        %2614 = vst [vmem:[#allocation2 + $0x68] sm:$0xff] %v2604
        %2615 = vst [vmem:[#allocation2 + $0x70] sm:$0xff] %v2605
        %v2616 = vld [vmem:[%s353 + $0x5] sm:$0x1f]
        %v2617 = vld [vmem:[%s1] sm:$0xff]
        %v2618 = vld [vmem:[%s1 + $0x8] sm:$0xff]
        %v2620 = vperm.slane %v2616, 0
        %v2621 = vperm.slane %v2616, 1
        %v2622 = vperm.slane %v2616, 2
        %v2623 = vperm.slane %v2616, 3
        %v2624 = vperm.slane %v2616, 4
        %2631 = vset.pattern.permute.xlu0 0
        %2632 = vperm.xlu0 %2631, %v2617
        %v2633 = vpop.permute.xlu0 %2632
        %2636 = vset.pattern.permute.xlu0 0
        %2637 = vperm.xlu0 %2636, %v2618
        %v2638 = vpop.permute.xlu0 %2637
        %v2640 = vmul.f32 %v2620, %v2633
        %v2641 = vmul.f32 %v2621, %v2633
        %v2642 = vmul.f32 %v2622, %v2633
        %v2643 = vmul.f32 %v2623, %v2633
        %v2644 = vmul.f32 %v2624, %v2633
        %v2645 = vmul.f32 %v2620, %v2638
        %v2646 = vmul.f32 %v2621, %v2638
        %v2647 = vmul.f32 %v2622, %v2638
        %v2648 = vmul.f32 %v2623, %v2638
        %v2649 = vmul.f32 %v2624, %v2638
        %v2650 = vld [vmem:[%s353 + $0x5] sm:$0x3f]
        %v2651 = vld [vmem:[%s390] sm:$0xff]
        %v2652 = vld [vmem:[%s390 + $0x8] sm:$0xff]
        %v2654 = vperm.slane %v2650, 0
        %v2655 = vperm.slane %v2650, 1
        %v2656 = vperm.slane %v2650, 2
        %v2657 = vperm.slane %v2650, 3
        %v2658 = vperm.slane %v2650, 4
        %v2659 = vperm.slane %v2650, 5
        %2667 = vset.pattern.permute.xlu0 0
        %2668 = vperm.xlu0 %2667, %v2651
        %v2669 = vpop.permute.xlu0 %2668
        %2672 = vset.pattern.permute.xlu0 0
        %2673 = vperm.xlu0 %2672, %v2652
        %v2674 = vpop.permute.xlu0 %2673
        %v2676 = vmul.f32 %v2654, %v2669
        %v2677 = vmul.f32 %v2655, %v2669
        %v2678 = vmul.f32 %v2656, %v2669
        %v2679 = vmul.f32 %v2657, %v2669
        %v2680 = vmul.f32 %v2658, %v2669
        %v2681 = vmul.f32 %v2659, %v2669
        %v2682 = vmul.f32 %v2654, %v2674
        %v2683 = vmul.f32 %v2655, %v2674
        %v2684 = vmul.f32 %v2656, %v2674
        %v2685 = vmul.f32 %v2657, %v2674
        %v2686 = vmul.f32 %v2658, %v2674
        %v2687 = vmul.f32 %v2659, %v2674
        %2700 = vrot.lane.b32.xlu0 %v2676, 127
        %v2701 = vpop.permute.xlu0 %2700
        %2702 = vrot.lane.b32.xlu0 %v2677, 127
        %v2703 = vpop.permute.xlu0 %2702
        %2704 = vrot.lane.b32.xlu0 %v2678, 127
        %v2705 = vpop.permute.xlu0 %2704
        %2706 = vrot.lane.b32.xlu0 %v2679, 127
        %v2707 = vpop.permute.xlu0 %2706
        %2708 = vrot.lane.b32.xlu0 %v2680, 127
        %v2709 = vpop.permute.xlu0 %2708
        %2710 = vrot.lane.b32.xlu0 %v2681, 127
        %v2711 = vpop.permute.xlu0 %2710
        %2712 = vrot.lane.b32.xlu0 %v2682, 127
        %v2713 = vpop.permute.xlu0 %2712
        %2714 = vrot.lane.b32.xlu0 %v2683, 127
        %v2715 = vpop.permute.xlu0 %2714
        %2716 = vrot.lane.b32.xlu0 %v2684, 127
        %v2717 = vpop.permute.xlu0 %2716
        %2718 = vrot.lane.b32.xlu0 %v2685, 127
        %v2719 = vpop.permute.xlu0 %2718
        %2720 = vrot.lane.b32.xlu0 %v2686, 127
        %v2721 = vpop.permute.xlu0 %2720
        %2722 = vrot.lane.b32.xlu0 %v2687, 127
        %v2723 = vpop.permute.xlu0 %2722
        %v2724 = vsel %vm464, %v2701, %v2703
        %v2725 = vsel %vm464, %v2703, %v2705
        %v2726 = vsel %vm464, %v2705, %v2707
        %v2727 = vsel %vm464, %v2707, %v2709
        %v2728 = vsel %vm464, %v2709, %v2711
        %v2729 = vsel %vm464, %v2713, %v2715
        %v2730 = vsel %vm464, %v2715, %v2717
        %v2731 = vsel %vm464, %v2717, %v2719
        %v2732 = vsel %vm464, %v2719, %v2721
        %v2733 = vsel %vm464, %v2721, %v2723
        %v2744 = vadd.f32 %v2640, %v2724
        %v2745 = vadd.f32 %v2641, %v2725
        %v2746 = vadd.f32 %v2642, %v2726
        %v2747 = vadd.f32 %v2643, %v2727
        %v2748 = vadd.f32 %v2644, %v2728
        %v2749 = vadd.f32 %v2645, %v2729
        %v2750 = vadd.f32 %v2646, %v2730
        %v2751 = vadd.f32 %v2647, %v2731
        %v2752 = vadd.f32 %v2648, %v2732
        %v2753 = vadd.f32 %v2649, %v2733
        %v2754 = vld [vmem:[%s495] sm:$0xff]
        %v2755 = vld [vmem:[%s495 + $0x8] sm:$0xff]
        %2757 = vset.pattern.permute.xlu0 0
        %2758 = vperm.xlu0 %2757, %v2754
        %v2759 = vpop.permute.xlu0 %2758
        %2762 = vset.pattern.permute.xlu0 0
        %2763 = vperm.xlu0 %2762, %v2755
        %v2764 = vpop.permute.xlu0 %2763
        %v2766 = vmul.f32 %v2654, %v2759
        %v2767 = vmul.f32 %v2655, %v2759
        %v2768 = vmul.f32 %v2656, %v2759
        %v2769 = vmul.f32 %v2657, %v2759
        %v2770 = vmul.f32 %v2658, %v2759
        %v2771 = vmul.f32 %v2659, %v2759
        %v2772 = vmul.f32 %v2654, %v2764
        %v2773 = vmul.f32 %v2655, %v2764
        %v2774 = vmul.f32 %v2656, %v2764
        %v2775 = vmul.f32 %v2657, %v2764
        %v2776 = vmul.f32 %v2658, %v2764
        %v2777 = vmul.f32 %v2659, %v2764
        %2790 = vrot.lane.b32.xlu0 %v2766, 126
        %v2791 = vpop.permute.xlu0 %2790
        %2792 = vrot.lane.b32.xlu0 %v2767, 126
        %v2793 = vpop.permute.xlu0 %2792
        %2794 = vrot.lane.b32.xlu0 %v2768, 126
        %v2795 = vpop.permute.xlu0 %2794
        %2796 = vrot.lane.b32.xlu0 %v2769, 126
        %v2797 = vpop.permute.xlu0 %2796
        %2798 = vrot.lane.b32.xlu0 %v2770, 126
        %v2799 = vpop.permute.xlu0 %2798
        %2800 = vrot.lane.b32.xlu0 %v2771, 126
        %v2801 = vpop.permute.xlu0 %2800
        %2802 = vrot.lane.b32.xlu0 %v2772, 126
        %v2803 = vpop.permute.xlu0 %2802
        %2804 = vrot.lane.b32.xlu0 %v2773, 126
        %v2805 = vpop.permute.xlu0 %2804
        %2806 = vrot.lane.b32.xlu0 %v2774, 126
        %v2807 = vpop.permute.xlu0 %2806
        %2808 = vrot.lane.b32.xlu0 %v2775, 126
        %v2809 = vpop.permute.xlu0 %2808
        %2810 = vrot.lane.b32.xlu0 %v2776, 126
        %v2811 = vpop.permute.xlu0 %2810
        %2812 = vrot.lane.b32.xlu0 %v2777, 126
        %v2813 = vpop.permute.xlu0 %2812
        %v2814 = vsel %vm556, %v2791, %v2793
        %v2815 = vsel %vm556, %v2793, %v2795
        %v2816 = vsel %vm556, %v2795, %v2797
        %v2817 = vsel %vm556, %v2797, %v2799
        %v2818 = vsel %vm556, %v2799, %v2801
        %v2819 = vsel %vm556, %v2803, %v2805
        %v2820 = vsel %vm556, %v2805, %v2807
        %v2821 = vsel %vm556, %v2807, %v2809
        %v2822 = vsel %vm556, %v2809, %v2811
        %v2823 = vsel %vm556, %v2811, %v2813
        %v2834 = vadd.f32 %v2744, %v2814
        %v2835 = vadd.f32 %v2745, %v2815
        %v2836 = vadd.f32 %v2746, %v2816
        %v2837 = vadd.f32 %v2747, %v2817
        %v2838 = vadd.f32 %v2748, %v2818
        %v2839 = vadd.f32 %v2749, %v2819
        %v2840 = vadd.f32 %v2750, %v2820
        %v2841 = vadd.f32 %v2751, %v2821
        %v2842 = vadd.f32 %v2752, %v2822
        %v2843 = vadd.f32 %v2753, %v2823
        %v2844 = vld [vmem:[%s587] sm:$0xff]
        %v2845 = vld [vmem:[%s587 + $0x8] sm:$0xff]
        %2847 = vset.pattern.permute.xlu0 0
        %2848 = vperm.xlu0 %2847, %v2844
        %v2849 = vpop.permute.xlu0 %2848
        %2852 = vset.pattern.permute.xlu0 0
        %2853 = vperm.xlu0 %2852, %v2845
        %v2854 = vpop.permute.xlu0 %2853
        %v2856 = vmul.f32 %v2654, %v2849
        %v2857 = vmul.f32 %v2655, %v2849
        %v2858 = vmul.f32 %v2656, %v2849
        %v2859 = vmul.f32 %v2657, %v2849
        %v2860 = vmul.f32 %v2658, %v2849
        %v2861 = vmul.f32 %v2659, %v2849
        %v2862 = vmul.f32 %v2654, %v2854
        %v2863 = vmul.f32 %v2655, %v2854
        %v2864 = vmul.f32 %v2656, %v2854
        %v2865 = vmul.f32 %v2657, %v2854
        %v2866 = vmul.f32 %v2658, %v2854
        %v2867 = vmul.f32 %v2659, %v2854
        %2880 = vrot.lane.b32.xlu0 %v2856, 125
        %v2881 = vpop.permute.xlu0 %2880
        %2882 = vrot.lane.b32.xlu0 %v2857, 125
        %v2883 = vpop.permute.xlu0 %2882
        %2884 = vrot.lane.b32.xlu0 %v2858, 125
        %v2885 = vpop.permute.xlu0 %2884
        %2886 = vrot.lane.b32.xlu0 %v2859, 125
        %v2887 = vpop.permute.xlu0 %2886
        %2888 = vrot.lane.b32.xlu0 %v2860, 125
        %v2889 = vpop.permute.xlu0 %2888
        %2890 = vrot.lane.b32.xlu0 %v2861, 125
        %v2891 = vpop.permute.xlu0 %2890
        %2892 = vrot.lane.b32.xlu0 %v2862, 125
        %v2893 = vpop.permute.xlu0 %2892
        %2894 = vrot.lane.b32.xlu0 %v2863, 125
        %v2895 = vpop.permute.xlu0 %2894
        %2896 = vrot.lane.b32.xlu0 %v2864, 125
        %v2897 = vpop.permute.xlu0 %2896
        %2898 = vrot.lane.b32.xlu0 %v2865, 125
        %v2899 = vpop.permute.xlu0 %2898
        %2900 = vrot.lane.b32.xlu0 %v2866, 125
        %v2901 = vpop.permute.xlu0 %2900
        %2902 = vrot.lane.b32.xlu0 %v2867, 125
        %v2903 = vpop.permute.xlu0 %2902
        %v2904 = vsel %vm648, %v2881, %v2883
        %v2905 = vsel %vm648, %v2883, %v2885
        %v2906 = vsel %vm648, %v2885, %v2887
        %v2907 = vsel %vm648, %v2887, %v2889
        %v2908 = vsel %vm648, %v2889, %v2891
        %v2909 = vsel %vm648, %v2893, %v2895
        %v2910 = vsel %vm648, %v2895, %v2897
        %v2911 = vsel %vm648, %v2897, %v2899
        %v2912 = vsel %vm648, %v2899, %v2901
        %v2913 = vsel %vm648, %v2901, %v2903
        %v2924 = vadd.f32 %v2834, %v2904
        %v2925 = vadd.f32 %v2835, %v2905
        %v2926 = vadd.f32 %v2836, %v2906
        %v2927 = vadd.f32 %v2837, %v2907
        %v2928 = vadd.f32 %v2838, %v2908
        %v2929 = vadd.f32 %v2839, %v2909
        %v2930 = vadd.f32 %v2840, %v2910
        %v2931 = vadd.f32 %v2841, %v2911
        %v2932 = vadd.f32 %v2842, %v2912
        %v2933 = vadd.f32 %v2843, %v2913
        %v2934 = vld [vmem:[%s679] sm:$0xff]
        %v2935 = vld [vmem:[%s679 + $0x8] sm:$0xff]
        %2937 = vset.pattern.permute.xlu0 0
        %2938 = vperm.xlu0 %2937, %v2934
        %v2939 = vpop.permute.xlu0 %2938
        %2942 = vset.pattern.permute.xlu0 0
        %2943 = vperm.xlu0 %2942, %v2935
        %v2944 = vpop.permute.xlu0 %2943
        %v2946 = vmul.f32 %v2654, %v2939
        %v2947 = vmul.f32 %v2655, %v2939
        %v2948 = vmul.f32 %v2656, %v2939
        %v2949 = vmul.f32 %v2657, %v2939
        %v2950 = vmul.f32 %v2658, %v2939
        %v2951 = vmul.f32 %v2659, %v2939
        %v2952 = vmul.f32 %v2654, %v2944
        %v2953 = vmul.f32 %v2655, %v2944
        %v2954 = vmul.f32 %v2656, %v2944
        %v2955 = vmul.f32 %v2657, %v2944
        %v2956 = vmul.f32 %v2658, %v2944
        %v2957 = vmul.f32 %v2659, %v2944
        %2970 = vrot.lane.b32.xlu0 %v2946, 124
        %v2971 = vpop.permute.xlu0 %2970
        %2972 = vrot.lane.b32.xlu0 %v2947, 124
        %v2973 = vpop.permute.xlu0 %2972
        %2974 = vrot.lane.b32.xlu0 %v2948, 124
        %v2975 = vpop.permute.xlu0 %2974
        %2976 = vrot.lane.b32.xlu0 %v2949, 124
        %v2977 = vpop.permute.xlu0 %2976
        %2978 = vrot.lane.b32.xlu0 %v2950, 124
        %v2979 = vpop.permute.xlu0 %2978
        %2980 = vrot.lane.b32.xlu0 %v2951, 124
        %v2981 = vpop.permute.xlu0 %2980
        %2982 = vrot.lane.b32.xlu0 %v2952, 124
        %v2983 = vpop.permute.xlu0 %2982
        %2984 = vrot.lane.b32.xlu0 %v2953, 124
        %v2985 = vpop.permute.xlu0 %2984
        %2986 = vrot.lane.b32.xlu0 %v2954, 124
        %v2987 = vpop.permute.xlu0 %2986
        %2988 = vrot.lane.b32.xlu0 %v2955, 124
        %v2989 = vpop.permute.xlu0 %2988
        %2990 = vrot.lane.b32.xlu0 %v2956, 124
        %v2991 = vpop.permute.xlu0 %2990
        %2992 = vrot.lane.b32.xlu0 %v2957, 124
        %v2993 = vpop.permute.xlu0 %2992
        %v2994 = vsel %vm740, %v2971, %v2973
        %v2995 = vsel %vm740, %v2973, %v2975
        %v2996 = vsel %vm740, %v2975, %v2977
        %v2997 = vsel %vm740, %v2977, %v2979
        %v2998 = vsel %vm740, %v2979, %v2981
        %v2999 = vsel %vm740, %v2983, %v2985
        %v3000 = vsel %vm740, %v2985, %v2987
        %v3001 = vsel %vm740, %v2987, %v2989
        %v3002 = vsel %vm740, %v2989, %v2991
        %v3003 = vsel %vm740, %v2991, %v2993
        %v3014 = vadd.f32 %v2924, %v2994
        %v3015 = vadd.f32 %v2925, %v2995
        %v3016 = vadd.f32 %v2926, %v2996
        %v3017 = vadd.f32 %v2927, %v2997
        %v3018 = vadd.f32 %v2928, %v2998
        %v3019 = vadd.f32 %v2929, %v2999
        %v3020 = vadd.f32 %v2930, %v3000
        %v3021 = vadd.f32 %v2931, %v3001
        %v3022 = vadd.f32 %v2932, %v3002
        %v3023 = vadd.f32 %v2933, %v3003
        %v3024 = vld [vmem:[%s771] sm:$0xff]
        %v3025 = vld [vmem:[%s771 + $0x8] sm:$0xff]
        %3027 = vset.pattern.permute.xlu0 0
        %3028 = vperm.xlu0 %3027, %v3024
        %v3029 = vpop.permute.xlu0 %3028
        %3032 = vset.pattern.permute.xlu0 0
        %3033 = vperm.xlu0 %3032, %v3025
        %v3034 = vpop.permute.xlu0 %3033
        %v3036 = vmul.f32 %v2654, %v3029
        %v3037 = vmul.f32 %v2655, %v3029
        %v3038 = vmul.f32 %v2656, %v3029
        %v3039 = vmul.f32 %v2657, %v3029
        %v3040 = vmul.f32 %v2658, %v3029
        %v3041 = vmul.f32 %v2659, %v3029
        %v3042 = vmul.f32 %v2654, %v3034
        %v3043 = vmul.f32 %v2655, %v3034
        %v3044 = vmul.f32 %v2656, %v3034
        %v3045 = vmul.f32 %v2657, %v3034
        %v3046 = vmul.f32 %v2658, %v3034
        %v3047 = vmul.f32 %v2659, %v3034
        %3060 = vrot.lane.b32.xlu0 %v3036, 96
        %v3061 = vpop.permute.xlu0 %3060
        %3062 = vrot.lane.b32.xlu0 %v3037, 96
        %v3063 = vpop.permute.xlu0 %3062
        %3064 = vrot.lane.b32.xlu0 %v3038, 96
        %v3065 = vpop.permute.xlu0 %3064
        %3066 = vrot.lane.b32.xlu0 %v3039, 96
        %v3067 = vpop.permute.xlu0 %3066
        %3068 = vrot.lane.b32.xlu0 %v3040, 96
        %v3069 = vpop.permute.xlu0 %3068
        %3070 = vrot.lane.b32.xlu0 %v3041, 96
        %v3071 = vpop.permute.xlu0 %3070
        %3072 = vrot.lane.b32.xlu0 %v3042, 96
        %v3073 = vpop.permute.xlu0 %3072
        %3074 = vrot.lane.b32.xlu0 %v3043, 96
        %v3075 = vpop.permute.xlu0 %3074
        %3076 = vrot.lane.b32.xlu0 %v3044, 96
        %v3077 = vpop.permute.xlu0 %3076
        %3078 = vrot.lane.b32.xlu0 %v3045, 96
        %v3079 = vpop.permute.xlu0 %3078
        %3080 = vrot.lane.b32.xlu0 %v3046, 96
        %v3081 = vpop.permute.xlu0 %3080
        %3082 = vrot.lane.b32.xlu0 %v3047, 96
        %v3083 = vpop.permute.xlu0 %3082
        %v3084 = vsel %vm832, %v3061, %v3063
        %v3085 = vsel %vm832, %v3063, %v3065
        %v3086 = vsel %vm832, %v3065, %v3067
        %v3087 = vsel %vm832, %v3067, %v3069
        %v3088 = vsel %vm832, %v3069, %v3071
        %v3089 = vsel %vm832, %v3073, %v3075
        %v3090 = vsel %vm832, %v3075, %v3077
        %v3091 = vsel %vm832, %v3077, %v3079
        %v3092 = vsel %vm832, %v3079, %v3081
        %v3093 = vsel %vm832, %v3081, %v3083
        %v3104 = vadd.f32 %v3014, %v3084
        %v3105 = vadd.f32 %v3015, %v3085
        %v3106 = vadd.f32 %v3016, %v3086
        %v3107 = vadd.f32 %v3017, %v3087
        %v3108 = vadd.f32 %v3018, %v3088
        %v3109 = vadd.f32 %v3019, %v3089
        %v3110 = vadd.f32 %v3020, %v3090
        %v3111 = vadd.f32 %v3021, %v3091
        %v3112 = vadd.f32 %v3022, %v3092
        %v3113 = vadd.f32 %v3023, %v3093
        %v3114 = vld [vmem:[%s863] sm:$0xff]
        %v3115 = vld [vmem:[%s863 + $0x8] sm:$0xff]
        %3117 = vset.pattern.permute.xlu0 0
        %3118 = vperm.xlu0 %3117, %v3114
        %v3119 = vpop.permute.xlu0 %3118
        %3122 = vset.pattern.permute.xlu0 0
        %3123 = vperm.xlu0 %3122, %v3115
        %v3124 = vpop.permute.xlu0 %3123
        %v3126 = vmul.f32 %v2654, %v3119
        %v3127 = vmul.f32 %v2655, %v3119
        %v3128 = vmul.f32 %v2656, %v3119
        %v3129 = vmul.f32 %v2657, %v3119
        %v3130 = vmul.f32 %v2658, %v3119
        %v3131 = vmul.f32 %v2659, %v3119
        %v3132 = vmul.f32 %v2654, %v3124
        %v3133 = vmul.f32 %v2655, %v3124
        %v3134 = vmul.f32 %v2656, %v3124
        %v3135 = vmul.f32 %v2657, %v3124
        %v3136 = vmul.f32 %v2658, %v3124
        %v3137 = vmul.f32 %v2659, %v3124
        %3150 = vrot.lane.b32.xlu0 %v3126, 95
        %v3151 = vpop.permute.xlu0 %3150
        %3152 = vrot.lane.b32.xlu0 %v3127, 95
        %v3153 = vpop.permute.xlu0 %3152
        %3154 = vrot.lane.b32.xlu0 %v3128, 95
        %v3155 = vpop.permute.xlu0 %3154
        %3156 = vrot.lane.b32.xlu0 %v3129, 95
        %v3157 = vpop.permute.xlu0 %3156
        %3158 = vrot.lane.b32.xlu0 %v3130, 95
        %v3159 = vpop.permute.xlu0 %3158
        %3160 = vrot.lane.b32.xlu0 %v3131, 95
        %v3161 = vpop.permute.xlu0 %3160
        %3162 = vrot.lane.b32.xlu0 %v3132, 95
        %v3163 = vpop.permute.xlu0 %3162
        %3164 = vrot.lane.b32.xlu0 %v3133, 95
        %v3165 = vpop.permute.xlu0 %3164
        %3166 = vrot.lane.b32.xlu0 %v3134, 95
        %v3167 = vpop.permute.xlu0 %3166
        %3168 = vrot.lane.b32.xlu0 %v3135, 95
        %v3169 = vpop.permute.xlu0 %3168
        %3170 = vrot.lane.b32.xlu0 %v3136, 95
        %v3171 = vpop.permute.xlu0 %3170
        %3172 = vrot.lane.b32.xlu0 %v3137, 95
        %v3173 = vpop.permute.xlu0 %3172
        %v3174 = vsel %vm924, %v3151, %v3153
        %v3175 = vsel %vm924, %v3153, %v3155
        %v3176 = vsel %vm924, %v3155, %v3157
        %v3177 = vsel %vm924, %v3157, %v3159
        %v3178 = vsel %vm924, %v3159, %v3161
        %v3179 = vsel %vm924, %v3163, %v3165
        %v3180 = vsel %vm924, %v3165, %v3167
        %v3181 = vsel %vm924, %v3167, %v3169
        %v3182 = vsel %vm924, %v3169, %v3171
        %v3183 = vsel %vm924, %v3171, %v3173
        %v3194 = vadd.f32 %v3104, %v3174
        %v3195 = vadd.f32 %v3105, %v3175
        %v3196 = vadd.f32 %v3106, %v3176
        %v3197 = vadd.f32 %v3107, %v3177
        %v3198 = vadd.f32 %v3108, %v3178
        %v3199 = vadd.f32 %v3109, %v3179
        %v3200 = vadd.f32 %v3110, %v3180
        %v3201 = vadd.f32 %v3111, %v3181
        %v3202 = vadd.f32 %v3112, %v3182
        %v3203 = vadd.f32 %v3113, %v3183
        %v3204 = vld [vmem:[%s955] sm:$0xff]
        %v3205 = vld [vmem:[%s955 + $0x8] sm:$0xff]
        %3207 = vset.pattern.permute.xlu0 0
        %3208 = vperm.xlu0 %3207, %v3204
        %v3209 = vpop.permute.xlu0 %3208
        %3212 = vset.pattern.permute.xlu0 0
        %3213 = vperm.xlu0 %3212, %v3205
        %v3214 = vpop.permute.xlu0 %3213
        %v3216 = vmul.f32 %v2654, %v3209
        %v3217 = vmul.f32 %v2655, %v3209
        %v3218 = vmul.f32 %v2656, %v3209
        %v3219 = vmul.f32 %v2657, %v3209
        %v3220 = vmul.f32 %v2658, %v3209
        %v3221 = vmul.f32 %v2659, %v3209
        %v3222 = vmul.f32 %v2654, %v3214
        %v3223 = vmul.f32 %v2655, %v3214
        %v3224 = vmul.f32 %v2656, %v3214
        %v3225 = vmul.f32 %v2657, %v3214
        %v3226 = vmul.f32 %v2658, %v3214
        %v3227 = vmul.f32 %v2659, %v3214
        %3240 = vrot.lane.b32.xlu0 %v3216, 94
        %v3241 = vpop.permute.xlu0 %3240
        %3242 = vrot.lane.b32.xlu0 %v3217, 94
        %v3243 = vpop.permute.xlu0 %3242
        %3244 = vrot.lane.b32.xlu0 %v3218, 94
        %v3245 = vpop.permute.xlu0 %3244
        %3246 = vrot.lane.b32.xlu0 %v3219, 94
        %v3247 = vpop.permute.xlu0 %3246
        %3248 = vrot.lane.b32.xlu0 %v3220, 94
        %v3249 = vpop.permute.xlu0 %3248
        %3250 = vrot.lane.b32.xlu0 %v3221, 94
        %v3251 = vpop.permute.xlu0 %3250
        %3252 = vrot.lane.b32.xlu0 %v3222, 94
        %v3253 = vpop.permute.xlu0 %3252
        %3254 = vrot.lane.b32.xlu0 %v3223, 94
        %v3255 = vpop.permute.xlu0 %3254
        %3256 = vrot.lane.b32.xlu0 %v3224, 94
        %v3257 = vpop.permute.xlu0 %3256
        %3258 = vrot.lane.b32.xlu0 %v3225, 94
        %v3259 = vpop.permute.xlu0 %3258
        %3260 = vrot.lane.b32.xlu0 %v3226, 94
        %v3261 = vpop.permute.xlu0 %3260
        %3262 = vrot.lane.b32.xlu0 %v3227, 94
        %v3263 = vpop.permute.xlu0 %3262
        %v3264 = vsel %vm1016, %v3241, %v3243
        %v3265 = vsel %vm1016, %v3243, %v3245
        %v3266 = vsel %vm1016, %v3245, %v3247
        %v3267 = vsel %vm1016, %v3247, %v3249
        %v3268 = vsel %vm1016, %v3249, %v3251
        %v3269 = vsel %vm1016, %v3253, %v3255
        %v3270 = vsel %vm1016, %v3255, %v3257
        %v3271 = vsel %vm1016, %v3257, %v3259
        %v3272 = vsel %vm1016, %v3259, %v3261
        %v3273 = vsel %vm1016, %v3261, %v3263
        %v3284 = vadd.f32 %v3194, %v3264
        %v3285 = vadd.f32 %v3195, %v3265
        %v3286 = vadd.f32 %v3196, %v3266
        %v3287 = vadd.f32 %v3197, %v3267
        %v3288 = vadd.f32 %v3198, %v3268
        %v3289 = vadd.f32 %v3199, %v3269
        %v3290 = vadd.f32 %v3200, %v3270
        %v3291 = vadd.f32 %v3201, %v3271
        %v3292 = vadd.f32 %v3202, %v3272
        %v3293 = vadd.f32 %v3203, %v3273
        %v3294 = vld [vmem:[%s1047] sm:$0xff]
        %v3295 = vld [vmem:[%s1047 + $0x8] sm:$0xff]
        %3297 = vset.pattern.permute.xlu0 0
        %3298 = vperm.xlu0 %3297, %v3294
        %v3299 = vpop.permute.xlu0 %3298
        %3302 = vset.pattern.permute.xlu0 0
        %3303 = vperm.xlu0 %3302, %v3295
        %v3304 = vpop.permute.xlu0 %3303
        %v3306 = vmul.f32 %v2654, %v3299
        %v3307 = vmul.f32 %v2655, %v3299
        %v3308 = vmul.f32 %v2656, %v3299
        %v3309 = vmul.f32 %v2657, %v3299
        %v3310 = vmul.f32 %v2658, %v3299
        %v3311 = vmul.f32 %v2659, %v3299
        %v3312 = vmul.f32 %v2654, %v3304
        %v3313 = vmul.f32 %v2655, %v3304
        %v3314 = vmul.f32 %v2656, %v3304
        %v3315 = vmul.f32 %v2657, %v3304
        %v3316 = vmul.f32 %v2658, %v3304
        %v3317 = vmul.f32 %v2659, %v3304
        %3330 = vrot.lane.b32.xlu0 %v3306, 93
        %v3331 = vpop.permute.xlu0 %3330
        %3332 = vrot.lane.b32.xlu0 %v3307, 93
        %v3333 = vpop.permute.xlu0 %3332
        %3334 = vrot.lane.b32.xlu0 %v3308, 93
        %v3335 = vpop.permute.xlu0 %3334
        %3336 = vrot.lane.b32.xlu0 %v3309, 93
        %v3337 = vpop.permute.xlu0 %3336
        %3338 = vrot.lane.b32.xlu0 %v3310, 93
        %v3339 = vpop.permute.xlu0 %3338
        %3340 = vrot.lane.b32.xlu0 %v3311, 93
        %v3341 = vpop.permute.xlu0 %3340
        %3342 = vrot.lane.b32.xlu0 %v3312, 93
        %v3343 = vpop.permute.xlu0 %3342
        %3344 = vrot.lane.b32.xlu0 %v3313, 93
        %v3345 = vpop.permute.xlu0 %3344
        %3346 = vrot.lane.b32.xlu0 %v3314, 93
        %v3347 = vpop.permute.xlu0 %3346
        %3348 = vrot.lane.b32.xlu0 %v3315, 93
        %v3349 = vpop.permute.xlu0 %3348
        %3350 = vrot.lane.b32.xlu0 %v3316, 93
        %v3351 = vpop.permute.xlu0 %3350
        %3352 = vrot.lane.b32.xlu0 %v3317, 93
        %v3353 = vpop.permute.xlu0 %3352
        %v3354 = vsel %vm1108, %v3331, %v3333
        %v3355 = vsel %vm1108, %v3333, %v3335
        %v3356 = vsel %vm1108, %v3335, %v3337
        %v3357 = vsel %vm1108, %v3337, %v3339
        %v3358 = vsel %vm1108, %v3339, %v3341
        %v3359 = vsel %vm1108, %v3343, %v3345
        %v3360 = vsel %vm1108, %v3345, %v3347
        %v3361 = vsel %vm1108, %v3347, %v3349
        %v3362 = vsel %vm1108, %v3349, %v3351
        %v3363 = vsel %vm1108, %v3351, %v3353
        %v3374 = vadd.f32 %v3284, %v3354
        %v3375 = vadd.f32 %v3285, %v3355
        %v3376 = vadd.f32 %v3286, %v3356
        %v3377 = vadd.f32 %v3287, %v3357
        %v3378 = vadd.f32 %v3288, %v3358
        %v3379 = vadd.f32 %v3289, %v3359
        %v3380 = vadd.f32 %v3290, %v3360
        %v3381 = vadd.f32 %v3291, %v3361
        %v3382 = vadd.f32 %v3292, %v3362
        %v3383 = vadd.f32 %v3293, %v3363
        %v3384 = vld [vmem:[%s1139] sm:$0xff]
        %v3385 = vld [vmem:[%s1139 + $0x8] sm:$0xff]
        %3387 = vset.pattern.permute.xlu0 0
        %3388 = vperm.xlu0 %3387, %v3384
        %v3389 = vpop.permute.xlu0 %3388
        %3392 = vset.pattern.permute.xlu0 0
        %3393 = vperm.xlu0 %3392, %v3385
        %v3394 = vpop.permute.xlu0 %3393
        %v3396 = vmul.f32 %v2654, %v3389
        %v3397 = vmul.f32 %v2655, %v3389
        %v3398 = vmul.f32 %v2656, %v3389
        %v3399 = vmul.f32 %v2657, %v3389
        %v3400 = vmul.f32 %v2658, %v3389
        %v3401 = vmul.f32 %v2659, %v3389
        %v3402 = vmul.f32 %v2654, %v3394
        %v3403 = vmul.f32 %v2655, %v3394
        %v3404 = vmul.f32 %v2656, %v3394
        %v3405 = vmul.f32 %v2657, %v3394
        %v3406 = vmul.f32 %v2658, %v3394
        %v3407 = vmul.f32 %v2659, %v3394
        %3420 = vrot.lane.b32.xlu0 %v3396, 92
        %v3421 = vpop.permute.xlu0 %3420
        %3422 = vrot.lane.b32.xlu0 %v3397, 92
        %v3423 = vpop.permute.xlu0 %3422
        %3424 = vrot.lane.b32.xlu0 %v3398, 92
        %v3425 = vpop.permute.xlu0 %3424
        %3426 = vrot.lane.b32.xlu0 %v3399, 92
        %v3427 = vpop.permute.xlu0 %3426
        %3428 = vrot.lane.b32.xlu0 %v3400, 92
        %v3429 = vpop.permute.xlu0 %3428
        %3430 = vrot.lane.b32.xlu0 %v3401, 92
        %v3431 = vpop.permute.xlu0 %3430
        %3432 = vrot.lane.b32.xlu0 %v3402, 92
        %v3433 = vpop.permute.xlu0 %3432
        %3434 = vrot.lane.b32.xlu0 %v3403, 92
        %v3435 = vpop.permute.xlu0 %3434
        %3436 = vrot.lane.b32.xlu0 %v3404, 92
        %v3437 = vpop.permute.xlu0 %3436
        %3438 = vrot.lane.b32.xlu0 %v3405, 92
        %v3439 = vpop.permute.xlu0 %3438
        %3440 = vrot.lane.b32.xlu0 %v3406, 92
        %v3441 = vpop.permute.xlu0 %3440
        %3442 = vrot.lane.b32.xlu0 %v3407, 92
        %v3443 = vpop.permute.xlu0 %3442
        %v3444 = vsel %vm1200, %v3421, %v3423
        %v3445 = vsel %vm1200, %v3423, %v3425
        %v3446 = vsel %vm1200, %v3425, %v3427
        %v3447 = vsel %vm1200, %v3427, %v3429
        %v3448 = vsel %vm1200, %v3429, %v3431
        %v3449 = vsel %vm1200, %v3433, %v3435
        %v3450 = vsel %vm1200, %v3435, %v3437
        %v3451 = vsel %vm1200, %v3437, %v3439
        %v3452 = vsel %vm1200, %v3439, %v3441
        %v3453 = vsel %vm1200, %v3441, %v3443
        %v3464 = vadd.f32 %v3374, %v3444
        %v3465 = vadd.f32 %v3375, %v3445
        %v3466 = vadd.f32 %v3376, %v3446
        %v3467 = vadd.f32 %v3377, %v3447
        %v3468 = vadd.f32 %v3378, %v3448
        %v3469 = vadd.f32 %v3379, %v3449
        %v3470 = vadd.f32 %v3380, %v3450
        %v3471 = vadd.f32 %v3381, %v3451
        %v3472 = vadd.f32 %v3382, %v3452
        %v3473 = vadd.f32 %v3383, %v3453
        %v3474 = vld [vmem:[%s1231] sm:$0xff]
        %v3475 = vld [vmem:[%s1231 + $0x8] sm:$0xff]
        %3477 = vset.pattern.permute.xlu0 0
        %3478 = vperm.xlu0 %3477, %v3474
        %v3479 = vpop.permute.xlu0 %3478
        %3482 = vset.pattern.permute.xlu0 0
        %3483 = vperm.xlu0 %3482, %v3475
        %v3484 = vpop.permute.xlu0 %3483
        %v3486 = vmul.f32 %v2654, %v3479
        %v3487 = vmul.f32 %v2655, %v3479
        %v3488 = vmul.f32 %v2656, %v3479
        %v3489 = vmul.f32 %v2657, %v3479
        %v3490 = vmul.f32 %v2658, %v3479
        %v3491 = vmul.f32 %v2659, %v3479
        %v3492 = vmul.f32 %v2654, %v3484
        %v3493 = vmul.f32 %v2655, %v3484
        %v3494 = vmul.f32 %v2656, %v3484
        %v3495 = vmul.f32 %v2657, %v3484
        %v3496 = vmul.f32 %v2658, %v3484
        %v3497 = vmul.f32 %v2659, %v3484
        %3510 = vrot.lane.b32.xlu0 %v3486, 64
        %v3511 = vpop.permute.xlu0 %3510
        %3512 = vrot.lane.b32.xlu0 %v3487, 64
        %v3513 = vpop.permute.xlu0 %3512
        %3514 = vrot.lane.b32.xlu0 %v3488, 64
        %v3515 = vpop.permute.xlu0 %3514
        %3516 = vrot.lane.b32.xlu0 %v3489, 64
        %v3517 = vpop.permute.xlu0 %3516
        %3518 = vrot.lane.b32.xlu0 %v3490, 64
        %v3519 = vpop.permute.xlu0 %3518
        %3520 = vrot.lane.b32.xlu0 %v3491, 64
        %v3521 = vpop.permute.xlu0 %3520
        %3522 = vrot.lane.b32.xlu0 %v3492, 64
        %v3523 = vpop.permute.xlu0 %3522
        %3524 = vrot.lane.b32.xlu0 %v3493, 64
        %v3525 = vpop.permute.xlu0 %3524
        %3526 = vrot.lane.b32.xlu0 %v3494, 64
        %v3527 = vpop.permute.xlu0 %3526
        %3528 = vrot.lane.b32.xlu0 %v3495, 64
        %v3529 = vpop.permute.xlu0 %3528
        %3530 = vrot.lane.b32.xlu0 %v3496, 64
        %v3531 = vpop.permute.xlu0 %3530
        %3532 = vrot.lane.b32.xlu0 %v3497, 64
        %v3533 = vpop.permute.xlu0 %3532
        %v3534 = vsel %vm1292, %v3511, %v3513
        %v3535 = vsel %vm1292, %v3513, %v3515
        %v3536 = vsel %vm1292, %v3515, %v3517
        %v3537 = vsel %vm1292, %v3517, %v3519
        %v3538 = vsel %vm1292, %v3519, %v3521
        %v3539 = vsel %vm1292, %v3523, %v3525
        %v3540 = vsel %vm1292, %v3525, %v3527
        %v3541 = vsel %vm1292, %v3527, %v3529
        %v3542 = vsel %vm1292, %v3529, %v3531
        %v3543 = vsel %vm1292, %v3531, %v3533
        %v3554 = vadd.f32 %v3464, %v3534
        %v3555 = vadd.f32 %v3465, %v3535
        %v3556 = vadd.f32 %v3466, %v3536
        %v3557 = vadd.f32 %v3467, %v3537
        %v3558 = vadd.f32 %v3468, %v3538
        %v3559 = vadd.f32 %v3469, %v3539
        %v3560 = vadd.f32 %v3470, %v3540
        %v3561 = vadd.f32 %v3471, %v3541
        %v3562 = vadd.f32 %v3472, %v3542
        %v3563 = vadd.f32 %v3473, %v3543
        %v3564 = vld [vmem:[%s1323] sm:$0xff]
        %v3565 = vld [vmem:[%s1323 + $0x8] sm:$0xff]
        %3567 = vset.pattern.permute.xlu0 0
        %3568 = vperm.xlu0 %3567, %v3564
        %v3569 = vpop.permute.xlu0 %3568
        %3572 = vset.pattern.permute.xlu0 0
        %3573 = vperm.xlu0 %3572, %v3565
        %v3574 = vpop.permute.xlu0 %3573
        %v3576 = vmul.f32 %v2654, %v3569
        %v3577 = vmul.f32 %v2655, %v3569
        %v3578 = vmul.f32 %v2656, %v3569
        %v3579 = vmul.f32 %v2657, %v3569
        %v3580 = vmul.f32 %v2658, %v3569
        %v3581 = vmul.f32 %v2659, %v3569
        %v3582 = vmul.f32 %v2654, %v3574
        %v3583 = vmul.f32 %v2655, %v3574
        %v3584 = vmul.f32 %v2656, %v3574
        %v3585 = vmul.f32 %v2657, %v3574
        %v3586 = vmul.f32 %v2658, %v3574
        %v3587 = vmul.f32 %v2659, %v3574
        %3600 = vrot.lane.b32.xlu0 %v3576, 63
        %v3601 = vpop.permute.xlu0 %3600
        %3602 = vrot.lane.b32.xlu0 %v3577, 63
        %v3603 = vpop.permute.xlu0 %3602
        %3604 = vrot.lane.b32.xlu0 %v3578, 63
        %v3605 = vpop.permute.xlu0 %3604
        %3606 = vrot.lane.b32.xlu0 %v3579, 63
        %v3607 = vpop.permute.xlu0 %3606
        %3608 = vrot.lane.b32.xlu0 %v3580, 63
        %v3609 = vpop.permute.xlu0 %3608
        %3610 = vrot.lane.b32.xlu0 %v3581, 63
        %v3611 = vpop.permute.xlu0 %3610
        %3612 = vrot.lane.b32.xlu0 %v3582, 63
        %v3613 = vpop.permute.xlu0 %3612
        %3614 = vrot.lane.b32.xlu0 %v3583, 63
        %v3615 = vpop.permute.xlu0 %3614
        %3616 = vrot.lane.b32.xlu0 %v3584, 63
        %v3617 = vpop.permute.xlu0 %3616
        %3618 = vrot.lane.b32.xlu0 %v3585, 63
        %v3619 = vpop.permute.xlu0 %3618
        %3620 = vrot.lane.b32.xlu0 %v3586, 63
        %v3621 = vpop.permute.xlu0 %3620
        %3622 = vrot.lane.b32.xlu0 %v3587, 63
        %v3623 = vpop.permute.xlu0 %3622
        %v3624 = vsel %vm1384, %v3601, %v3603
        %v3625 = vsel %vm1384, %v3603, %v3605
        %v3626 = vsel %vm1384, %v3605, %v3607
        %v3627 = vsel %vm1384, %v3607, %v3609
        %v3628 = vsel %vm1384, %v3609, %v3611
        %v3629 = vsel %vm1384, %v3613, %v3615
        %v3630 = vsel %vm1384, %v3615, %v3617
        %v3631 = vsel %vm1384, %v3617, %v3619
        %v3632 = vsel %vm1384, %v3619, %v3621
        %v3633 = vsel %vm1384, %v3621, %v3623
        %v3644 = vadd.f32 %v3554, %v3624
        %v3645 = vadd.f32 %v3555, %v3625
        %v3646 = vadd.f32 %v3556, %v3626
        %v3647 = vadd.f32 %v3557, %v3627
        %v3648 = vadd.f32 %v3558, %v3628
        %v3649 = vadd.f32 %v3559, %v3629
        %v3650 = vadd.f32 %v3560, %v3630
        %v3651 = vadd.f32 %v3561, %v3631
        %v3652 = vadd.f32 %v3562, %v3632
        %v3653 = vadd.f32 %v3563, %v3633
        %v3654 = vld [vmem:[%s1415] sm:$0xff]
        %v3655 = vld [vmem:[%s1415 + $0x8] sm:$0xff]
        %3657 = vset.pattern.permute.xlu0 0
        %3658 = vperm.xlu0 %3657, %v3654
        %v3659 = vpop.permute.xlu0 %3658
        %3662 = vset.pattern.permute.xlu0 0
        %3663 = vperm.xlu0 %3662, %v3655
        %v3664 = vpop.permute.xlu0 %3663
        %v3666 = vmul.f32 %v2654, %v3659
        %v3667 = vmul.f32 %v2655, %v3659
        %v3668 = vmul.f32 %v2656, %v3659
        %v3669 = vmul.f32 %v2657, %v3659
        %v3670 = vmul.f32 %v2658, %v3659
        %v3671 = vmul.f32 %v2659, %v3659
        %v3672 = vmul.f32 %v2654, %v3664
        %v3673 = vmul.f32 %v2655, %v3664
        %v3674 = vmul.f32 %v2656, %v3664
        %v3675 = vmul.f32 %v2657, %v3664
        %v3676 = vmul.f32 %v2658, %v3664
        %v3677 = vmul.f32 %v2659, %v3664
        %3690 = vrot.lane.b32.xlu0 %v3666, 62
        %v3691 = vpop.permute.xlu0 %3690
        %3692 = vrot.lane.b32.xlu0 %v3667, 62
        %v3693 = vpop.permute.xlu0 %3692
        %3694 = vrot.lane.b32.xlu0 %v3668, 62
        %v3695 = vpop.permute.xlu0 %3694
        %3696 = vrot.lane.b32.xlu0 %v3669, 62
        %v3697 = vpop.permute.xlu0 %3696
        %3698 = vrot.lane.b32.xlu0 %v3670, 62
        %v3699 = vpop.permute.xlu0 %3698
        %3700 = vrot.lane.b32.xlu0 %v3671, 62
        %v3701 = vpop.permute.xlu0 %3700
        %3702 = vrot.lane.b32.xlu0 %v3672, 62
        %v3703 = vpop.permute.xlu0 %3702
        %3704 = vrot.lane.b32.xlu0 %v3673, 62
        %v3705 = vpop.permute.xlu0 %3704
        %3706 = vrot.lane.b32.xlu0 %v3674, 62
        %v3707 = vpop.permute.xlu0 %3706
        %3708 = vrot.lane.b32.xlu0 %v3675, 62
        %v3709 = vpop.permute.xlu0 %3708
        %3710 = vrot.lane.b32.xlu0 %v3676, 62
        %v3711 = vpop.permute.xlu0 %3710
        %3712 = vrot.lane.b32.xlu0 %v3677, 62
        %v3713 = vpop.permute.xlu0 %3712
        %v3714 = vsel %vm1476, %v3691, %v3693
        %v3715 = vsel %vm1476, %v3693, %v3695
        %v3716 = vsel %vm1476, %v3695, %v3697
        %v3717 = vsel %vm1476, %v3697, %v3699
        %v3718 = vsel %vm1476, %v3699, %v3701
        %v3719 = vsel %vm1476, %v3703, %v3705
        %v3720 = vsel %vm1476, %v3705, %v3707
        %v3721 = vsel %vm1476, %v3707, %v3709
        %v3722 = vsel %vm1476, %v3709, %v3711
        %v3723 = vsel %vm1476, %v3711, %v3713
        %v3734 = vadd.f32 %v3644, %v3714
        %v3735 = vadd.f32 %v3645, %v3715
        %v3736 = vadd.f32 %v3646, %v3716
        %v3737 = vadd.f32 %v3647, %v3717
        %v3738 = vadd.f32 %v3648, %v3718
        %v3739 = vadd.f32 %v3649, %v3719
        %v3740 = vadd.f32 %v3650, %v3720
        %v3741 = vadd.f32 %v3651, %v3721
        %v3742 = vadd.f32 %v3652, %v3722
        %v3743 = vadd.f32 %v3653, %v3723
        %v3744 = vld [vmem:[%s1507] sm:$0xff]
        %v3745 = vld [vmem:[%s1507 + $0x8] sm:$0xff]
        %3747 = vset.pattern.permute.xlu0 0
        %3748 = vperm.xlu0 %3747, %v3744
        %v3749 = vpop.permute.xlu0 %3748
        %3752 = vset.pattern.permute.xlu0 0
        %3753 = vperm.xlu0 %3752, %v3745
        %v3754 = vpop.permute.xlu0 %3753
        %v3756 = vmul.f32 %v2654, %v3749
        %v3757 = vmul.f32 %v2655, %v3749
        %v3758 = vmul.f32 %v2656, %v3749
        %v3759 = vmul.f32 %v2657, %v3749
        %v3760 = vmul.f32 %v2658, %v3749
        %v3761 = vmul.f32 %v2659, %v3749
        %v3762 = vmul.f32 %v2654, %v3754
        %v3763 = vmul.f32 %v2655, %v3754
        %v3764 = vmul.f32 %v2656, %v3754
        %v3765 = vmul.f32 %v2657, %v3754
        %v3766 = vmul.f32 %v2658, %v3754
        %v3767 = vmul.f32 %v2659, %v3754
        %3780 = vrot.lane.b32.xlu0 %v3756, 61
        %v3781 = vpop.permute.xlu0 %3780
        %3782 = vrot.lane.b32.xlu0 %v3757, 61
        %v3783 = vpop.permute.xlu0 %3782
        %3784 = vrot.lane.b32.xlu0 %v3758, 61
        %v3785 = vpop.permute.xlu0 %3784
        %3786 = vrot.lane.b32.xlu0 %v3759, 61
        %v3787 = vpop.permute.xlu0 %3786
        %3788 = vrot.lane.b32.xlu0 %v3760, 61
        %v3789 = vpop.permute.xlu0 %3788
        %3790 = vrot.lane.b32.xlu0 %v3761, 61
        %v3791 = vpop.permute.xlu0 %3790
        %3792 = vrot.lane.b32.xlu0 %v3762, 61
        %v3793 = vpop.permute.xlu0 %3792
        %3794 = vrot.lane.b32.xlu0 %v3763, 61
        %v3795 = vpop.permute.xlu0 %3794
        %3796 = vrot.lane.b32.xlu0 %v3764, 61
        %v3797 = vpop.permute.xlu0 %3796
        %3798 = vrot.lane.b32.xlu0 %v3765, 61
        %v3799 = vpop.permute.xlu0 %3798
        %3800 = vrot.lane.b32.xlu0 %v3766, 61
        %v3801 = vpop.permute.xlu0 %3800
        %3802 = vrot.lane.b32.xlu0 %v3767, 61
        %v3803 = vpop.permute.xlu0 %3802
        %v3804 = vsel %vm1568, %v3781, %v3783
        %v3805 = vsel %vm1568, %v3783, %v3785
        %v3806 = vsel %vm1568, %v3785, %v3787
        %v3807 = vsel %vm1568, %v3787, %v3789
        %v3808 = vsel %vm1568, %v3789, %v3791
        %v3809 = vsel %vm1568, %v3793, %v3795
        %v3810 = vsel %vm1568, %v3795, %v3797
        %v3811 = vsel %vm1568, %v3797, %v3799
        %v3812 = vsel %vm1568, %v3799, %v3801
        %v3813 = vsel %vm1568, %v3801, %v3803
        %v3824 = vadd.f32 %v3734, %v3804
        %v3825 = vadd.f32 %v3735, %v3805
        %v3826 = vadd.f32 %v3736, %v3806
        %v3827 = vadd.f32 %v3737, %v3807
        %v3828 = vadd.f32 %v3738, %v3808
        %v3829 = vadd.f32 %v3739, %v3809
        %v3830 = vadd.f32 %v3740, %v3810
        %v3831 = vadd.f32 %v3741, %v3811
        %v3832 = vadd.f32 %v3742, %v3812
        %v3833 = vadd.f32 %v3743, %v3813
        %v3834 = vld [vmem:[%s1599] sm:$0xff]
        %v3835 = vld [vmem:[%s1599 + $0x8] sm:$0xff]
        %3837 = vset.pattern.permute.xlu0 0
        %3838 = vperm.xlu0 %3837, %v3834
        %v3839 = vpop.permute.xlu0 %3838
        %3842 = vset.pattern.permute.xlu0 0
        %3843 = vperm.xlu0 %3842, %v3835
        %v3844 = vpop.permute.xlu0 %3843
        %v3846 = vmul.f32 %v2654, %v3839
        %v3847 = vmul.f32 %v2655, %v3839
        %v3848 = vmul.f32 %v2656, %v3839
        %v3849 = vmul.f32 %v2657, %v3839
        %v3850 = vmul.f32 %v2658, %v3839
        %v3851 = vmul.f32 %v2659, %v3839
        %v3852 = vmul.f32 %v2654, %v3844
        %v3853 = vmul.f32 %v2655, %v3844
        %v3854 = vmul.f32 %v2656, %v3844
        %v3855 = vmul.f32 %v2657, %v3844
        %v3856 = vmul.f32 %v2658, %v3844
        %v3857 = vmul.f32 %v2659, %v3844
        %3870 = vrot.lane.b32.xlu0 %v3846, 60
        %v3871 = vpop.permute.xlu0 %3870
        %3872 = vrot.lane.b32.xlu0 %v3847, 60
        %v3873 = vpop.permute.xlu0 %3872
        %3874 = vrot.lane.b32.xlu0 %v3848, 60
        %v3875 = vpop.permute.xlu0 %3874
        %3876 = vrot.lane.b32.xlu0 %v3849, 60
        %v3877 = vpop.permute.xlu0 %3876
        %3878 = vrot.lane.b32.xlu0 %v3850, 60
        %v3879 = vpop.permute.xlu0 %3878
        %3880 = vrot.lane.b32.xlu0 %v3851, 60
        %v3881 = vpop.permute.xlu0 %3880
        %3882 = vrot.lane.b32.xlu0 %v3852, 60
        %v3883 = vpop.permute.xlu0 %3882
        %3884 = vrot.lane.b32.xlu0 %v3853, 60
        %v3885 = vpop.permute.xlu0 %3884
        %3886 = vrot.lane.b32.xlu0 %v3854, 60
        %v3887 = vpop.permute.xlu0 %3886
        %3888 = vrot.lane.b32.xlu0 %v3855, 60
        %v3889 = vpop.permute.xlu0 %3888
        %3890 = vrot.lane.b32.xlu0 %v3856, 60
        %v3891 = vpop.permute.xlu0 %3890
        %3892 = vrot.lane.b32.xlu0 %v3857, 60
        %v3893 = vpop.permute.xlu0 %3892
        %v3894 = vsel %vm1660, %v3871, %v3873
        %v3895 = vsel %vm1660, %v3873, %v3875
        %v3896 = vsel %vm1660, %v3875, %v3877
        %v3897 = vsel %vm1660, %v3877, %v3879
        %v3898 = vsel %vm1660, %v3879, %v3881
        %v3899 = vsel %vm1660, %v3883, %v3885
        %v3900 = vsel %vm1660, %v3885, %v3887
        %v3901 = vsel %vm1660, %v3887, %v3889
        %v3902 = vsel %vm1660, %v3889, %v3891
        %v3903 = vsel %vm1660, %v3891, %v3893
        %v3914 = vadd.f32 %v3824, %v3894
        %v3915 = vadd.f32 %v3825, %v3895
        %v3916 = vadd.f32 %v3826, %v3896
        %v3917 = vadd.f32 %v3827, %v3897
        %v3918 = vadd.f32 %v3828, %v3898
        %v3919 = vadd.f32 %v3829, %v3899
        %v3920 = vadd.f32 %v3830, %v3900
        %v3921 = vadd.f32 %v3831, %v3901
        %v3922 = vadd.f32 %v3832, %v3902
        %v3923 = vadd.f32 %v3833, %v3903
        %v3924 = vld [vmem:[%s1691] sm:$0xff]
        %v3925 = vld [vmem:[%s1691 + $0x8] sm:$0xff]
        %3927 = vset.pattern.permute.xlu0 0
        %3928 = vperm.xlu0 %3927, %v3924
        %v3929 = vpop.permute.xlu0 %3928
        %3932 = vset.pattern.permute.xlu0 0
        %3933 = vperm.xlu0 %3932, %v3925
        %v3934 = vpop.permute.xlu0 %3933
        %v3936 = vmul.f32 %v2654, %v3929
        %v3937 = vmul.f32 %v2655, %v3929
        %v3938 = vmul.f32 %v2656, %v3929
        %v3939 = vmul.f32 %v2657, %v3929
        %v3940 = vmul.f32 %v2658, %v3929
        %v3941 = vmul.f32 %v2659, %v3929
        %v3942 = vmul.f32 %v2654, %v3934
        %v3943 = vmul.f32 %v2655, %v3934
        %v3944 = vmul.f32 %v2656, %v3934
        %v3945 = vmul.f32 %v2657, %v3934
        %v3946 = vmul.f32 %v2658, %v3934
        %v3947 = vmul.f32 %v2659, %v3934
        %3960 = vrot.lane.b32.xlu0 %v3936, 32
        %v3961 = vpop.permute.xlu0 %3960
        %3962 = vrot.lane.b32.xlu0 %v3937, 32
        %v3963 = vpop.permute.xlu0 %3962
        %3964 = vrot.lane.b32.xlu0 %v3938, 32
        %v3965 = vpop.permute.xlu0 %3964
        %3966 = vrot.lane.b32.xlu0 %v3939, 32
        %v3967 = vpop.permute.xlu0 %3966
        %3968 = vrot.lane.b32.xlu0 %v3940, 32
        %v3969 = vpop.permute.xlu0 %3968
        %3970 = vrot.lane.b32.xlu0 %v3941, 32
        %v3971 = vpop.permute.xlu0 %3970
        %3972 = vrot.lane.b32.xlu0 %v3942, 32
        %v3973 = vpop.permute.xlu0 %3972
        %3974 = vrot.lane.b32.xlu0 %v3943, 32
        %v3975 = vpop.permute.xlu0 %3974
        %3976 = vrot.lane.b32.xlu0 %v3944, 32
        %v3977 = vpop.permute.xlu0 %3976
        %3978 = vrot.lane.b32.xlu0 %v3945, 32
        %v3979 = vpop.permute.xlu0 %3978
        %3980 = vrot.lane.b32.xlu0 %v3946, 32
        %v3981 = vpop.permute.xlu0 %3980
        %3982 = vrot.lane.b32.xlu0 %v3947, 32
        %v3983 = vpop.permute.xlu0 %3982
        %v3984 = vsel %vm1752, %v3961, %v3963
        %v3985 = vsel %vm1752, %v3963, %v3965
        %v3986 = vsel %vm1752, %v3965, %v3967
        %v3987 = vsel %vm1752, %v3967, %v3969
        %v3988 = vsel %vm1752, %v3969, %v3971
        %v3989 = vsel %vm1752, %v3973, %v3975
        %v3990 = vsel %vm1752, %v3975, %v3977
        %v3991 = vsel %vm1752, %v3977, %v3979
        %v3992 = vsel %vm1752, %v3979, %v3981
        %v3993 = vsel %vm1752, %v3981, %v3983
        %v4004 = vadd.f32 %v3914, %v3984
        %v4005 = vadd.f32 %v3915, %v3985
        %v4006 = vadd.f32 %v3916, %v3986
        %v4007 = vadd.f32 %v3917, %v3987
        %v4008 = vadd.f32 %v3918, %v3988
        %v4009 = vadd.f32 %v3919, %v3989
        %v4010 = vadd.f32 %v3920, %v3990
        %v4011 = vadd.f32 %v3921, %v3991
        %v4012 = vadd.f32 %v3922, %v3992
        %v4013 = vadd.f32 %v3923, %v3993
        %v4014 = vld [vmem:[%s1783] sm:$0xff]
        %v4015 = vld [vmem:[%s1783 + $0x8] sm:$0xff]
        %4017 = vset.pattern.permute.xlu0 0
        %4018 = vperm.xlu0 %4017, %v4014
        %v4019 = vpop.permute.xlu0 %4018
        %4022 = vset.pattern.permute.xlu0 0
        %4023 = vperm.xlu0 %4022, %v4015
        %v4024 = vpop.permute.xlu0 %4023
        %v4026 = vmul.f32 %v2654, %v4019
        %v4027 = vmul.f32 %v2655, %v4019
        %v4028 = vmul.f32 %v2656, %v4019
        %v4029 = vmul.f32 %v2657, %v4019
        %v4030 = vmul.f32 %v2658, %v4019
        %v4031 = vmul.f32 %v2659, %v4019
        %v4032 = vmul.f32 %v2654, %v4024
        %v4033 = vmul.f32 %v2655, %v4024
        %v4034 = vmul.f32 %v2656, %v4024
        %v4035 = vmul.f32 %v2657, %v4024
        %v4036 = vmul.f32 %v2658, %v4024
        %v4037 = vmul.f32 %v2659, %v4024
        %4050 = vrot.lane.b32.xlu0 %v4026, 31
        %v4051 = vpop.permute.xlu0 %4050
        %4052 = vrot.lane.b32.xlu0 %v4027, 31
        %v4053 = vpop.permute.xlu0 %4052
        %4054 = vrot.lane.b32.xlu0 %v4028, 31
        %v4055 = vpop.permute.xlu0 %4054
        %4056 = vrot.lane.b32.xlu0 %v4029, 31
        %v4057 = vpop.permute.xlu0 %4056
        %4058 = vrot.lane.b32.xlu0 %v4030, 31
        %v4059 = vpop.permute.xlu0 %4058
        %4060 = vrot.lane.b32.xlu0 %v4031, 31
        %v4061 = vpop.permute.xlu0 %4060
        %4062 = vrot.lane.b32.xlu0 %v4032, 31
        %v4063 = vpop.permute.xlu0 %4062
        %4064 = vrot.lane.b32.xlu0 %v4033, 31
        %v4065 = vpop.permute.xlu0 %4064
        %4066 = vrot.lane.b32.xlu0 %v4034, 31
        %v4067 = vpop.permute.xlu0 %4066
        %4068 = vrot.lane.b32.xlu0 %v4035, 31
        %v4069 = vpop.permute.xlu0 %4068
        %4070 = vrot.lane.b32.xlu0 %v4036, 31
        %v4071 = vpop.permute.xlu0 %4070
        %4072 = vrot.lane.b32.xlu0 %v4037, 31
        %v4073 = vpop.permute.xlu0 %4072
        %v4074 = vsel %vm1844, %v4051, %v4053
        %v4075 = vsel %vm1844, %v4053, %v4055
        %v4076 = vsel %vm1844, %v4055, %v4057
        %v4077 = vsel %vm1844, %v4057, %v4059
        %v4078 = vsel %vm1844, %v4059, %v4061
        %v4079 = vsel %vm1844, %v4063, %v4065
        %v4080 = vsel %vm1844, %v4065, %v4067
        %v4081 = vsel %vm1844, %v4067, %v4069
        %v4082 = vsel %vm1844, %v4069, %v4071
        %v4083 = vsel %vm1844, %v4071, %v4073
        %v4094 = vadd.f32 %v4004, %v4074
        %v4095 = vadd.f32 %v4005, %v4075
        %v4096 = vadd.f32 %v4006, %v4076
        %v4097 = vadd.f32 %v4007, %v4077
        %v4098 = vadd.f32 %v4008, %v4078
        %v4099 = vadd.f32 %v4009, %v4079
        %v4100 = vadd.f32 %v4010, %v4080
        %v4101 = vadd.f32 %v4011, %v4081
        %v4102 = vadd.f32 %v4012, %v4082
        %v4103 = vadd.f32 %v4013, %v4083
        %v4104 = vld [vmem:[%s1875] sm:$0xff]
        %v4105 = vld [vmem:[%s1875 + $0x8] sm:$0xff]
        %4107 = vset.pattern.permute.xlu0 0
        %4108 = vperm.xlu0 %4107, %v4104
        %v4109 = vpop.permute.xlu0 %4108
        %4112 = vset.pattern.permute.xlu0 0
        %4113 = vperm.xlu0 %4112, %v4105
        %v4114 = vpop.permute.xlu0 %4113
        %v4116 = vmul.f32 %v2654, %v4109
        %v4117 = vmul.f32 %v2655, %v4109
        %v4118 = vmul.f32 %v2656, %v4109
        %v4119 = vmul.f32 %v2657, %v4109
        %v4120 = vmul.f32 %v2658, %v4109
        %v4121 = vmul.f32 %v2659, %v4109
        %v4122 = vmul.f32 %v2654, %v4114
        %v4123 = vmul.f32 %v2655, %v4114
        %v4124 = vmul.f32 %v2656, %v4114
        %v4125 = vmul.f32 %v2657, %v4114
        %v4126 = vmul.f32 %v2658, %v4114
        %v4127 = vmul.f32 %v2659, %v4114
        %4140 = vrot.lane.b32.xlu0 %v4116, 30
        %v4141 = vpop.permute.xlu0 %4140
        %4142 = vrot.lane.b32.xlu0 %v4117, 30
        %v4143 = vpop.permute.xlu0 %4142
        %4144 = vrot.lane.b32.xlu0 %v4118, 30
        %v4145 = vpop.permute.xlu0 %4144
        %4146 = vrot.lane.b32.xlu0 %v4119, 30
        %v4147 = vpop.permute.xlu0 %4146
        %4148 = vrot.lane.b32.xlu0 %v4120, 30
        %v4149 = vpop.permute.xlu0 %4148
        %4150 = vrot.lane.b32.xlu0 %v4121, 30
        %v4151 = vpop.permute.xlu0 %4150
        %4152 = vrot.lane.b32.xlu0 %v4122, 30
        %v4153 = vpop.permute.xlu0 %4152
        %4154 = vrot.lane.b32.xlu0 %v4123, 30
        %v4155 = vpop.permute.xlu0 %4154
        %4156 = vrot.lane.b32.xlu0 %v4124, 30
        %v4157 = vpop.permute.xlu0 %4156
        %4158 = vrot.lane.b32.xlu0 %v4125, 30
        %v4159 = vpop.permute.xlu0 %4158
        %4160 = vrot.lane.b32.xlu0 %v4126, 30
        %v4161 = vpop.permute.xlu0 %4160
        %4162 = vrot.lane.b32.xlu0 %v4127, 30
        %v4163 = vpop.permute.xlu0 %4162
        %v4164 = vsel %vm1936, %v4141, %v4143
        %v4165 = vsel %vm1936, %v4143, %v4145
        %v4166 = vsel %vm1936, %v4145, %v4147
        %v4167 = vsel %vm1936, %v4147, %v4149
        %v4168 = vsel %vm1936, %v4149, %v4151
        %v4169 = vsel %vm1936, %v4153, %v4155
        %v4170 = vsel %vm1936, %v4155, %v4157
        %v4171 = vsel %vm1936, %v4157, %v4159
        %v4172 = vsel %vm1936, %v4159, %v4161
        %v4173 = vsel %vm1936, %v4161, %v4163
        %v4184 = vadd.f32 %v4094, %v4164
        %v4185 = vadd.f32 %v4095, %v4165
        %v4186 = vadd.f32 %v4096, %v4166
        %v4187 = vadd.f32 %v4097, %v4167
        %v4188 = vadd.f32 %v4098, %v4168
        %v4189 = vadd.f32 %v4099, %v4169
        %v4190 = vadd.f32 %v4100, %v4170
        %v4191 = vadd.f32 %v4101, %v4171
        %v4192 = vadd.f32 %v4102, %v4172
        %v4193 = vadd.f32 %v4103, %v4173
        %v4194 = vld [vmem:[%s1967] sm:$0xff]
        %v4195 = vld [vmem:[%s1967 + $0x8] sm:$0xff]
        %4197 = vset.pattern.permute.xlu0 0
        %4198 = vperm.xlu0 %4197, %v4194
        %v4199 = vpop.permute.xlu0 %4198
        %4202 = vset.pattern.permute.xlu0 0
        %4203 = vperm.xlu0 %4202, %v4195
        %v4204 = vpop.permute.xlu0 %4203
        %v4206 = vmul.f32 %v2654, %v4199
        %v4207 = vmul.f32 %v2655, %v4199
        %v4208 = vmul.f32 %v2656, %v4199
        %v4209 = vmul.f32 %v2657, %v4199
        %v4210 = vmul.f32 %v2658, %v4199
        %v4211 = vmul.f32 %v2659, %v4199
        %v4212 = vmul.f32 %v2654, %v4204
        %v4213 = vmul.f32 %v2655, %v4204
        %v4214 = vmul.f32 %v2656, %v4204
        %v4215 = vmul.f32 %v2657, %v4204
        %v4216 = vmul.f32 %v2658, %v4204
        %v4217 = vmul.f32 %v2659, %v4204
        %4230 = vrot.lane.b32.xlu0 %v4206, 29
        %v4231 = vpop.permute.xlu0 %4230
        %4232 = vrot.lane.b32.xlu0 %v4207, 29
        %v4233 = vpop.permute.xlu0 %4232
        %4234 = vrot.lane.b32.xlu0 %v4208, 29
        %v4235 = vpop.permute.xlu0 %4234
        %4236 = vrot.lane.b32.xlu0 %v4209, 29
        %v4237 = vpop.permute.xlu0 %4236
        %4238 = vrot.lane.b32.xlu0 %v4210, 29
        %v4239 = vpop.permute.xlu0 %4238
        %4240 = vrot.lane.b32.xlu0 %v4211, 29
        %v4241 = vpop.permute.xlu0 %4240
        %4242 = vrot.lane.b32.xlu0 %v4212, 29
        %v4243 = vpop.permute.xlu0 %4242
        %4244 = vrot.lane.b32.xlu0 %v4213, 29
        %v4245 = vpop.permute.xlu0 %4244
        %4246 = vrot.lane.b32.xlu0 %v4214, 29
        %v4247 = vpop.permute.xlu0 %4246
        %4248 = vrot.lane.b32.xlu0 %v4215, 29
        %v4249 = vpop.permute.xlu0 %4248
        %4250 = vrot.lane.b32.xlu0 %v4216, 29
        %v4251 = vpop.permute.xlu0 %4250
        %4252 = vrot.lane.b32.xlu0 %v4217, 29
        %v4253 = vpop.permute.xlu0 %4252
        %v4254 = vsel %vm2028, %v4231, %v4233
        %v4255 = vsel %vm2028, %v4233, %v4235
        %v4256 = vsel %vm2028, %v4235, %v4237
        %v4257 = vsel %vm2028, %v4237, %v4239
        %v4258 = vsel %vm2028, %v4239, %v4241
        %v4259 = vsel %vm2028, %v4243, %v4245
        %v4260 = vsel %vm2028, %v4245, %v4247
        %v4261 = vsel %vm2028, %v4247, %v4249
        %v4262 = vsel %vm2028, %v4249, %v4251
        %v4263 = vsel %vm2028, %v4251, %v4253
        %v4274 = vadd.f32 %v4184, %v4254
        %v4275 = vadd.f32 %v4185, %v4255
        %v4276 = vadd.f32 %v4186, %v4256
        %v4277 = vadd.f32 %v4187, %v4257
        %v4278 = vadd.f32 %v4188, %v4258
        %v4279 = vadd.f32 %v4189, %v4259
        %v4280 = vadd.f32 %v4190, %v4260
        %v4281 = vadd.f32 %v4191, %v4261
        %v4282 = vadd.f32 %v4192, %v4262
        %v4283 = vadd.f32 %v4193, %v4263
        %v4284 = vld [vmem:[%s2059] sm:$0xff]
        %v4285 = vld [vmem:[%s2059 + $0x8] sm:$0xff]
        %4287 = vset.pattern.permute.xlu0 0
        %4288 = vperm.xlu0 %4287, %v4284
        %v4289 = vpop.permute.xlu0 %4288
        %4292 = vset.pattern.permute.xlu0 0
        %4293 = vperm.xlu0 %4292, %v4285
        %v4294 = vpop.permute.xlu0 %4293
        %v4296 = vmul.f32 %v2654, %v4289
        %v4297 = vmul.f32 %v2655, %v4289
        %v4298 = vmul.f32 %v2656, %v4289
        %v4299 = vmul.f32 %v2657, %v4289
        %v4300 = vmul.f32 %v2658, %v4289
        %v4301 = vmul.f32 %v2659, %v4289
        %v4302 = vmul.f32 %v2654, %v4294
        %v4303 = vmul.f32 %v2655, %v4294
        %v4304 = vmul.f32 %v2656, %v4294
        %v4305 = vmul.f32 %v2657, %v4294
        %v4306 = vmul.f32 %v2658, %v4294
        %v4307 = vmul.f32 %v2659, %v4294
        %4320 = vrot.lane.b32.xlu0 %v4296, 28
        %v4321 = vpop.permute.xlu0 %4320
        %4322 = vrot.lane.b32.xlu0 %v4297, 28
        %v4323 = vpop.permute.xlu0 %4322
        %4324 = vrot.lane.b32.xlu0 %v4298, 28
        %v4325 = vpop.permute.xlu0 %4324
        %4326 = vrot.lane.b32.xlu0 %v4299, 28
        %v4327 = vpop.permute.xlu0 %4326
        %4328 = vrot.lane.b32.xlu0 %v4300, 28
        %v4329 = vpop.permute.xlu0 %4328
        %4330 = vrot.lane.b32.xlu0 %v4301, 28
        %v4331 = vpop.permute.xlu0 %4330
        %4332 = vrot.lane.b32.xlu0 %v4302, 28
        %v4333 = vpop.permute.xlu0 %4332
        %4334 = vrot.lane.b32.xlu0 %v4303, 28
        %v4335 = vpop.permute.xlu0 %4334
        %4336 = vrot.lane.b32.xlu0 %v4304, 28
        %v4337 = vpop.permute.xlu0 %4336
        %4338 = vrot.lane.b32.xlu0 %v4305, 28
        %v4339 = vpop.permute.xlu0 %4338
        %4340 = vrot.lane.b32.xlu0 %v4306, 28
        %v4341 = vpop.permute.xlu0 %4340
        %4342 = vrot.lane.b32.xlu0 %v4307, 28
        %v4343 = vpop.permute.xlu0 %4342
        %v4344 = vsel %vm2120, %v4321, %v4323
        %v4345 = vsel %vm2120, %v4323, %v4325
        %v4346 = vsel %vm2120, %v4325, %v4327
        %v4347 = vsel %vm2120, %v4327, %v4329
        %v4348 = vsel %vm2120, %v4329, %v4331
        %v4349 = vsel %vm2120, %v4333, %v4335
        %v4350 = vsel %vm2120, %v4335, %v4337
        %v4351 = vsel %vm2120, %v4337, %v4339
        %v4352 = vsel %vm2120, %v4339, %v4341
        %v4353 = vsel %vm2120, %v4341, %v4343
        %v4364 = vadd.f32 %v4274, %v4344
        %v4365 = vadd.f32 %v4275, %v4345
        %v4366 = vadd.f32 %v4276, %v4346
        %v4367 = vadd.f32 %v4277, %v4347
        %v4368 = vadd.f32 %v4278, %v4348
        %v4369 = vadd.f32 %v4279, %v4349
        %v4370 = vadd.f32 %v4280, %v4350
        %v4371 = vadd.f32 %v4281, %v4351
        %v4372 = vadd.f32 %v4282, %v4352
        %v4373 = vadd.f32 %v4283, %v4353
        %v4374 = vld [vmem:[%s353 + $0x6] sm:$0x1f]
        %v4375 = vld [vmem:[%s2152] sm:$0xff]
        %v4376 = vld [vmem:[%s2152 + $0x8] sm:$0xff]
        %v4378 = vperm.slane %v4374, 0
        %v4379 = vperm.slane %v4374, 1
        %v4380 = vperm.slane %v4374, 2
        %v4381 = vperm.slane %v4374, 3
        %v4382 = vperm.slane %v4374, 4
        %4389 = vset.pattern.permute.xlu0 0
        %4390 = vperm.xlu0 %4389, %v4375
        %v4391 = vpop.permute.xlu0 %4390
        %4394 = vset.pattern.permute.xlu0 0
        %4395 = vperm.xlu0 %4394, %v4376
        %v4396 = vpop.permute.xlu0 %4395
        %v4398 = vmul.f32 %v4378, %v4391
        %v4399 = vmul.f32 %v4379, %v4391
        %v4400 = vmul.f32 %v4380, %v4391
        %v4401 = vmul.f32 %v4381, %v4391
        %v4402 = vmul.f32 %v4382, %v4391
        %v4403 = vmul.f32 %v4378, %v4396
        %v4404 = vmul.f32 %v4379, %v4396
        %v4405 = vmul.f32 %v4380, %v4396
        %v4406 = vmul.f32 %v4381, %v4396
        %v4407 = vmul.f32 %v4382, %v4396
        %v4408 = vadd.f32 %v4364, %v4398
        %v4409 = vadd.f32 %v4365, %v4399
        %v4410 = vadd.f32 %v4366, %v4400
        %v4411 = vadd.f32 %v4367, %v4401
        %v4412 = vadd.f32 %v4368, %v4402
        %v4413 = vadd.f32 %v4369, %v4403
        %v4414 = vadd.f32 %v4370, %v4404
        %v4415 = vadd.f32 %v4371, %v4405
        %v4416 = vadd.f32 %v4372, %v4406
        %v4417 = vadd.f32 %v4373, %v4407
        %v4418 = vld [vmem:[%s353 + $0x6] sm:$0x3f]
        %v4419 = vld [vmem:[%s2197] sm:$0xff]
        %v4420 = vld [vmem:[%s2197 + $0x8] sm:$0xff]
        %v4422 = vperm.slane %v4418, 0
        %v4423 = vperm.slane %v4418, 1
        %v4424 = vperm.slane %v4418, 2
        %v4425 = vperm.slane %v4418, 3
        %v4426 = vperm.slane %v4418, 4
        %v4427 = vperm.slane %v4418, 5
        %4435 = vset.pattern.permute.xlu0 0
        %4436 = vperm.xlu0 %4435, %v4419
        %v4437 = vpop.permute.xlu0 %4436
        %4440 = vset.pattern.permute.xlu0 0
        %4441 = vperm.xlu0 %4440, %v4420
        %v4442 = vpop.permute.xlu0 %4441
        %v4444 = vmul.f32 %v4422, %v4437
        %v4445 = vmul.f32 %v4423, %v4437
        %v4446 = vmul.f32 %v4424, %v4437
        %v4447 = vmul.f32 %v4425, %v4437
        %v4448 = vmul.f32 %v4426, %v4437
        %v4449 = vmul.f32 %v4427, %v4437
        %v4450 = vmul.f32 %v4422, %v4442
        %v4451 = vmul.f32 %v4423, %v4442
        %v4452 = vmul.f32 %v4424, %v4442
        %v4453 = vmul.f32 %v4425, %v4442
        %v4454 = vmul.f32 %v4426, %v4442
        %v4455 = vmul.f32 %v4427, %v4442
        %4468 = vrot.lane.b32.xlu0 %v4444, 127
        %v4469 = vpop.permute.xlu0 %4468
        %4470 = vrot.lane.b32.xlu0 %v4445, 127
        %v4471 = vpop.permute.xlu0 %4470
        %4472 = vrot.lane.b32.xlu0 %v4446, 127
        %v4473 = vpop.permute.xlu0 %4472
        %4474 = vrot.lane.b32.xlu0 %v4447, 127
        %v4475 = vpop.permute.xlu0 %4474
        %4476 = vrot.lane.b32.xlu0 %v4448, 127
        %v4477 = vpop.permute.xlu0 %4476
        %4478 = vrot.lane.b32.xlu0 %v4449, 127
        %v4479 = vpop.permute.xlu0 %4478
        %4480 = vrot.lane.b32.xlu0 %v4450, 127
        %v4481 = vpop.permute.xlu0 %4480
        %4482 = vrot.lane.b32.xlu0 %v4451, 127
        %v4483 = vpop.permute.xlu0 %4482
        %4484 = vrot.lane.b32.xlu0 %v4452, 127
        %v4485 = vpop.permute.xlu0 %4484
        %4486 = vrot.lane.b32.xlu0 %v4453, 127
        %v4487 = vpop.permute.xlu0 %4486
        %4488 = vrot.lane.b32.xlu0 %v4454, 127
        %v4489 = vpop.permute.xlu0 %4488
        %4490 = vrot.lane.b32.xlu0 %v4455, 127
        %v4491 = vpop.permute.xlu0 %4490
        %v4492 = vsel %vm464, %v4469, %v4471
        %v4493 = vsel %vm464, %v4471, %v4473
        %v4494 = vsel %vm464, %v4473, %v4475
        %v4495 = vsel %vm464, %v4475, %v4477
        %v4496 = vsel %vm464, %v4477, %v4479
        %v4497 = vsel %vm464, %v4481, %v4483
        %v4498 = vsel %vm464, %v4483, %v4485
        %v4499 = vsel %vm464, %v4485, %v4487
        %v4500 = vsel %vm464, %v4487, %v4489
        %v4501 = vsel %vm464, %v4489, %v4491
        %v4512 = vadd.f32 %v4408, %v4492
        %v4513 = vadd.f32 %v4409, %v4493
        %v4514 = vadd.f32 %v4410, %v4494
        %v4515 = vadd.f32 %v4411, %v4495
        %v4516 = vadd.f32 %v4412, %v4496
        %v4517 = vadd.f32 %v4413, %v4497
        %v4518 = vadd.f32 %v4414, %v4498
        %v4519 = vadd.f32 %v4415, %v4499
        %v4520 = vadd.f32 %v4416, %v4500
        %v4521 = vadd.f32 %v4417, %v4501
        %v4522 = vld [vmem:[%s2301] sm:$0xff]
        %v4523 = vld [vmem:[%s2301 + $0x8] sm:$0xff]
        %4525 = vset.pattern.permute.xlu0 0
        %4526 = vperm.xlu0 %4525, %v4522
        %v4527 = vpop.permute.xlu0 %4526
        %4530 = vset.pattern.permute.xlu0 0
        %4531 = vperm.xlu0 %4530, %v4523
        %v4532 = vpop.permute.xlu0 %4531
        %v4534 = vmul.f32 %v4422, %v4527
        %v4535 = vmul.f32 %v4423, %v4527
        %v4536 = vmul.f32 %v4424, %v4527
        %v4537 = vmul.f32 %v4425, %v4527
        %v4538 = vmul.f32 %v4426, %v4527
        %v4539 = vmul.f32 %v4427, %v4527
        %v4540 = vmul.f32 %v4422, %v4532
        %v4541 = vmul.f32 %v4423, %v4532
        %v4542 = vmul.f32 %v4424, %v4532
        %v4543 = vmul.f32 %v4425, %v4532
        %v4544 = vmul.f32 %v4426, %v4532
        %v4545 = vmul.f32 %v4427, %v4532
        %4558 = vrot.lane.b32.xlu0 %v4534, 126
        %v4559 = vpop.permute.xlu0 %4558
        %4560 = vrot.lane.b32.xlu0 %v4535, 126
        %v4561 = vpop.permute.xlu0 %4560
        %4562 = vrot.lane.b32.xlu0 %v4536, 126
        %v4563 = vpop.permute.xlu0 %4562
        %4564 = vrot.lane.b32.xlu0 %v4537, 126
        %v4565 = vpop.permute.xlu0 %4564
        %4566 = vrot.lane.b32.xlu0 %v4538, 126
        %v4567 = vpop.permute.xlu0 %4566
        %4568 = vrot.lane.b32.xlu0 %v4539, 126
        %v4569 = vpop.permute.xlu0 %4568
        %4570 = vrot.lane.b32.xlu0 %v4540, 126
        %v4571 = vpop.permute.xlu0 %4570
        %4572 = vrot.lane.b32.xlu0 %v4541, 126
        %v4573 = vpop.permute.xlu0 %4572
        %4574 = vrot.lane.b32.xlu0 %v4542, 126
        %v4575 = vpop.permute.xlu0 %4574
        %4576 = vrot.lane.b32.xlu0 %v4543, 126
        %v4577 = vpop.permute.xlu0 %4576
        %4578 = vrot.lane.b32.xlu0 %v4544, 126
        %v4579 = vpop.permute.xlu0 %4578
        %4580 = vrot.lane.b32.xlu0 %v4545, 126
        %v4581 = vpop.permute.xlu0 %4580
        %v4582 = vsel %vm556, %v4559, %v4561
        %v4583 = vsel %vm556, %v4561, %v4563
        %v4584 = vsel %vm556, %v4563, %v4565
        %v4585 = vsel %vm556, %v4565, %v4567
        %v4586 = vsel %vm556, %v4567, %v4569
        %v4587 = vsel %vm556, %v4571, %v4573
        %v4588 = vsel %vm556, %v4573, %v4575
        %v4589 = vsel %vm556, %v4575, %v4577
        %v4590 = vsel %vm556, %v4577, %v4579
        %v4591 = vsel %vm556, %v4579, %v4581
        %v4602 = vadd.f32 %v4512, %v4582
        %v4603 = vadd.f32 %v4513, %v4583
        %v4604 = vadd.f32 %v4514, %v4584
        %v4605 = vadd.f32 %v4515, %v4585
        %v4606 = vadd.f32 %v4516, %v4586
        %v4607 = vadd.f32 %v4517, %v4587
        %v4608 = vadd.f32 %v4518, %v4588
        %v4609 = vadd.f32 %v4519, %v4589
        %v4610 = vadd.f32 %v4520, %v4590
        %v4611 = vadd.f32 %v4521, %v4591
        %v4612 = vld [vmem:[%s2392] sm:$0xff]
        %v4613 = vld [vmem:[%s2392 + $0x8] sm:$0xff]
        %4615 = vset.pattern.permute.xlu0 0
        %4616 = vperm.xlu0 %4615, %v4612
        %v4617 = vpop.permute.xlu0 %4616
        %4620 = vset.pattern.permute.xlu0 0
        %4621 = vperm.xlu0 %4620, %v4613
        %v4622 = vpop.permute.xlu0 %4621
        %v4624 = vmul.f32 %v4422, %v4617
        %v4625 = vmul.f32 %v4423, %v4617
        %v4626 = vmul.f32 %v4424, %v4617
        %v4627 = vmul.f32 %v4425, %v4617
        %v4628 = vmul.f32 %v4426, %v4617
        %v4629 = vmul.f32 %v4427, %v4617
        %v4630 = vmul.f32 %v4422, %v4622
        %v4631 = vmul.f32 %v4423, %v4622
        %v4632 = vmul.f32 %v4424, %v4622
        %v4633 = vmul.f32 %v4425, %v4622
        %v4634 = vmul.f32 %v4426, %v4622
        %v4635 = vmul.f32 %v4427, %v4622
        %4648 = vrot.lane.b32.xlu0 %v4624, 125
        %v4649 = vpop.permute.xlu0 %4648
        %4650 = vrot.lane.b32.xlu0 %v4625, 125
        %v4651 = vpop.permute.xlu0 %4650
        %4652 = vrot.lane.b32.xlu0 %v4626, 125
        %v4653 = vpop.permute.xlu0 %4652
        %4654 = vrot.lane.b32.xlu0 %v4627, 125
        %v4655 = vpop.permute.xlu0 %4654
        %4656 = vrot.lane.b32.xlu0 %v4628, 125
        %v4657 = vpop.permute.xlu0 %4656
        %4658 = vrot.lane.b32.xlu0 %v4629, 125
        %v4659 = vpop.permute.xlu0 %4658
        %4660 = vrot.lane.b32.xlu0 %v4630, 125
        %v4661 = vpop.permute.xlu0 %4660
        %4662 = vrot.lane.b32.xlu0 %v4631, 125
        %v4663 = vpop.permute.xlu0 %4662
        %4664 = vrot.lane.b32.xlu0 %v4632, 125
        %v4665 = vpop.permute.xlu0 %4664
        %4666 = vrot.lane.b32.xlu0 %v4633, 125
        %v4667 = vpop.permute.xlu0 %4666
        %4668 = vrot.lane.b32.xlu0 %v4634, 125
        %v4669 = vpop.permute.xlu0 %4668
        %4670 = vrot.lane.b32.xlu0 %v4635, 125
        %v4671 = vpop.permute.xlu0 %4670
        %v4672 = vsel %vm648, %v4649, %v4651
        %v4673 = vsel %vm648, %v4651, %v4653
        %v4674 = vsel %vm648, %v4653, %v4655
        %v4675 = vsel %vm648, %v4655, %v4657
        %v4676 = vsel %vm648, %v4657, %v4659
        %v4677 = vsel %vm648, %v4661, %v4663
        %v4678 = vsel %vm648, %v4663, %v4665
        %v4679 = vsel %vm648, %v4665, %v4667
        %v4680 = vsel %vm648, %v4667, %v4669
        %v4681 = vsel %vm648, %v4669, %v4671
        %v4692 = vadd.f32 %v4602, %v4672
        %v4693 = vadd.f32 %v4603, %v4673
        %v4694 = vadd.f32 %v4604, %v4674
        %v4695 = vadd.f32 %v4605, %v4675
        %v4696 = vadd.f32 %v4606, %v4676
        %v4697 = vadd.f32 %v4607, %v4677
        %v4698 = vadd.f32 %v4608, %v4678
        %v4699 = vadd.f32 %v4609, %v4679
        %v4700 = vadd.f32 %v4610, %v4680
        %v4701 = vadd.f32 %v4611, %v4681
        %v4702 = vld [vmem:[%s2483] sm:$0xff]
        %v4703 = vld [vmem:[%s2483 + $0x8] sm:$0xff]
        %4705 = vset.pattern.permute.xlu0 0
        %4706 = vperm.xlu0 %4705, %v4702
        %v4707 = vpop.permute.xlu0 %4706
        %4710 = vset.pattern.permute.xlu0 0
        %4711 = vperm.xlu0 %4710, %v4703
        %v4712 = vpop.permute.xlu0 %4711
        %v4714 = vmul.f32 %v4422, %v4707
        %v4715 = vmul.f32 %v4423, %v4707
        %v4716 = vmul.f32 %v4424, %v4707
        %v4717 = vmul.f32 %v4425, %v4707
        %v4718 = vmul.f32 %v4426, %v4707
        %v4719 = vmul.f32 %v4427, %v4707
        %v4720 = vmul.f32 %v4422, %v4712
        %v4721 = vmul.f32 %v4423, %v4712
        %v4722 = vmul.f32 %v4424, %v4712
        %v4723 = vmul.f32 %v4425, %v4712
        %v4724 = vmul.f32 %v4426, %v4712
        %v4725 = vmul.f32 %v4427, %v4712
        %4738 = vrot.lane.b32.xlu0 %v4714, 124
        %v4739 = vpop.permute.xlu0 %4738
        %4740 = vrot.lane.b32.xlu0 %v4715, 124
        %v4741 = vpop.permute.xlu0 %4740
        %4742 = vrot.lane.b32.xlu0 %v4716, 124
        %v4743 = vpop.permute.xlu0 %4742
        %4744 = vrot.lane.b32.xlu0 %v4717, 124
        %v4745 = vpop.permute.xlu0 %4744
        %4746 = vrot.lane.b32.xlu0 %v4718, 124
        %v4747 = vpop.permute.xlu0 %4746
        %4748 = vrot.lane.b32.xlu0 %v4719, 124
        %v4749 = vpop.permute.xlu0 %4748
        %4750 = vrot.lane.b32.xlu0 %v4720, 124
        %v4751 = vpop.permute.xlu0 %4750
        %4752 = vrot.lane.b32.xlu0 %v4721, 124
        %v4753 = vpop.permute.xlu0 %4752
        %4754 = vrot.lane.b32.xlu0 %v4722, 124
        %v4755 = vpop.permute.xlu0 %4754
        %4756 = vrot.lane.b32.xlu0 %v4723, 124
        %v4757 = vpop.permute.xlu0 %4756
        %4758 = vrot.lane.b32.xlu0 %v4724, 124
        %v4759 = vpop.permute.xlu0 %4758
        %4760 = vrot.lane.b32.xlu0 %v4725, 124
        %v4761 = vpop.permute.xlu0 %4760
        %v4762 = vsel %vm740, %v4739, %v4741
        %v4763 = vsel %vm740, %v4741, %v4743
        %v4764 = vsel %vm740, %v4743, %v4745
        %v4765 = vsel %vm740, %v4745, %v4747
        %v4766 = vsel %vm740, %v4747, %v4749
        %v4767 = vsel %vm740, %v4751, %v4753
        %v4768 = vsel %vm740, %v4753, %v4755
        %v4769 = vsel %vm740, %v4755, %v4757
        %v4770 = vsel %vm740, %v4757, %v4759
        %v4771 = vsel %vm740, %v4759, %v4761
        %v4782 = vadd.f32 %v4692, %v4762
        %v4783 = vadd.f32 %v4693, %v4763
        %v4784 = vadd.f32 %v4694, %v4764
        %v4785 = vadd.f32 %v4695, %v4765
        %v4786 = vadd.f32 %v4696, %v4766
        %v4787 = vadd.f32 %v4697, %v4767
        %v4788 = vadd.f32 %v4698, %v4768
        %v4789 = vadd.f32 %v4699, %v4769
        %v4790 = vadd.f32 %v4700, %v4770
        %v4791 = vadd.f32 %v4701, %v4771
        %v4792 = vld [vmem:[%s2] sm:$0xff]
        %v4793 = vld [vmem:[%s2 + $0x8] sm:$0xff]
        %4795 = vset.pattern.permute.xlu0 0
        %4796 = vperm.xlu0 %4795, %v4792
        %v4797 = vpop.permute.xlu0 %4796
        %4800 = vset.pattern.permute.xlu0 0
        %4801 = vperm.xlu0 %4800, %v4793
        %v4802 = vpop.permute.xlu0 %4801
        %v4804 = vadd.f32 %v4782, %v4797
        %v4805 = vadd.f32 %v4783, %v4797
        %v4806 = vadd.f32 %v4784, %v4797
        %v4807 = vadd.f32 %v4785, %v4797
        %v4808 = vadd.f32 %v4786, %v4797
        %v4809 = vadd.f32 %v4787, %v4802
        %v4810 = vadd.f32 %v4788, %v4802
        %v4811 = vadd.f32 %v4789, %v4802
        %v4812 = vadd.f32 %v4790, %v4802
        %v4813 = vadd.f32 %v4791, %v4802
        %v4814 = vmax.f32 %v4804, 0.0
        %v4815 = vmax.f32 %v4805, 0.0
        %v4816 = vmax.f32 %v4806, 0.0
        %v4817 = vmax.f32 %v4807, 0.0
        %v4818 = vmax.f32 %v4808, 0.0
        %v4819 = vmax.f32 %v4809, 0.0
        %v4820 = vmax.f32 %v4810, 0.0
        %v4821 = vmax.f32 %v4811, 0.0
        %v4822 = vmax.f32 %v4812, 0.0
        %v4823 = vmax.f32 %v4813, 0.0
        %4824 = vst [vmem:[#allocation2 + $0x28] sm:$0xff] %v4814
        %4825 = vst [vmem:[#allocation2 + $0x30] sm:$0xff] %v4815
        %4826 = vst [vmem:[#allocation2 + $0x38] sm:$0xff] %v4816
        %4827 = vst [vmem:[#allocation2 + $0x40] sm:$0xff] %v4817
        %4828 = vst [vmem:[#allocation2 + $0x48] sm:$0xff] %v4818
        %4829 = vst [vmem:[#allocation2 + $0x78] sm:$0xff] %v4819
        %4830 = vst [vmem:[#allocation2 + $0x80] sm:$0xff] %v4820
        %4831 = vst [vmem:[#allocation2 + $0x88] sm:$0xff] %v4821
        %4832 = vst [vmem:[#allocation2 + $0x90] sm:$0xff] %v4822
        %4833 = vst [vmem:[#allocation2 + $0x98] sm:$0xff] %v4823
        %v4834 = vld [vmem:[#allocation2] sm:$0xff]
        %v4835 = vld [vmem:[#allocation2 + $0x8] sm:$0xff]
        %v4836 = vld [vmem:[#allocation2 + $0x10] sm:$0xff]
        %v4837 = vld [vmem:[#allocation2 + $0x18] sm:$0xff]
        %v4838 = vld [vmem:[#allocation2 + $0x20] sm:$0xff]
        %v4839 = vld [vmem:[#allocation2 + $0x28] sm:$0xff]
        %v4840 = vld [vmem:[#allocation2 + $0x30] sm:$0xff]
        %v4841 = vld [vmem:[#allocation2 + $0x38] sm:$0xff]
        %v4842 = vld [vmem:[#allocation2 + $0x40] sm:$0xff]
        %v4843 = vld [vmem:[#allocation2 + $0x50] sm:$0xff]
        %v4844 = vld [vmem:[#allocation2 + $0x58] sm:$0xff]
        %v4845 = vld [vmem:[#allocation2 + $0x60] sm:$0xff]
        %v4846 = vld [vmem:[#allocation2 + $0x68] sm:$0xff]
        %v4847 = vld [vmem:[#allocation2 + $0x70] sm:$0xff]
        %v4848 = vld [vmem:[#allocation2 + $0x78] sm:$0xff]
        %v4849 = vld [vmem:[#allocation2 + $0x80] sm:$0xff]
        %v4850 = vld [vmem:[#allocation2 + $0x88] sm:$0xff]
        %v4851 = vld [vmem:[#allocation2 + $0x90] sm:$0xff]
        %v4852 = vld [vmem:[#allocation2] sm:$0xff]
        %v4853 = vld [vmem:[#allocation2 + $0x8] sm:$0xff]
        %v4854 = vld [vmem:[#allocation2 + $0x10] sm:$0xff]
        %v4855 = vld [vmem:[#allocation2 + $0x18] sm:$0xff]
        %v4856 = vld [vmem:[#allocation2 + $0x20] sm:$0xff]
        %v4857 = vld [vmem:[#allocation2 + $0x28] sm:$0xff]
        %v4858 = vld [vmem:[#allocation2 + $0x30] sm:$0xff]
        %v4859 = vld [vmem:[#allocation2 + $0x38] sm:$0xff]
        %v4860 = vld [vmem:[#allocation2 + $0x40] sm:$0xff]
        %v4861 = vld [vmem:[#allocation2 + $0x48] sm:$0xff]
        %v4862 = vld [vmem:[#allocation2 + $0x50] sm:$0xff]
        %v4863 = vld [vmem:[#allocation2 + $0x58] sm:$0xff]
        %v4864 = vld [vmem:[#allocation2 + $0x60] sm:$0xff]
        %v4865 = vld [vmem:[#allocation2 + $0x68] sm:$0xff]
        %v4866 = vld [vmem:[#allocation2 + $0x70] sm:$0xff]
        %v4867 = vld [vmem:[#allocation2 + $0x78] sm:$0xff]
        %v4868 = vld [vmem:[#allocation2 + $0x80] sm:$0xff]
        %v4869 = vld [vmem:[#allocation2 + $0x88] sm:$0xff]
        %v4870 = vld [vmem:[#allocation2 + $0x90] sm:$0xff]
        %v4871 = vld [vmem:[#allocation2 + $0x98] sm:$0xff]
        %4892 = vrot.lane.b32.xlu0 %v4852, 127
        %v4893 = vpop.permute.xlu0 %4892
        %4894 = vrot.lane.b32.xlu0 %v4853, 127
        %v4895 = vpop.permute.xlu0 %4894
        %4896 = vrot.lane.b32.xlu0 %v4854, 127
        %v4897 = vpop.permute.xlu0 %4896
        %4898 = vrot.lane.b32.xlu0 %v4855, 127
        %v4899 = vpop.permute.xlu0 %4898
        %4900 = vrot.lane.b32.xlu0 %v4856, 127
        %v4901 = vpop.permute.xlu0 %4900
        %4902 = vrot.lane.b32.xlu0 %v4857, 127
        %v4903 = vpop.permute.xlu0 %4902
        %4904 = vrot.lane.b32.xlu0 %v4858, 127
        %v4905 = vpop.permute.xlu0 %4904
        %4906 = vrot.lane.b32.xlu0 %v4859, 127
        %v4907 = vpop.permute.xlu0 %4906
        %4908 = vrot.lane.b32.xlu0 %v4860, 127
        %v4909 = vpop.permute.xlu0 %4908
        %4910 = vrot.lane.b32.xlu0 %v4861, 127
        %v4911 = vpop.permute.xlu0 %4910
        %4912 = vrot.lane.b32.xlu0 %v4862, 127
        %v4913 = vpop.permute.xlu0 %4912
        %4914 = vrot.lane.b32.xlu0 %v4863, 127
        %v4915 = vpop.permute.xlu0 %4914
        %4916 = vrot.lane.b32.xlu0 %v4864, 127
        %v4917 = vpop.permute.xlu0 %4916
        %4918 = vrot.lane.b32.xlu0 %v4865, 127
        %v4919 = vpop.permute.xlu0 %4918
        %4920 = vrot.lane.b32.xlu0 %v4866, 127
        %v4921 = vpop.permute.xlu0 %4920
        %4922 = vrot.lane.b32.xlu0 %v4867, 127
        %v4923 = vpop.permute.xlu0 %4922
        %4924 = vrot.lane.b32.xlu0 %v4868, 127
        %v4925 = vpop.permute.xlu0 %4924
        %4926 = vrot.lane.b32.xlu0 %v4869, 127
        %v4927 = vpop.permute.xlu0 %4926
        %4928 = vrot.lane.b32.xlu0 %v4870, 127
        %v4929 = vpop.permute.xlu0 %4928
        %4930 = vrot.lane.b32.xlu0 %v4871, 127
        %v4931 = vpop.permute.xlu0 %4930
        %v4932 = vsel %vm464, %v4893, %v4895
        %v4933 = vsel %vm464, %v4895, %v4897
        %v4934 = vsel %vm464, %v4897, %v4899
        %v4935 = vsel %vm464, %v4899, %v4901
        %v4936 = vsel %vm464, %v4901, %v4903
        %v4937 = vsel %vm464, %v4903, %v4905
        %v4938 = vsel %vm464, %v4905, %v4907
        %v4939 = vsel %vm464, %v4907, %v4909
        %v4940 = vsel %vm464, %v4909, %v4911
        %v4941 = vsel %vm464, %v4913, %v4915
        %v4942 = vsel %vm464, %v4915, %v4917
        %v4943 = vsel %vm464, %v4917, %v4919
        %v4944 = vsel %vm464, %v4919, %v4921
        %v4945 = vsel %vm464, %v4921, %v4923
        %v4946 = vsel %vm464, %v4923, %v4925
        %v4947 = vsel %vm464, %v4925, %v4927
        %v4948 = vsel %vm464, %v4927, %v4929
        %v4949 = vsel %vm464, %v4929, %v4931
        %v4968 = vmax.f32 %v4834, %v4932
        %v4969 = vmax.f32 %v4835, %v4933
        %v4970 = vmax.f32 %v4836, %v4934
        %v4971 = vmax.f32 %v4837, %v4935
        %v4972 = vmax.f32 %v4838, %v4936
        %v4973 = vmax.f32 %v4839, %v4937
        %v4974 = vmax.f32 %v4840, %v4938
        %v4975 = vmax.f32 %v4841, %v4939
        %v4976 = vmax.f32 %v4842, %v4940
        %v4977 = vmax.f32 %v4843, %v4941
        %v4978 = vmax.f32 %v4844, %v4942
        %v4979 = vmax.f32 %v4845, %v4943
        %v4980 = vmax.f32 %v4846, %v4944
        %v4981 = vmax.f32 %v4847, %v4945
        %v4982 = vmax.f32 %v4848, %v4946
        %v4983 = vmax.f32 %v4849, %v4947
        %v4984 = vmax.f32 %v4850, %v4948
        %v4985 = vmax.f32 %v4851, %v4949
        %v4988 = vmax.f32 %v4852, %v4932
        %v4989 = vmax.f32 %v4853, %v4933
        %v4990 = vmax.f32 %v4854, %v4934
        %v4991 = vmax.f32 %v4855, %v4935
        %v4992 = vmax.f32 %v4856, %v4936
        %v4993 = vmax.f32 %v4857, %v4937
        %v4994 = vmax.f32 %v4858, %v4938
        %v4995 = vmax.f32 %v4859, %v4939
        %v4996 = vmax.f32 %v4860, %v4940
        %v4997 = vmax.f32 %v4861, %v4911
        %v4998 = vmax.f32 %v4862, %v4941
        %v4999 = vmax.f32 %v4863, %v4942
        %v5000 = vmax.f32 %v4864, %v4943
        %v5001 = vmax.f32 %v4865, %v4944
        %v5002 = vmax.f32 %v4866, %v4945
        %v5003 = vmax.f32 %v4867, %v4946
        %v5004 = vmax.f32 %v4868, %v4947
        %v5005 = vmax.f32 %v4869, %v4948
        %v5006 = vmax.f32 %v4870, %v4949
        %v5007 = vmax.f32 %v4871, %v4931
        %5028 = vrot.lane.b32.xlu0 %v4988, 96
        %v5029 = vpop.permute.xlu0 %5028
        %5030 = vrot.lane.b32.xlu0 %v4989, 96
        %v5031 = vpop.permute.xlu0 %5030
        %5032 = vrot.lane.b32.xlu0 %v4990, 96
        %v5033 = vpop.permute.xlu0 %5032
        %5034 = vrot.lane.b32.xlu0 %v4991, 96
        %v5035 = vpop.permute.xlu0 %5034
        %5036 = vrot.lane.b32.xlu0 %v4992, 96
        %v5037 = vpop.permute.xlu0 %5036
        %5038 = vrot.lane.b32.xlu0 %v4993, 96
        %v5039 = vpop.permute.xlu0 %5038
        %5040 = vrot.lane.b32.xlu0 %v4994, 96
        %v5041 = vpop.permute.xlu0 %5040
        %5042 = vrot.lane.b32.xlu0 %v4995, 96
        %v5043 = vpop.permute.xlu0 %5042
        %5044 = vrot.lane.b32.xlu0 %v4996, 96
        %v5045 = vpop.permute.xlu0 %5044
        %5046 = vrot.lane.b32.xlu0 %v4997, 96
        %v5047 = vpop.permute.xlu0 %5046
        %5048 = vrot.lane.b32.xlu0 %v4998, 96
        %v5049 = vpop.permute.xlu0 %5048
        %5050 = vrot.lane.b32.xlu0 %v4999, 96
        %v5051 = vpop.permute.xlu0 %5050
        %5052 = vrot.lane.b32.xlu0 %v5000, 96
        %v5053 = vpop.permute.xlu0 %5052
        %5054 = vrot.lane.b32.xlu0 %v5001, 96
        %v5055 = vpop.permute.xlu0 %5054
        %5056 = vrot.lane.b32.xlu0 %v5002, 96
        %v5057 = vpop.permute.xlu0 %5056
        %5058 = vrot.lane.b32.xlu0 %v5003, 96
        %v5059 = vpop.permute.xlu0 %5058
        %5060 = vrot.lane.b32.xlu0 %v5004, 96
        %v5061 = vpop.permute.xlu0 %5060
        %5062 = vrot.lane.b32.xlu0 %v5005, 96
        %v5063 = vpop.permute.xlu0 %5062
        %5064 = vrot.lane.b32.xlu0 %v5006, 96
        %v5065 = vpop.permute.xlu0 %5064
        %5066 = vrot.lane.b32.xlu0 %v5007, 96
        %v5067 = vpop.permute.xlu0 %5066
        %v5068 = vsel %vm832, %v5029, %v5031
        %v5069 = vsel %vm832, %v5031, %v5033
        %v5070 = vsel %vm832, %v5033, %v5035
        %v5071 = vsel %vm832, %v5035, %v5037
        %v5072 = vsel %vm832, %v5037, %v5039
        %v5073 = vsel %vm832, %v5039, %v5041
        %v5074 = vsel %vm832, %v5041, %v5043
        %v5075 = vsel %vm832, %v5043, %v5045
        %v5076 = vsel %vm832, %v5045, %v5047
        %v5077 = vsel %vm832, %v5049, %v5051
        %v5078 = vsel %vm832, %v5051, %v5053
        %v5079 = vsel %vm832, %v5053, %v5055
        %v5080 = vsel %vm832, %v5055, %v5057
        %v5081 = vsel %vm832, %v5057, %v5059
        %v5082 = vsel %vm832, %v5059, %v5061
        %v5083 = vsel %vm832, %v5061, %v5063
        %v5084 = vsel %vm832, %v5063, %v5065
        %v5085 = vsel %vm832, %v5065, %v5067
        %v5104 = vmax.f32 %v4968, %v5068
        %v5105 = vmax.f32 %v4969, %v5069
        %v5106 = vmax.f32 %v4970, %v5070
        %v5107 = vmax.f32 %v4971, %v5071
        %v5108 = vmax.f32 %v4972, %v5072
        %v5109 = vmax.f32 %v4973, %v5073
        %v5110 = vmax.f32 %v4974, %v5074
        %v5111 = vmax.f32 %v4975, %v5075
        %v5112 = vmax.f32 %v4976, %v5076
        %v5113 = vmax.f32 %v4977, %v5077
        %v5114 = vmax.f32 %v4978, %v5078
        %v5115 = vmax.f32 %v4979, %v5079
        %v5116 = vmax.f32 %v4980, %v5080
        %v5117 = vmax.f32 %v4981, %v5081
        %v5118 = vmax.f32 %v4982, %v5082
        %v5119 = vmax.f32 %v4983, %v5083
        %v5120 = vmax.f32 %v4984, %v5084
        %v5121 = vmax.f32 %v4985, %v5085
        %v5122 = vld [vmem:[%s3] sm:$0xff]
        %v5123 = vld [vmem:[%s3 + $0x8] sm:$0x1]
        %v5126 = vperm.slane %v5122, 0
        %v5127 = vperm.slane %v5122, 1
        %v5128 = vperm.slane %v5122, 2
        %v5129 = vperm.slane %v5122, 3
        %v5130 = vperm.slane %v5122, 4
        %v5131 = vperm.slane %v5122, 5
        %v5132 = vperm.slane %v5122, 6
        %v5133 = vperm.slane %v5122, 7
        %v5134 = vperm.slane %v5123, 0
        %v5144 = vmul.f32 %v5104, %v5126
        %v5145 = vmul.f32 %v5105, %v5127
        %v5146 = vmul.f32 %v5106, %v5128
        %v5147 = vmul.f32 %v5107, %v5129
        %v5148 = vmul.f32 %v5108, %v5130
        %v5149 = vmul.f32 %v5109, %v5131
        %v5150 = vmul.f32 %v5110, %v5132
        %v5151 = vmul.f32 %v5111, %v5133
        %v5152 = vmul.f32 %v5112, %v5134
        %v5153 = vmul.f32 %v5113, %v5126
        %v5154 = vmul.f32 %v5114, %v5127
        %v5155 = vmul.f32 %v5115, %v5128
        %v5156 = vmul.f32 %v5116, %v5129
        %v5157 = vmul.f32 %v5117, %v5130
        %v5158 = vmul.f32 %v5118, %v5131
        %v5159 = vmul.f32 %v5119, %v5132
        %v5160 = vmul.f32 %v5120, %v5133
        %v5161 = vmul.f32 %v5121, %v5134
        %v5162 = vpack.c.bf16 %v5145, %v5144
        %v5163 = vpack.c.bf16 %v5147, %v5146
        %v5164 = vpack.c.bf16 %v5149, %v5148
        %v5165 = vpack.c.bf16 %v5151, %v5150
        %v5166 = vpack.c.bf16 %v5152, %v5152
        %v5167 = vpack.c.bf16 %v5154, %v5153
        %v5168 = vpack.c.bf16 %v5156, %v5155
        %v5169 = vpack.c.bf16 %v5158, %v5157
        %v5170 = vpack.c.bf16 %v5160, %v5159
        %v5171 = vpack.c.bf16 %v5161, %v5161
        %5172 = vst [vmem:[#allocation3] sm:$0xff] %v5162
        %5173 = vst [vmem:[#allocation3 + $0x8] sm:$0xff] %v5163
        %5174 = vst [vmem:[#allocation3 + $0x10] sm:$0xff] %v5164
        %5175 = vst [vmem:[#allocation3 + $0x18] sm:$0xff] %v5165
        %5176 = vst [vmem:[#allocation3 + $0x20] sm:$0xf] %v5166
        %5177 = vst [vmem:[#allocation3 + $0x28] sm:$0xff] %v5167
        %5178 = vst [vmem:[#allocation3 + $0x30] sm:$0xff] %v5168
        %5179 = vst [vmem:[#allocation3 + $0x38] sm:$0xff] %v5169
        %5180 = vst [vmem:[#allocation3 + $0x40] sm:$0xff] %v5170
        %5181 = vst [vmem:[#allocation3 + $0x48] sm:$0xf] %v5171
        %5182 = vst [vmem:[#allocation3 + $0x24] sm:$0xf] 0
        %5183 = vst [vmem:[#allocation3 + $0x4c] sm:$0xf] 0
        %v5184 = vld [vmem:[#allocation3] sm:$0xff]
        %v5185 = vld [vmem:[#allocation3 + $0x8] sm:$0xff]
        %v5186 = vld [vmem:[#allocation3 + $0x10] sm:$0xff]
        %v5187 = vld [vmem:[#allocation3 + $0x18] sm:$0xf]
        %v5188 = vld [vmem:[#allocation3 + $0x28] sm:$0xff]
        %v5189 = vld [vmem:[#allocation3 + $0x30] sm:$0xff]
        %v5190 = vld [vmem:[#allocation3 + $0x38] sm:$0xff]
        %v5191 = vld [vmem:[#allocation3 + $0x40] sm:$0xf]
        %5192 = vst [vmem:[#allocation4] sm:$0xff] %v5184
        %5193 = vst [vmem:[#allocation4 + $0x8] sm:$0xff] %v5185
        %5194 = vst [vmem:[#allocation4 + $0x10] sm:$0xff] %v5186
        %5195 = vst [vmem:[#allocation4 + $0x18] sm:$0xf] %v5187
        %5196 = vst [vmem:[#allocation4 + $0x1c] sm:$0xff] %v5188
        %5197 = vst [vmem:[#allocation4 + $0x24] sm:$0xff] %v5189
        %5198 = vst [vmem:[#allocation4 + $0x2c] sm:$0xff] %v5190
        %5199 = vst [vmem:[#allocation4 + $0x34] sm:$0xf] %v5191
        %v5200 = vld [vmem:[#allocation3] sm:$0xff]
        %v5201 = vld [vmem:[#allocation3 + $0x8] sm:$0xff]
        %v5202 = vld [vmem:[#allocation3 + $0x10] sm:$0xff]
        %v5203 = vld [vmem:[#allocation3 + $0x18] sm:$0xff]
        %v5204 = vld [vmem:[#allocation3 + $0x28] sm:$0xff]
        %v5205 = vld [vmem:[#allocation3 + $0x30] sm:$0xff]
        %v5206 = vld [vmem:[#allocation3 + $0x38] sm:$0xff]
        %v5207 = vld [vmem:[#allocation3 + $0x40] sm:$0xff]
        %5216 = vrot.lane.b32.xlu0 %v5200, 126
        %v5217 = vpop.permute.xlu0 %5216
        %5218 = vrot.lane.b32.xlu0 %v5201, 126
        %v5219 = vpop.permute.xlu0 %5218
        %5220 = vrot.lane.b32.xlu0 %v5202, 126
        %v5221 = vpop.permute.xlu0 %5220
        %5222 = vrot.lane.b32.xlu0 %v5203, 126
        %v5223 = vpop.permute.xlu0 %5222
        %5224 = vrot.lane.b32.xlu0 %v5204, 126
        %v5225 = vpop.permute.xlu0 %5224
        %5226 = vrot.lane.b32.xlu0 %v5205, 126
        %v5227 = vpop.permute.xlu0 %5226
        %5228 = vrot.lane.b32.xlu0 %v5206, 126
        %v5229 = vpop.permute.xlu0 %5228
        %5230 = vrot.lane.b32.xlu0 %v5207, 126
        %v5231 = vpop.permute.xlu0 %5230
        %v5232 = vrot.slane %v5217, 4
        %v5233 = vrot.slane %v5219, 4
        %v5234 = vrot.slane %v5221, 4
        %v5235 = vrot.slane %v5223, 4
        %v5236 = vrot.slane %v5225, 4
        %v5237 = vrot.slane %v5227, 4
        %v5238 = vrot.slane %v5229, 4
        %v5239 = vrot.slane %v5231, 4
        %vm5240 = vcmask 1043456
        %v5241 = vsel %vm5240, %v5232, %v5233
        %vm5242 = vcmask 1031168
        %v5243 = vsel %vm5242, %v5217, %v5241
        %v5244 = vsel %vm5240, %v5233, %v5234
        %v5245 = vsel %vm5242, %v5219, %v5244
        %v5246 = vsel %vm5240, %v5234, %v5235
        %v5247 = vsel %vm5242, %v5221, %v5246
        %v5248 = vsel %vm5242, %v5223, %v5235
        %v5249 = vsel %vm5240, %v5236, %v5237
        %v5250 = vsel %vm5242, %v5225, %v5249
        %v5251 = vsel %vm5240, %v5237, %v5238
        %v5252 = vsel %vm5242, %v5227, %v5251
        %v5253 = vsel %vm5240, %v5238, %v5239
        %v5254 = vsel %vm5242, %v5229, %v5253
        %v5255 = vsel %vm5242, %v5231, %v5239
        %5264 = vst [vmem:[#allocation4 + $0x38] sm:$0xff] %v5243
        %5265 = vst [vmem:[#allocation4 + $0x40] sm:$0xff] %v5245
        %5266 = vst [vmem:[#allocation4 + $0x48] sm:$0xff] %v5247
        %5267 = vst [vmem:[#allocation4 + $0x50] sm:$0xf] %v5248
        %5268 = vst [vmem:[#allocation4 + $0x54] sm:$0xff] %v5250
        %5269 = vst [vmem:[#allocation4 + $0x5c] sm:$0xff] %v5252
        %5270 = vst [vmem:[#allocation4 + $0x64] sm:$0xff] %v5254
        %5271 = vst [vmem:[#allocation4 + $0x6c] sm:$0xf] %v5255
        %v5272 = vld [vmem:[#allocation3] sm:$0xff]
        %v5273 = vld [vmem:[#allocation3 + $0x8] sm:$0xff]
        %v5274 = vld [vmem:[#allocation3 + $0x10] sm:$0xff]
        %v5275 = vld [vmem:[#allocation3 + $0x18] sm:$0xff]
        %v5276 = vld [vmem:[#allocation3 + $0x28] sm:$0xff]
        %v5277 = vld [vmem:[#allocation3 + $0x30] sm:$0xff]
        %v5278 = vld [vmem:[#allocation3 + $0x38] sm:$0xff]
        %v5279 = vld [vmem:[#allocation3 + $0x40] sm:$0xff]
        %5288 = vrot.lane.b32.xlu0 %v5272, 124
        %v5289 = vpop.permute.xlu0 %5288
        %5290 = vrot.lane.b32.xlu0 %v5273, 124
        %v5291 = vpop.permute.xlu0 %5290
        %5292 = vrot.lane.b32.xlu0 %v5274, 124
        %v5293 = vpop.permute.xlu0 %5292
        %5294 = vrot.lane.b32.xlu0 %v5275, 124
        %v5295 = vpop.permute.xlu0 %5294
        %5296 = vrot.lane.b32.xlu0 %v5276, 124
        %v5297 = vpop.permute.xlu0 %5296
        %5298 = vrot.lane.b32.xlu0 %v5277, 124
        %v5299 = vpop.permute.xlu0 %5298
        %5300 = vrot.lane.b32.xlu0 %v5278, 124
        %v5301 = vpop.permute.xlu0 %5300
        %5302 = vrot.lane.b32.xlu0 %v5279, 124
        %v5303 = vpop.permute.xlu0 %5302
        %v5304 = vrot.slane %v5289, 4
        %v5305 = vrot.slane %v5291, 4
        %v5306 = vrot.slane %v5293, 4
        %v5307 = vrot.slane %v5295, 4
        %v5308 = vrot.slane %v5297, 4
        %v5309 = vrot.slane %v5299, 4
        %v5310 = vrot.slane %v5301, 4
        %v5311 = vrot.slane %v5303, 4
        %v5312 = vsel %vm5240, %v5304, %v5305
        %vm5313 = vcmask 1014784
        %v5314 = vsel %vm5313, %v5289, %v5312
        %v5315 = vsel %vm5240, %v5305, %v5306
        %v5316 = vsel %vm5313, %v5291, %v5315
        %v5317 = vsel %vm5240, %v5306, %v5307
        %v5318 = vsel %vm5313, %v5293, %v5317
        %v5319 = vsel %vm5313, %v5295, %v5307
        %v5320 = vsel %vm5240, %v5308, %v5309
        %v5321 = vsel %vm5313, %v5297, %v5320
        %v5322 = vsel %vm5240, %v5309, %v5310
        %v5323 = vsel %vm5313, %v5299, %v5322
        %v5324 = vsel %vm5240, %v5310, %v5311
        %v5325 = vsel %vm5313, %v5301, %v5324
        %v5326 = vsel %vm5313, %v5303, %v5311
        %5335 = vst [vmem:[#allocation4 + $0x70] sm:$0xff] %v5314
        %5336 = vst [vmem:[#allocation4 + $0x78] sm:$0xff] %v5316
        %5337 = vst [vmem:[#allocation4 + $0x80] sm:$0xff] %v5318
        %5338 = vst [vmem:[#allocation4 + $0x88] sm:$0xf] %v5319
        %5339 = vst [vmem:[#allocation4 + $0x8c] sm:$0xff] %v5321
        %5340 = vst [vmem:[#allocation4 + $0x94] sm:$0xff] %v5323
        %5341 = vst [vmem:[#allocation4 + $0x9c] sm:$0xff] %v5325
        %5342 = vst [vmem:[#allocation4 + $0xa4] sm:$0xf] %v5326
        %v5343 = vld [vmem:[#allocation3] sm:$0xff]
        %v5344 = vld [vmem:[#allocation3 + $0x8] sm:$0xff]
        %v5345 = vld [vmem:[#allocation3 + $0x10] sm:$0xff]
        %v5346 = vld [vmem:[#allocation3 + $0x18] sm:$0xff]
        %v5347 = vld [vmem:[#allocation3 + $0x28] sm:$0xff]
        %v5348 = vld [vmem:[#allocation3 + $0x30] sm:$0xff]
        %v5349 = vld [vmem:[#allocation3 + $0x38] sm:$0xff]
        %v5350 = vld [vmem:[#allocation3 + $0x40] sm:$0xff]
        %5359 = vrot.lane.b32.xlu0 %v5343, 122
        %v5360 = vpop.permute.xlu0 %5359
        %5361 = vrot.lane.b32.xlu0 %v5344, 122
        %v5362 = vpop.permute.xlu0 %5361
        %5363 = vrot.lane.b32.xlu0 %v5345, 122
        %v5364 = vpop.permute.xlu0 %5363
        %5365 = vrot.lane.b32.xlu0 %v5346, 122
        %v5366 = vpop.permute.xlu0 %5365
        %5367 = vrot.lane.b32.xlu0 %v5347, 122
        %v5368 = vpop.permute.xlu0 %5367
        %5369 = vrot.lane.b32.xlu0 %v5348, 122
        %v5370 = vpop.permute.xlu0 %5369
        %5371 = vrot.lane.b32.xlu0 %v5349, 122
        %v5372 = vpop.permute.xlu0 %5371
        %5373 = vrot.lane.b32.xlu0 %v5350, 122
        %v5374 = vpop.permute.xlu0 %5373
        %v5375 = vrot.slane %v5360, 4
        %v5376 = vrot.slane %v5362, 4
        %v5377 = vrot.slane %v5364, 4
        %v5378 = vrot.slane %v5366, 4
        %v5379 = vrot.slane %v5368, 4
        %v5380 = vrot.slane %v5370, 4
        %v5381 = vrot.slane %v5372, 4
        %v5382 = vrot.slane %v5374, 4
        %v5383 = vsel %vm5240, %v5375, %v5376
        %vm5384 = vcmask 998400
        %v5385 = vsel %vm5384, %v5360, %v5383
        %v5386 = vsel %vm5240, %v5376, %v5377
        %v5387 = vsel %vm5384, %v5362, %v5386
        %v5388 = vsel %vm5240, %v5377, %v5378
        %v5389 = vsel %vm5384, %v5364, %v5388
        %v5390 = vsel %vm5384, %v5366, %v5378
        %v5391 = vsel %vm5240, %v5379, %v5380
        %v5392 = vsel %vm5384, %v5368, %v5391
        %v5393 = vsel %vm5240, %v5380, %v5381
        %v5394 = vsel %vm5384, %v5370, %v5393
        %v5395 = vsel %vm5240, %v5381, %v5382
        %v5396 = vsel %vm5384, %v5372, %v5395
        %v5397 = vsel %vm5384, %v5374, %v5382
        %5406 = vst [vmem:[#allocation4 + $0xa8] sm:$0xff] %v5385
        %5407 = vst [vmem:[#allocation4 + $0xb0] sm:$0xff] %v5387
        %5408 = vst [vmem:[#allocation4 + $0xb8] sm:$0xff] %v5389
        %5409 = vst [vmem:[#allocation4 + $0xc0] sm:$0xf] %v5390
        %5410 = vst [vmem:[#allocation4 + $0xc4] sm:$0xff] %v5392
        %5411 = vst [vmem:[#allocation4 + $0xcc] sm:$0xff] %v5394
        %5412 = vst [vmem:[#allocation4 + $0xd4] sm:$0xff] %v5396
        %5413 = vst [vmem:[#allocation4 + $0xdc] sm:$0xf] %v5397
        %v5414 = vld [vmem:[#allocation3] sm:$0xff]
        %v5415 = vld [vmem:[#allocation3 + $0x8] sm:$0xff]
        %v5416 = vld [vmem:[#allocation3 + $0x10] sm:$0xff]
        %v5417 = vld [vmem:[#allocation3 + $0x18] sm:$0xff]
        %v5418 = vld [vmem:[#allocation3 + $0x28] sm:$0xff]
        %v5419 = vld [vmem:[#allocation3 + $0x30] sm:$0xff]
        %v5420 = vld [vmem:[#allocation3 + $0x38] sm:$0xff]
        %v5421 = vld [vmem:[#allocation3 + $0x40] sm:$0xff]
        %5430 = vrot.lane.b32.xlu0 %v5414, 120
        %v5431 = vpop.permute.xlu0 %5430
        %5432 = vrot.lane.b32.xlu0 %v5415, 120
        %v5433 = vpop.permute.xlu0 %5432
        %5434 = vrot.lane.b32.xlu0 %v5416, 120
        %v5435 = vpop.permute.xlu0 %5434
        %5436 = vrot.lane.b32.xlu0 %v5417, 120
        %v5437 = vpop.permute.xlu0 %5436
        %5438 = vrot.lane.b32.xlu0 %v5418, 120
        %v5439 = vpop.permute.xlu0 %5438
        %5440 = vrot.lane.b32.xlu0 %v5419, 120
        %v5441 = vpop.permute.xlu0 %5440
        %5442 = vrot.lane.b32.xlu0 %v5420, 120
        %v5443 = vpop.permute.xlu0 %5442
        %5444 = vrot.lane.b32.xlu0 %v5421, 120
        %v5445 = vpop.permute.xlu0 %5444
        %v5446 = vrot.slane %v5431, 4
        %v5447 = vrot.slane %v5433, 4
        %v5448 = vrot.slane %v5435, 4
        %v5449 = vrot.slane %v5437, 4
        %v5450 = vrot.slane %v5439, 4
        %v5451 = vrot.slane %v5441, 4
        %v5452 = vrot.slane %v5443, 4
        %v5453 = vrot.slane %v5445, 4
        %v5454 = vsel %vm5240, %v5446, %v5447
        %vm5455 = vcmask 982016
        %v5456 = vsel %vm5455, %v5431, %v5454
        %v5457 = vsel %vm5240, %v5447, %v5448
        %v5458 = vsel %vm5455, %v5433, %v5457
        %v5459 = vsel %vm5240, %v5448, %v5449
        %v5460 = vsel %vm5455, %v5435, %v5459
        %v5461 = vsel %vm5455, %v5437, %v5449
        %v5462 = vsel %vm5240, %v5450, %v5451
        %v5463 = vsel %vm5455, %v5439, %v5462
        %v5464 = vsel %vm5240, %v5451, %v5452
        %v5465 = vsel %vm5455, %v5441, %v5464
        %v5466 = vsel %vm5240, %v5452, %v5453
        %v5467 = vsel %vm5455, %v5443, %v5466
        %v5468 = vsel %vm5455, %v5445, %v5453
        %5477 = vst [vmem:[#allocation4 + $0xe0] sm:$0xff] %v5456
        %5478 = vst [vmem:[#allocation4 + $0xe8] sm:$0xff] %v5458
        %5479 = vst [vmem:[#allocation4 + $0xf0] sm:$0xff] %v5460
        %5480 = vst [vmem:[#allocation4 + $0xf8] sm:$0xf] %v5461
        %5481 = vst [vmem:[#allocation4 + $0xfc] sm:$0xff] %v5463
        %5482 = vst [vmem:[#allocation4 + $0x104] sm:$0xff] %v5465
        %5483 = vst [vmem:[#allocation4 + $0x10c] sm:$0xff] %v5467
        %5484 = vst [vmem:[#allocation4 + $0x114] sm:$0xf] %v5468
        %v5485 = vld [vmem:[#allocation3] sm:$0xff]
        %v5486 = vld [vmem:[#allocation3 + $0x8] sm:$0xff]
        %v5487 = vld [vmem:[#allocation3 + $0x10] sm:$0xff]
        %v5488 = vld [vmem:[#allocation3 + $0x18] sm:$0xff]
        %v5489 = vld [vmem:[#allocation3 + $0x28] sm:$0xff]
        %v5490 = vld [vmem:[#allocation3 + $0x30] sm:$0xff]
        %v5491 = vld [vmem:[#allocation3 + $0x38] sm:$0xff]
        %v5492 = vld [vmem:[#allocation3 + $0x40] sm:$0xff]
        %5501 = vrot.lane.b32.xlu0 %v5485, 64
        %v5502 = vpop.permute.xlu0 %5501
        %5503 = vrot.lane.b32.xlu0 %v5486, 64
        %v5504 = vpop.permute.xlu0 %5503
        %5505 = vrot.lane.b32.xlu0 %v5487, 64
        %v5506 = vpop.permute.xlu0 %5505
        %5507 = vrot.lane.b32.xlu0 %v5488, 64
        %v5508 = vpop.permute.xlu0 %5507
        %5509 = vrot.lane.b32.xlu0 %v5489, 64
        %v5510 = vpop.permute.xlu0 %5509
        %5511 = vrot.lane.b32.xlu0 %v5490, 64
        %v5512 = vpop.permute.xlu0 %5511
        %5513 = vrot.lane.b32.xlu0 %v5491, 64
        %v5514 = vpop.permute.xlu0 %5513
        %5515 = vrot.lane.b32.xlu0 %v5492, 64
        %v5516 = vpop.permute.xlu0 %5515
        %v5517 = vrot.slane %v5502, 4
        %v5518 = vrot.slane %v5504, 4
        %v5519 = vrot.slane %v5506, 4
        %v5520 = vrot.slane %v5508, 4
        %v5521 = vrot.slane %v5510, 4
        %v5522 = vrot.slane %v5512, 4
        %v5523 = vrot.slane %v5514, 4
        %v5524 = vrot.slane %v5516, 4
        %v5525 = vsel %vm5240, %v5517, %v5518
        %vm5526 = vcmask 523264
        %v5527 = vsel %vm5526, %v5502, %v5525
        %v5528 = vsel %vm5240, %v5518, %v5519
        %v5529 = vsel %vm5526, %v5504, %v5528
        %v5530 = vsel %vm5240, %v5519, %v5520
        %v5531 = vsel %vm5526, %v5506, %v5530
        %v5532 = vsel %vm5526, %v5508, %v5520
        %v5533 = vsel %vm5240, %v5521, %v5522
        %v5534 = vsel %vm5526, %v5510, %v5533
        %v5535 = vsel %vm5240, %v5522, %v5523
        %v5536 = vsel %vm5526, %v5512, %v5535
        %v5537 = vsel %vm5240, %v5523, %v5524
        %v5538 = vsel %vm5526, %v5514, %v5537
        %v5539 = vsel %vm5526, %v5516, %v5524
        %5548 = vst [vmem:[#allocation4 + $0x118] sm:$0xff] %v5527
        %5549 = vst [vmem:[#allocation4 + $0x120] sm:$0xff] %v5529
        %5550 = vst [vmem:[#allocation4 + $0x128] sm:$0xff] %v5531
        %5551 = vst [vmem:[#allocation4 + $0x130] sm:$0xf] %v5532
        %5552 = vst [vmem:[#allocation4 + $0x134] sm:$0xff] %v5534
        %5553 = vst [vmem:[#allocation4 + $0x13c] sm:$0xff] %v5536
        %5554 = vst [vmem:[#allocation4 + $0x144] sm:$0xff] %v5538
        %5555 = vst [vmem:[#allocation4 + $0x14c] sm:$0xf] %v5539
        %v5556 = vld [vmem:[#allocation3] sm:$0xff]
        %v5557 = vld [vmem:[#allocation3 + $0x8] sm:$0xff]
        %v5558 = vld [vmem:[#allocation3 + $0x10] sm:$0xff]
        %v5559 = vld [vmem:[#allocation3 + $0x18] sm:$0xff]
        %v5560 = vld [vmem:[#allocation3 + $0x28] sm:$0xff]
        %v5561 = vld [vmem:[#allocation3 + $0x30] sm:$0xff]
        %v5562 = vld [vmem:[#allocation3 + $0x38] sm:$0xff]
        %v5563 = vld [vmem:[#allocation3 + $0x40] sm:$0xff]
        %5572 = vrot.lane.b32.xlu0 %v5556, 62
        %v5573 = vpop.permute.xlu0 %5572
        %5574 = vrot.lane.b32.xlu0 %v5557, 62
        %v5575 = vpop.permute.xlu0 %5574
        %5576 = vrot.lane.b32.xlu0 %v5558, 62
        %v5577 = vpop.permute.xlu0 %5576
        %5578 = vrot.lane.b32.xlu0 %v5559, 62
        %v5579 = vpop.permute.xlu0 %5578
        %5580 = vrot.lane.b32.xlu0 %v5560, 62
        %v5581 = vpop.permute.xlu0 %5580
        %5582 = vrot.lane.b32.xlu0 %v5561, 62
        %v5583 = vpop.permute.xlu0 %5582
        %5584 = vrot.lane.b32.xlu0 %v5562, 62
        %v5585 = vpop.permute.xlu0 %5584
        %5586 = vrot.lane.b32.xlu0 %v5563, 62
        %v5587 = vpop.permute.xlu0 %5586
        %v5588 = vrot.slane %v5573, 4
        %v5589 = vrot.slane %v5575, 4
        %v5590 = vrot.slane %v5577, 4
        %v5591 = vrot.slane %v5579, 4
        %v5592 = vrot.slane %v5581, 4
        %v5593 = vrot.slane %v5583, 4
        %v5594 = vrot.slane %v5585, 4
        %v5595 = vrot.slane %v5587, 4
        %v5596 = vsel %vm5240, %v5588, %v5589
        %vm5597 = vcmask 506880
        %v5598 = vsel %vm5597, %v5573, %v5596
        %v5599 = vsel %vm5240, %v5589, %v5590
        %v5600 = vsel %vm5597, %v5575, %v5599
        %v5601 = vsel %vm5240, %v5590, %v5591
        %v5602 = vsel %vm5597, %v5577, %v5601
        %v5603 = vsel %vm5597, %v5579, %v5591
        %v5604 = vsel %vm5240, %v5592, %v5593
        %v5605 = vsel %vm5597, %v5581, %v5604
        %v5606 = vsel %vm5240, %v5593, %v5594
        %v5607 = vsel %vm5597, %v5583, %v5606
        %v5608 = vsel %vm5240, %v5594, %v5595
        %v5609 = vsel %vm5597, %v5585, %v5608
        %v5610 = vsel %vm5597, %v5587, %v5595
        %5619 = vst [vmem:[#allocation4 + $0x150] sm:$0xff] %v5598
        %5620 = vst [vmem:[#allocation4 + $0x158] sm:$0xff] %v5600
        %5621 = vst [vmem:[#allocation4 + $0x160] sm:$0xff] %v5602
        %5622 = vst [vmem:[#allocation4 + $0x168] sm:$0xf] %v5603
        %5623 = vst [vmem:[#allocation4 + $0x16c] sm:$0xff] %v5605
        %5624 = vst [vmem:[#allocation4 + $0x174] sm:$0xff] %v5607
        %5625 = vst [vmem:[#allocation4 + $0x17c] sm:$0xff] %v5609
        %5626 = vst [vmem:[#allocation4 + $0x184] sm:$0xf] %v5610
        %v5627 = vld [vmem:[#allocation3] sm:$0xff]
        %v5628 = vld [vmem:[#allocation3 + $0x8] sm:$0xff]
        %v5629 = vld [vmem:[#allocation3 + $0x10] sm:$0xff]
        %v5630 = vld [vmem:[#allocation3 + $0x18] sm:$0xff]
        %v5631 = vld [vmem:[#allocation3 + $0x28] sm:$0xff]
        %v5632 = vld [vmem:[#allocation3 + $0x30] sm:$0xff]
        %v5633 = vld [vmem:[#allocation3 + $0x38] sm:$0xff]
        %v5634 = vld [vmem:[#allocation3 + $0x40] sm:$0xff]
        %5643 = vrot.lane.b32.xlu0 %v5627, 60
        %v5644 = vpop.permute.xlu0 %5643
        %5645 = vrot.lane.b32.xlu0 %v5628, 60
        %v5646 = vpop.permute.xlu0 %5645
        %5647 = vrot.lane.b32.xlu0 %v5629, 60
        %v5648 = vpop.permute.xlu0 %5647
        %5649 = vrot.lane.b32.xlu0 %v5630, 60
        %v5650 = vpop.permute.xlu0 %5649
        %5651 = vrot.lane.b32.xlu0 %v5631, 60
        %v5652 = vpop.permute.xlu0 %5651
        %5653 = vrot.lane.b32.xlu0 %v5632, 60
        %v5654 = vpop.permute.xlu0 %5653
        %5655 = vrot.lane.b32.xlu0 %v5633, 60
        %v5656 = vpop.permute.xlu0 %5655
        %5657 = vrot.lane.b32.xlu0 %v5634, 60
        %v5658 = vpop.permute.xlu0 %5657
        %v5659 = vrot.slane %v5644, 4
        %v5660 = vrot.slane %v5646, 4
        %v5661 = vrot.slane %v5648, 4
        %v5662 = vrot.slane %v5650, 4
        %v5663 = vrot.slane %v5652, 4
        %v5664 = vrot.slane %v5654, 4
        %v5665 = vrot.slane %v5656, 4
        %v5666 = vrot.slane %v5658, 4
        %v5667 = vsel %vm5240, %v5659, %v5660
        %vm5668 = vcmask 490496
        %v5669 = vsel %vm5668, %v5644, %v5667
        %v5670 = vsel %vm5240, %v5660, %v5661
        %v5671 = vsel %vm5668, %v5646, %v5670
        %v5672 = vsel %vm5240, %v5661, %v5662
        %v5673 = vsel %vm5668, %v5648, %v5672
        %v5674 = vsel %vm5668, %v5650, %v5662
        %v5675 = vsel %vm5240, %v5663, %v5664
        %v5676 = vsel %vm5668, %v5652, %v5675
        %v5677 = vsel %vm5240, %v5664, %v5665
        %v5678 = vsel %vm5668, %v5654, %v5677
        %v5679 = vsel %vm5240, %v5665, %v5666
        %v5680 = vsel %vm5668, %v5656, %v5679
        %v5681 = vsel %vm5668, %v5658, %v5666
        %5690 = vst [vmem:[#allocation4 + $0x188] sm:$0xff] %v5669
        %5691 = vst [vmem:[#allocation4 + $0x190] sm:$0xff] %v5671
        %5692 = vst [vmem:[#allocation4 + $0x198] sm:$0xff] %v5673
        %5693 = vst [vmem:[#allocation4 + $0x1a0] sm:$0xf] %v5674
        %5694 = vst [vmem:[#allocation4 + $0x1a4] sm:$0xff] %v5676
        %5695 = vst [vmem:[#allocation4 + $0x1ac] sm:$0xff] %v5678
        %5696 = vst [vmem:[#allocation4 + $0x1b4] sm:$0xff] %v5680
        %5697 = vst [vmem:[#allocation4 + $0x1bc] sm:$0xf] %v5681
        %v5698 = vld [vmem:[#allocation3] sm:$0xff]
        %v5699 = vld [vmem:[#allocation3 + $0x8] sm:$0xff]
        %v5700 = vld [vmem:[#allocation3 + $0x10] sm:$0xff]
        %v5701 = vld [vmem:[#allocation3 + $0x18] sm:$0xff]
        %v5702 = vld [vmem:[#allocation3 + $0x28] sm:$0xff]
        %v5703 = vld [vmem:[#allocation3 + $0x30] sm:$0xff]
        %v5704 = vld [vmem:[#allocation3 + $0x38] sm:$0xff]
        %v5705 = vld [vmem:[#allocation3 + $0x40] sm:$0xff]
        %5714 = vrot.lane.b32.xlu0 %v5698, 58
        %v5715 = vpop.permute.xlu0 %5714
        %5716 = vrot.lane.b32.xlu0 %v5699, 58
        %v5717 = vpop.permute.xlu0 %5716
        %5718 = vrot.lane.b32.xlu0 %v5700, 58
        %v5719 = vpop.permute.xlu0 %5718
        %5720 = vrot.lane.b32.xlu0 %v5701, 58
        %v5721 = vpop.permute.xlu0 %5720
        %5722 = vrot.lane.b32.xlu0 %v5702, 58
        %v5723 = vpop.permute.xlu0 %5722
        %5724 = vrot.lane.b32.xlu0 %v5703, 58
        %v5725 = vpop.permute.xlu0 %5724
        %5726 = vrot.lane.b32.xlu0 %v5704, 58
        %v5727 = vpop.permute.xlu0 %5726
        %5728 = vrot.lane.b32.xlu0 %v5705, 58
        %v5729 = vpop.permute.xlu0 %5728
        %v5730 = vrot.slane %v5715, 4
        %v5731 = vrot.slane %v5717, 4
        %v5732 = vrot.slane %v5719, 4
        %v5733 = vrot.slane %v5721, 4
        %v5734 = vrot.slane %v5723, 4
        %v5735 = vrot.slane %v5725, 4
        %v5736 = vrot.slane %v5727, 4
        %v5737 = vrot.slane %v5729, 4
        %v5738 = vsel %vm5240, %v5730, %v5731
        %vm5739 = vcmask 474112
        %v5740 = vsel %vm5739, %v5715, %v5738
        %v5741 = vsel %vm5240, %v5731, %v5732
        %v5742 = vsel %vm5739, %v5717, %v5741
        %v5743 = vsel %vm5240, %v5732, %v5733
        %v5744 = vsel %vm5739, %v5719, %v5743
        %v5745 = vsel %vm5739, %v5721, %v5733
        %v5746 = vsel %vm5240, %v5734, %v5735
        %v5747 = vsel %vm5739, %v5723, %v5746
        %v5748 = vsel %vm5240, %v5735, %v5736
        %v5749 = vsel %vm5739, %v5725, %v5748
        %v5750 = vsel %vm5240, %v5736, %v5737
        %v5751 = vsel %vm5739, %v5727, %v5750
        %v5752 = vsel %vm5739, %v5729, %v5737
        %5761 = vst [vmem:[#allocation4 + $0x1c0] sm:$0xff] %v5740
        %5762 = vst [vmem:[#allocation4 + $0x1c8] sm:$0xff] %v5742
        %5763 = vst [vmem:[#allocation4 + $0x1d0] sm:$0xff] %v5744
        %5764 = vst [vmem:[#allocation4 + $0x1d8] sm:$0xf] %v5745
        %5765 = vst [vmem:[#allocation4 + $0x1dc] sm:$0xff] %v5747
        %5766 = vst [vmem:[#allocation4 + $0x1e4] sm:$0xff] %v5749
        %5767 = vst [vmem:[#allocation4 + $0x1ec] sm:$0xff] %v5751
        %5768 = vst [vmem:[#allocation4 + $0x1f4] sm:$0xf] %v5752
        %v5769 = vld [vmem:[#allocation3] sm:$0xff]
        %v5770 = vld [vmem:[#allocation3 + $0x8] sm:$0xff]
        %v5771 = vld [vmem:[#allocation3 + $0x10] sm:$0xff]
        %v5772 = vld [vmem:[#allocation3 + $0x18] sm:$0xff]
        %v5773 = vld [vmem:[#allocation3 + $0x28] sm:$0xff]
        %v5774 = vld [vmem:[#allocation3 + $0x30] sm:$0xff]
        %v5775 = vld [vmem:[#allocation3 + $0x38] sm:$0xff]
        %v5776 = vld [vmem:[#allocation3 + $0x40] sm:$0xff]
        %5785 = vrot.lane.b32.xlu0 %v5769, 56
        %v5786 = vpop.permute.xlu0 %5785
        %5787 = vrot.lane.b32.xlu0 %v5770, 56
        %v5788 = vpop.permute.xlu0 %5787
        %5789 = vrot.lane.b32.xlu0 %v5771, 56
        %v5790 = vpop.permute.xlu0 %5789
        %5791 = vrot.lane.b32.xlu0 %v5772, 56
        %v5792 = vpop.permute.xlu0 %5791
        %5793 = vrot.lane.b32.xlu0 %v5773, 56
        %v5794 = vpop.permute.xlu0 %5793
        %5795 = vrot.lane.b32.xlu0 %v5774, 56
        %v5796 = vpop.permute.xlu0 %5795
        %5797 = vrot.lane.b32.xlu0 %v5775, 56
        %v5798 = vpop.permute.xlu0 %5797
        %5799 = vrot.lane.b32.xlu0 %v5776, 56
        %v5800 = vpop.permute.xlu0 %5799
        %v5801 = vrot.slane %v5786, 4
        %v5802 = vrot.slane %v5788, 4
        %v5803 = vrot.slane %v5790, 4
        %v5804 = vrot.slane %v5792, 4
        %v5805 = vrot.slane %v5794, 4
        %v5806 = vrot.slane %v5796, 4
        %v5807 = vrot.slane %v5798, 4
        %v5808 = vrot.slane %v5800, 4
        %v5809 = vsel %vm5240, %v5801, %v5802
        %vm5810 = vcmask 457728
        %v5811 = vsel %vm5810, %v5786, %v5809
        %v5812 = vsel %vm5240, %v5802, %v5803
        %v5813 = vsel %vm5810, %v5788, %v5812
        %v5814 = vsel %vm5240, %v5803, %v5804
        %v5815 = vsel %vm5810, %v5790, %v5814
        %v5816 = vsel %vm5810, %v5792, %v5804
        %v5817 = vsel %vm5240, %v5805, %v5806
        %v5818 = vsel %vm5810, %v5794, %v5817
        %v5819 = vsel %vm5240, %v5806, %v5807
        %v5820 = vsel %vm5810, %v5796, %v5819
        %v5821 = vsel %vm5240, %v5807, %v5808
        %v5822 = vsel %vm5810, %v5798, %v5821
        %v5823 = vsel %vm5810, %v5800, %v5808
        %5832 = vst [vmem:[#allocation4 + $0x1f8] sm:$0xff] %v5811
        %5833 = vst [vmem:[#allocation4 + $0x200] sm:$0xff] %v5813
        %5834 = vst [vmem:[#allocation4 + $0x208] sm:$0xff] %v5815
        %5835 = vst [vmem:[#allocation4 + $0x210] sm:$0xf] %v5816
        %5836 = vst [vmem:[#allocation4 + $0x214] sm:$0xff] %v5818
        %5837 = vst [vmem:[#allocation4 + $0x21c] sm:$0xff] %v5820
        %5838 = vst [vmem:[#allocation4 + $0x224] sm:$0xff] %v5822
        %5839 = vst [vmem:[#allocation4 + $0x22c] sm:$0xf] %v5823
        %v5840 = vld [vmem:[#allocation3 + $0x4] sm:$0xff]
        %v5841 = vld [vmem:[#allocation3 + $0xc] sm:$0xff]
        %v5842 = vld [vmem:[#allocation3 + $0x14] sm:$0xff]
        %v5843 = vld [vmem:[#allocation3 + $0x1c] sm:$0xf]
        %v5844 = vld [vmem:[#allocation3 + $0x2c] sm:$0xff]
        %v5845 = vld [vmem:[#allocation3 + $0x34] sm:$0xff]
        %v5846 = vld [vmem:[#allocation3 + $0x3c] sm:$0xff]
        %v5847 = vld [vmem:[#allocation3 + $0x44] sm:$0xf]
        %5848 = vst [vmem:[#allocation4 + $0x230] sm:$0xff] %v5840
        %5849 = vst [vmem:[#allocation4 + $0x238] sm:$0xff] %v5841
        %5850 = vst [vmem:[#allocation4 + $0x240] sm:$0xff] %v5842
        %5851 = vst [vmem:[#allocation4 + $0x248] sm:$0xf] %v5843
        %5852 = vst [vmem:[#allocation4 + $0x24c] sm:$0xff] %v5844
        %5853 = vst [vmem:[#allocation4 + $0x254] sm:$0xff] %v5845
        %5854 = vst [vmem:[#allocation4 + $0x25c] sm:$0xff] %v5846
        %5855 = vst [vmem:[#allocation4 + $0x264] sm:$0xf] %v5847
        %v5856 = vld [vmem:[#allocation3 + $0x4] sm:$0xff]
        %v5857 = vld [vmem:[#allocation3 + $0xc] sm:$0xff]
        %v5858 = vld [vmem:[#allocation3 + $0x14] sm:$0xff]
        %v5859 = vld [vmem:[#allocation3 + $0x1c] sm:$0xff]
        %v5860 = vld [vmem:[#allocation3 + $0x2c] sm:$0xff]
        %v5861 = vld [vmem:[#allocation3 + $0x34] sm:$0xff]
        %v5862 = vld [vmem:[#allocation3 + $0x3c] sm:$0xff]
        %v5863 = vld [vmem:[#allocation3 + $0x44] sm:$0xff]
        %5872 = vrot.lane.b32.xlu0 %v5856, 126
        %v5873 = vpop.permute.xlu0 %5872
        %5874 = vrot.lane.b32.xlu0 %v5857, 126
        %v5875 = vpop.permute.xlu0 %5874
        %5876 = vrot.lane.b32.xlu0 %v5858, 126
        %v5877 = vpop.permute.xlu0 %5876
        %5878 = vrot.lane.b32.xlu0 %v5859, 126
        %v5879 = vpop.permute.xlu0 %5878
        %5880 = vrot.lane.b32.xlu0 %v5860, 126
        %v5881 = vpop.permute.xlu0 %5880
        %5882 = vrot.lane.b32.xlu0 %v5861, 126
        %v5883 = vpop.permute.xlu0 %5882
        %5884 = vrot.lane.b32.xlu0 %v5862, 126
        %v5885 = vpop.permute.xlu0 %5884
        %5886 = vrot.lane.b32.xlu0 %v5863, 126
        %v5887 = vpop.permute.xlu0 %5886
        %v5888 = vrot.slane %v5873, 4
        %v5889 = vrot.slane %v5875, 4
        %v5890 = vrot.slane %v5877, 4
        %v5891 = vrot.slane %v5879, 4
        %v5892 = vrot.slane %v5881, 4
        %v5893 = vrot.slane %v5883, 4
        %v5894 = vrot.slane %v5885, 4
        %v5895 = vrot.slane %v5887, 4
        %v5896 = vsel %vm5240, %v5888, %v5889
        %v5897 = vsel %vm5242, %v5873, %v5896
        %v5898 = vsel %vm5240, %v5889, %v5890
        %v5899 = vsel %vm5242, %v5875, %v5898
        %v5900 = vsel %vm5240, %v5890, %v5891
        %v5901 = vsel %vm5242, %v5877, %v5900
        %v5902 = vsel %vm5242, %v5879, %v5891
        %v5903 = vsel %vm5240, %v5892, %v5893
        %v5904 = vsel %vm5242, %v5881, %v5903
        %v5905 = vsel %vm5240, %v5893, %v5894
        %v5906 = vsel %vm5242, %v5883, %v5905
        %v5907 = vsel %vm5240, %v5894, %v5895
        %v5908 = vsel %vm5242, %v5885, %v5907
        %v5909 = vsel %vm5242, %v5887, %v5895
        %5918 = vst [vmem:[#allocation4 + $0x268] sm:$0xff] %v5897
        %5919 = vst [vmem:[#allocation4 + $0x270] sm:$0xff] %v5899
        %5920 = vst [vmem:[#allocation4 + $0x278] sm:$0xff] %v5901
        %5921 = vst [vmem:[#allocation4 + $0x280] sm:$0xf] %v5902
        %5922 = vst [vmem:[#allocation4 + $0x284] sm:$0xff] %v5904
        %5923 = vst [vmem:[#allocation4 + $0x28c] sm:$0xff] %v5906
        %5924 = vst [vmem:[#allocation4 + $0x294] sm:$0xff] %v5908
        %5925 = vst [vmem:[#allocation4 + $0x29c] sm:$0xf] %v5909
        %v5926 = vld [vmem:[#allocation3 + $0x4] sm:$0xff]
        %v5927 = vld [vmem:[#allocation3 + $0xc] sm:$0xff]
        %v5928 = vld [vmem:[#allocation3 + $0x14] sm:$0xff]
        %v5929 = vld [vmem:[#allocation3 + $0x1c] sm:$0xff]
        %v5930 = vld [vmem:[#allocation3 + $0x2c] sm:$0xff]
        %v5931 = vld [vmem:[#allocation3 + $0x34] sm:$0xff]
        %v5932 = vld [vmem:[#allocation3 + $0x3c] sm:$0xff]
        %v5933 = vld [vmem:[#allocation3 + $0x44] sm:$0xff]
        %5942 = vrot.lane.b32.xlu0 %v5926, 124
        %v5943 = vpop.permute.xlu0 %5942
        %5944 = vrot.lane.b32.xlu0 %v5927, 124
        %v5945 = vpop.permute.xlu0 %5944
        %5946 = vrot.lane.b32.xlu0 %v5928, 124
        %v5947 = vpop.permute.xlu0 %5946
        %5948 = vrot.lane.b32.xlu0 %v5929, 124
        %v5949 = vpop.permute.xlu0 %5948
        %5950 = vrot.lane.b32.xlu0 %v5930, 124
        %v5951 = vpop.permute.xlu0 %5950
        %5952 = vrot.lane.b32.xlu0 %v5931, 124
        %v5953 = vpop.permute.xlu0 %5952
        %5954 = vrot.lane.b32.xlu0 %v5932, 124
        %v5955 = vpop.permute.xlu0 %5954
        %5956 = vrot.lane.b32.xlu0 %v5933, 124
        %v5957 = vpop.permute.xlu0 %5956
        %v5958 = vrot.slane %v5943, 4
        %v5959 = vrot.slane %v5945, 4
        %v5960 = vrot.slane %v5947, 4
        %v5961 = vrot.slane %v5949, 4
        %v5962 = vrot.slane %v5951, 4
        %v5963 = vrot.slane %v5953, 4
        %v5964 = vrot.slane %v5955, 4
        %v5965 = vrot.slane %v5957, 4
        %v5966 = vsel %vm5240, %v5958, %v5959
        %v5967 = vsel %vm5313, %v5943, %v5966
        %v5968 = vsel %vm5240, %v5959, %v5960
        %v5969 = vsel %vm5313, %v5945, %v5968
        %v5970 = vsel %vm5240, %v5960, %v5961
        %v5971 = vsel %vm5313, %v5947, %v5970
        %v5972 = vsel %vm5313, %v5949, %v5961
        %v5973 = vsel %vm5240, %v5962, %v5963
        %v5974 = vsel %vm5313, %v5951, %v5973
        %v5975 = vsel %vm5240, %v5963, %v5964
        %v5976 = vsel %vm5313, %v5953, %v5975
        %v5977 = vsel %vm5240, %v5964, %v5965
        %v5978 = vsel %vm5313, %v5955, %v5977
        %v5979 = vsel %vm5313, %v5957, %v5965
        %5988 = vst [vmem:[#allocation4 + $0x2a0] sm:$0xff] %v5967
        %5989 = vst [vmem:[#allocation4 + $0x2a8] sm:$0xff] %v5969
        %5990 = vst [vmem:[#allocation4 + $0x2b0] sm:$0xff] %v5971
        %5991 = vst [vmem:[#allocation4 + $0x2b8] sm:$0xf] %v5972
        %5992 = vst [vmem:[#allocation4 + $0x2bc] sm:$0xff] %v5974
        %5993 = vst [vmem:[#allocation4 + $0x2c4] sm:$0xff] %v5976
        %5994 = vst [vmem:[#allocation4 + $0x2cc] sm:$0xff] %v5978
        %5995 = vst [vmem:[#allocation4 + $0x2d4] sm:$0xf] %v5979
        %v5996 = vld [vmem:[#allocation3 + $0x4] sm:$0xff]
        %v5997 = vld [vmem:[#allocation3 + $0xc] sm:$0xff]
        %v5998 = vld [vmem:[#allocation3 + $0x14] sm:$0xff]
        %v5999 = vld [vmem:[#allocation3 + $0x1c] sm:$0xff]
        %v6000 = vld [vmem:[#allocation3 + $0x2c] sm:$0xff]
        %v6001 = vld [vmem:[#allocation3 + $0x34] sm:$0xff]
        %v6002 = vld [vmem:[#allocation3 + $0x3c] sm:$0xff]
        %v6003 = vld [vmem:[#allocation3 + $0x44] sm:$0xff]
        %6012 = vrot.lane.b32.xlu0 %v5996, 122
        %v6013 = vpop.permute.xlu0 %6012
        %6014 = vrot.lane.b32.xlu0 %v5997, 122
        %v6015 = vpop.permute.xlu0 %6014
        %6016 = vrot.lane.b32.xlu0 %v5998, 122
        %v6017 = vpop.permute.xlu0 %6016
        %6018 = vrot.lane.b32.xlu0 %v5999, 122
        %v6019 = vpop.permute.xlu0 %6018
        %6020 = vrot.lane.b32.xlu0 %v6000, 122
        %v6021 = vpop.permute.xlu0 %6020
        %6022 = vrot.lane.b32.xlu0 %v6001, 122
        %v6023 = vpop.permute.xlu0 %6022
        %6024 = vrot.lane.b32.xlu0 %v6002, 122
        %v6025 = vpop.permute.xlu0 %6024
        %6026 = vrot.lane.b32.xlu0 %v6003, 122
        %v6027 = vpop.permute.xlu0 %6026
        %v6028 = vrot.slane %v6013, 4
        %v6029 = vrot.slane %v6015, 4
        %v6030 = vrot.slane %v6017, 4
        %v6031 = vrot.slane %v6019, 4
        %v6032 = vrot.slane %v6021, 4
        %v6033 = vrot.slane %v6023, 4
        %v6034 = vrot.slane %v6025, 4
        %v6035 = vrot.slane %v6027, 4
        %v6036 = vsel %vm5240, %v6028, %v6029
        %v6037 = vsel %vm5384, %v6013, %v6036
        %v6038 = vsel %vm5240, %v6029, %v6030
        %v6039 = vsel %vm5384, %v6015, %v6038
        %v6040 = vsel %vm5240, %v6030, %v6031
        %v6041 = vsel %vm5384, %v6017, %v6040
        %v6042 = vsel %vm5384, %v6019, %v6031
        %v6043 = vsel %vm5240, %v6032, %v6033
        %v6044 = vsel %vm5384, %v6021, %v6043
        %v6045 = vsel %vm5240, %v6033, %v6034
        %v6046 = vsel %vm5384, %v6023, %v6045
        %v6047 = vsel %vm5240, %v6034, %v6035
        %v6048 = vsel %vm5384, %v6025, %v6047
        %v6049 = vsel %vm5384, %v6027, %v6035
        %6058 = vst [vmem:[#allocation4 + $0x2d8] sm:$0xff] %v6037
        %6059 = vst [vmem:[#allocation4 + $0x2e0] sm:$0xff] %v6039
        %6060 = vst [vmem:[#allocation4 + $0x2e8] sm:$0xff] %v6041
        %6061 = vst [vmem:[#allocation4 + $0x2f0] sm:$0xf] %v6042
        %6062 = vst [vmem:[#allocation4 + $0x2f4] sm:$0xff] %v6044
        %6063 = vst [vmem:[#allocation4 + $0x2fc] sm:$0xff] %v6046
        %6064 = vst [vmem:[#allocation4 + $0x304] sm:$0xff] %v6048
        %6065 = vst [vmem:[#allocation4 + $0x30c] sm:$0xf] %v6049
        %v6066 = vld [vmem:[#allocation3 + $0x4] sm:$0xff]
        %v6067 = vld [vmem:[#allocation3 + $0xc] sm:$0xff]
        %v6068 = vld [vmem:[#allocation3 + $0x14] sm:$0xff]
        %v6069 = vld [vmem:[#allocation3 + $0x1c] sm:$0xff]
        %v6070 = vld [vmem:[#allocation3 + $0x2c] sm:$0xff]
        %v6071 = vld [vmem:[#allocation3 + $0x34] sm:$0xff]
        %v6072 = vld [vmem:[#allocation3 + $0x3c] sm:$0xff]
        %v6073 = vld [vmem:[#allocation3 + $0x44] sm:$0xff]
        %6082 = vrot.lane.b32.xlu0 %v6066, 120
        %v6083 = vpop.permute.xlu0 %6082
        %6084 = vrot.lane.b32.xlu0 %v6067, 120
        %v6085 = vpop.permute.xlu0 %6084
        %6086 = vrot.lane.b32.xlu0 %v6068, 120
        %v6087 = vpop.permute.xlu0 %6086
        %6088 = vrot.lane.b32.xlu0 %v6069, 120
        %v6089 = vpop.permute.xlu0 %6088
        %6090 = vrot.lane.b32.xlu0 %v6070, 120
        %v6091 = vpop.permute.xlu0 %6090
        %6092 = vrot.lane.b32.xlu0 %v6071, 120
        %v6093 = vpop.permute.xlu0 %6092
        %6094 = vrot.lane.b32.xlu0 %v6072, 120
        %v6095 = vpop.permute.xlu0 %6094
        %6096 = vrot.lane.b32.xlu0 %v6073, 120
        %v6097 = vpop.permute.xlu0 %6096
        %v6098 = vrot.slane %v6083, 4
        %v6099 = vrot.slane %v6085, 4
        %v6100 = vrot.slane %v6087, 4
        %v6101 = vrot.slane %v6089, 4
        %v6102 = vrot.slane %v6091, 4
        %v6103 = vrot.slane %v6093, 4
        %v6104 = vrot.slane %v6095, 4
        %v6105 = vrot.slane %v6097, 4
        %v6106 = vsel %vm5240, %v6098, %v6099
        %v6107 = vsel %vm5455, %v6083, %v6106
        %v6108 = vsel %vm5240, %v6099, %v6100
        %v6109 = vsel %vm5455, %v6085, %v6108
        %v6110 = vsel %vm5240, %v6100, %v6101
        %v6111 = vsel %vm5455, %v6087, %v6110
        %v6112 = vsel %vm5455, %v6089, %v6101
        %v6113 = vsel %vm5240, %v6102, %v6103
        %v6114 = vsel %vm5455, %v6091, %v6113
        %v6115 = vsel %vm5240, %v6103, %v6104
        %v6116 = vsel %vm5455, %v6093, %v6115
        %v6117 = vsel %vm5240, %v6104, %v6105
        %v6118 = vsel %vm5455, %v6095, %v6117
        %v6119 = vsel %vm5455, %v6097, %v6105
        %6128 = vst [vmem:[#allocation4 + $0x310] sm:$0xff] %v6107
        %6129 = vst [vmem:[#allocation4 + $0x318] sm:$0xff] %v6109
        %6130 = vst [vmem:[#allocation4 + $0x320] sm:$0xff] %v6111
        %6131 = vst [vmem:[#allocation4 + $0x328] sm:$0xf] %v6112
        %6132 = vst [vmem:[#allocation4 + $0x32c] sm:$0xff] %v6114
        %6133 = vst [vmem:[#allocation4 + $0x334] sm:$0xff] %v6116
        %6134 = vst [vmem:[#allocation4 + $0x33c] sm:$0xff] %v6118
        %6135 = vst [vmem:[#allocation4 + $0x344] sm:$0xf] %v6119
        %v6136 = vld [vmem:[#allocation3 + $0x4] sm:$0xff]
        %v6137 = vld [vmem:[#allocation3 + $0xc] sm:$0xff]
        %v6138 = vld [vmem:[#allocation3 + $0x14] sm:$0xff]
        %v6139 = vld [vmem:[#allocation3 + $0x1c] sm:$0xff]
        %v6140 = vld [vmem:[#allocation3 + $0x2c] sm:$0xff]
        %v6141 = vld [vmem:[#allocation3 + $0x34] sm:$0xff]
        %v6142 = vld [vmem:[#allocation3 + $0x3c] sm:$0xff]
        %v6143 = vld [vmem:[#allocation3 + $0x44] sm:$0xff]
        %6152 = vrot.lane.b32.xlu0 %v6136, 64
        %v6153 = vpop.permute.xlu0 %6152
        %6154 = vrot.lane.b32.xlu0 %v6137, 64
        %v6155 = vpop.permute.xlu0 %6154
        %6156 = vrot.lane.b32.xlu0 %v6138, 64
        %v6157 = vpop.permute.xlu0 %6156
        %6158 = vrot.lane.b32.xlu0 %v6139, 64
        %v6159 = vpop.permute.xlu0 %6158
        %6160 = vrot.lane.b32.xlu0 %v6140, 64
        %v6161 = vpop.permute.xlu0 %6160
        %6162 = vrot.lane.b32.xlu0 %v6141, 64
        %v6163 = vpop.permute.xlu0 %6162
        %6164 = vrot.lane.b32.xlu0 %v6142, 64
        %v6165 = vpop.permute.xlu0 %6164
        %6166 = vrot.lane.b32.xlu0 %v6143, 64
        %v6167 = vpop.permute.xlu0 %6166
        %v6168 = vrot.slane %v6153, 4
        %v6169 = vrot.slane %v6155, 4
        %v6170 = vrot.slane %v6157, 4
        %v6171 = vrot.slane %v6159, 4
        %v6172 = vrot.slane %v6161, 4
        %v6173 = vrot.slane %v6163, 4
        %v6174 = vrot.slane %v6165, 4
        %v6175 = vrot.slane %v6167, 4
        %v6176 = vsel %vm5240, %v6168, %v6169
        %v6177 = vsel %vm5526, %v6153, %v6176
        %v6178 = vsel %vm5240, %v6169, %v6170
        %v6179 = vsel %vm5526, %v6155, %v6178
        %v6180 = vsel %vm5240, %v6170, %v6171
        %v6181 = vsel %vm5526, %v6157, %v6180
        %v6182 = vsel %vm5526, %v6159, %v6171
        %v6183 = vsel %vm5240, %v6172, %v6173
        %v6184 = vsel %vm5526, %v6161, %v6183
        %v6185 = vsel %vm5240, %v6173, %v6174
        %v6186 = vsel %vm5526, %v6163, %v6185
        %v6187 = vsel %vm5240, %v6174, %v6175
        %v6188 = vsel %vm5526, %v6165, %v6187
        %v6189 = vsel %vm5526, %v6167, %v6175
        %6198 = vst [vmem:[#allocation4 + $0x348] sm:$0xff] %v6177
        %6199 = vst [vmem:[#allocation4 + $0x350] sm:$0xff] %v6179
        %6200 = vst [vmem:[#allocation4 + $0x358] sm:$0xff] %v6181
        %6201 = vst [vmem:[#allocation4 + $0x360] sm:$0xf] %v6182
        %6202 = vst [vmem:[#allocation4 + $0x364] sm:$0xff] %v6184
        %6203 = vst [vmem:[#allocation4 + $0x36c] sm:$0xff] %v6186
        %6204 = vst [vmem:[#allocation4 + $0x374] sm:$0xff] %v6188
        %6205 = vst [vmem:[#allocation4 + $0x37c] sm:$0xf] %v6189
        %v6206 = vld [vmem:[#allocation3 + $0x4] sm:$0xff]
        %v6207 = vld [vmem:[#allocation3 + $0xc] sm:$0xff]
        %v6208 = vld [vmem:[#allocation3 + $0x14] sm:$0xff]
        %v6209 = vld [vmem:[#allocation3 + $0x1c] sm:$0xff]
        %v6210 = vld [vmem:[#allocation3 + $0x2c] sm:$0xff]
        %v6211 = vld [vmem:[#allocation3 + $0x34] sm:$0xff]
        %v6212 = vld [vmem:[#allocation3 + $0x3c] sm:$0xff]
        %v6213 = vld [vmem:[#allocation3 + $0x44] sm:$0xff]
        %6222 = vrot.lane.b32.xlu0 %v6206, 62
        %v6223 = vpop.permute.xlu0 %6222
        %6224 = vrot.lane.b32.xlu0 %v6207, 62
        %v6225 = vpop.permute.xlu0 %6224
        %6226 = vrot.lane.b32.xlu0 %v6208, 62
        %v6227 = vpop.permute.xlu0 %6226
        %6228 = vrot.lane.b32.xlu0 %v6209, 62
        %v6229 = vpop.permute.xlu0 %6228
        %6230 = vrot.lane.b32.xlu0 %v6210, 62
        %v6231 = vpop.permute.xlu0 %6230
        %6232 = vrot.lane.b32.xlu0 %v6211, 62
        %v6233 = vpop.permute.xlu0 %6232
        %6234 = vrot.lane.b32.xlu0 %v6212, 62
        %v6235 = vpop.permute.xlu0 %6234
        %6236 = vrot.lane.b32.xlu0 %v6213, 62
        %v6237 = vpop.permute.xlu0 %6236
        %v6238 = vrot.slane %v6223, 4
        %v6239 = vrot.slane %v6225, 4
        %v6240 = vrot.slane %v6227, 4
        %v6241 = vrot.slane %v6229, 4
        %v6242 = vrot.slane %v6231, 4
        %v6243 = vrot.slane %v6233, 4
        %v6244 = vrot.slane %v6235, 4
        %v6245 = vrot.slane %v6237, 4
        %v6246 = vsel %vm5240, %v6238, %v6239
        %v6247 = vsel %vm5597, %v6223, %v6246
        %v6248 = vsel %vm5240, %v6239, %v6240
        %v6249 = vsel %vm5597, %v6225, %v6248
        %v6250 = vsel %vm5240, %v6240, %v6241
        %v6251 = vsel %vm5597, %v6227, %v6250
        %v6252 = vsel %vm5597, %v6229, %v6241
        %v6253 = vsel %vm5240, %v6242, %v6243
        %v6254 = vsel %vm5597, %v6231, %v6253
        %v6255 = vsel %vm5240, %v6243, %v6244
        %v6256 = vsel %vm5597, %v6233, %v6255
        %v6257 = vsel %vm5240, %v6244, %v6245
        %v6258 = vsel %vm5597, %v6235, %v6257
        %v6259 = vsel %vm5597, %v6237, %v6245
        %6268 = vst [vmem:[#allocation4 + $0x380] sm:$0xff] %v6247
        %6269 = vst [vmem:[#allocation4 + $0x388] sm:$0xff] %v6249
        %6270 = vst [vmem:[#allocation4 + $0x390] sm:$0xff] %v6251
        %6271 = vst [vmem:[#allocation4 + $0x398] sm:$0xf] %v6252
        %6272 = vst [vmem:[#allocation4 + $0x39c] sm:$0xff] %v6254
        %6273 = vst [vmem:[#allocation4 + $0x3a4] sm:$0xff] %v6256
        %6274 = vst [vmem:[#allocation4 + $0x3ac] sm:$0xff] %v6258
        %6275 = vst [vmem:[#allocation4 + $0x3b4] sm:$0xf] %v6259
        %v6276 = vld [vmem:[#allocation3 + $0x4] sm:$0xff]
        %v6277 = vld [vmem:[#allocation3 + $0xc] sm:$0xff]
        %v6278 = vld [vmem:[#allocation3 + $0x14] sm:$0xff]
        %v6279 = vld [vmem:[#allocation3 + $0x1c] sm:$0xff]
        %v6280 = vld [vmem:[#allocation3 + $0x2c] sm:$0xff]
        %v6281 = vld [vmem:[#allocation3 + $0x34] sm:$0xff]
        %v6282 = vld [vmem:[#allocation3 + $0x3c] sm:$0xff]
        %v6283 = vld [vmem:[#allocation3 + $0x44] sm:$0xff]
        %6292 = vrot.lane.b32.xlu0 %v6276, 60
        %v6293 = vpop.permute.xlu0 %6292
        %6294 = vrot.lane.b32.xlu0 %v6277, 60
        %v6295 = vpop.permute.xlu0 %6294
        %6296 = vrot.lane.b32.xlu0 %v6278, 60
        %v6297 = vpop.permute.xlu0 %6296
        %6298 = vrot.lane.b32.xlu0 %v6279, 60
        %v6299 = vpop.permute.xlu0 %6298
        %6300 = vrot.lane.b32.xlu0 %v6280, 60
        %v6301 = vpop.permute.xlu0 %6300
        %6302 = vrot.lane.b32.xlu0 %v6281, 60
        %v6303 = vpop.permute.xlu0 %6302
        %6304 = vrot.lane.b32.xlu0 %v6282, 60
        %v6305 = vpop.permute.xlu0 %6304
        %6306 = vrot.lane.b32.xlu0 %v6283, 60
        %v6307 = vpop.permute.xlu0 %6306
        %v6308 = vrot.slane %v6293, 4
        %v6309 = vrot.slane %v6295, 4
        %v6310 = vrot.slane %v6297, 4
        %v6311 = vrot.slane %v6299, 4
        %v6312 = vrot.slane %v6301, 4
        %v6313 = vrot.slane %v6303, 4
        %v6314 = vrot.slane %v6305, 4
        %v6315 = vrot.slane %v6307, 4
        %v6316 = vsel %vm5240, %v6308, %v6309
        %v6317 = vsel %vm5668, %v6293, %v6316
        %v6318 = vsel %vm5240, %v6309, %v6310
        %v6319 = vsel %vm5668, %v6295, %v6318
        %v6320 = vsel %vm5240, %v6310, %v6311
        %v6321 = vsel %vm5668, %v6297, %v6320
        %v6322 = vsel %vm5668, %v6299, %v6311
        %v6323 = vsel %vm5240, %v6312, %v6313
        %v6324 = vsel %vm5668, %v6301, %v6323
        %v6325 = vsel %vm5240, %v6313, %v6314
        %v6326 = vsel %vm5668, %v6303, %v6325
        %v6327 = vsel %vm5240, %v6314, %v6315
        %v6328 = vsel %vm5668, %v6305, %v6327
        %v6329 = vsel %vm5668, %v6307, %v6315
        %6338 = vst [vmem:[#allocation4 + $0x3b8] sm:$0xff] %v6317
        %6339 = vst [vmem:[#allocation4 + $0x3c0] sm:$0xff] %v6319
        %6340 = vst [vmem:[#allocation4 + $0x3c8] sm:$0xff] %v6321
        %6341 = vst [vmem:[#allocation4 + $0x3d0] sm:$0xf] %v6322
        %6342 = vst [vmem:[#allocation4 + $0x3d4] sm:$0xff] %v6324
        %6343 = vst [vmem:[#allocation4 + $0x3dc] sm:$0xff] %v6326
        %6344 = vst [vmem:[#allocation4 + $0x3e4] sm:$0xff] %v6328
        %6345 = vst [vmem:[#allocation4 + $0x3ec] sm:$0xf] %v6329
        %v6346 = vld [vmem:[#allocation3 + $0x4] sm:$0xff]
        %v6347 = vld [vmem:[#allocation3 + $0xc] sm:$0xff]
        %v6348 = vld [vmem:[#allocation3 + $0x14] sm:$0xff]
        %v6349 = vld [vmem:[#allocation3 + $0x1c] sm:$0xff]
        %v6350 = vld [vmem:[#allocation3 + $0x2c] sm:$0xff]
        %v6351 = vld [vmem:[#allocation3 + $0x34] sm:$0xff]
        %v6352 = vld [vmem:[#allocation3 + $0x3c] sm:$0xff]
        %v6353 = vld [vmem:[#allocation3 + $0x44] sm:$0xff]
        %6362 = vrot.lane.b32.xlu0 %v6346, 58
        %v6363 = vpop.permute.xlu0 %6362
        %6364 = vrot.lane.b32.xlu0 %v6347, 58
        %v6365 = vpop.permute.xlu0 %6364
        %6366 = vrot.lane.b32.xlu0 %v6348, 58
        %v6367 = vpop.permute.xlu0 %6366
        %6368 = vrot.lane.b32.xlu0 %v6349, 58
        %v6369 = vpop.permute.xlu0 %6368
        %6370 = vrot.lane.b32.xlu0 %v6350, 58
        %v6371 = vpop.permute.xlu0 %6370
        %6372 = vrot.lane.b32.xlu0 %v6351, 58
        %v6373 = vpop.permute.xlu0 %6372
        %6374 = vrot.lane.b32.xlu0 %v6352, 58
        %v6375 = vpop.permute.xlu0 %6374
        %6376 = vrot.lane.b32.xlu0 %v6353, 58
        %v6377 = vpop.permute.xlu0 %6376
        %v6378 = vrot.slane %v6363, 4
        %v6379 = vrot.slane %v6365, 4
        %v6380 = vrot.slane %v6367, 4
        %v6381 = vrot.slane %v6369, 4
        %v6382 = vrot.slane %v6371, 4
        %v6383 = vrot.slane %v6373, 4
        %v6384 = vrot.slane %v6375, 4
        %v6385 = vrot.slane %v6377, 4
        %v6386 = vsel %vm5240, %v6378, %v6379
        %v6387 = vsel %vm5739, %v6363, %v6386
        %v6388 = vsel %vm5240, %v6379, %v6380
        %v6389 = vsel %vm5739, %v6365, %v6388
        %v6390 = vsel %vm5240, %v6380, %v6381
        %v6391 = vsel %vm5739, %v6367, %v6390
        %v6392 = vsel %vm5739, %v6369, %v6381
        %v6393 = vsel %vm5240, %v6382, %v6383
        %v6394 = vsel %vm5739, %v6371, %v6393
        %v6395 = vsel %vm5240, %v6383, %v6384
        %v6396 = vsel %vm5739, %v6373, %v6395
        %v6397 = vsel %vm5240, %v6384, %v6385
        %v6398 = vsel %vm5739, %v6375, %v6397
        %v6399 = vsel %vm5739, %v6377, %v6385
        %6408 = vst [vmem:[#allocation4 + $0x3f0] sm:$0xff] %v6387
        %6409 = vst [vmem:[#allocation4 + $0x3f8] sm:$0xff] %v6389
        %6410 = vst [vmem:[#allocation4 + $0x400] sm:$0xff] %v6391
        %6411 = vst [vmem:[#allocation4 + $0x408] sm:$0xf] %v6392
        %6412 = vst [vmem:[#allocation4 + $0x40c] sm:$0xff] %v6394
        %6413 = vst [vmem:[#allocation4 + $0x414] sm:$0xff] %v6396
        %6414 = vst [vmem:[#allocation4 + $0x41c] sm:$0xff] %v6398
        %6415 = vst [vmem:[#allocation4 + $0x424] sm:$0xf] %v6399
        %v6416 = vld [vmem:[#allocation3 + $0x4] sm:$0xff]
        %v6417 = vld [vmem:[#allocation3 + $0xc] sm:$0xff]
        %v6418 = vld [vmem:[#allocation3 + $0x14] sm:$0xff]
        %v6419 = vld [vmem:[#allocation3 + $0x1c] sm:$0xff]
        %v6420 = vld [vmem:[#allocation3 + $0x2c] sm:$0xff]
        %v6421 = vld [vmem:[#allocation3 + $0x34] sm:$0xff]
        %v6422 = vld [vmem:[#allocation3 + $0x3c] sm:$0xff]
        %v6423 = vld [vmem:[#allocation3 + $0x44] sm:$0xff]
        %6432 = vrot.lane.b32.xlu0 %v6416, 56
        %v6433 = vpop.permute.xlu0 %6432
        %6434 = vrot.lane.b32.xlu0 %v6417, 56
        %v6435 = vpop.permute.xlu0 %6434
        %6436 = vrot.lane.b32.xlu0 %v6418, 56
        %v6437 = vpop.permute.xlu0 %6436
        %6438 = vrot.lane.b32.xlu0 %v6419, 56
        %v6439 = vpop.permute.xlu0 %6438
        %6440 = vrot.lane.b32.xlu0 %v6420, 56
        %v6441 = vpop.permute.xlu0 %6440
        %6442 = vrot.lane.b32.xlu0 %v6421, 56
        %v6443 = vpop.permute.xlu0 %6442
        %6444 = vrot.lane.b32.xlu0 %v6422, 56
        %v6445 = vpop.permute.xlu0 %6444
        %6446 = vrot.lane.b32.xlu0 %v6423, 56
        %v6447 = vpop.permute.xlu0 %6446
        %v6448 = vrot.slane %v6433, 4
        %v6449 = vrot.slane %v6435, 4
        %v6450 = vrot.slane %v6437, 4
        %v6451 = vrot.slane %v6439, 4
        %v6452 = vrot.slane %v6441, 4
        %v6453 = vrot.slane %v6443, 4
        %v6454 = vrot.slane %v6445, 4
        %v6455 = vrot.slane %v6447, 4
        %v6456 = vsel %vm5240, %v6448, %v6449
        %v6457 = vsel %vm5810, %v6433, %v6456
        %v6458 = vsel %vm5240, %v6449, %v6450
        %v6459 = vsel %vm5810, %v6435, %v6458
        %v6460 = vsel %vm5240, %v6450, %v6451
        %v6461 = vsel %vm5810, %v6437, %v6460
        %v6462 = vsel %vm5810, %v6439, %v6451
        %v6463 = vsel %vm5240, %v6452, %v6453
        %v6464 = vsel %vm5810, %v6441, %v6463
        %v6465 = vsel %vm5240, %v6453, %v6454
        %v6466 = vsel %vm5810, %v6443, %v6465
        %v6467 = vsel %vm5240, %v6454, %v6455
        %v6468 = vsel %vm5810, %v6445, %v6467
        %v6469 = vsel %vm5810, %v6447, %v6455
        %6478 = vst [vmem:[#allocation4 + $0x428] sm:$0xff] %v6457
        %6479 = vst [vmem:[#allocation4 + $0x430] sm:$0xff] %v6459
        %6480 = vst [vmem:[#allocation4 + $0x438] sm:$0xff] %v6461
        %6481 = vst [vmem:[#allocation4 + $0x440] sm:$0xf] %v6462
        %6482 = vst [vmem:[#allocation4 + $0x444] sm:$0xff] %v6464
        %6483 = vst [vmem:[#allocation4 + $0x44c] sm:$0xff] %v6466
        %6484 = vst [vmem:[#allocation4 + $0x454] sm:$0xff] %v6468
        %6485 = vst [vmem:[#allocation4 + $0x45c] sm:$0xf] %v6469
        %v6486 = vld [vmem:[#allocation3 + $0x8] sm:$0xff]
        %v6487 = vld [vmem:[#allocation3 + $0x10] sm:$0xff]
        %v6488 = vld [vmem:[#allocation3 + $0x18] sm:$0xff]
        %v6489 = vld [vmem:[#allocation3 + $0x20] sm:$0xf]
        %v6490 = vld [vmem:[#allocation3 + $0x30] sm:$0xff]
        %v6491 = vld [vmem:[#allocation3 + $0x38] sm:$0xff]
        %v6492 = vld [vmem:[#allocation3 + $0x40] sm:$0xff]
        %v6493 = vld [vmem:[#allocation3 + $0x48] sm:$0xf]
        %6494 = vst [vmem:[#allocation4 + $0x460] sm:$0xff] %v6486
        %6495 = vst [vmem:[#allocation4 + $0x468] sm:$0xff] %v6487
        %6496 = vst [vmem:[#allocation4 + $0x470] sm:$0xff] %v6488
        %6497 = vst [vmem:[#allocation4 + $0x478] sm:$0xf] %v6489
        %6498 = vst [vmem:[#allocation4 + $0x47c] sm:$0xff] %v6490
        %6499 = vst [vmem:[#allocation4 + $0x484] sm:$0xff] %v6491
        %6500 = vst [vmem:[#allocation4 + $0x48c] sm:$0xff] %v6492
        %6501 = vst [vmem:[#allocation4 + $0x494] sm:$0xf] %v6493
        %v6502 = vld [vmem:[#allocation3 + $0x8] sm:$0xff]
        %v6503 = vld [vmem:[#allocation3 + $0x10] sm:$0xff]
        %v6504 = vld [vmem:[#allocation3 + $0x18] sm:$0xff]
        %v6505 = vld [vmem:[#allocation3 + $0x20] sm:$0xff]
        %v6506 = vld [vmem:[#allocation3 + $0x30] sm:$0xff]
        %v6507 = vld [vmem:[#allocation3 + $0x38] sm:$0xff]
        %v6508 = vld [vmem:[#allocation3 + $0x40] sm:$0xff]
        %v6509 = vld [vmem:[#allocation3 + $0x48] sm:$0xff]
        %6518 = vrot.lane.b32.xlu0 %v6502, 126
        %v6519 = vpop.permute.xlu0 %6518
        %6520 = vrot.lane.b32.xlu0 %v6503, 126
        %v6521 = vpop.permute.xlu0 %6520
        %6522 = vrot.lane.b32.xlu0 %v6504, 126
        %v6523 = vpop.permute.xlu0 %6522
        %6524 = vrot.lane.b32.xlu0 %v6505, 126
        %v6525 = vpop.permute.xlu0 %6524
        %6526 = vrot.lane.b32.xlu0 %v6506, 126
        %v6527 = vpop.permute.xlu0 %6526
        %6528 = vrot.lane.b32.xlu0 %v6507, 126
        %v6529 = vpop.permute.xlu0 %6528
        %6530 = vrot.lane.b32.xlu0 %v6508, 126
        %v6531 = vpop.permute.xlu0 %6530
        %6532 = vrot.lane.b32.xlu0 %v6509, 126
        %v6533 = vpop.permute.xlu0 %6532
        %v6534 = vrot.slane %v6519, 4
        %v6535 = vrot.slane %v6521, 4
        %v6536 = vrot.slane %v6523, 4
        %v6537 = vrot.slane %v6525, 4
        %v6538 = vrot.slane %v6527, 4
        %v6539 = vrot.slane %v6529, 4
        %v6540 = vrot.slane %v6531, 4
        %v6541 = vrot.slane %v6533, 4
        %v6542 = vsel %vm5240, %v6534, %v6535
        %v6543 = vsel %vm5242, %v6519, %v6542
        %v6544 = vsel %vm5240, %v6535, %v6536
        %v6545 = vsel %vm5242, %v6521, %v6544
        %v6546 = vsel %vm5240, %v6536, %v6537
        %v6547 = vsel %vm5242, %v6523, %v6546
        %v6548 = vsel %vm5242, %v6525, %v6537
        %v6549 = vsel %vm5240, %v6538, %v6539
        %v6550 = vsel %vm5242, %v6527, %v6549
        %v6551 = vsel %vm5240, %v6539, %v6540
        %v6552 = vsel %vm5242, %v6529, %v6551
        %v6553 = vsel %vm5240, %v6540, %v6541
        %v6554 = vsel %vm5242, %v6531, %v6553
        %v6555 = vsel %vm5242, %v6533, %v6541
        %6564 = vst [vmem:[#allocation4 + $0x498] sm:$0xff] %v6543
        %6565 = vst [vmem:[#allocation4 + $0x4a0] sm:$0xff] %v6545
        %6566 = vst [vmem:[#allocation4 + $0x4a8] sm:$0xff] %v6547
        %6567 = vst [vmem:[#allocation4 + $0x4b0] sm:$0xf] %v6548
        %6568 = vst [vmem:[#allocation4 + $0x4b4] sm:$0xff] %v6550
        %6569 = vst [vmem:[#allocation4 + $0x4bc] sm:$0xff] %v6552
        %6570 = vst [vmem:[#allocation4 + $0x4c4] sm:$0xff] %v6554
        %6571 = vst [vmem:[#allocation4 + $0x4cc] sm:$0xf] %v6555
        %v6572 = vld [vmem:[#allocation3 + $0x8] sm:$0xff]
        %v6573 = vld [vmem:[#allocation3 + $0x10] sm:$0xff]
        %v6574 = vld [vmem:[#allocation3 + $0x18] sm:$0xff]
        %v6575 = vld [vmem:[#allocation3 + $0x20] sm:$0xff]
        %v6576 = vld [vmem:[#allocation3 + $0x30] sm:$0xff]
        %v6577 = vld [vmem:[#allocation3 + $0x38] sm:$0xff]
        %v6578 = vld [vmem:[#allocation3 + $0x40] sm:$0xff]
        %v6579 = vld [vmem:[#allocation3 + $0x48] sm:$0xff]
        %6588 = vrot.lane.b32.xlu0 %v6572, 124
        %v6589 = vpop.permute.xlu0 %6588
        %6590 = vrot.lane.b32.xlu0 %v6573, 124
        %v6591 = vpop.permute.xlu0 %6590
        %6592 = vrot.lane.b32.xlu0 %v6574, 124
        %v6593 = vpop.permute.xlu0 %6592
        %6594 = vrot.lane.b32.xlu0 %v6575, 124
        %v6595 = vpop.permute.xlu0 %6594
        %6596 = vrot.lane.b32.xlu0 %v6576, 124
        %v6597 = vpop.permute.xlu0 %6596
        %6598 = vrot.lane.b32.xlu0 %v6577, 124
        %v6599 = vpop.permute.xlu0 %6598
        %6600 = vrot.lane.b32.xlu0 %v6578, 124
        %v6601 = vpop.permute.xlu0 %6600
        %6602 = vrot.lane.b32.xlu0 %v6579, 124
        %v6603 = vpop.permute.xlu0 %6602
        %v6604 = vrot.slane %v6589, 4
        %v6605 = vrot.slane %v6591, 4
        %v6606 = vrot.slane %v6593, 4
        %v6607 = vrot.slane %v6595, 4
        %v6608 = vrot.slane %v6597, 4
        %v6609 = vrot.slane %v6599, 4
        %v6610 = vrot.slane %v6601, 4
        %v6611 = vrot.slane %v6603, 4
        %v6612 = vsel %vm5240, %v6604, %v6605
        %v6613 = vsel %vm5313, %v6589, %v6612
        %v6614 = vsel %vm5240, %v6605, %v6606
        %v6615 = vsel %vm5313, %v6591, %v6614
        %v6616 = vsel %vm5240, %v6606, %v6607
        %v6617 = vsel %vm5313, %v6593, %v6616
        %v6618 = vsel %vm5313, %v6595, %v6607
        %v6619 = vsel %vm5240, %v6608, %v6609
        %v6620 = vsel %vm5313, %v6597, %v6619
        %v6621 = vsel %vm5240, %v6609, %v6610
        %v6622 = vsel %vm5313, %v6599, %v6621
        %v6623 = vsel %vm5240, %v6610, %v6611
        %v6624 = vsel %vm5313, %v6601, %v6623
        %v6625 = vsel %vm5313, %v6603, %v6611
        %6634 = vst [vmem:[#allocation4 + $0x4d0] sm:$0xff] %v6613
        %6635 = vst [vmem:[#allocation4 + $0x4d8] sm:$0xff] %v6615
        %6636 = vst [vmem:[#allocation4 + $0x4e0] sm:$0xff] %v6617
        %6637 = vst [vmem:[#allocation4 + $0x4e8] sm:$0xf] %v6618
        %6638 = vst [vmem:[#allocation4 + $0x4ec] sm:$0xff] %v6620
        %6639 = vst [vmem:[#allocation4 + $0x4f4] sm:$0xff] %v6622
        %6640 = vst [vmem:[#allocation4 + $0x4fc] sm:$0xff] %v6624
        %6641 = vst [vmem:[#allocation4 + $0x504] sm:$0xf] %v6625
        %v6642 = vld [vmem:[#allocation3 + $0x8] sm:$0xff]
        %v6643 = vld [vmem:[#allocation3 + $0x10] sm:$0xff]
        %v6644 = vld [vmem:[#allocation3 + $0x18] sm:$0xff]
        %v6645 = vld [vmem:[#allocation3 + $0x20] sm:$0xff]
        %v6646 = vld [vmem:[#allocation3 + $0x30] sm:$0xff]
        %v6647 = vld [vmem:[#allocation3 + $0x38] sm:$0xff]
        %v6648 = vld [vmem:[#allocation3 + $0x40] sm:$0xff]
        %v6649 = vld [vmem:[#allocation3 + $0x48] sm:$0xff]
        %6658 = vrot.lane.b32.xlu0 %v6642, 122
        %v6659 = vpop.permute.xlu0 %6658
        %6660 = vrot.lane.b32.xlu0 %v6643, 122
        %v6661 = vpop.permute.xlu0 %6660
        %6662 = vrot.lane.b32.xlu0 %v6644, 122
        %v6663 = vpop.permute.xlu0 %6662
        %6664 = vrot.lane.b32.xlu0 %v6645, 122
        %v6665 = vpop.permute.xlu0 %6664
        %6666 = vrot.lane.b32.xlu0 %v6646, 122
        %v6667 = vpop.permute.xlu0 %6666
        %6668 = vrot.lane.b32.xlu0 %v6647, 122
        %v6669 = vpop.permute.xlu0 %6668
        %6670 = vrot.lane.b32.xlu0 %v6648, 122
        %v6671 = vpop.permute.xlu0 %6670
        %6672 = vrot.lane.b32.xlu0 %v6649, 122
        %v6673 = vpop.permute.xlu0 %6672
        %v6674 = vrot.slane %v6659, 4
        %v6675 = vrot.slane %v6661, 4
        %v6676 = vrot.slane %v6663, 4
        %v6677 = vrot.slane %v6665, 4
        %v6678 = vrot.slane %v6667, 4
        %v6679 = vrot.slane %v6669, 4
        %v6680 = vrot.slane %v6671, 4
        %v6681 = vrot.slane %v6673, 4
        %v6682 = vsel %vm5240, %v6674, %v6675
        %v6683 = vsel %vm5384, %v6659, %v6682
        %v6684 = vsel %vm5240, %v6675, %v6676
        %v6685 = vsel %vm5384, %v6661, %v6684
        %v6686 = vsel %vm5240, %v6676, %v6677
        %v6687 = vsel %vm5384, %v6663, %v6686
        %v6688 = vsel %vm5384, %v6665, %v6677
        %v6689 = vsel %vm5240, %v6678, %v6679
        %v6690 = vsel %vm5384, %v6667, %v6689
        %v6691 = vsel %vm5240, %v6679, %v6680
        %v6692 = vsel %vm5384, %v6669, %v6691
        %v6693 = vsel %vm5240, %v6680, %v6681
        %v6694 = vsel %vm5384, %v6671, %v6693
        %v6695 = vsel %vm5384, %v6673, %v6681
        %6704 = vst [vmem:[#allocation4 + $0x508] sm:$0xff] %v6683
        %6705 = vst [vmem:[#allocation4 + $0x510] sm:$0xff] %v6685
        %6706 = vst [vmem:[#allocation4 + $0x518] sm:$0xff] %v6687
        %6707 = vst [vmem:[#allocation4 + $0x520] sm:$0xf] %v6688
        %6708 = vst [vmem:[#allocation4 + $0x524] sm:$0xff] %v6690
        %6709 = vst [vmem:[#allocation4 + $0x52c] sm:$0xff] %v6692
        %6710 = vst [vmem:[#allocation4 + $0x534] sm:$0xff] %v6694
        %6711 = vst [vmem:[#allocation4 + $0x53c] sm:$0xf] %v6695
        %v6712 = vld [vmem:[#allocation3 + $0x8] sm:$0xff]
        %v6713 = vld [vmem:[#allocation3 + $0x10] sm:$0xff]
        %v6714 = vld [vmem:[#allocation3 + $0x18] sm:$0xff]
        %v6715 = vld [vmem:[#allocation3 + $0x20] sm:$0xff]
        %v6716 = vld [vmem:[#allocation3 + $0x30] sm:$0xff]
        %v6717 = vld [vmem:[#allocation3 + $0x38] sm:$0xff]
        %v6718 = vld [vmem:[#allocation3 + $0x40] sm:$0xff]
        %v6719 = vld [vmem:[#allocation3 + $0x48] sm:$0xff]
        %6728 = vrot.lane.b32.xlu0 %v6712, 120
        %v6729 = vpop.permute.xlu0 %6728
        %6730 = vrot.lane.b32.xlu0 %v6713, 120
        %v6731 = vpop.permute.xlu0 %6730
        %6732 = vrot.lane.b32.xlu0 %v6714, 120
        %v6733 = vpop.permute.xlu0 %6732
        %6734 = vrot.lane.b32.xlu0 %v6715, 120
        %v6735 = vpop.permute.xlu0 %6734
        %6736 = vrot.lane.b32.xlu0 %v6716, 120
        %v6737 = vpop.permute.xlu0 %6736
        %6738 = vrot.lane.b32.xlu0 %v6717, 120
        %v6739 = vpop.permute.xlu0 %6738
        %6740 = vrot.lane.b32.xlu0 %v6718, 120
        %v6741 = vpop.permute.xlu0 %6740
        %6742 = vrot.lane.b32.xlu0 %v6719, 120
        %v6743 = vpop.permute.xlu0 %6742
        %v6744 = vrot.slane %v6729, 4
        %v6745 = vrot.slane %v6731, 4
        %v6746 = vrot.slane %v6733, 4
        %v6747 = vrot.slane %v6735, 4
        %v6748 = vrot.slane %v6737, 4
        %v6749 = vrot.slane %v6739, 4
        %v6750 = vrot.slane %v6741, 4
        %v6751 = vrot.slane %v6743, 4
        %v6752 = vsel %vm5240, %v6744, %v6745
        %v6753 = vsel %vm5455, %v6729, %v6752
        %v6754 = vsel %vm5240, %v6745, %v6746
        %v6755 = vsel %vm5455, %v6731, %v6754
        %v6756 = vsel %vm5240, %v6746, %v6747
        %v6757 = vsel %vm5455, %v6733, %v6756
        %v6758 = vsel %vm5455, %v6735, %v6747
        %v6759 = vsel %vm5240, %v6748, %v6749
        %v6760 = vsel %vm5455, %v6737, %v6759
        %v6761 = vsel %vm5240, %v6749, %v6750
        %v6762 = vsel %vm5455, %v6739, %v6761
        %v6763 = vsel %vm5240, %v6750, %v6751
        %v6764 = vsel %vm5455, %v6741, %v6763
        %v6765 = vsel %vm5455, %v6743, %v6751
        %6774 = vst [vmem:[#allocation4 + $0x540] sm:$0xff] %v6753
        %6775 = vst [vmem:[#allocation4 + $0x548] sm:$0xff] %v6755
        %6776 = vst [vmem:[#allocation4 + $0x550] sm:$0xff] %v6757
        %6777 = vst [vmem:[#allocation4 + $0x558] sm:$0xf] %v6758
        %6778 = vst [vmem:[#allocation4 + $0x55c] sm:$0xff] %v6760
        %6779 = vst [vmem:[#allocation4 + $0x564] sm:$0xff] %v6762
        %6780 = vst [vmem:[#allocation4 + $0x56c] sm:$0xff] %v6764
        %6781 = vst [vmem:[#allocation4 + $0x574] sm:$0xf] %v6765
        %v6782 = vld [vmem:[%s4] sm:$0xff]
        %v6783 = vld [vmem:[%s4 + $0x8] sm:$0xff]
        %v6784 = vld [vmem:[%s4 + $0x10] sm:$0xff]
        %v6785 = vld [vmem:[%s4 + $0x18] sm:$0xff]
        %v6786 = vld [vmem:[%s4 + $0x20] sm:$0xff]
        %v6787 = vld [vmem:[%s4 + $0x28] sm:$0xff]
        %v6788 = vld [vmem:[%s4 + $0x30] sm:$0xff]
        %v6789 = vld [vmem:[%s4 + $0x38] sm:$0xff]
        %v6790 = vld [vmem:[#allocation4] sm:$0xff]
        %v6791 = vld [vmem:[#allocation4 + $0x8] sm:$0xff]
        %v6792 = vld [vmem:[#allocation4 + $0x10] sm:$0xff]
        %v6793 = vld [vmem:[#allocation4 + $0x18] sm:$0xf]
        %v6794 = vld [vmem:[#allocation4 + $0x1c] sm:$0xff]
        %v6795 = vld [vmem:[#allocation4 + $0x24] sm:$0xff]
        %v6796 = vld [vmem:[#allocation4 + $0x2c] sm:$0xff]
        %v6797 = vld [vmem:[#allocation4 + $0x34] sm:$0xf]
        %v6798 = vld [vmem:[#allocation4 + $0x38] sm:$0xff]
        %v6799 = vld [vmem:[#allocation4 + $0x40] sm:$0xff]
        %v6800 = vld [vmem:[#allocation4 + $0x48] sm:$0xff]
        %v6801 = vld [vmem:[#allocation4 + $0x50] sm:$0xf]
        %v6802 = vld [vmem:[#allocation4 + $0x54] sm:$0xff]
        %v6803 = vld [vmem:[#allocation4 + $0x5c] sm:$0xff]
        %v6804 = vld [vmem:[#allocation4 + $0x64] sm:$0xff]
        %v6805 = vld [vmem:[#allocation4 + $0x6c] sm:$0xf]
        %v6806 = vld [vmem:[#allocation4 + $0x70] sm:$0xff]
        %v6807 = vld [vmem:[#allocation4 + $0x78] sm:$0xff]
        %v6808 = vld [vmem:[#allocation4 + $0x80] sm:$0xff]
        %v6809 = vld [vmem:[#allocation4 + $0x88] sm:$0xf]
        %v6810 = vld [vmem:[#allocation4 + $0x8c] sm:$0xff]
        %v6811 = vld [vmem:[#allocation4 + $0x94] sm:$0xff]
        %v6812 = vld [vmem:[#allocation4 + $0x9c] sm:$0xff]
        %v6813 = vld [vmem:[#allocation4 + $0xa4] sm:$0xf]
        %v6814 = vld [vmem:[#allocation4 + $0xa8] sm:$0xff]
        %v6815 = vld [vmem:[#allocation4 + $0xb0] sm:$0xff]
        %v6816 = vld [vmem:[#allocation4 + $0xb8] sm:$0xff]
        %v6817 = vld [vmem:[#allocation4 + $0xc0] sm:$0xf]
        %v6818 = vld [vmem:[#allocation4 + $0xc4] sm:$0xff]
        %v6819 = vld [vmem:[#allocation4 + $0xcc] sm:$0xff]
        %v6820 = vld [vmem:[#allocation4 + $0xd4] sm:$0xff]
        %v6821 = vld [vmem:[#allocation4 + $0xdc] sm:$0xf]
        %v6822 = vld [vmem:[#allocation4 + $0xe0] sm:$0xff]
        %v6823 = vld [vmem:[#allocation4 + $0xe8] sm:$0xff]
        %v6824 = vld [vmem:[#allocation4 + $0xf0] sm:$0xff]
        %v6825 = vld [vmem:[#allocation4 + $0xf8] sm:$0xf]
        %v6826 = vld [vmem:[#allocation4 + $0xfc] sm:$0xff]
        %v6827 = vld [vmem:[#allocation4 + $0x104] sm:$0xff]
        %v6828 = vld [vmem:[#allocation4 + $0x10c] sm:$0xff]
        %v6829 = vld [vmem:[#allocation4 + $0x114] sm:$0xf]
        %v6830 = vld [vmem:[#allocation4 + $0x118] sm:$0xff]
        %v6831 = vld [vmem:[#allocation4 + $0x120] sm:$0xff]
        %v6832 = vld [vmem:[#allocation4 + $0x128] sm:$0xff]
        %v6833 = vld [vmem:[#allocation4 + $0x130] sm:$0xf]
        %v6834 = vld [vmem:[#allocation4 + $0x134] sm:$0xff]
        %v6835 = vld [vmem:[#allocation4 + $0x13c] sm:$0xff]
        %v6836 = vld [vmem:[#allocation4 + $0x144] sm:$0xff]
        %v6837 = vld [vmem:[#allocation4 + $0x14c] sm:$0xf]
        %v6838 = vld [vmem:[#allocation4 + $0x150] sm:$0xff]
        %v6839 = vld [vmem:[#allocation4 + $0x158] sm:$0xff]
        %v6840 = vld [vmem:[#allocation4 + $0x160] sm:$0xff]
        %v6841 = vld [vmem:[#allocation4 + $0x168] sm:$0xf]
        %v6842 = vld [vmem:[#allocation4 + $0x16c] sm:$0xff]
        %v6843 = vld [vmem:[#allocation4 + $0x174] sm:$0xff]
        %v6844 = vld [vmem:[#allocation4 + $0x17c] sm:$0xff]
        %v6845 = vld [vmem:[#allocation4 + $0x184] sm:$0xf]
        %v6846 = vld [vmem:[#allocation4 + $0x188] sm:$0xff]
        %v6847 = vld [vmem:[#allocation4 + $0x190] sm:$0xff]
        %v6848 = vld [vmem:[#allocation4 + $0x198] sm:$0xff]
        %v6849 = vld [vmem:[#allocation4 + $0x1a0] sm:$0xf]
        %v6850 = vld [vmem:[#allocation4 + $0x1a4] sm:$0xff]
        %v6851 = vld [vmem:[#allocation4 + $0x1ac] sm:$0xff]
        %v6852 = vld [vmem:[#allocation4 + $0x1b4] sm:$0xff]
        %v6853 = vld [vmem:[#allocation4 + $0x1bc] sm:$0xf]
        %v6854 = vld [vmem:[#allocation4 + $0x1c0] sm:$0xff]
        %v6855 = vld [vmem:[#allocation4 + $0x1c8] sm:$0xff]
        %v6856 = vld [vmem:[#allocation4 + $0x1d0] sm:$0xff]
        %v6857 = vld [vmem:[#allocation4 + $0x1d8] sm:$0xf]
        %v6858 = vld [vmem:[#allocation4 + $0x1dc] sm:$0xff]
        %v6859 = vld [vmem:[#allocation4 + $0x1e4] sm:$0xff]
        %v6860 = vld [vmem:[#allocation4 + $0x1ec] sm:$0xff]
        %v6861 = vld [vmem:[#allocation4 + $0x1f4] sm:$0xf]
        %v6862 = vld [vmem:[#allocation4 + $0x1f8] sm:$0xff]
        %v6863 = vld [vmem:[#allocation4 + $0x200] sm:$0xff]
        %v6864 = vld [vmem:[#allocation4 + $0x208] sm:$0xff]
        %v6865 = vld [vmem:[#allocation4 + $0x210] sm:$0xf]
        %v6866 = vld [vmem:[#allocation4 + $0x214] sm:$0xff]
        %v6867 = vld [vmem:[#allocation4 + $0x21c] sm:$0xff]
        %v6868 = vld [vmem:[#allocation4 + $0x224] sm:$0xff]
        %v6869 = vld [vmem:[#allocation4 + $0x22c] sm:$0xf]
        %v6870 = vld [vmem:[#allocation4 + $0x230] sm:$0xff]
        %v6871 = vld [vmem:[#allocation4 + $0x238] sm:$0xff]
        %v6872 = vld [vmem:[#allocation4 + $0x240] sm:$0xff]
        %v6873 = vld [vmem:[#allocation4 + $0x248] sm:$0xf]
        %v6874 = vld [vmem:[#allocation4 + $0x24c] sm:$0xff]
        %v6875 = vld [vmem:[#allocation4 + $0x254] sm:$0xff]
        %v6876 = vld [vmem:[#allocation4 + $0x25c] sm:$0xff]
        %v6877 = vld [vmem:[#allocation4 + $0x264] sm:$0xf]
        %v6878 = vld [vmem:[#allocation4 + $0x268] sm:$0xff]
        %v6879 = vld [vmem:[#allocation4 + $0x270] sm:$0xff]
        %v6880 = vld [vmem:[#allocation4 + $0x278] sm:$0xff]
        %v6881 = vld [vmem:[#allocation4 + $0x280] sm:$0xf]
        %v6882 = vld [vmem:[#allocation4 + $0x284] sm:$0xff]
        %v6883 = vld [vmem:[#allocation4 + $0x28c] sm:$0xff]
        %v6884 = vld [vmem:[#allocation4 + $0x294] sm:$0xff]
        %v6885 = vld [vmem:[#allocation4 + $0x29c] sm:$0xf]
        %v6886 = vld [vmem:[#allocation4 + $0x2a0] sm:$0xff]
        %v6887 = vld [vmem:[#allocation4 + $0x2a8] sm:$0xff]
        %v6888 = vld [vmem:[#allocation4 + $0x2b0] sm:$0xff]
        %v6889 = vld [vmem:[#allocation4 + $0x2b8] sm:$0xf]
        %v6890 = vld [vmem:[#allocation4 + $0x2bc] sm:$0xff]
        %v6891 = vld [vmem:[#allocation4 + $0x2c4] sm:$0xff]
        %v6892 = vld [vmem:[#allocation4 + $0x2cc] sm:$0xff]
        %v6893 = vld [vmem:[#allocation4 + $0x2d4] sm:$0xf]
        %v6894 = vld [vmem:[#allocation4 + $0x2d8] sm:$0xff]
        %v6895 = vld [vmem:[#allocation4 + $0x2e0] sm:$0xff]
        %v6896 = vld [vmem:[#allocation4 + $0x2e8] sm:$0xff]
        %v6897 = vld [vmem:[#allocation4 + $0x2f0] sm:$0xf]
        %v6898 = vld [vmem:[#allocation4 + $0x2f4] sm:$0xff]
        %v6899 = vld [vmem:[#allocation4 + $0x2fc] sm:$0xff]
        %v6900 = vld [vmem:[#allocation4 + $0x304] sm:$0xff]
        %v6901 = vld [vmem:[#allocation4 + $0x30c] sm:$0xf]
        %v6902 = vld [vmem:[#allocation4 + $0x310] sm:$0xff]
        %v6903 = vld [vmem:[#allocation4 + $0x318] sm:$0xff]
        %v6904 = vld [vmem:[#allocation4 + $0x320] sm:$0xff]
        %v6905 = vld [vmem:[#allocation4 + $0x328] sm:$0xf]
        %v6906 = vld [vmem:[#allocation4 + $0x32c] sm:$0xff]
        %v6907 = vld [vmem:[#allocation4 + $0x334] sm:$0xff]
        %v6908 = vld [vmem:[#allocation4 + $0x33c] sm:$0xff]
        %v6909 = vld [vmem:[#allocation4 + $0x344] sm:$0xf]
        %v6910 = vld [vmem:[#allocation4 + $0x348] sm:$0xff]
        %v6911 = vld [vmem:[#allocation4 + $0x350] sm:$0xff]
        %v6912 = vld [vmem:[#allocation4 + $0x358] sm:$0xff]
        %v6913 = vld [vmem:[#allocation4 + $0x360] sm:$0xf]
        %v6914 = vld [vmem:[#allocation4 + $0x364] sm:$0xff]
        %v6915 = vld [vmem:[#allocation4 + $0x36c] sm:$0xff]
        %v6916 = vld [vmem:[#allocation4 + $0x374] sm:$0xff]
        %v6917 = vld [vmem:[#allocation4 + $0x37c] sm:$0xf]
        %v6918 = vld [vmem:[#allocation4 + $0x380] sm:$0xff]
        %v6919 = vld [vmem:[#allocation4 + $0x388] sm:$0xff]
        %v6920 = vld [vmem:[#allocation4 + $0x390] sm:$0xff]
        %v6921 = vld [vmem:[#allocation4 + $0x398] sm:$0xf]
        %v6922 = vld [vmem:[#allocation4 + $0x39c] sm:$0xff]
        %v6923 = vld [vmem:[#allocation4 + $0x3a4] sm:$0xff]
        %v6924 = vld [vmem:[#allocation4 + $0x3ac] sm:$0xff]
        %v6925 = vld [vmem:[#allocation4 + $0x3b4] sm:$0xf]
        %v6926 = vld [vmem:[#allocation4 + $0x3b8] sm:$0xff]
        %v6927 = vld [vmem:[#allocation4 + $0x3c0] sm:$0xff]
        %v6928 = vld [vmem:[#allocation4 + $0x3c8] sm:$0xff]
        %v6929 = vld [vmem:[#allocation4 + $0x3d0] sm:$0xf]
        %v6930 = vld [vmem:[#allocation4 + $0x3d4] sm:$0xff]
        %v6931 = vld [vmem:[#allocation4 + $0x3dc] sm:$0xff]
        %v6932 = vld [vmem:[#allocation4 + $0x3e4] sm:$0xff]
        %v6933 = vld [vmem:[#allocation4 + $0x3ec] sm:$0xf]
        %v6934 = vld [vmem:[#allocation4 + $0x3f0] sm:$0xff]
        %v6935 = vld [vmem:[#allocation4 + $0x3f8] sm:$0xff]
        %v6936 = vld [vmem:[#allocation4 + $0x400] sm:$0xff]
        %v6937 = vld [vmem:[#allocation4 + $0x408] sm:$0xf]
        %v6938 = vld [vmem:[#allocation4 + $0x40c] sm:$0xff]
        %v6939 = vld [vmem:[#allocation4 + $0x414] sm:$0xff]
        %v6940 = vld [vmem:[#allocation4 + $0x41c] sm:$0xff]
        %v6941 = vld [vmem:[#allocation4 + $0x424] sm:$0xf]
        %v6942 = vld [vmem:[#allocation4 + $0x428] sm:$0xff]
        %v6943 = vld [vmem:[#allocation4 + $0x430] sm:$0xff]
        %v6944 = vld [vmem:[#allocation4 + $0x438] sm:$0xff]
        %v6945 = vld [vmem:[#allocation4 + $0x440] sm:$0xf]
        %v6946 = vld [vmem:[#allocation4 + $0x444] sm:$0xff]
        %v6947 = vld [vmem:[#allocation4 + $0x44c] sm:$0xff]
        %v6948 = vld [vmem:[#allocation4 + $0x454] sm:$0xff]
        %v6949 = vld [vmem:[#allocation4 + $0x45c] sm:$0xf]
        %v6950 = vld [vmem:[#allocation4 + $0x460] sm:$0xff]
        %v6951 = vld [vmem:[#allocation4 + $0x468] sm:$0xff]
        %v6952 = vld [vmem:[#allocation4 + $0x470] sm:$0xff]
        %v6953 = vld [vmem:[#allocation4 + $0x478] sm:$0xf]
        %v6954 = vld [vmem:[#allocation4 + $0x47c] sm:$0xff]
        %v6955 = vld [vmem:[#allocation4 + $0x484] sm:$0xff]
        %v6956 = vld [vmem:[#allocation4 + $0x48c] sm:$0xff]
        %v6957 = vld [vmem:[#allocation4 + $0x494] sm:$0xf]
        %v6958 = vld [vmem:[#allocation4 + $0x498] sm:$0xff]
        %v6959 = vld [vmem:[#allocation4 + $0x4a0] sm:$0xff]
        %v6960 = vld [vmem:[#allocation4 + $0x4a8] sm:$0xff]
        %v6961 = vld [vmem:[#allocation4 + $0x4b0] sm:$0xf]
        %v6962 = vld [vmem:[#allocation4 + $0x4b4] sm:$0xff]
        %v6963 = vld [vmem:[#allocation4 + $0x4bc] sm:$0xff]
        %v6964 = vld [vmem:[#allocation4 + $0x4c4] sm:$0xff]
        %v6965 = vld [vmem:[#allocation4 + $0x4cc] sm:$0xf]
        %v6966 = vld [vmem:[#allocation4 + $0x4d0] sm:$0xff]
        %v6967 = vld [vmem:[#allocation4 + $0x4d8] sm:$0xff]
        %v6968 = vld [vmem:[#allocation4 + $0x4e0] sm:$0xff]
        %v6969 = vld [vmem:[#allocation4 + $0x4e8] sm:$0xf]
        %v6970 = vld [vmem:[#allocation4 + $0x4ec] sm:$0xff]
        %v6971 = vld [vmem:[#allocation4 + $0x4f4] sm:$0xff]
        %v6972 = vld [vmem:[#allocation4 + $0x4fc] sm:$0xff]
        %v6973 = vld [vmem:[#allocation4 + $0x504] sm:$0xf]
        %v6974 = vld [vmem:[#allocation4 + $0x508] sm:$0xff]
        %v6975 = vld [vmem:[#allocation4 + $0x510] sm:$0xff]
        %v6976 = vld [vmem:[#allocation4 + $0x518] sm:$0xff]
        %v6977 = vld [vmem:[#allocation4 + $0x520] sm:$0xf]
        %v6978 = vld [vmem:[#allocation4 + $0x524] sm:$0xff]
        %v6979 = vld [vmem:[#allocation4 + $0x52c] sm:$0xff]
        %v6980 = vld [vmem:[#allocation4 + $0x534] sm:$0xff]
        %v6981 = vld [vmem:[#allocation4 + $0x53c] sm:$0xf]
        %v6982 = vld [vmem:[#allocation4 + $0x540] sm:$0xff]
        %v6983 = vld [vmem:[#allocation4 + $0x548] sm:$0xff]
        %v6984 = vld [vmem:[#allocation4 + $0x550] sm:$0xff]
        %v6985 = vld [vmem:[#allocation4 + $0x558] sm:$0xf]
        %v6986 = vld [vmem:[#allocation4 + $0x55c] sm:$0xff]
        %v6987 = vld [vmem:[#allocation4 + $0x564] sm:$0xff]
        %v6988 = vld [vmem:[#allocation4 + $0x56c] sm:$0xff]
        %v6989 = vld [vmem:[#allocation4 + $0x574] sm:$0xf]
        %v6990 = vld [vmem:[%s5] sm:$0xff]
        %v6991 = vld [vmem:[%s5 + $0x8] sm:$0xff]
        %v6992 = vld [vmem:[%s5 + $0x10] sm:$0xff]
        %v6993 = vld [vmem:[%s5 + $0x18] sm:$0xff]
        %6995 = vset.pattern.permute.xlu0 0
        %6996 = vperm.xlu0 %6995, %v6990
        %v6997 = vpop.permute.xlu0 %6996
        %7000 = vset.pattern.permute.xlu0 0
        %7001 = vperm.xlu0 %7000, %v6991
        %v7002 = vpop.permute.xlu0 %7001
        %7005 = vset.pattern.permute.xlu0 0
        %7006 = vperm.xlu0 %7005, %v6992
        %v7007 = vpop.permute.xlu0 %7006
        %7010 = vset.pattern.permute.xlu0 0
        %7011 = vperm.xlu0 %7010, %v6993
        %v7012 = vpop.permute.xlu0 %7011
        %v7022 = vunpack.c.l.b16 %v6782
        %v7023 = vunpack.c.h.b16 %v6782
        %v7024 = vunpack.c.l.b16 %v6783
        %v7025 = vunpack.c.h.b16 %v6783
        %v7026 = vunpack.c.l.b16 %v6784
        %v7027 = vunpack.c.h.b16 %v6784
        %v7028 = vunpack.c.l.b16 %v6785
        %v7029 = vunpack.c.h.b16 %v6785
        %v7030 = vunpack.c.l.b16 %v6786
        %v7031 = vunpack.c.h.b16 %v6786
        %v7032 = vunpack.c.l.b16 %v6787
        %v7033 = vunpack.c.h.b16 %v6787
        %v7034 = vunpack.c.l.b16 %v6788
        %v7035 = vunpack.c.h.b16 %v6788
        %v7036 = vunpack.c.l.b16 %v6789
        %v7037 = vunpack.c.h.b16 %v6789
        %v7038 = vpack.c.b16 %v7026, %v7022
        %v7039 = vpack.c.b16 %v7027, %v7023
        %v7040 = vpack.c.b16 %v7028, %v7024
        %v7041 = vpack.c.b16 %v7029, %v7025
        %v7042 = vpack.c.b16 %v7034, %v7030
        %v7043 = vpack.c.b16 %v7035, %v7031
        %v7044 = vpack.c.b16 %v7036, %v7032
        %v7045 = vpack.c.b16 %v7037, %v7033
        %v7252 = vunpack.c.l.b16 %v6790
        %v7253 = vunpack.c.h.b16 %v6790
        %v7254 = vunpack.c.l.b16 %v6791
        %v7255 = vunpack.c.h.b16 %v6791
        %v7256 = vunpack.c.l.b16 %v6792
        %v7257 = vunpack.c.h.b16 %v6792
        %v7258 = vunpack.c.l.b16 %v6793
        %v7259 = vunpack.c.l.b16 %v6794
        %v7260 = vunpack.c.h.b16 %v6794
        %v7261 = vunpack.c.l.b16 %v6795
        %v7262 = vunpack.c.h.b16 %v6795
        %v7263 = vunpack.c.l.b16 %v6796
        %v7264 = vunpack.c.h.b16 %v6796
        %v7265 = vunpack.c.l.b16 %v6797
        %v7266 = vunpack.c.l.b16 %v6798
        %v7267 = vunpack.c.h.b16 %v6798
        %v7268 = vunpack.c.l.b16 %v6799
        %v7269 = vunpack.c.h.b16 %v6799
        %v7270 = vunpack.c.l.b16 %v6800
        %v7271 = vunpack.c.h.b16 %v6800
        %v7272 = vunpack.c.l.b16 %v6801
        %v7273 = vunpack.c.l.b16 %v6802
        %v7274 = vunpack.c.h.b16 %v6802
        %v7275 = vunpack.c.l.b16 %v6803
        %v7276 = vunpack.c.h.b16 %v6803
        %v7277 = vunpack.c.l.b16 %v6804
        %v7278 = vunpack.c.h.b16 %v6804
        %v7279 = vunpack.c.l.b16 %v6805
        %v7280 = vunpack.c.l.b16 %v6806
        %v7281 = vunpack.c.h.b16 %v6806
        %v7282 = vunpack.c.l.b16 %v6807
        %v7283 = vunpack.c.h.b16 %v6807
        %v7284 = vunpack.c.l.b16 %v6808
        %v7285 = vunpack.c.h.b16 %v6808
        %v7286 = vunpack.c.l.b16 %v6809
        %v7287 = vunpack.c.l.b16 %v6810
        %v7288 = vunpack.c.h.b16 %v6810
        %v7289 = vunpack.c.l.b16 %v6811
        %v7290 = vunpack.c.h.b16 %v6811
        %v7291 = vunpack.c.l.b16 %v6812
        %v7292 = vunpack.c.h.b16 %v6812
        %v7293 = vunpack.c.l.b16 %v6813
        %v7294 = vunpack.c.l.b16 %v6814
        %v7295 = vunpack.c.h.b16 %v6814
        %v7296 = vunpack.c.l.b16 %v6815
        %v7297 = vunpack.c.h.b16 %v6815
        %v7298 = vunpack.c.l.b16 %v6816
        %v7299 = vunpack.c.h.b16 %v6816
        %v7300 = vunpack.c.l.b16 %v6817
        %v7301 = vunpack.c.l.b16 %v6818
        %v7302 = vunpack.c.h.b16 %v6818
        %v7303 = vunpack.c.l.b16 %v6819
        %v7304 = vunpack.c.h.b16 %v6819
        %v7305 = vunpack.c.l.b16 %v6820
        %v7306 = vunpack.c.h.b16 %v6820
        %v7307 = vunpack.c.l.b16 %v6821
        %v7308 = vunpack.c.l.b16 %v6822
        %v7309 = vunpack.c.h.b16 %v6822
        %v7310 = vunpack.c.l.b16 %v6823
        %v7311 = vunpack.c.h.b16 %v6823
        %v7312 = vunpack.c.l.b16 %v6824
        %v7313 = vunpack.c.h.b16 %v6824
        %v7314 = vunpack.c.l.b16 %v6825
        %v7315 = vunpack.c.l.b16 %v6826
        %v7316 = vunpack.c.h.b16 %v6826
        %v7317 = vunpack.c.l.b16 %v6827
        %v7318 = vunpack.c.h.b16 %v6827
        %v7319 = vunpack.c.l.b16 %v6828
        %v7320 = vunpack.c.h.b16 %v6828
        %v7321 = vunpack.c.l.b16 %v6829
        %v7322 = vunpack.c.l.b16 %v6830
        %v7323 = vunpack.c.h.b16 %v6830
        %v7324 = vunpack.c.l.b16 %v6831
        %v7325 = vunpack.c.h.b16 %v6831
        %v7326 = vunpack.c.l.b16 %v6832
        %v7327 = vunpack.c.h.b16 %v6832
        %v7328 = vunpack.c.l.b16 %v6833
        %v7329 = vunpack.c.l.b16 %v6834
        %v7330 = vunpack.c.h.b16 %v6834
        %v7331 = vunpack.c.l.b16 %v6835
        %v7332 = vunpack.c.h.b16 %v6835
        %v7333 = vunpack.c.l.b16 %v6836
        %v7334 = vunpack.c.h.b16 %v6836
        %v7335 = vunpack.c.l.b16 %v6837
        %v7336 = vunpack.c.l.b16 %v6838
        %v7337 = vunpack.c.h.b16 %v6838
        %v7338 = vunpack.c.l.b16 %v6839
        %v7339 = vunpack.c.h.b16 %v6839
        %v7340 = vunpack.c.l.b16 %v6840
        %v7341 = vunpack.c.h.b16 %v6840
        %v7342 = vunpack.c.l.b16 %v6841
        %v7343 = vunpack.c.l.b16 %v6842
        %v7344 = vunpack.c.h.b16 %v6842
        %v7345 = vunpack.c.l.b16 %v6843
        %v7346 = vunpack.c.h.b16 %v6843
        %v7347 = vunpack.c.l.b16 %v6844
        %v7348 = vunpack.c.h.b16 %v6844
        %v7349 = vunpack.c.l.b16 %v6845
        %v7350 = vunpack.c.l.b16 %v6846
        %v7351 = vunpack.c.h.b16 %v6846
        %v7352 = vunpack.c.l.b16 %v6847
        %v7353 = vunpack.c.h.b16 %v6847
        %v7354 = vunpack.c.l.b16 %v6848
        %v7355 = vunpack.c.h.b16 %v6848
        %v7356 = vunpack.c.l.b16 %v6849
        %v7357 = vunpack.c.l.b16 %v6850
        %v7358 = vunpack.c.h.b16 %v6850
        %v7359 = vunpack.c.l.b16 %v6851
        %v7360 = vunpack.c.h.b16 %v6851
        %v7361 = vunpack.c.l.b16 %v6852
        %v7362 = vunpack.c.h.b16 %v6852
        %v7363 = vunpack.c.l.b16 %v6853
        %v7364 = vunpack.c.l.b16 %v6854
        %v7365 = vunpack.c.h.b16 %v6854
        %v7366 = vunpack.c.l.b16 %v6855
        %v7367 = vunpack.c.h.b16 %v6855
        %v7368 = vunpack.c.l.b16 %v6856
        %v7369 = vunpack.c.h.b16 %v6856
        %v7370 = vunpack.c.l.b16 %v6857
        %v7371 = vunpack.c.l.b16 %v6858
        %v7372 = vunpack.c.h.b16 %v6858
        %v7373 = vunpack.c.l.b16 %v6859
        %v7374 = vunpack.c.h.b16 %v6859
        %v7375 = vunpack.c.l.b16 %v6860
        %v7376 = vunpack.c.h.b16 %v6860
        %v7377 = vunpack.c.l.b16 %v6861
        %v7378 = vunpack.c.l.b16 %v6862
        %v7379 = vunpack.c.h.b16 %v6862
        %v7380 = vunpack.c.l.b16 %v6863
        %v7381 = vunpack.c.h.b16 %v6863
        %v7382 = vunpack.c.l.b16 %v6864
        %v7383 = vunpack.c.h.b16 %v6864
        %v7384 = vunpack.c.l.b16 %v6865
        %v7385 = vunpack.c.l.b16 %v6866
        %v7386 = vunpack.c.h.b16 %v6866
        %v7387 = vunpack.c.l.b16 %v6867
        %v7388 = vunpack.c.h.b16 %v6867
        %v7389 = vunpack.c.l.b16 %v6868
        %v7390 = vunpack.c.h.b16 %v6868
        %v7391 = vunpack.c.l.b16 %v6869
        %v7392 = vunpack.c.l.b16 %v6870
        %v7393 = vunpack.c.h.b16 %v6870
        %v7394 = vunpack.c.l.b16 %v6871
        %v7395 = vunpack.c.h.b16 %v6871
        %v7396 = vunpack.c.l.b16 %v6872
        %v7397 = vunpack.c.h.b16 %v6872
        %v7398 = vunpack.c.l.b16 %v6873
        %v7399 = vunpack.c.l.b16 %v6874
        %v7400 = vunpack.c.h.b16 %v6874
        %v7401 = vunpack.c.l.b16 %v6875
        %v7402 = vunpack.c.h.b16 %v6875
        %v7403 = vunpack.c.l.b16 %v6876
        %v7404 = vunpack.c.h.b16 %v6876
        %v7405 = vunpack.c.l.b16 %v6877
        %v7406 = vunpack.c.l.b16 %v6878
        %v7407 = vunpack.c.h.b16 %v6878
        %v7408 = vunpack.c.l.b16 %v6879
        %v7409 = vunpack.c.h.b16 %v6879
        %v7410 = vunpack.c.l.b16 %v6880
        %v7411 = vunpack.c.h.b16 %v6880
        %v7412 = vunpack.c.l.b16 %v6881
        %v7413 = vunpack.c.l.b16 %v6882
        %v7414 = vunpack.c.h.b16 %v6882
        %v7415 = vunpack.c.l.b16 %v6883
        %v7416 = vunpack.c.h.b16 %v6883
        %v7417 = vunpack.c.l.b16 %v6884
        %v7418 = vunpack.c.h.b16 %v6884
        %v7419 = vunpack.c.l.b16 %v6885
        %v7420 = vunpack.c.l.b16 %v6886
        %v7421 = vunpack.c.h.b16 %v6886
        %v7422 = vunpack.c.l.b16 %v6887
        %v7423 = vunpack.c.h.b16 %v6887
        %v7424 = vunpack.c.l.b16 %v6888
        %v7425 = vunpack.c.h.b16 %v6888
        %v7426 = vunpack.c.l.b16 %v6889
        %v7427 = vunpack.c.l.b16 %v6890
        %v7428 = vunpack.c.h.b16 %v6890
        %v7429 = vunpack.c.l.b16 %v6891
        %v7430 = vunpack.c.h.b16 %v6891
        %v7431 = vunpack.c.l.b16 %v6892
        %v7432 = vunpack.c.h.b16 %v6892
        %v7433 = vunpack.c.l.b16 %v6893
        %v7434 = vunpack.c.l.b16 %v6894
        %v7435 = vunpack.c.h.b16 %v6894
        %v7436 = vunpack.c.l.b16 %v6895
        %v7437 = vunpack.c.h.b16 %v6895
        %v7438 = vunpack.c.l.b16 %v6896
        %v7439 = vunpack.c.h.b16 %v6896
        %v7440 = vunpack.c.l.b16 %v6897
        %v7441 = vunpack.c.l.b16 %v6898
        %v7442 = vunpack.c.h.b16 %v6898
        %v7443 = vunpack.c.l.b16 %v6899
        %v7444 = vunpack.c.h.b16 %v6899
        %v7445 = vunpack.c.l.b16 %v6900
        %v7446 = vunpack.c.h.b16 %v6900
        %v7447 = vunpack.c.l.b16 %v6901
        %v7448 = vunpack.c.l.b16 %v6902
        %v7449 = vunpack.c.h.b16 %v6902
        %v7450 = vunpack.c.l.b16 %v6903
        %v7451 = vunpack.c.h.b16 %v6903
        %v7452 = vunpack.c.l.b16 %v6904
        %v7453 = vunpack.c.h.b16 %v6904
        %v7454 = vunpack.c.l.b16 %v6905
        %v7455 = vunpack.c.l.b16 %v6906
        %v7456 = vunpack.c.h.b16 %v6906
        %v7457 = vunpack.c.l.b16 %v6907
        %v7458 = vunpack.c.h.b16 %v6907
        %v7459 = vunpack.c.l.b16 %v6908
        %v7460 = vunpack.c.h.b16 %v6908
        %v7461 = vunpack.c.l.b16 %v6909
        %v7462 = vunpack.c.l.b16 %v6910
        %v7463 = vunpack.c.h.b16 %v6910
        %v7464 = vunpack.c.l.b16 %v6911
        %v7465 = vunpack.c.h.b16 %v6911
        %v7466 = vunpack.c.l.b16 %v6912
        %v7467 = vunpack.c.h.b16 %v6912
        %v7468 = vunpack.c.l.b16 %v6913
        %v7469 = vunpack.c.l.b16 %v6914
        %v7470 = vunpack.c.h.b16 %v6914
        %v7471 = vunpack.c.l.b16 %v6915
        %v7472 = vunpack.c.h.b16 %v6915
        %v7473 = vunpack.c.l.b16 %v6916
        %v7474 = vunpack.c.h.b16 %v6916
        %v7475 = vunpack.c.l.b16 %v6917
        %v7476 = vunpack.c.l.b16 %v6918
        %v7477 = vunpack.c.h.b16 %v6918
        %v7478 = vunpack.c.l.b16 %v6919
        %v7479 = vunpack.c.h.b16 %v6919
        %v7480 = vunpack.c.l.b16 %v6920
        %v7481 = vunpack.c.h.b16 %v6920
        %v7482 = vunpack.c.l.b16 %v6921
        %v7483 = vunpack.c.l.b16 %v6922
        %v7484 = vunpack.c.h.b16 %v6922
        %v7485 = vunpack.c.l.b16 %v6923
        %v7486 = vunpack.c.h.b16 %v6923
        %v7487 = vunpack.c.l.b16 %v6924
        %v7488 = vunpack.c.h.b16 %v6924
        %v7489 = vunpack.c.l.b16 %v6925
        %v7490 = vunpack.c.l.b16 %v6926
        %v7491 = vunpack.c.h.b16 %v6926
        %v7492 = vunpack.c.l.b16 %v6927
        %v7493 = vunpack.c.h.b16 %v6927
        %v7494 = vunpack.c.l.b16 %v6928
        %v7495 = vunpack.c.h.b16 %v6928
        %v7496 = vunpack.c.l.b16 %v6929
        %v7497 = vunpack.c.l.b16 %v6930
        %v7498 = vunpack.c.h.b16 %v6930
        %v7499 = vunpack.c.l.b16 %v6931
        %v7500 = vunpack.c.h.b16 %v6931
        %v7501 = vunpack.c.l.b16 %v6932
        %v7502 = vunpack.c.h.b16 %v6932
        %v7503 = vunpack.c.l.b16 %v6933
        %v7504 = vunpack.c.l.b16 %v6934
        %v7505 = vunpack.c.h.b16 %v6934
        %v7506 = vunpack.c.l.b16 %v6935
        %v7507 = vunpack.c.h.b16 %v6935
        %v7508 = vunpack.c.l.b16 %v6936
        %v7509 = vunpack.c.h.b16 %v6936
        %v7510 = vunpack.c.l.b16 %v6937
        %v7511 = vunpack.c.l.b16 %v6938
        %v7512 = vunpack.c.h.b16 %v6938
        %v7513 = vunpack.c.l.b16 %v6939
        %v7514 = vunpack.c.h.b16 %v6939
        %v7515 = vunpack.c.l.b16 %v6940
        %v7516 = vunpack.c.h.b16 %v6940
        %v7517 = vunpack.c.l.b16 %v6941
        %v7518 = vunpack.c.l.b16 %v6942
        %v7519 = vunpack.c.h.b16 %v6942
        %v7520 = vunpack.c.l.b16 %v6943
        %v7521 = vunpack.c.h.b16 %v6943
        %v7522 = vunpack.c.l.b16 %v6944
        %v7523 = vunpack.c.h.b16 %v6944
        %v7524 = vunpack.c.l.b16 %v6945
        %v7525 = vunpack.c.l.b16 %v6946
        %v7526 = vunpack.c.h.b16 %v6946
        %v7527 = vunpack.c.l.b16 %v6947
        %v7528 = vunpack.c.h.b16 %v6947
        %v7529 = vunpack.c.l.b16 %v6948
        %v7530 = vunpack.c.h.b16 %v6948
        %v7531 = vunpack.c.l.b16 %v6949
        %v7532 = vunpack.c.l.b16 %v6950
        %v7533 = vunpack.c.h.b16 %v6950
        %v7534 = vunpack.c.l.b16 %v6951
        %v7535 = vunpack.c.h.b16 %v6951
        %v7536 = vunpack.c.l.b16 %v6952
        %v7537 = vunpack.c.h.b16 %v6952
        %v7538 = vunpack.c.l.b16 %v6953
        %v7539 = vunpack.c.l.b16 %v6954
        %v7540 = vunpack.c.h.b16 %v6954
        %v7541 = vunpack.c.l.b16 %v6955
        %v7542 = vunpack.c.h.b16 %v6955
        %v7543 = vunpack.c.l.b16 %v6956
        %v7544 = vunpack.c.h.b16 %v6956
        %v7545 = vunpack.c.l.b16 %v6957
        %v7546 = vunpack.c.l.b16 %v6958
        %v7547 = vunpack.c.h.b16 %v6958
        %v7548 = vunpack.c.l.b16 %v6959
        %v7549 = vunpack.c.h.b16 %v6959
        %v7550 = vunpack.c.l.b16 %v6960
        %v7551 = vunpack.c.h.b16 %v6960
        %v7552 = vunpack.c.l.b16 %v6961
        %v7553 = vunpack.c.l.b16 %v6962
        %v7554 = vunpack.c.h.b16 %v6962
        %v7555 = vunpack.c.l.b16 %v6963
        %v7556 = vunpack.c.h.b16 %v6963
        %v7557 = vunpack.c.l.b16 %v6964
        %v7558 = vunpack.c.h.b16 %v6964
        %v7559 = vunpack.c.l.b16 %v6965
        %v7560 = vunpack.c.l.b16 %v6966
        %v7561 = vunpack.c.h.b16 %v6966
        %v7562 = vunpack.c.l.b16 %v6967
        %v7563 = vunpack.c.h.b16 %v6967
        %v7564 = vunpack.c.l.b16 %v6968
        %v7565 = vunpack.c.h.b16 %v6968
        %v7566 = vunpack.c.l.b16 %v6969
        %v7567 = vunpack.c.l.b16 %v6970
        %v7568 = vunpack.c.h.b16 %v6970
        %v7569 = vunpack.c.l.b16 %v6971
        %v7570 = vunpack.c.h.b16 %v6971
        %v7571 = vunpack.c.l.b16 %v6972
        %v7572 = vunpack.c.h.b16 %v6972
        %v7573 = vunpack.c.l.b16 %v6973
        %v7574 = vunpack.c.l.b16 %v6974
        %v7575 = vunpack.c.h.b16 %v6974
        %v7576 = vunpack.c.l.b16 %v6975
        %v7577 = vunpack.c.h.b16 %v6975
        %v7578 = vunpack.c.l.b16 %v6976
        %v7579 = vunpack.c.h.b16 %v6976
        %v7580 = vunpack.c.l.b16 %v6977
        %v7581 = vunpack.c.l.b16 %v6978
        %v7582 = vunpack.c.h.b16 %v6978
        %v7583 = vunpack.c.l.b16 %v6979
        %v7584 = vunpack.c.h.b16 %v6979
        %v7585 = vunpack.c.l.b16 %v6980
        %v7586 = vunpack.c.h.b16 %v6980
        %v7587 = vunpack.c.l.b16 %v6981
        %v7588 = vunpack.c.l.b16 %v6982
        %v7589 = vunpack.c.h.b16 %v6982
        %v7590 = vunpack.c.l.b16 %v6983
        %v7591 = vunpack.c.h.b16 %v6983
        %v7592 = vunpack.c.l.b16 %v6984
        %v7593 = vunpack.c.h.b16 %v6984
        %v7594 = vunpack.c.l.b16 %v6985
        %v7595 = vunpack.c.l.b16 %v6986
        %v7596 = vunpack.c.h.b16 %v6986
        %v7597 = vunpack.c.l.b16 %v6987
        %v7598 = vunpack.c.h.b16 %v6987
        %v7599 = vunpack.c.l.b16 %v6988
        %v7600 = vunpack.c.h.b16 %v6988
        %v7601 = vunpack.c.l.b16 %v6989
        %v7602 = vpack.c.b16 %v7259, %v7252
        %v7603 = vpack.c.b16 %v7260, %v7253
        %v7604 = vpack.c.b16 %v7261, %v7254
        %v7605 = vpack.c.b16 %v7262, %v7255
        %v7606 = vpack.c.b16 %v7263, %v7256
        %v7607 = vpack.c.b16 %v7264, %v7257
        %v7608 = vpack.c.b16 %v7265, %v7258
        %v7609 = vpack.c.b16 %v7273, %v7266
        %v7610 = vpack.c.b16 %v7274, %v7267
        %v7611 = vpack.c.b16 %v7275, %v7268
        %v7612 = vpack.c.b16 %v7276, %v7269
        %v7613 = vpack.c.b16 %v7277, %v7270
        %v7614 = vpack.c.b16 %v7278, %v7271
        %v7615 = vpack.c.b16 %v7279, %v7272
        %v7616 = vpack.c.b16 %v7287, %v7280
        %v7617 = vpack.c.b16 %v7288, %v7281
        %v7618 = vpack.c.b16 %v7289, %v7282
        %v7619 = vpack.c.b16 %v7290, %v7283
        %v7620 = vpack.c.b16 %v7291, %v7284
        %v7621 = vpack.c.b16 %v7292, %v7285
        %v7622 = vpack.c.b16 %v7293, %v7286
        %v7623 = vpack.c.b16 %v7301, %v7294
        %v7624 = vpack.c.b16 %v7302, %v7295
        %v7625 = vpack.c.b16 %v7303, %v7296
        %v7626 = vpack.c.b16 %v7304, %v7297
        %v7627 = vpack.c.b16 %v7305, %v7298
        %v7628 = vpack.c.b16 %v7306, %v7299
        %v7629 = vpack.c.b16 %v7307, %v7300
        %v7630 = vpack.c.b16 %v7315, %v7308
        %v7631 = vpack.c.b16 %v7316, %v7309
        %v7632 = vpack.c.b16 %v7317, %v7310
        %v7633 = vpack.c.b16 %v7318, %v7311
        %v7634 = vpack.c.b16 %v7319, %v7312
        %v7635 = vpack.c.b16 %v7320, %v7313
        %v7636 = vpack.c.b16 %v7321, %v7314
        %v7637 = vpack.c.b16 %v7329, %v7322
        %v7638 = vpack.c.b16 %v7330, %v7323
        %v7639 = vpack.c.b16 %v7331, %v7324
        %v7640 = vpack.c.b16 %v7332, %v7325
        %v7641 = vpack.c.b16 %v7333, %v7326
        %v7642 = vpack.c.b16 %v7334, %v7327
        %v7643 = vpack.c.b16 %v7335, %v7328
        %v7644 = vpack.c.b16 %v7343, %v7336
        %v7645 = vpack.c.b16 %v7344, %v7337
        %v7646 = vpack.c.b16 %v7345, %v7338
        %v7647 = vpack.c.b16 %v7346, %v7339
        %v7648 = vpack.c.b16 %v7347, %v7340
        %v7649 = vpack.c.b16 %v7348, %v7341
        %v7650 = vpack.c.b16 %v7349, %v7342
        %v7651 = vpack.c.b16 %v7357, %v7350
        %v7652 = vpack.c.b16 %v7358, %v7351
        %v7653 = vpack.c.b16 %v7359, %v7352
        %v7654 = vpack.c.b16 %v7360, %v7353
        %v7655 = vpack.c.b16 %v7361, %v7354
        %v7656 = vpack.c.b16 %v7362, %v7355
        %v7657 = vpack.c.b16 %v7363, %v7356
        %v7658 = vpack.c.b16 %v7371, %v7364
        %v7659 = vpack.c.b16 %v7372, %v7365
        %v7660 = vpack.c.b16 %v7373, %v7366
        %v7661 = vpack.c.b16 %v7374, %v7367
        %v7662 = vpack.c.b16 %v7375, %v7368
        %v7663 = vpack.c.b16 %v7376, %v7369
        %v7664 = vpack.c.b16 %v7377, %v7370
        %v7665 = vpack.c.b16 %v7385, %v7378
        %v7666 = vpack.c.b16 %v7386, %v7379
        %v7667 = vpack.c.b16 %v7387, %v7380
        %v7668 = vpack.c.b16 %v7388, %v7381
        %v7669 = vpack.c.b16 %v7389, %v7382
        %v7670 = vpack.c.b16 %v7390, %v7383
        %v7671 = vpack.c.b16 %v7391, %v7384
        %v7672 = vpack.c.b16 %v7399, %v7392
        %v7673 = vpack.c.b16 %v7400, %v7393
        %v7674 = vpack.c.b16 %v7401, %v7394
        %v7675 = vpack.c.b16 %v7402, %v7395
        %v7676 = vpack.c.b16 %v7403, %v7396
        %v7677 = vpack.c.b16 %v7404, %v7397
        %v7678 = vpack.c.b16 %v7405, %v7398
        %v7679 = vpack.c.b16 %v7413, %v7406
        %v7680 = vpack.c.b16 %v7414, %v7407
        %v7681 = vpack.c.b16 %v7415, %v7408
        %v7682 = vpack.c.b16 %v7416, %v7409
        %v7683 = vpack.c.b16 %v7417, %v7410
        %v7684 = vpack.c.b16 %v7418, %v7411
        %v7685 = vpack.c.b16 %v7419, %v7412
        %v7686 = vpack.c.b16 %v7427, %v7420
        %v7687 = vpack.c.b16 %v7428, %v7421
        %v7688 = vpack.c.b16 %v7429, %v7422
        %v7689 = vpack.c.b16 %v7430, %v7423
        %v7690 = vpack.c.b16 %v7431, %v7424
        %v7691 = vpack.c.b16 %v7432, %v7425
        %v7692 = vpack.c.b16 %v7433, %v7426
        %v7693 = vpack.c.b16 %v7441, %v7434
        %v7694 = vpack.c.b16 %v7442, %v7435
        %v7695 = vpack.c.b16 %v7443, %v7436
        %v7696 = vpack.c.b16 %v7444, %v7437
        %v7697 = vpack.c.b16 %v7445, %v7438
        %v7698 = vpack.c.b16 %v7446, %v7439
        %v7699 = vpack.c.b16 %v7447, %v7440
        %v7700 = vpack.c.b16 %v7455, %v7448
        %v7701 = vpack.c.b16 %v7456, %v7449
        %v7702 = vpack.c.b16 %v7457, %v7450
        %v7703 = vpack.c.b16 %v7458, %v7451
        %v7704 = vpack.c.b16 %v7459, %v7452
        %v7705 = vpack.c.b16 %v7460, %v7453
        %v7706 = vpack.c.b16 %v7461, %v7454
        %v7707 = vpack.c.b16 %v7469, %v7462
        %v7708 = vpack.c.b16 %v7470, %v7463
        %v7709 = vpack.c.b16 %v7471, %v7464
        %v7710 = vpack.c.b16 %v7472, %v7465
        %v7711 = vpack.c.b16 %v7473, %v7466
        %v7712 = vpack.c.b16 %v7474, %v7467
        %v7713 = vpack.c.b16 %v7475, %v7468
        %v7714 = vpack.c.b16 %v7483, %v7476
        %v7715 = vpack.c.b16 %v7484, %v7477
        %v7716 = vpack.c.b16 %v7485, %v7478
        %v7717 = vpack.c.b16 %v7486, %v7479
        %v7718 = vpack.c.b16 %v7487, %v7480
        %v7719 = vpack.c.b16 %v7488, %v7481
        %v7720 = vpack.c.b16 %v7489, %v7482
        %v7721 = vpack.c.b16 %v7497, %v7490
        %v7722 = vpack.c.b16 %v7498, %v7491
        %v7723 = vpack.c.b16 %v7499, %v7492
        %v7724 = vpack.c.b16 %v7500, %v7493
        %v7725 = vpack.c.b16 %v7501, %v7494
        %v7726 = vpack.c.b16 %v7502, %v7495
        %v7727 = vpack.c.b16 %v7503, %v7496
        %v7728 = vpack.c.b16 %v7511, %v7504
        %v7729 = vpack.c.b16 %v7512, %v7505
        %v7730 = vpack.c.b16 %v7513, %v7506
        %v7731 = vpack.c.b16 %v7514, %v7507
        %v7732 = vpack.c.b16 %v7515, %v7508
        %v7733 = vpack.c.b16 %v7516, %v7509
        %v7734 = vpack.c.b16 %v7517, %v7510
        %v7735 = vpack.c.b16 %v7525, %v7518
        %v7736 = vpack.c.b16 %v7526, %v7519
        %v7737 = vpack.c.b16 %v7527, %v7520
        %v7738 = vpack.c.b16 %v7528, %v7521
        %v7739 = vpack.c.b16 %v7529, %v7522
        %v7740 = vpack.c.b16 %v7530, %v7523
        %v7741 = vpack.c.b16 %v7531, %v7524
        %v7742 = vpack.c.b16 %v7539, %v7532
        %v7743 = vpack.c.b16 %v7540, %v7533
        %v7744 = vpack.c.b16 %v7541, %v7534
        %v7745 = vpack.c.b16 %v7542, %v7535
        %v7746 = vpack.c.b16 %v7543, %v7536
        %v7747 = vpack.c.b16 %v7544, %v7537
        %v7748 = vpack.c.b16 %v7545, %v7538
        %v7749 = vpack.c.b16 %v7553, %v7546
        %v7750 = vpack.c.b16 %v7554, %v7547
        %v7751 = vpack.c.b16 %v7555, %v7548
        %v7752 = vpack.c.b16 %v7556, %v7549
        %v7753 = vpack.c.b16 %v7557, %v7550
        %v7754 = vpack.c.b16 %v7558, %v7551
        %v7755 = vpack.c.b16 %v7559, %v7552
        %v7756 = vpack.c.b16 %v7567, %v7560
        %v7757 = vpack.c.b16 %v7568, %v7561
        %v7758 = vpack.c.b16 %v7569, %v7562
        %v7759 = vpack.c.b16 %v7570, %v7563
        %v7760 = vpack.c.b16 %v7571, %v7564
        %v7761 = vpack.c.b16 %v7572, %v7565
        %v7762 = vpack.c.b16 %v7573, %v7566
        %v7763 = vpack.c.b16 %v7581, %v7574
        %v7764 = vpack.c.b16 %v7582, %v7575
        %v7765 = vpack.c.b16 %v7583, %v7576
        %v7766 = vpack.c.b16 %v7584, %v7577
        %v7767 = vpack.c.b16 %v7585, %v7578
        %v7768 = vpack.c.b16 %v7586, %v7579
        %v7769 = vpack.c.b16 %v7587, %v7580
        %v7770 = vpack.c.b16 %v7595, %v7588
        %v7771 = vpack.c.b16 %v7596, %v7589
        %v7772 = vpack.c.b16 %v7597, %v7590
        %v7773 = vpack.c.b16 %v7598, %v7591
        %v7774 = vpack.c.b16 %v7599, %v7592
        %v7775 = vpack.c.b16 %v7600, %v7593
        %v7776 = vpack.c.b16 %v7601, %v7594
        %vm7952 = vcmask 130048
        %v7954 = vsel %vm7952, %v7041, 0
        %v7957 = vsel %vm7952, %v7045, 0
        %7959 = vmatpush.bf16.msra.mxu0 %v7651
        %7960 = vmatpush.bf16.msra.mxu0 %v7644
        %7961 = vmatpush.bf16.msra.mxu0 %v7637
        %7962 = vmatpush.bf16.msra.mxu0 %v7630
        %7963 = vmatpush.bf16.msra.mxu0 %v7623
        %7964 = vmatpush.bf16.msra.mxu0 %v7616
        %7965 = vmatpush.bf16.msra.mxu0 %v7609
        %7966 = vmatpush.bf16.msra.mxu0 %v7602
        %7967 = vmatmul.bf16.gmra.mxu0 %v7038
        %v7968 = vpop.f32.mrf.mxu0
        %v7969 = vadd.f32 %v6997, %v7968
        %v7970 = vpop.f32.mrf.mxu0
        %v7971 = vadd.f32 %v7002, %v7970
        %7972 = vmatmul.bf16.gmra.mxu0 %v7042
        %v7973 = vpop.f32.mrf.mxu0
        %v7974 = vadd.f32 %v7007, %v7973
        %v7975 = vpop.f32.mrf.mxu0
        %v7976 = vadd.f32 %v7012, %v7975
        %7977 = vdwg.mxu0
        %7978 = vmatpush.bf16.msra.mxu0 %v7707
        %7979 = vmatpush.bf16.msra.mxu0 %v7700
        %7980 = vmatpush.bf16.msra.mxu0 %v7693
        %7981 = vmatpush.bf16.msra.mxu0 %v7686
        %7982 = vmatpush.bf16.msra.mxu0 %v7679
        %7983 = vmatpush.bf16.msra.mxu0 %v7672
        %7984 = vmatpush.bf16.msra.mxu0 %v7665
        %7985 = vmatpush.bf16.msra.mxu0 %v7658
        %7986 = vmatmul.bf16.gmra.mxu0 %v7039
        %v7987 = vpop.f32.mrf.mxu0
        %v7988 = vadd.f32 %v7969, %v7987
        %v7989 = vpop.f32.mrf.mxu0
        %v7990 = vadd.f32 %v7971, %v7989
        %7991 = vmatmul.bf16.gmra.mxu0 %v7043
        %v7992 = vpop.f32.mrf.mxu0
        %v7993 = vadd.f32 %v7974, %v7992
        %v7994 = vpop.f32.mrf.mxu0
        %v7995 = vadd.f32 %v7976, %v7994
        %7996 = vdwg.mxu0
        %7997 = vmatpush.bf16.msra.mxu0 %v7763
        %7998 = vmatpush.bf16.msra.mxu0 %v7756
        %7999 = vmatpush.bf16.msra.mxu0 %v7749
        %8000 = vmatpush.bf16.msra.mxu0 %v7742
        %8001 = vmatpush.bf16.msra.mxu0 %v7735
        %8002 = vmatpush.bf16.msra.mxu0 %v7728
        %8003 = vmatpush.bf16.msra.mxu0 %v7721
        %8004 = vmatpush.bf16.msra.mxu0 %v7714
        %8005 = vmatmul.bf16.gmra.mxu0 %v7040
        %v8006 = vpop.f32.mrf.mxu0
        %v8007 = vadd.f32 %v7988, %v8006
        %v8008 = vpop.f32.mrf.mxu0
        %v8009 = vadd.f32 %v7990, %v8008
        %8010 = vmatmul.bf16.gmra.mxu0 %v7044
        %v8011 = vpop.f32.mrf.mxu0
        %v8012 = vadd.f32 %v7993, %v8011
        %v8013 = vpop.f32.mrf.mxu0
        %v8014 = vadd.f32 %v7995, %v8013
        %8015 = vdwg.mxu0
        %8016 = vmatpush.bf16.msra.mxu0 0
        %8017 = vmatpush.bf16.msra.mxu0 0
        %8018 = vmatpush.bf16.msra.mxu0 0
        %8019 = vmatpush.bf16.msra.mxu0 0
        %8020 = vmatpush.bf16.msra.mxu0 0
        %8021 = vmatpush.bf16.msra.mxu0 0
        %8022 = vmatpush.bf16.msra.mxu0 0
        %8023 = vmatpush.bf16.msra.mxu0 %v7770
        %8024 = vmatmul.bf16.gmra.mxu0 %v7954
        %v8025 = vpop.f32.mrf.mxu0
        %v8026 = vadd.f32 %v8007, %v8025
        %v8027 = vpop.f32.mrf.mxu0
        %v8028 = vadd.f32 %v8009, %v8027
        %8029 = vmatmul.bf16.gmra.mxu0 %v7957
        %v8030 = vpop.f32.mrf.mxu0
        %v8031 = vadd.f32 %v8012, %v8030
        %v8032 = vpop.f32.mrf.mxu0
        %v8033 = vadd.f32 %v8014, %v8032
        %8034 = vdwg.mxu0
        %8035 = vmatpush.bf16.msra.mxu0 %v7652
        %8036 = vmatpush.bf16.msra.mxu0 %v7645
        %8037 = vmatpush.bf16.msra.mxu0 %v7638
        %8038 = vmatpush.bf16.msra.mxu0 %v7631
        %8039 = vmatpush.bf16.msra.mxu0 %v7624
        %8040 = vmatpush.bf16.msra.mxu0 %v7617
        %8041 = vmatpush.bf16.msra.mxu0 %v7610
        %8042 = vmatpush.bf16.msra.mxu0 %v7603
        %8043 = vmatmul.bf16.gmra.mxu0 %v7038
        %v8044 = vpop.f32.mrf.mxu0
        %v8045 = vadd.f32 %v6997, %v8044
        %v8046 = vpop.f32.mrf.mxu0
        %v8047 = vadd.f32 %v7002, %v8046
        %8048 = vmatmul.bf16.gmra.mxu0 %v7042
        %v8049 = vpop.f32.mrf.mxu0
        %v8050 = vadd.f32 %v7007, %v8049
        %v8051 = vpop.f32.mrf.mxu0
        %v8052 = vadd.f32 %v7012, %v8051
        %8053 = vdwg.mxu0
        %8054 = vmatpush.bf16.msra.mxu0 %v7708
        %8055 = vmatpush.bf16.msra.mxu0 %v7701
        %8056 = vmatpush.bf16.msra.mxu0 %v7694
        %8057 = vmatpush.bf16.msra.mxu0 %v7687
        %8058 = vmatpush.bf16.msra.mxu0 %v7680
        %8059 = vmatpush.bf16.msra.mxu0 %v7673
        %8060 = vmatpush.bf16.msra.mxu0 %v7666
        %8061 = vmatpush.bf16.msra.mxu0 %v7659
        %8062 = vmatmul.bf16.gmra.mxu0 %v7039
        %v8063 = vpop.f32.mrf.mxu0
        %v8064 = vadd.f32 %v8045, %v8063
        %v8065 = vpop.f32.mrf.mxu0
        %v8066 = vadd.f32 %v8047, %v8065
        %8067 = vmatmul.bf16.gmra.mxu0 %v7043
        %v8068 = vpop.f32.mrf.mxu0
        %v8069 = vadd.f32 %v8050, %v8068
        %v8070 = vpop.f32.mrf.mxu0
        %v8071 = vadd.f32 %v8052, %v8070
        %8072 = vdwg.mxu0
        %8073 = vmatpush.bf16.msra.mxu0 %v7764
        %8074 = vmatpush.bf16.msra.mxu0 %v7757
        %8075 = vmatpush.bf16.msra.mxu0 %v7750
        %8076 = vmatpush.bf16.msra.mxu0 %v7743
        %8077 = vmatpush.bf16.msra.mxu0 %v7736
        %8078 = vmatpush.bf16.msra.mxu0 %v7729
        %8079 = vmatpush.bf16.msra.mxu0 %v7722
        %8080 = vmatpush.bf16.msra.mxu0 %v7715
        %8081 = vmatmul.bf16.gmra.mxu0 %v7040
        %v8082 = vpop.f32.mrf.mxu0
        %v8083 = vadd.f32 %v8064, %v8082
        %v8084 = vpop.f32.mrf.mxu0
        %v8085 = vadd.f32 %v8066, %v8084
        %8086 = vmatmul.bf16.gmra.mxu0 %v7044
        %v8087 = vpop.f32.mrf.mxu0
        %v8088 = vadd.f32 %v8069, %v8087
        %v8089 = vpop.f32.mrf.mxu0
        %v8090 = vadd.f32 %v8071, %v8089
        %8091 = vdwg.mxu0
        %8092 = vmatpush.bf16.msra.mxu0 0
        %8093 = vmatpush.bf16.msra.mxu0 0
        %8094 = vmatpush.bf16.msra.mxu0 0
        %8095 = vmatpush.bf16.msra.mxu0 0
        %8096 = vmatpush.bf16.msra.mxu0 0
        %8097 = vmatpush.bf16.msra.mxu0 0
        %8098 = vmatpush.bf16.msra.mxu0 0
        %8099 = vmatpush.bf16.msra.mxu0 %v7771
        %8100 = vmatmul.bf16.gmra.mxu0 %v7954
        %v8101 = vpop.f32.mrf.mxu0
        %v8102 = vadd.f32 %v8083, %v8101
        %v8103 = vpop.f32.mrf.mxu0
        %v8104 = vadd.f32 %v8085, %v8103
        %8105 = vmatmul.bf16.gmra.mxu0 %v7957
        %v8106 = vpop.f32.mrf.mxu0
        %v8107 = vadd.f32 %v8088, %v8106
        %v8108 = vpop.f32.mrf.mxu0
        %v8109 = vadd.f32 %v8090, %v8108
        %8110 = vdwg.mxu0
        %8111 = vmatpush.bf16.msra.mxu0 %v7653
        %8112 = vmatpush.bf16.msra.mxu0 %v7646
        %8113 = vmatpush.bf16.msra.mxu0 %v7639
        %8114 = vmatpush.bf16.msra.mxu0 %v7632
        %8115 = vmatpush.bf16.msra.mxu0 %v7625
        %8116 = vmatpush.bf16.msra.mxu0 %v7618
        %8117 = vmatpush.bf16.msra.mxu0 %v7611
        %8118 = vmatpush.bf16.msra.mxu0 %v7604
        %8119 = vmatmul.bf16.gmra.mxu0 %v7038
        %v8120 = vpop.f32.mrf.mxu0
        %v8121 = vadd.f32 %v6997, %v8120
        %v8122 = vpop.f32.mrf.mxu0
        %v8123 = vadd.f32 %v7002, %v8122
        %8124 = vmatmul.bf16.gmra.mxu0 %v7042
        %v8125 = vpop.f32.mrf.mxu0
        %v8126 = vadd.f32 %v7007, %v8125
        %v8127 = vpop.f32.mrf.mxu0
        %v8128 = vadd.f32 %v7012, %v8127
        %8129 = vdwg.mxu0
        %8130 = vmatpush.bf16.msra.mxu0 %v7709
        %8131 = vmatpush.bf16.msra.mxu0 %v7702
        %8132 = vmatpush.bf16.msra.mxu0 %v7695
        %8133 = vmatpush.bf16.msra.mxu0 %v7688
        %8134 = vmatpush.bf16.msra.mxu0 %v7681
        %8135 = vmatpush.bf16.msra.mxu0 %v7674
        %8136 = vmatpush.bf16.msra.mxu0 %v7667
        %8137 = vmatpush.bf16.msra.mxu0 %v7660
        %8138 = vmatmul.bf16.gmra.mxu0 %v7039
        %v8139 = vpop.f32.mrf.mxu0
        %v8140 = vadd.f32 %v8121, %v8139
        %v8141 = vpop.f32.mrf.mxu0
        %v8142 = vadd.f32 %v8123, %v8141
        %8143 = vmatmul.bf16.gmra.mxu0 %v7043
        %v8144 = vpop.f32.mrf.mxu0
        %v8145 = vadd.f32 %v8126, %v8144
        %v8146 = vpop.f32.mrf.mxu0
        %v8147 = vadd.f32 %v8128, %v8146
        %8148 = vdwg.mxu0
        %8149 = vmatpush.bf16.msra.mxu0 %v7765
        %8150 = vmatpush.bf16.msra.mxu0 %v7758
        %8151 = vmatpush.bf16.msra.mxu0 %v7751
        %8152 = vmatpush.bf16.msra.mxu0 %v7744
        %8153 = vmatpush.bf16.msra.mxu0 %v7737
        %8154 = vmatpush.bf16.msra.mxu0 %v7730
        %8155 = vmatpush.bf16.msra.mxu0 %v7723
        %8156 = vmatpush.bf16.msra.mxu0 %v7716
        %8157 = vmatmul.bf16.gmra.mxu0 %v7040
        %v8158 = vpop.f32.mrf.mxu0
        %v8159 = vadd.f32 %v8140, %v8158
        %v8160 = vpop.f32.mrf.mxu0
        %v8161 = vadd.f32 %v8142, %v8160
        %8162 = vmatmul.bf16.gmra.mxu0 %v7044
        %v8163 = vpop.f32.mrf.mxu0
        %v8164 = vadd.f32 %v8145, %v8163
        %v8165 = vpop.f32.mrf.mxu0
        %v8166 = vadd.f32 %v8147, %v8165
        %8167 = vdwg.mxu0
        %8168 = vmatpush.bf16.msra.mxu0 0
        %8169 = vmatpush.bf16.msra.mxu0 0
        %8170 = vmatpush.bf16.msra.mxu0 0
        %8171 = vmatpush.bf16.msra.mxu0 0
        %8172 = vmatpush.bf16.msra.mxu0 0
        %8173 = vmatpush.bf16.msra.mxu0 0
        %8174 = vmatpush.bf16.msra.mxu0 0
        %8175 = vmatpush.bf16.msra.mxu0 %v7772
        %8176 = vmatmul.bf16.gmra.mxu0 %v7954
        %v8177 = vpop.f32.mrf.mxu0
        %v8178 = vadd.f32 %v8159, %v8177
        %v8179 = vpop.f32.mrf.mxu0
        %v8180 = vadd.f32 %v8161, %v8179
        %8181 = vmatmul.bf16.gmra.mxu0 %v7957
        %v8182 = vpop.f32.mrf.mxu0
        %v8183 = vadd.f32 %v8164, %v8182
        %v8184 = vpop.f32.mrf.mxu0
        %v8185 = vadd.f32 %v8166, %v8184
        %8186 = vdwg.mxu0
        %8187 = vmatpush.bf16.msra.mxu0 %v7654
        %8188 = vmatpush.bf16.msra.mxu0 %v7647
        %8189 = vmatpush.bf16.msra.mxu0 %v7640
        %8190 = vmatpush.bf16.msra.mxu0 %v7633
        %8191 = vmatpush.bf16.msra.mxu0 %v7626
        %8192 = vmatpush.bf16.msra.mxu0 %v7619
        %8193 = vmatpush.bf16.msra.mxu0 %v7612
        %8194 = vmatpush.bf16.msra.mxu0 %v7605
        %8195 = vmatmul.bf16.gmra.mxu0 %v7038
        %v8196 = vpop.f32.mrf.mxu0
        %v8197 = vadd.f32 %v6997, %v8196
        %v8198 = vpop.f32.mrf.mxu0
        %v8199 = vadd.f32 %v7002, %v8198
        %8200 = vmatmul.bf16.gmra.mxu0 %v7042
        %v8201 = vpop.f32.mrf.mxu0
        %v8202 = vadd.f32 %v7007, %v8201
        %v8203 = vpop.f32.mrf.mxu0
        %v8204 = vadd.f32 %v7012, %v8203
        %8205 = vdwg.mxu0
        %8206 = vmatpush.bf16.msra.mxu0 %v7710
        %8207 = vmatpush.bf16.msra.mxu0 %v7703
        %8208 = vmatpush.bf16.msra.mxu0 %v7696
        %8209 = vmatpush.bf16.msra.mxu0 %v7689
        %8210 = vmatpush.bf16.msra.mxu0 %v7682
        %8211 = vmatpush.bf16.msra.mxu0 %v7675
        %8212 = vmatpush.bf16.msra.mxu0 %v7668
        %8213 = vmatpush.bf16.msra.mxu0 %v7661
        %8214 = vmatmul.bf16.gmra.mxu0 %v7039
        %v8215 = vpop.f32.mrf.mxu0
        %v8216 = vadd.f32 %v8197, %v8215
        %v8217 = vpop.f32.mrf.mxu0
        %v8218 = vadd.f32 %v8199, %v8217
        %8219 = vmatmul.bf16.gmra.mxu0 %v7043
        %v8220 = vpop.f32.mrf.mxu0
        %v8221 = vadd.f32 %v8202, %v8220
        %v8222 = vpop.f32.mrf.mxu0
        %v8223 = vadd.f32 %v8204, %v8222
        %8224 = vdwg.mxu0
        %8225 = vmatpush.bf16.msra.mxu0 %v7766
        %8226 = vmatpush.bf16.msra.mxu0 %v7759
        %8227 = vmatpush.bf16.msra.mxu0 %v7752
        %8228 = vmatpush.bf16.msra.mxu0 %v7745
        %8229 = vmatpush.bf16.msra.mxu0 %v7738
        %8230 = vmatpush.bf16.msra.mxu0 %v7731
        %8231 = vmatpush.bf16.msra.mxu0 %v7724
        %8232 = vmatpush.bf16.msra.mxu0 %v7717
        %8233 = vmatmul.bf16.gmra.mxu0 %v7040
        %v8234 = vpop.f32.mrf.mxu0
        %v8235 = vadd.f32 %v8216, %v8234
        %v8236 = vpop.f32.mrf.mxu0
        %v8237 = vadd.f32 %v8218, %v8236
        %8238 = vmatmul.bf16.gmra.mxu0 %v7044
        %v8239 = vpop.f32.mrf.mxu0
        %v8240 = vadd.f32 %v8221, %v8239
        %v8241 = vpop.f32.mrf.mxu0
        %v8242 = vadd.f32 %v8223, %v8241
        %8243 = vdwg.mxu0
        %8244 = vmatpush.bf16.msra.mxu0 0
        %8245 = vmatpush.bf16.msra.mxu0 0
        %8246 = vmatpush.bf16.msra.mxu0 0
        %8247 = vmatpush.bf16.msra.mxu0 0
        %8248 = vmatpush.bf16.msra.mxu0 0
        %8249 = vmatpush.bf16.msra.mxu0 0
        %8250 = vmatpush.bf16.msra.mxu0 0
        %8251 = vmatpush.bf16.msra.mxu0 %v7773
        %8252 = vmatmul.bf16.gmra.mxu0 %v7954
        %v8253 = vpop.f32.mrf.mxu0
        %v8254 = vadd.f32 %v8235, %v8253
        %v8255 = vpop.f32.mrf.mxu0
        %v8256 = vadd.f32 %v8237, %v8255
        %8257 = vmatmul.bf16.gmra.mxu0 %v7957
        %v8258 = vpop.f32.mrf.mxu0
        %v8259 = vadd.f32 %v8240, %v8258
        %v8260 = vpop.f32.mrf.mxu0
        %v8261 = vadd.f32 %v8242, %v8260
        %8262 = vdwg.mxu0
        %8263 = vmatpush.bf16.msra.mxu0 %v7655
        %8264 = vmatpush.bf16.msra.mxu0 %v7648
        %8265 = vmatpush.bf16.msra.mxu0 %v7641
        %8266 = vmatpush.bf16.msra.mxu0 %v7634
        %8267 = vmatpush.bf16.msra.mxu0 %v7627
        %8268 = vmatpush.bf16.msra.mxu0 %v7620
        %8269 = vmatpush.bf16.msra.mxu0 %v7613
        %8270 = vmatpush.bf16.msra.mxu0 %v7606
        %8271 = vmatmul.bf16.gmra.mxu0 %v7038
        %v8272 = vpop.f32.mrf.mxu0
        %v8273 = vadd.f32 %v6997, %v8272
        %v8274 = vpop.f32.mrf.mxu0
        %v8275 = vadd.f32 %v7002, %v8274
        %8276 = vmatmul.bf16.gmra.mxu0 %v7042
        %v8277 = vpop.f32.mrf.mxu0
        %v8278 = vadd.f32 %v7007, %v8277
        %v8279 = vpop.f32.mrf.mxu0
        %v8280 = vadd.f32 %v7012, %v8279
        %8281 = vdwg.mxu0
        %8282 = vmatpush.bf16.msra.mxu0 %v7711
        %8283 = vmatpush.bf16.msra.mxu0 %v7704
        %8284 = vmatpush.bf16.msra.mxu0 %v7697
        %8285 = vmatpush.bf16.msra.mxu0 %v7690
        %8286 = vmatpush.bf16.msra.mxu0 %v7683
        %8287 = vmatpush.bf16.msra.mxu0 %v7676
        %8288 = vmatpush.bf16.msra.mxu0 %v7669
        %8289 = vmatpush.bf16.msra.mxu0 %v7662
        %8290 = vmatmul.bf16.gmra.mxu0 %v7039
        %v8291 = vpop.f32.mrf.mxu0
        %v8292 = vadd.f32 %v8273, %v8291
        %v8293 = vpop.f32.mrf.mxu0
        %v8294 = vadd.f32 %v8275, %v8293
        %8295 = vmatmul.bf16.gmra.mxu0 %v7043
        %v8296 = vpop.f32.mrf.mxu0
        %v8297 = vadd.f32 %v8278, %v8296
        %v8298 = vpop.f32.mrf.mxu0
        %v8299 = vadd.f32 %v8280, %v8298
        %8300 = vdwg.mxu0
        %8301 = vmatpush.bf16.msra.mxu0 %v7767
        %8302 = vmatpush.bf16.msra.mxu0 %v7760
        %8303 = vmatpush.bf16.msra.mxu0 %v7753
        %8304 = vmatpush.bf16.msra.mxu0 %v7746
        %8305 = vmatpush.bf16.msra.mxu0 %v7739
        %8306 = vmatpush.bf16.msra.mxu0 %v7732
        %8307 = vmatpush.bf16.msra.mxu0 %v7725
        %8308 = vmatpush.bf16.msra.mxu0 %v7718
        %8309 = vmatmul.bf16.gmra.mxu0 %v7040
        %v8310 = vpop.f32.mrf.mxu0
        %v8311 = vadd.f32 %v8292, %v8310
        %v8312 = vpop.f32.mrf.mxu0
        %v8313 = vadd.f32 %v8294, %v8312
        %8314 = vmatmul.bf16.gmra.mxu0 %v7044
        %v8315 = vpop.f32.mrf.mxu0
        %v8316 = vadd.f32 %v8297, %v8315
        %v8317 = vpop.f32.mrf.mxu0
        %v8318 = vadd.f32 %v8299, %v8317
        %8319 = vdwg.mxu0
        %8320 = vmatpush.bf16.msra.mxu0 0
        %8321 = vmatpush.bf16.msra.mxu0 0
        %8322 = vmatpush.bf16.msra.mxu0 0
        %8323 = vmatpush.bf16.msra.mxu0 0
        %8324 = vmatpush.bf16.msra.mxu0 0
        %8325 = vmatpush.bf16.msra.mxu0 0
        %8326 = vmatpush.bf16.msra.mxu0 0
        %8327 = vmatpush.bf16.msra.mxu0 %v7774
        %8328 = vmatmul.bf16.gmra.mxu0 %v7954
        %v8329 = vpop.f32.mrf.mxu0
        %v8330 = vadd.f32 %v8311, %v8329
        %v8331 = vpop.f32.mrf.mxu0
        %v8332 = vadd.f32 %v8313, %v8331
        %8333 = vmatmul.bf16.gmra.mxu0 %v7957
        %v8334 = vpop.f32.mrf.mxu0
        %v8335 = vadd.f32 %v8316, %v8334
        %v8336 = vpop.f32.mrf.mxu0
        %v8337 = vadd.f32 %v8318, %v8336
        %8338 = vdwg.mxu0
        %8339 = vmatpush.bf16.msra.mxu0 %v7656
        %8340 = vmatpush.bf16.msra.mxu0 %v7649
        %8341 = vmatpush.bf16.msra.mxu0 %v7642
        %8342 = vmatpush.bf16.msra.mxu0 %v7635
        %8343 = vmatpush.bf16.msra.mxu0 %v7628
        %8344 = vmatpush.bf16.msra.mxu0 %v7621
        %8345 = vmatpush.bf16.msra.mxu0 %v7614
        %8346 = vmatpush.bf16.msra.mxu0 %v7607
        %8347 = vmatmul.bf16.gmra.mxu0 %v7038
        %v8348 = vpop.f32.mrf.mxu0
        %v8349 = vadd.f32 %v6997, %v8348
        %v8350 = vpop.f32.mrf.mxu0
        %v8351 = vadd.f32 %v7002, %v8350
        %8352 = vmatmul.bf16.gmra.mxu0 %v7042
        %v8353 = vpop.f32.mrf.mxu0
        %v8354 = vadd.f32 %v7007, %v8353
        %v8355 = vpop.f32.mrf.mxu0
        %v8356 = vadd.f32 %v7012, %v8355
        %8357 = vdwg.mxu0
        %8358 = vmatpush.bf16.msra.mxu0 %v7712
        %8359 = vmatpush.bf16.msra.mxu0 %v7705
        %8360 = vmatpush.bf16.msra.mxu0 %v7698
        %8361 = vmatpush.bf16.msra.mxu0 %v7691
        %8362 = vmatpush.bf16.msra.mxu0 %v7684
        %8363 = vmatpush.bf16.msra.mxu0 %v7677
        %8364 = vmatpush.bf16.msra.mxu0 %v7670
        %8365 = vmatpush.bf16.msra.mxu0 %v7663
        %8366 = vmatmul.bf16.gmra.mxu0 %v7039
        %v8367 = vpop.f32.mrf.mxu0
        %v8368 = vadd.f32 %v8349, %v8367
        %v8369 = vpop.f32.mrf.mxu0
        %v8370 = vadd.f32 %v8351, %v8369
        %8371 = vmatmul.bf16.gmra.mxu0 %v7043
        %v8372 = vpop.f32.mrf.mxu0
        %v8373 = vadd.f32 %v8354, %v8372
        %v8374 = vpop.f32.mrf.mxu0
        %v8375 = vadd.f32 %v8356, %v8374
        %8376 = vdwg.mxu0
        %8377 = vmatpush.bf16.msra.mxu0 %v7768
        %8378 = vmatpush.bf16.msra.mxu0 %v7761
        %8379 = vmatpush.bf16.msra.mxu0 %v7754
        %8380 = vmatpush.bf16.msra.mxu0 %v7747
        %8381 = vmatpush.bf16.msra.mxu0 %v7740
        %8382 = vmatpush.bf16.msra.mxu0 %v7733
        %8383 = vmatpush.bf16.msra.mxu0 %v7726
        %8384 = vmatpush.bf16.msra.mxu0 %v7719
        %8385 = vmatmul.bf16.gmra.mxu0 %v7040
        %v8386 = vpop.f32.mrf.mxu0
        %v8387 = vadd.f32 %v8368, %v8386
        %v8388 = vpop.f32.mrf.mxu0
        %v8389 = vadd.f32 %v8370, %v8388
        %8390 = vmatmul.bf16.gmra.mxu0 %v7044
        %v8391 = vpop.f32.mrf.mxu0
        %v8392 = vadd.f32 %v8373, %v8391
        %v8393 = vpop.f32.mrf.mxu0
        %v8394 = vadd.f32 %v8375, %v8393
        %8395 = vdwg.mxu0
        %8396 = vmatpush.bf16.msra.mxu0 0
        %8397 = vmatpush.bf16.msra.mxu0 0
        %8398 = vmatpush.bf16.msra.mxu0 0
        %8399 = vmatpush.bf16.msra.mxu0 0
        %8400 = vmatpush.bf16.msra.mxu0 0
        %8401 = vmatpush.bf16.msra.mxu0 0
        %8402 = vmatpush.bf16.msra.mxu0 0
        %8403 = vmatpush.bf16.msra.mxu0 %v7775
        %8404 = vmatmul.bf16.gmra.mxu0 %v7954
        %v8405 = vpop.f32.mrf.mxu0
        %v8406 = vadd.f32 %v8387, %v8405
        %v8407 = vpop.f32.mrf.mxu0
        %v8408 = vadd.f32 %v8389, %v8407
        %8409 = vmatmul.bf16.gmra.mxu0 %v7957
        %v8410 = vpop.f32.mrf.mxu0
        %v8411 = vadd.f32 %v8392, %v8410
        %v8412 = vpop.f32.mrf.mxu0
        %v8413 = vadd.f32 %v8394, %v8412
        %8414 = vdwg.mxu0
        %8415 = vmatpush.bf16.msra.mxu0 %v7657
        %8416 = vmatpush.bf16.msra.mxu0 %v7650
        %8417 = vmatpush.bf16.msra.mxu0 %v7643
        %8418 = vmatpush.bf16.msra.mxu0 %v7636
        %8419 = vmatpush.bf16.msra.mxu0 %v7629
        %8420 = vmatpush.bf16.msra.mxu0 %v7622
        %8421 = vmatpush.bf16.msra.mxu0 %v7615
        %8422 = vmatpush.bf16.msra.mxu0 %v7608
        %8423 = vmatmul.bf16.gmra.mxu0 %v7038
        %v8424 = vpop.f32.mrf.mxu0
        %v8425 = vadd.f32 %v6997, %v8424
        %v8426 = vpop.f32.mrf.mxu0
        %v8427 = vadd.f32 %v7002, %v8426
        %8428 = vmatmul.bf16.gmra.mxu0 %v7042
        %v8429 = vpop.f32.mrf.mxu0
        %v8430 = vadd.f32 %v7007, %v8429
        %v8431 = vpop.f32.mrf.mxu0
        %v8432 = vadd.f32 %v7012, %v8431
        %8433 = vdwg.mxu0
        %8434 = vmatpush.bf16.msra.mxu0 %v7713
        %8435 = vmatpush.bf16.msra.mxu0 %v7706
        %8436 = vmatpush.bf16.msra.mxu0 %v7699
        %8437 = vmatpush.bf16.msra.mxu0 %v7692
        %8438 = vmatpush.bf16.msra.mxu0 %v7685
        %8439 = vmatpush.bf16.msra.mxu0 %v7678
        %8440 = vmatpush.bf16.msra.mxu0 %v7671
        %8441 = vmatpush.bf16.msra.mxu0 %v7664
        %8442 = vmatmul.bf16.gmra.mxu0 %v7039
        %v8443 = vpop.f32.mrf.mxu0
        %v8444 = vadd.f32 %v8425, %v8443
        %v8445 = vpop.f32.mrf.mxu0
        %v8446 = vadd.f32 %v8427, %v8445
        %8447 = vmatmul.bf16.gmra.mxu0 %v7043
        %v8448 = vpop.f32.mrf.mxu0
        %v8449 = vadd.f32 %v8430, %v8448
        %v8450 = vpop.f32.mrf.mxu0
        %v8451 = vadd.f32 %v8432, %v8450
        %8452 = vdwg.mxu0
        %8453 = vmatpush.bf16.msra.mxu0 %v7769
        %8454 = vmatpush.bf16.msra.mxu0 %v7762
        %8455 = vmatpush.bf16.msra.mxu0 %v7755
        %8456 = vmatpush.bf16.msra.mxu0 %v7748
        %8457 = vmatpush.bf16.msra.mxu0 %v7741
        %8458 = vmatpush.bf16.msra.mxu0 %v7734
        %8459 = vmatpush.bf16.msra.mxu0 %v7727
        %8460 = vmatpush.bf16.msra.mxu0 %v7720
        %8461 = vmatmul.bf16.gmra.mxu0 %v7040
        %v8462 = vpop.f32.mrf.mxu0
        %v8463 = vadd.f32 %v8444, %v8462
        %v8464 = vpop.f32.mrf.mxu0
        %v8465 = vadd.f32 %v8446, %v8464
        %8466 = vmatmul.bf16.gmra.mxu0 %v7044
        %v8467 = vpop.f32.mrf.mxu0
        %v8468 = vadd.f32 %v8449, %v8467
        %v8469 = vpop.f32.mrf.mxu0
        %v8470 = vadd.f32 %v8451, %v8469
        %8471 = vdwg.mxu0
        %8472 = vmatpush.bf16.msra.mxu0 0
        %8473 = vmatpush.bf16.msra.mxu0 0
        %8474 = vmatpush.bf16.msra.mxu0 0
        %8475 = vmatpush.bf16.msra.mxu0 0
        %8476 = vmatpush.bf16.msra.mxu0 0
        %8477 = vmatpush.bf16.msra.mxu0 0
        %8478 = vmatpush.bf16.msra.mxu0 0
        %8479 = vmatpush.bf16.msra.mxu0 %v7776
        %8480 = vmatmul.bf16.gmra.mxu0 %v7954
        %v8481 = vpop.f32.mrf.mxu0
        %v8482 = vadd.f32 %v8463, %v8481
        %v8483 = vpop.f32.mrf.mxu0
        %v8484 = vadd.f32 %v8465, %v8483
        %8485 = vmatmul.bf16.gmra.mxu0 %v7957
        %v8486 = vpop.f32.mrf.mxu0
        %v8487 = vadd.f32 %v8468, %v8486
        %v8488 = vpop.f32.mrf.mxu0
        %v8489 = vadd.f32 %v8470, %v8488
        %8490 = vdwg.mxu0
        %v8491 = vmax.f32 %v8026, 0.0
        %v8492 = vmax.f32 %v8102, 0.0
        %v8493 = vmax.f32 %v8178, 0.0
        %v8494 = vmax.f32 %v8254, 0.0
        %v8495 = vmax.f32 %v8330, 0.0
        %v8496 = vmax.f32 %v8406, 0.0
        %v8497 = vmax.f32 %v8482, 0.0
        %v8498 = vmax.f32 %v8028, 0.0
        %v8499 = vmax.f32 %v8104, 0.0
        %v8500 = vmax.f32 %v8180, 0.0
        %v8501 = vmax.f32 %v8256, 0.0
        %v8502 = vmax.f32 %v8332, 0.0
        %v8503 = vmax.f32 %v8408, 0.0
        %v8504 = vmax.f32 %v8484, 0.0
        %v8505 = vmax.f32 %v8031, 0.0
        %v8506 = vmax.f32 %v8107, 0.0
        %v8507 = vmax.f32 %v8183, 0.0
        %v8508 = vmax.f32 %v8259, 0.0
        %v8509 = vmax.f32 %v8335, 0.0
        %v8510 = vmax.f32 %v8411, 0.0
        %v8511 = vmax.f32 %v8487, 0.0
        %v8512 = vmax.f32 %v8033, 0.0
        %v8513 = vmax.f32 %v8109, 0.0
        %v8514 = vmax.f32 %v8185, 0.0
        %v8515 = vmax.f32 %v8261, 0.0
        %v8516 = vmax.f32 %v8337, 0.0
        %v8517 = vmax.f32 %v8413, 0.0
        %v8518 = vmax.f32 %v8489, 0.0
        %8519 = vst [vmem:[#allocation5] sm:$0xff] %v8491
        %8520 = vst [vmem:[#allocation5 + $0x8] sm:$0xff] %v8492
        %8521 = vst [vmem:[#allocation5 + $0x10] sm:$0xff] %v8493
        %8522 = vst [vmem:[#allocation5 + $0x18] sm:$0xff] %v8494
        %8523 = vst [vmem:[#allocation5 + $0x20] sm:$0xff] %v8495
        %8524 = vst [vmem:[#allocation5 + $0x28] sm:$0xff] %v8496
        %8525 = vst [vmem:[#allocation5 + $0x30] sm:$0xff] %v8497
        %8526 = vst [vmem:[#allocation5 + $0x40] sm:$0xff] %v8498
        %8527 = vst [vmem:[#allocation5 + $0x48] sm:$0xff] %v8499
        %8528 = vst [vmem:[#allocation5 + $0x50] sm:$0xff] %v8500
        %8529 = vst [vmem:[#allocation5 + $0x58] sm:$0xff] %v8501
        %8530 = vst [vmem:[#allocation5 + $0x60] sm:$0xff] %v8502
        %8531 = vst [vmem:[#allocation5 + $0x68] sm:$0xff] %v8503
        %8532 = vst [vmem:[#allocation5 + $0x70] sm:$0xff] %v8504
        %8533 = vst [vmem:[#allocation5 + $0x80] sm:$0xff] %v8505
        %8534 = vst [vmem:[#allocation5 + $0x88] sm:$0xff] %v8506
        %8535 = vst [vmem:[#allocation5 + $0x90] sm:$0xff] %v8507
        %8536 = vst [vmem:[#allocation5 + $0x98] sm:$0xff] %v8508
        %8537 = vst [vmem:[#allocation5 + $0xa0] sm:$0xff] %v8509
        %8538 = vst [vmem:[#allocation5 + $0xa8] sm:$0xff] %v8510
        %8539 = vst [vmem:[#allocation5 + $0xb0] sm:$0xff] %v8511
        %8540 = vst [vmem:[#allocation5 + $0xc0] sm:$0xff] %v8512
        %8541 = vst [vmem:[#allocation5 + $0xc8] sm:$0xff] %v8513
        %8542 = vst [vmem:[#allocation5 + $0xd0] sm:$0xff] %v8514
        %8543 = vst [vmem:[#allocation5 + $0xd8] sm:$0xff] %v8515
        %8544 = vst [vmem:[#allocation5 + $0xe0] sm:$0xff] %v8516
        %8545 = vst [vmem:[#allocation5 + $0xe8] sm:$0xff] %v8517
        %8546 = vst [vmem:[#allocation5 + $0xf0] sm:$0xff] %v8518
        %8547 = vst [vmem:[#allocation5 + $0x38] sm:$0xff] 0.0
        %8548 = vst [vmem:[#allocation5 + $0x78] sm:$0xff] 0.0
        %8549 = vst [vmem:[#allocation5 + $0xb8] sm:$0xff] 0.0
        %8550 = vst [vmem:[#allocation5 + $0xf8] sm:$0xff] 0.0
        %v8551 = vld [vmem:[#allocation5] sm:$0xff]
        %v8552 = vld [vmem:[#allocation5 + $0x8] sm:$0xff]
        %v8553 = vld [vmem:[#allocation5 + $0x10] sm:$0xff]
        %v8554 = vld [vmem:[#allocation5 + $0x18] sm:$0xff]
        %v8555 = vld [vmem:[#allocation5 + $0x20] sm:$0xff]
        %v8556 = vld [vmem:[#allocation5 + $0x28] sm:$0xff]
        %v8557 = vld [vmem:[#allocation5 + $0x30] sm:$0xff]
        %v8558 = vld [vmem:[#allocation5 + $0x40] sm:$0xff]
        %v8559 = vld [vmem:[#allocation5 + $0x48] sm:$0xff]
        %v8560 = vld [vmem:[#allocation5 + $0x50] sm:$0xff]
        %v8561 = vld [vmem:[#allocation5 + $0x58] sm:$0xff]
        %v8562 = vld [vmem:[#allocation5 + $0x60] sm:$0xff]
        %v8563 = vld [vmem:[#allocation5 + $0x68] sm:$0xff]
        %v8564 = vld [vmem:[#allocation5 + $0x70] sm:$0xff]
        %v8565 = vld [vmem:[#allocation5 + $0x80] sm:$0xff]
        %v8566 = vld [vmem:[#allocation5 + $0x88] sm:$0xff]
        %v8567 = vld [vmem:[#allocation5 + $0x90] sm:$0xff]
        %v8568 = vld [vmem:[#allocation5 + $0x98] sm:$0xff]
        %v8569 = vld [vmem:[#allocation5 + $0xa0] sm:$0xff]
        %v8570 = vld [vmem:[#allocation5 + $0xa8] sm:$0xff]
        %v8571 = vld [vmem:[#allocation5 + $0xb0] sm:$0xff]
        %v8572 = vld [vmem:[#allocation5 + $0xc0] sm:$0xff]
        %v8573 = vld [vmem:[#allocation5 + $0xc8] sm:$0xff]
        %v8574 = vld [vmem:[#allocation5 + $0xd0] sm:$0xff]
        %v8575 = vld [vmem:[#allocation5 + $0xd8] sm:$0xff]
        %v8576 = vld [vmem:[#allocation5 + $0xe0] sm:$0xff]
        %v8577 = vld [vmem:[#allocation5 + $0xe8] sm:$0xff]
        %v8578 = vld [vmem:[#allocation5 + $0xf0] sm:$0xff]
        %v8579 = vld [vmem:[#allocation5] sm:$0xff]
        %v8580 = vld [vmem:[#allocation5 + $0x8] sm:$0xff]
        %v8581 = vld [vmem:[#allocation5 + $0x10] sm:$0xff]
        %v8582 = vld [vmem:[#allocation5 + $0x18] sm:$0xff]
        %v8583 = vld [vmem:[#allocation5 + $0x20] sm:$0xff]
        %v8584 = vld [vmem:[#allocation5 + $0x28] sm:$0xff]
        %v8585 = vld [vmem:[#allocation5 + $0x30] sm:$0xff]
        %v8586 = vld [vmem:[#allocation5 + $0x38] sm:$0xff]
        %v8587 = vld [vmem:[#allocation5 + $0x40] sm:$0xff]
        %v8588 = vld [vmem:[#allocation5 + $0x48] sm:$0xff]
        %v8589 = vld [vmem:[#allocation5 + $0x50] sm:$0xff]
        %v8590 = vld [vmem:[#allocation5 + $0x58] sm:$0xff]
        %v8591 = vld [vmem:[#allocation5 + $0x60] sm:$0xff]
        %v8592 = vld [vmem:[#allocation5 + $0x68] sm:$0xff]
        %v8593 = vld [vmem:[#allocation5 + $0x70] sm:$0xff]
        %v8594 = vld [vmem:[#allocation5 + $0x78] sm:$0xff]
        %v8595 = vld [vmem:[#allocation5 + $0x80] sm:$0xff]
        %v8596 = vld [vmem:[#allocation5 + $0x88] sm:$0xff]
        %v8597 = vld [vmem:[#allocation5 + $0x90] sm:$0xff]
        %v8598 = vld [vmem:[#allocation5 + $0x98] sm:$0xff]
        %v8599 = vld [vmem:[#allocation5 + $0xa0] sm:$0xff]
        %v8600 = vld [vmem:[#allocation5 + $0xa8] sm:$0xff]
        %v8601 = vld [vmem:[#allocation5 + $0xb0] sm:$0xff]
        %v8602 = vld [vmem:[#allocation5 + $0xb8] sm:$0xff]
        %v8603 = vld [vmem:[#allocation5 + $0xc0] sm:$0xff]
        %v8604 = vld [vmem:[#allocation5 + $0xc8] sm:$0xff]
        %v8605 = vld [vmem:[#allocation5 + $0xd0] sm:$0xff]
        %v8606 = vld [vmem:[#allocation5 + $0xd8] sm:$0xff]
        %v8607 = vld [vmem:[#allocation5 + $0xe0] sm:$0xff]
        %v8608 = vld [vmem:[#allocation5 + $0xe8] sm:$0xff]
        %v8609 = vld [vmem:[#allocation5 + $0xf0] sm:$0xff]
        %v8610 = vld [vmem:[#allocation5 + $0xf8] sm:$0xff]
        %8643 = vrot.lane.b32.xlu0 %v8579, 126
        %v8644 = vpop.permute.xlu0 %8643
        %8645 = vrot.lane.b32.xlu0 %v8580, 126
        %v8646 = vpop.permute.xlu0 %8645
        %8647 = vrot.lane.b32.xlu0 %v8581, 126
        %v8648 = vpop.permute.xlu0 %8647
        %8649 = vrot.lane.b32.xlu0 %v8582, 126
        %v8650 = vpop.permute.xlu0 %8649
        %8651 = vrot.lane.b32.xlu0 %v8583, 126
        %v8652 = vpop.permute.xlu0 %8651
        %8653 = vrot.lane.b32.xlu0 %v8584, 126
        %v8654 = vpop.permute.xlu0 %8653
        %8655 = vrot.lane.b32.xlu0 %v8585, 126
        %v8656 = vpop.permute.xlu0 %8655
        %8657 = vrot.lane.b32.xlu0 %v8586, 126
        %v8658 = vpop.permute.xlu0 %8657
        %8659 = vrot.lane.b32.xlu0 %v8587, 126
        %v8660 = vpop.permute.xlu0 %8659
        %8661 = vrot.lane.b32.xlu0 %v8588, 126
        %v8662 = vpop.permute.xlu0 %8661
        %8663 = vrot.lane.b32.xlu0 %v8589, 126
        %v8664 = vpop.permute.xlu0 %8663
        %8665 = vrot.lane.b32.xlu0 %v8590, 126
        %v8666 = vpop.permute.xlu0 %8665
        %8667 = vrot.lane.b32.xlu0 %v8591, 126
        %v8668 = vpop.permute.xlu0 %8667
        %8669 = vrot.lane.b32.xlu0 %v8592, 126
        %v8670 = vpop.permute.xlu0 %8669
        %8671 = vrot.lane.b32.xlu0 %v8593, 126
        %v8672 = vpop.permute.xlu0 %8671
        %8673 = vrot.lane.b32.xlu0 %v8594, 126
        %v8674 = vpop.permute.xlu0 %8673
        %8675 = vrot.lane.b32.xlu0 %v8595, 126
        %v8676 = vpop.permute.xlu0 %8675
        %8677 = vrot.lane.b32.xlu0 %v8596, 126
        %v8678 = vpop.permute.xlu0 %8677
        %8679 = vrot.lane.b32.xlu0 %v8597, 126
        %v8680 = vpop.permute.xlu0 %8679
        %8681 = vrot.lane.b32.xlu0 %v8598, 126
        %v8682 = vpop.permute.xlu0 %8681
        %8683 = vrot.lane.b32.xlu0 %v8599, 126
        %v8684 = vpop.permute.xlu0 %8683
        %8685 = vrot.lane.b32.xlu0 %v8600, 126
        %v8686 = vpop.permute.xlu0 %8685
        %8687 = vrot.lane.b32.xlu0 %v8601, 126
        %v8688 = vpop.permute.xlu0 %8687
        %8689 = vrot.lane.b32.xlu0 %v8602, 126
        %v8690 = vpop.permute.xlu0 %8689
        %8691 = vrot.lane.b32.xlu0 %v8603, 126
        %v8692 = vpop.permute.xlu0 %8691
        %8693 = vrot.lane.b32.xlu0 %v8604, 126
        %v8694 = vpop.permute.xlu0 %8693
        %8695 = vrot.lane.b32.xlu0 %v8605, 126
        %v8696 = vpop.permute.xlu0 %8695
        %8697 = vrot.lane.b32.xlu0 %v8606, 126
        %v8698 = vpop.permute.xlu0 %8697
        %8699 = vrot.lane.b32.xlu0 %v8607, 126
        %v8700 = vpop.permute.xlu0 %8699
        %8701 = vrot.lane.b32.xlu0 %v8608, 126
        %v8702 = vpop.permute.xlu0 %8701
        %8703 = vrot.lane.b32.xlu0 %v8609, 126
        %v8704 = vpop.permute.xlu0 %8703
        %8705 = vrot.lane.b32.xlu0 %v8610, 126
        %v8706 = vpop.permute.xlu0 %8705
        %v8707 = vsel %vm556, %v8644, %v8646
        %v8708 = vsel %vm556, %v8646, %v8648
        %v8709 = vsel %vm556, %v8648, %v8650
        %v8710 = vsel %vm556, %v8650, %v8652
        %v8711 = vsel %vm556, %v8652, %v8654
        %v8712 = vsel %vm556, %v8654, %v8656
        %v8713 = vsel %vm556, %v8656, %v8658
        %v8714 = vsel %vm556, %v8660, %v8662
        %v8715 = vsel %vm556, %v8662, %v8664
        %v8716 = vsel %vm556, %v8664, %v8666
        %v8717 = vsel %vm556, %v8666, %v8668
        %v8718 = vsel %vm556, %v8668, %v8670
        %v8719 = vsel %vm556, %v8670, %v8672
        %v8720 = vsel %vm556, %v8672, %v8674
        %v8721 = vsel %vm556, %v8676, %v8678
        %v8722 = vsel %vm556, %v8678, %v8680
        %v8723 = vsel %vm556, %v8680, %v8682
        %v8724 = vsel %vm556, %v8682, %v8684
        %v8725 = vsel %vm556, %v8684, %v8686
        %v8726 = vsel %vm556, %v8686, %v8688
        %v8727 = vsel %vm556, %v8688, %v8690
        %v8728 = vsel %vm556, %v8692, %v8694
        %v8729 = vsel %vm556, %v8694, %v8696
        %v8730 = vsel %vm556, %v8696, %v8698
        %v8731 = vsel %vm556, %v8698, %v8700
        %v8732 = vsel %vm556, %v8700, %v8702
        %v8733 = vsel %vm556, %v8702, %v8704
        %v8734 = vsel %vm556, %v8704, %v8706
        %v8763 = vmax.f32 %v8551, %v8707
        %v8764 = vmax.f32 %v8552, %v8708
        %v8765 = vmax.f32 %v8553, %v8709
        %v8766 = vmax.f32 %v8554, %v8710
        %v8767 = vmax.f32 %v8555, %v8711
        %v8768 = vmax.f32 %v8556, %v8712
        %v8769 = vmax.f32 %v8557, %v8713
        %v8770 = vmax.f32 %v8558, %v8714
        %v8771 = vmax.f32 %v8559, %v8715
        %v8772 = vmax.f32 %v8560, %v8716
        %v8773 = vmax.f32 %v8561, %v8717
        %v8774 = vmax.f32 %v8562, %v8718
        %v8775 = vmax.f32 %v8563, %v8719
        %v8776 = vmax.f32 %v8564, %v8720
        %v8777 = vmax.f32 %v8565, %v8721
        %v8778 = vmax.f32 %v8566, %v8722
        %v8779 = vmax.f32 %v8567, %v8723
        %v8780 = vmax.f32 %v8568, %v8724
        %v8781 = vmax.f32 %v8569, %v8725
        %v8782 = vmax.f32 %v8570, %v8726
        %v8783 = vmax.f32 %v8571, %v8727
        %v8784 = vmax.f32 %v8572, %v8728
        %v8785 = vmax.f32 %v8573, %v8729
        %v8786 = vmax.f32 %v8574, %v8730
        %v8787 = vmax.f32 %v8575, %v8731
        %v8788 = vmax.f32 %v8576, %v8732
        %v8789 = vmax.f32 %v8577, %v8733
        %v8790 = vmax.f32 %v8578, %v8734
        %v8795 = vmax.f32 %v8579, %v8707
        %v8796 = vmax.f32 %v8580, %v8708
        %v8797 = vmax.f32 %v8581, %v8709
        %v8798 = vmax.f32 %v8582, %v8710
        %v8799 = vmax.f32 %v8583, %v8711
        %v8800 = vmax.f32 %v8584, %v8712
        %v8801 = vmax.f32 %v8585, %v8713
        %v8802 = vmax.f32 %v8586, %v8658
        %v8803 = vmax.f32 %v8587, %v8714
        %v8804 = vmax.f32 %v8588, %v8715
        %v8805 = vmax.f32 %v8589, %v8716
        %v8806 = vmax.f32 %v8590, %v8717
        %v8807 = vmax.f32 %v8591, %v8718
        %v8808 = vmax.f32 %v8592, %v8719
        %v8809 = vmax.f32 %v8593, %v8720
        %v8810 = vmax.f32 %v8594, %v8674
        %v8811 = vmax.f32 %v8595, %v8721
        %v8812 = vmax.f32 %v8596, %v8722
        %v8813 = vmax.f32 %v8597, %v8723
        %v8814 = vmax.f32 %v8598, %v8724
        %v8815 = vmax.f32 %v8599, %v8725
        %v8816 = vmax.f32 %v8600, %v8726
        %v8817 = vmax.f32 %v8601, %v8727
        %v8818 = vmax.f32 %v8602, %v8690
        %v8819 = vmax.f32 %v8603, %v8728
        %v8820 = vmax.f32 %v8604, %v8729
        %v8821 = vmax.f32 %v8605, %v8730
        %v8822 = vmax.f32 %v8606, %v8731
        %v8823 = vmax.f32 %v8607, %v8732
        %v8824 = vmax.f32 %v8608, %v8733
        %v8825 = vmax.f32 %v8609, %v8734
        %v8826 = vmax.f32 %v8610, %v8706
        %8859 = vrot.lane.b32.xlu0 %v8795, 64
        %v8860 = vpop.permute.xlu0 %8859
        %8861 = vrot.lane.b32.xlu0 %v8796, 64
        %v8862 = vpop.permute.xlu0 %8861
        %8863 = vrot.lane.b32.xlu0 %v8797, 64
        %v8864 = vpop.permute.xlu0 %8863
        %8865 = vrot.lane.b32.xlu0 %v8798, 64
        %v8866 = vpop.permute.xlu0 %8865
        %8867 = vrot.lane.b32.xlu0 %v8799, 64
        %v8868 = vpop.permute.xlu0 %8867
        %8869 = vrot.lane.b32.xlu0 %v8800, 64
        %v8870 = vpop.permute.xlu0 %8869
        %8871 = vrot.lane.b32.xlu0 %v8801, 64
        %v8872 = vpop.permute.xlu0 %8871
        %8873 = vrot.lane.b32.xlu0 %v8802, 64
        %v8874 = vpop.permute.xlu0 %8873
        %8875 = vrot.lane.b32.xlu0 %v8803, 64
        %v8876 = vpop.permute.xlu0 %8875
        %8877 = vrot.lane.b32.xlu0 %v8804, 64
        %v8878 = vpop.permute.xlu0 %8877
        %8879 = vrot.lane.b32.xlu0 %v8805, 64
        %v8880 = vpop.permute.xlu0 %8879
        %8881 = vrot.lane.b32.xlu0 %v8806, 64
        %v8882 = vpop.permute.xlu0 %8881
        %8883 = vrot.lane.b32.xlu0 %v8807, 64
        %v8884 = vpop.permute.xlu0 %8883
        %8885 = vrot.lane.b32.xlu0 %v8808, 64
        %v8886 = vpop.permute.xlu0 %8885
        %8887 = vrot.lane.b32.xlu0 %v8809, 64
        %v8888 = vpop.permute.xlu0 %8887
        %8889 = vrot.lane.b32.xlu0 %v8810, 64
        %v8890 = vpop.permute.xlu0 %8889
        %8891 = vrot.lane.b32.xlu0 %v8811, 64
        %v8892 = vpop.permute.xlu0 %8891
        %8893 = vrot.lane.b32.xlu0 %v8812, 64
        %v8894 = vpop.permute.xlu0 %8893
        %8895 = vrot.lane.b32.xlu0 %v8813, 64
        %v8896 = vpop.permute.xlu0 %8895
        %8897 = vrot.lane.b32.xlu0 %v8814, 64
        %v8898 = vpop.permute.xlu0 %8897
        %8899 = vrot.lane.b32.xlu0 %v8815, 64
        %v8900 = vpop.permute.xlu0 %8899
        %8901 = vrot.lane.b32.xlu0 %v8816, 64
        %v8902 = vpop.permute.xlu0 %8901
        %8903 = vrot.lane.b32.xlu0 %v8817, 64
        %v8904 = vpop.permute.xlu0 %8903
        %8905 = vrot.lane.b32.xlu0 %v8818, 64
        %v8906 = vpop.permute.xlu0 %8905
        %8907 = vrot.lane.b32.xlu0 %v8819, 64
        %v8908 = vpop.permute.xlu0 %8907
        %8909 = vrot.lane.b32.xlu0 %v8820, 64
        %v8910 = vpop.permute.xlu0 %8909
        %8911 = vrot.lane.b32.xlu0 %v8821, 64
        %v8912 = vpop.permute.xlu0 %8911
        %8913 = vrot.lane.b32.xlu0 %v8822, 64
        %v8914 = vpop.permute.xlu0 %8913
        %8915 = vrot.lane.b32.xlu0 %v8823, 64
        %v8916 = vpop.permute.xlu0 %8915
        %8917 = vrot.lane.b32.xlu0 %v8824, 64
        %v8918 = vpop.permute.xlu0 %8917
        %8919 = vrot.lane.b32.xlu0 %v8825, 64
        %v8920 = vpop.permute.xlu0 %8919
        %8921 = vrot.lane.b32.xlu0 %v8826, 64
        %v8922 = vpop.permute.xlu0 %8921
        %v8923 = vsel %vm1292, %v8860, %v8862
        %v8924 = vsel %vm1292, %v8862, %v8864
        %v8925 = vsel %vm1292, %v8864, %v8866
        %v8926 = vsel %vm1292, %v8866, %v8868
        %v8927 = vsel %vm1292, %v8868, %v8870
        %v8928 = vsel %vm1292, %v8870, %v8872
        %v8929 = vsel %vm1292, %v8872, %v8874
        %v8930 = vsel %vm1292, %v8876, %v8878
        %v8931 = vsel %vm1292, %v8878, %v8880
        %v8932 = vsel %vm1292, %v8880, %v8882
        %v8933 = vsel %vm1292, %v8882, %v8884
        %v8934 = vsel %vm1292, %v8884, %v8886
        %v8935 = vsel %vm1292, %v8886, %v8888
        %v8936 = vsel %vm1292, %v8888, %v8890
        %v8937 = vsel %vm1292, %v8892, %v8894
        %v8938 = vsel %vm1292, %v8894, %v8896
        %v8939 = vsel %vm1292, %v8896, %v8898
        %v8940 = vsel %vm1292, %v8898, %v8900
        %v8941 = vsel %vm1292, %v8900, %v8902
        %v8942 = vsel %vm1292, %v8902, %v8904
        %v8943 = vsel %vm1292, %v8904, %v8906
        %v8944 = vsel %vm1292, %v8908, %v8910
        %v8945 = vsel %vm1292, %v8910, %v8912
        %v8946 = vsel %vm1292, %v8912, %v8914
        %v8947 = vsel %vm1292, %v8914, %v8916
        %v8948 = vsel %vm1292, %v8916, %v8918
        %v8949 = vsel %vm1292, %v8918, %v8920
        %v8950 = vsel %vm1292, %v8920, %v8922
        %v8979 = vmax.f32 %v8763, %v8923
        %v8980 = vmax.f32 %v8764, %v8924
        %v8981 = vmax.f32 %v8765, %v8925
        %v8982 = vmax.f32 %v8766, %v8926
        %v8983 = vmax.f32 %v8767, %v8927
        %v8984 = vmax.f32 %v8768, %v8928
        %v8985 = vmax.f32 %v8769, %v8929
        %v8986 = vmax.f32 %v8770, %v8930
        %v8987 = vmax.f32 %v8771, %v8931
        %v8988 = vmax.f32 %v8772, %v8932
        %v8989 = vmax.f32 %v8773, %v8933
        %v8990 = vmax.f32 %v8774, %v8934
        %v8991 = vmax.f32 %v8775, %v8935
        %v8992 = vmax.f32 %v8776, %v8936
        %v8993 = vmax.f32 %v8777, %v8937
        %v8994 = vmax.f32 %v8778, %v8938
        %v8995 = vmax.f32 %v8779, %v8939
        %v8996 = vmax.f32 %v8780, %v8940
        %v8997 = vmax.f32 %v8781, %v8941
        %v8998 = vmax.f32 %v8782, %v8942
        %v8999 = vmax.f32 %v8783, %v8943
        %v9000 = vmax.f32 %v8784, %v8944
        %v9001 = vmax.f32 %v8785, %v8945
        %v9002 = vmax.f32 %v8786, %v8946
        %v9003 = vmax.f32 %v8787, %v8947
        %v9004 = vmax.f32 %v8788, %v8948
        %v9005 = vmax.f32 %v8789, %v8949
        %v9006 = vmax.f32 %v8790, %v8950
        %v9007 = vpack.c.bf16 %v8986, %v8979
        %v9008 = vpack.c.bf16 %v8987, %v8980
        %v9009 = vpack.c.bf16 %v8988, %v8981
        %v9010 = vpack.c.bf16 %v8989, %v8982
        %v9011 = vpack.c.bf16 %v8990, %v8983
        %v9012 = vpack.c.bf16 %v8991, %v8984
        %v9013 = vpack.c.bf16 %v8992, %v8985
        %v9014 = vpack.c.bf16 %v9000, %v8993
        %v9015 = vpack.c.bf16 %v9001, %v8994
        %v9016 = vpack.c.bf16 %v9002, %v8995
        %v9017 = vpack.c.bf16 %v9003, %v8996
        %v9018 = vpack.c.bf16 %v9004, %v8997
        %v9019 = vpack.c.bf16 %v9005, %v8998
        %v9020 = vpack.c.bf16 %v9006, %v8999
        %v9021 = vld [vmem:[%s6] sm:$0xff]
        %v9022 = vld [vmem:[%s6 + $0x8] sm:$0xf]
        %v9023 = vld [vmem:[%s6 + $0xc] sm:$0xff]
        %v9024 = vld [vmem:[%s6 + $0x14] sm:$0xf]
        %v9025 = vld [vmem:[%s6 + $0x18] sm:$0xff]
        %v9026 = vld [vmem:[%s6 + $0x20] sm:$0xf]
        %v9027 = vld [vmem:[%s6 + $0x24] sm:$0xff]
        %v9028 = vld [vmem:[%s6 + $0x2c] sm:$0xf]
        %v9029 = vld [vmem:[%s6 + $0x30] sm:$0xff]
        %v9030 = vld [vmem:[%s6 + $0x38] sm:$0xf]
        %v9031 = vld [vmem:[%s6 + $0x3c] sm:$0xff]
        %v9032 = vld [vmem:[%s6 + $0x44] sm:$0xf]
        %v9033 = vld [vmem:[%s6 + $0x48] sm:$0xff]
        %v9034 = vld [vmem:[%s6 + $0x50] sm:$0xf]
        %v9035 = vld [vmem:[%s6 + $0x54] sm:$0xff]
        %v9036 = vld [vmem:[%s6 + $0x5c] sm:$0xf]
        %v9037 = vld [vmem:[%s6 + $0x60] sm:$0xff]
        %v9038 = vld [vmem:[%s6 + $0x68] sm:$0xf]
        %v9039 = vld [vmem:[%s6 + $0x6c] sm:$0xff]
        %v9040 = vld [vmem:[%s6 + $0x74] sm:$0xf]
        %v9041 = vld [vmem:[%s6 + $0x78] sm:$0xff]
        %v9042 = vld [vmem:[%s6 + $0x80] sm:$0xf]
        %v9043 = vld [vmem:[%s6 + $0x84] sm:$0xff]
        %v9044 = vld [vmem:[%s6 + $0x8c] sm:$0xf]
        %v9045 = vld [vmem:[%s6 + $0x90] sm:$0xff]
        %v9046 = vld [vmem:[%s6 + $0x98] sm:$0xf]
        %v9047 = vld [vmem:[%s6 + $0x9c] sm:$0xff]
        %v9048 = vld [vmem:[%s6 + $0xa4] sm:$0xf]
        %v9049 = vld [vmem:[%s6 + $0xa8] sm:$0xff]
        %v9050 = vld [vmem:[%s6 + $0xb0] sm:$0xf]
        %v9051 = vld [vmem:[%s6 + $0xb4] sm:$0xff]
        %v9052 = vld [vmem:[%s6 + $0xbc] sm:$0xf]
        %v9053 = vld [vmem:[%s6 + $0xc0] sm:$0xff]
        %v9054 = vld [vmem:[%s6 + $0xc8] sm:$0xf]
        %v9055 = vld [vmem:[%s6 + $0xcc] sm:$0xff]
        %v9056 = vld [vmem:[%s6 + $0xd4] sm:$0xf]
        %v9057 = vld [vmem:[%s6 + $0xd8] sm:$0xff]
        %v9058 = vld [vmem:[%s6 + $0xe0] sm:$0xf]
        %v9059 = vld [vmem:[%s6 + $0xe4] sm:$0xff]
        %v9060 = vld [vmem:[%s6 + $0xec] sm:$0xf]
        %v9061 = vld [vmem:[%s6 + $0xf0] sm:$0xff]
        %v9062 = vld [vmem:[%s6 + $0xf8] sm:$0xf]
        %v9063 = vld [vmem:[%s6 + $0xfc] sm:$0xff]
        %v9064 = vld [vmem:[%s6 + $0x104] sm:$0xf]
        %v9065 = vld [vmem:[%s6 + $0x108] sm:$0xff]
        %v9066 = vld [vmem:[%s6 + $0x110] sm:$0xf]
        %v9067 = vld [vmem:[%s6 + $0x114] sm:$0xff]
        %v9068 = vld [vmem:[%s6 + $0x11c] sm:$0xf]
        %v9069 = vld [vmem:[%s6 + $0x120] sm:$0xff]
        %v9070 = vld [vmem:[%s6 + $0x128] sm:$0xf]
        %v9071 = vld [vmem:[%s6 + $0x12c] sm:$0xff]
        %v9072 = vld [vmem:[%s6 + $0x134] sm:$0xf]
        %v9073 = vld [vmem:[%s6 + $0x138] sm:$0xff]
        %v9074 = vld [vmem:[%s6 + $0x140] sm:$0xf]
        %v9075 = vld [vmem:[%s6 + $0x144] sm:$0xff]
        %v9076 = vld [vmem:[%s6 + $0x14c] sm:$0xf]
        %v9077 = vld [vmem:[%s6 + $0x150] sm:$0xff]
        %v9078 = vld [vmem:[%s6 + $0x158] sm:$0xf]
        %v9079 = vld [vmem:[%s6 + $0x15c] sm:$0xff]
        %v9080 = vld [vmem:[%s6 + $0x164] sm:$0xf]
        %v9081 = vld [vmem:[%s6 + $0x168] sm:$0xff]
        %v9082 = vld [vmem:[%s6 + $0x170] sm:$0xf]
        %v9083 = vld [vmem:[%s6 + $0x174] sm:$0xff]
        %v9084 = vld [vmem:[%s6 + $0x17c] sm:$0xf]
        %v9085 = vld [vmem:[%s6 + $0x180] sm:$0xff]
        %v9086 = vld [vmem:[%s6 + $0x188] sm:$0xf]
        %v9087 = vld [vmem:[%s6 + $0x18c] sm:$0xff]
        %v9088 = vld [vmem:[%s6 + $0x194] sm:$0xf]
        %v9089 = vld [vmem:[%s6 + $0x198] sm:$0xff]
        %v9090 = vld [vmem:[%s6 + $0x1a0] sm:$0xf]
        %v9091 = vld [vmem:[%s6 + $0x1a4] sm:$0xff]
        %v9092 = vld [vmem:[%s6 + $0x1ac] sm:$0xf]
        %v9093 = vld [vmem:[%s6 + $0x1b0] sm:$0xff]
        %v9094 = vld [vmem:[%s6 + $0x1b8] sm:$0xf]
        %v9095 = vld [vmem:[%s6 + $0x1bc] sm:$0xff]
        %v9096 = vld [vmem:[%s6 + $0x1c4] sm:$0xf]
        %v9097 = vld [vmem:[%s6 + $0x1c8] sm:$0xff]
        %v9098 = vld [vmem:[%s6 + $0x1d0] sm:$0xf]
        %v9099 = vld [vmem:[%s6 + $0x1d4] sm:$0xff]
        %v9100 = vld [vmem:[%s6 + $0x1dc] sm:$0xf]
        %v9101 = vld [vmem:[%s6 + $0x1e0] sm:$0xff]
        %v9102 = vld [vmem:[%s6 + $0x1e8] sm:$0xf]
        %v9103 = vld [vmem:[%s6 + $0x1ec] sm:$0xff]
        %v9104 = vld [vmem:[%s6 + $0x1f4] sm:$0xf]
        %v9105 = vld [vmem:[%s6 + $0x1f8] sm:$0xff]
        %v9106 = vld [vmem:[%s6 + $0x200] sm:$0xf]
        %v9107 = vld [vmem:[%s6 + $0x204] sm:$0xff]
        %v9108 = vld [vmem:[%s6 + $0x20c] sm:$0xf]
        %v9109 = vld [vmem:[%s6 + $0x210] sm:$0xff]
        %v9110 = vld [vmem:[%s6 + $0x218] sm:$0xf]
        %v9111 = vld [vmem:[%s6 + $0x21c] sm:$0xff]
        %v9112 = vld [vmem:[%s6 + $0x224] sm:$0xf]
        %v9113 = vld [vmem:[%s6 + $0x228] sm:$0xff]
        %v9114 = vld [vmem:[%s6 + $0x230] sm:$0xf]
        %v9115 = vld [vmem:[%s6 + $0x234] sm:$0xff]
        %v9116 = vld [vmem:[%s6 + $0x23c] sm:$0xf]
        %v9117 = vld [vmem:[%s6 + $0x240] sm:$0xff]
        %v9118 = vld [vmem:[%s6 + $0x248] sm:$0xf]
        %v9119 = vld [vmem:[%s6 + $0x24c] sm:$0xff]
        %v9120 = vld [vmem:[%s6 + $0x254] sm:$0xf]
        %v9121 = vld [vmem:[%s6 + $0x258] sm:$0xff]
        %v9122 = vld [vmem:[%s6 + $0x260] sm:$0xf]
        %v9123 = vld [vmem:[%s6 + $0x264] sm:$0xff]
        %v9124 = vld [vmem:[%s6 + $0x26c] sm:$0xf]
        %v9125 = vld [vmem:[%s6 + $0x270] sm:$0xff]
        %v9126 = vld [vmem:[%s6 + $0x278] sm:$0xf]
        %v9127 = vld [vmem:[%s6 + $0x27c] sm:$0xff]
        %v9128 = vld [vmem:[%s6 + $0x284] sm:$0xf]
        %v9129 = vld [vmem:[%s6 + $0x288] sm:$0xff]
        %v9130 = vld [vmem:[%s6 + $0x290] sm:$0xf]
        %v9131 = vld [vmem:[%s6 + $0x294] sm:$0xff]
        %v9132 = vld [vmem:[%s6 + $0x29c] sm:$0xf]
        %v9133 = vld [vmem:[%s6 + $0x2a0] sm:$0xff]
        %v9134 = vld [vmem:[%s6 + $0x2a8] sm:$0xf]
        %v9135 = vld [vmem:[%s6 + $0x2ac] sm:$0xff]
        %v9136 = vld [vmem:[%s6 + $0x2b4] sm:$0xf]
        %v9137 = vld [vmem:[%s6 + $0x2b8] sm:$0xff]
        %v9138 = vld [vmem:[%s6 + $0x2c0] sm:$0xf]
        %v9139 = vld [vmem:[%s6 + $0x2c4] sm:$0xff]
        %v9140 = vld [vmem:[%s6 + $0x2cc] sm:$0xf]
        %v9141 = vld [vmem:[%s6 + $0x2d0] sm:$0xff]
        %v9142 = vld [vmem:[%s6 + $0x2d8] sm:$0xf]
        %v9143 = vld [vmem:[%s6 + $0x2dc] sm:$0xff]
        %v9144 = vld [vmem:[%s6 + $0x2e4] sm:$0xf]
        %v9145 = vld [vmem:[%s6 + $0x2e8] sm:$0xff]
        %v9146 = vld [vmem:[%s6 + $0x2f0] sm:$0xf]
        %v9147 = vld [vmem:[%s6 + $0x2f4] sm:$0xff]
        %v9148 = vld [vmem:[%s6 + $0x2fc] sm:$0xf]
        %v9149 = vld [vmem:[%s6 + $0x300] sm:$0xff]
        %v9150 = vld [vmem:[%s6 + $0x308] sm:$0xf]
        %v9151 = vld [vmem:[%s6 + $0x30c] sm:$0xff]
        %v9152 = vld [vmem:[%s6 + $0x314] sm:$0xf]
        %v9153 = vld [vmem:[%s6 + $0x318] sm:$0xff]
        %v9154 = vld [vmem:[%s6 + $0x320] sm:$0xf]
        %v9155 = vld [vmem:[%s6 + $0x324] sm:$0xff]
        %v9156 = vld [vmem:[%s6 + $0x32c] sm:$0xf]
        %v9157 = vld [vmem:[%s6 + $0x330] sm:$0xff]
        %v9158 = vld [vmem:[%s6 + $0x338] sm:$0xf]
        %v9159 = vld [vmem:[%s6 + $0x33c] sm:$0xff]
        %v9160 = vld [vmem:[%s6 + $0x344] sm:$0xf]
        %v9161 = vld [vmem:[%s6 + $0x348] sm:$0xff]
        %v9162 = vld [vmem:[%s6 + $0x350] sm:$0xf]
        %v9163 = vld [vmem:[%s6 + $0x354] sm:$0xff]
        %v9164 = vld [vmem:[%s6 + $0x35c] sm:$0xf]
        %v9165 = vld [vmem:[%s6 + $0x360] sm:$0xff]
        %v9166 = vld [vmem:[%s6 + $0x368] sm:$0xf]
        %v9167 = vld [vmem:[%s6 + $0x36c] sm:$0xff]
        %v9168 = vld [vmem:[%s6 + $0x374] sm:$0xf]
        %v9169 = vld [vmem:[%s6 + $0x378] sm:$0xff]
        %v9170 = vld [vmem:[%s6 + $0x380] sm:$0xf]
        %v9171 = vld [vmem:[%s6 + $0x384] sm:$0xff]
        %v9172 = vld [vmem:[%s6 + $0x38c] sm:$0xf]
        %v9173 = vld [vmem:[%s6 + $0x390] sm:$0xff]
        %v9174 = vld [vmem:[%s6 + $0x398] sm:$0xf]
        %v9175 = vld [vmem:[%s6 + $0x39c] sm:$0xff]
        %v9176 = vld [vmem:[%s6 + $0x3a4] sm:$0xf]
        %v9177 = vld [vmem:[%s6 + $0x3a8] sm:$0xff]
        %v9178 = vld [vmem:[%s6 + $0x3b0] sm:$0xf]
        %v9179 = vld [vmem:[%s6 + $0x3b4] sm:$0xff]
        %v9180 = vld [vmem:[%s6 + $0x3bc] sm:$0xf]
        %v9181 = vld [vmem:[%s6 + $0x3c0] sm:$0xff]
        %v9182 = vld [vmem:[%s6 + $0x3c8] sm:$0xf]
        %v9183 = vld [vmem:[%s6 + $0x3cc] sm:$0xff]
        %v9184 = vld [vmem:[%s6 + $0x3d4] sm:$0xf]
        %v9185 = vld [vmem:[%s6 + $0x3d8] sm:$0xff]
        %v9186 = vld [vmem:[%s6 + $0x3e0] sm:$0xf]
        %v9187 = vld [vmem:[%s6 + $0x3e4] sm:$0xff]
        %v9188 = vld [vmem:[%s6 + $0x3ec] sm:$0xf]
        %v9189 = vld [vmem:[%s6 + $0x3f0] sm:$0xff]
        %v9190 = vld [vmem:[%s6 + $0x3f8] sm:$0xf]
        %v9191 = vld [vmem:[%s6 + $0x3fc] sm:$0xff]
        %v9192 = vld [vmem:[%s6 + $0x404] sm:$0xf]
        %v9193 = vld [vmem:[%s6 + $0x408] sm:$0xff]
        %v9194 = vld [vmem:[%s6 + $0x410] sm:$0xf]
        %v9195 = vld [vmem:[%s6 + $0x414] sm:$0xff]
        %v9196 = vld [vmem:[%s6 + $0x41c] sm:$0xf]
        %v9197 = vld [vmem:[%s6 + $0x420] sm:$0xff]
        %v9198 = vld [vmem:[%s6 + $0x428] sm:$0xf]
        %v9199 = vld [vmem:[%s6 + $0x42c] sm:$0xff]
        %v9200 = vld [vmem:[%s6 + $0x434] sm:$0xf]
        %v9201 = vld [vmem:[%s6 + $0x438] sm:$0xff]
        %v9202 = vld [vmem:[%s6 + $0x440] sm:$0xf]
        %v9203 = vld [vmem:[%s6 + $0x444] sm:$0xff]
        %v9204 = vld [vmem:[%s6 + $0x44c] sm:$0xf]
        %v9205 = vld [vmem:[%s6 + $0x450] sm:$0xff]
        %v9206 = vld [vmem:[%s6 + $0x458] sm:$0xf]
        %v9207 = vld [vmem:[%s6 + $0x45c] sm:$0xff]
        %v9208 = vld [vmem:[%s6 + $0x464] sm:$0xf]
        %v9209 = vld [vmem:[%s6 + $0x468] sm:$0xff]
        %v9210 = vld [vmem:[%s6 + $0x470] sm:$0xf]
        %v9211 = vld [vmem:[%s6 + $0x474] sm:$0xff]
        %v9212 = vld [vmem:[%s6 + $0x47c] sm:$0xf]
        %v9213 = vld [vmem:[%s6 + $0x480] sm:$0xff]
        %v9214 = vld [vmem:[%s6 + $0x488] sm:$0xf]
        %v9215 = vld [vmem:[%s6 + $0x48c] sm:$0xff]
        %v9216 = vld [vmem:[%s6 + $0x494] sm:$0xf]
        %v9217 = vld [vmem:[%s6 + $0x498] sm:$0xff]
        %v9218 = vld [vmem:[%s6 + $0x4a0] sm:$0xf]
        %v9219 = vld [vmem:[%s6 + $0x4a4] sm:$0xff]
        %v9220 = vld [vmem:[%s6 + $0x4ac] sm:$0xf]
        %v9221 = vld [vmem:[%s6 + $0x4b0] sm:$0xff]
        %v9222 = vld [vmem:[%s6 + $0x4b8] sm:$0xf]
        %v9223 = vld [vmem:[%s6 + $0x4bc] sm:$0xff]
        %v9224 = vld [vmem:[%s6 + $0x4c4] sm:$0xf]
        %v9225 = vld [vmem:[%s6 + $0x4c8] sm:$0xff]
        %v9226 = vld [vmem:[%s6 + $0x4d0] sm:$0xf]
        %v9227 = vld [vmem:[%s6 + $0x4d4] sm:$0xff]
        %v9228 = vld [vmem:[%s6 + $0x4dc] sm:$0xf]
        %v9229 = vld [vmem:[%s6 + $0x4e0] sm:$0xff]
        %v9230 = vld [vmem:[%s6 + $0x4e8] sm:$0xf]
        %v9231 = vld [vmem:[%s6 + $0x4ec] sm:$0xff]
        %v9232 = vld [vmem:[%s6 + $0x4f4] sm:$0xf]
        %v9233 = vld [vmem:[%s6 + $0x4f8] sm:$0xff]
        %v9234 = vld [vmem:[%s6 + $0x500] sm:$0xf]
        %v9235 = vld [vmem:[%s6 + $0x504] sm:$0xff]
        %v9236 = vld [vmem:[%s6 + $0x50c] sm:$0xf]
        %v9237 = vld [vmem:[%s6 + $0x510] sm:$0xff]
        %v9238 = vld [vmem:[%s6 + $0x518] sm:$0xf]
        %v9239 = vld [vmem:[%s6 + $0x51c] sm:$0xff]
        %v9240 = vld [vmem:[%s6 + $0x524] sm:$0xf]
        %v9241 = vld [vmem:[%s6 + $0x528] sm:$0xff]
        %v9242 = vld [vmem:[%s6 + $0x530] sm:$0xf]
        %v9243 = vld [vmem:[%s6 + $0x534] sm:$0xff]
        %v9244 = vld [vmem:[%s6 + $0x53c] sm:$0xf]
        %v9469 = vunpack.c.l.b16 %v9021
        %v9470 = vunpack.c.h.b16 %v9021
        %v9471 = vunpack.c.l.b16 %v9022
        %v9472 = vunpack.c.l.b16 %v9023
        %v9473 = vunpack.c.h.b16 %v9023
        %v9474 = vunpack.c.l.b16 %v9024
        %v9475 = vunpack.c.l.b16 %v9025
        %v9476 = vunpack.c.h.b16 %v9025
        %v9477 = vunpack.c.l.b16 %v9026
        %v9478 = vunpack.c.l.b16 %v9027
        %v9479 = vunpack.c.h.b16 %v9027
        %v9480 = vunpack.c.l.b16 %v9028
        %v9481 = vunpack.c.l.b16 %v9029
        %v9482 = vunpack.c.h.b16 %v9029
        %v9483 = vunpack.c.l.b16 %v9030
        %v9484 = vunpack.c.l.b16 %v9031
        %v9485 = vunpack.c.h.b16 %v9031
        %v9486 = vunpack.c.l.b16 %v9032
        %v9487 = vunpack.c.l.b16 %v9033
        %v9488 = vunpack.c.h.b16 %v9033
        %v9489 = vunpack.c.l.b16 %v9034
        %v9490 = vunpack.c.l.b16 %v9035
        %v9491 = vunpack.c.h.b16 %v9035
        %v9492 = vunpack.c.l.b16 %v9036
        %v9493 = vunpack.c.l.b16 %v9037
        %v9494 = vunpack.c.h.b16 %v9037
        %v9495 = vunpack.c.l.b16 %v9038
        %v9496 = vunpack.c.l.b16 %v9039
        %v9497 = vunpack.c.h.b16 %v9039
        %v9498 = vunpack.c.l.b16 %v9040
        %v9499 = vunpack.c.l.b16 %v9041
        %v9500 = vunpack.c.h.b16 %v9041
        %v9501 = vunpack.c.l.b16 %v9042
        %v9502 = vunpack.c.l.b16 %v9043
        %v9503 = vunpack.c.h.b16 %v9043
        %v9504 = vunpack.c.l.b16 %v9044
        %v9505 = vunpack.c.l.b16 %v9045
        %v9506 = vunpack.c.h.b16 %v9045
        %v9507 = vunpack.c.l.b16 %v9046
        %v9508 = vunpack.c.l.b16 %v9047
        %v9509 = vunpack.c.h.b16 %v9047
        %v9510 = vunpack.c.l.b16 %v9048
        %v9511 = vunpack.c.l.b16 %v9049
        %v9512 = vunpack.c.h.b16 %v9049
        %v9513 = vunpack.c.l.b16 %v9050
        %v9514 = vunpack.c.l.b16 %v9051
        %v9515 = vunpack.c.h.b16 %v9051
        %v9516 = vunpack.c.l.b16 %v9052
        %v9517 = vunpack.c.l.b16 %v9053
        %v9518 = vunpack.c.h.b16 %v9053
        %v9519 = vunpack.c.l.b16 %v9054
        %v9520 = vunpack.c.l.b16 %v9055
        %v9521 = vunpack.c.h.b16 %v9055
        %v9522 = vunpack.c.l.b16 %v9056
        %v9523 = vunpack.c.l.b16 %v9057
        %v9524 = vunpack.c.h.b16 %v9057
        %v9525 = vunpack.c.l.b16 %v9058
        %v9526 = vunpack.c.l.b16 %v9059
        %v9527 = vunpack.c.h.b16 %v9059
        %v9528 = vunpack.c.l.b16 %v9060
        %v9529 = vunpack.c.l.b16 %v9061
        %v9530 = vunpack.c.h.b16 %v9061
        %v9531 = vunpack.c.l.b16 %v9062
        %v9532 = vunpack.c.l.b16 %v9063
        %v9533 = vunpack.c.h.b16 %v9063
        %v9534 = vunpack.c.l.b16 %v9064
        %v9535 = vunpack.c.l.b16 %v9065
        %v9536 = vunpack.c.h.b16 %v9065
        %v9537 = vunpack.c.l.b16 %v9066
        %v9538 = vunpack.c.l.b16 %v9067
        %v9539 = vunpack.c.h.b16 %v9067
        %v9540 = vunpack.c.l.b16 %v9068
        %v9541 = vunpack.c.l.b16 %v9069
        %v9542 = vunpack.c.h.b16 %v9069
        %v9543 = vunpack.c.l.b16 %v9070
        %v9544 = vunpack.c.l.b16 %v9071
        %v9545 = vunpack.c.h.b16 %v9071
        %v9546 = vunpack.c.l.b16 %v9072
        %v9547 = vunpack.c.l.b16 %v9073
        %v9548 = vunpack.c.h.b16 %v9073
        %v9549 = vunpack.c.l.b16 %v9074
        %v9550 = vunpack.c.l.b16 %v9075
        %v9551 = vunpack.c.h.b16 %v9075
        %v9552 = vunpack.c.l.b16 %v9076
        %v9553 = vunpack.c.l.b16 %v9077
        %v9554 = vunpack.c.h.b16 %v9077
        %v9555 = vunpack.c.l.b16 %v9078
        %v9556 = vunpack.c.l.b16 %v9079
        %v9557 = vunpack.c.h.b16 %v9079
        %v9558 = vunpack.c.l.b16 %v9080
        %v9559 = vunpack.c.l.b16 %v9081
        %v9560 = vunpack.c.h.b16 %v9081
        %v9561 = vunpack.c.l.b16 %v9082
        %v9562 = vunpack.c.l.b16 %v9083
        %v9563 = vunpack.c.h.b16 %v9083
        %v9564 = vunpack.c.l.b16 %v9084
        %v9565 = vunpack.c.l.b16 %v9085
        %v9566 = vunpack.c.h.b16 %v9085
        %v9567 = vunpack.c.l.b16 %v9086
        %v9568 = vunpack.c.l.b16 %v9087
        %v9569 = vunpack.c.h.b16 %v9087
        %v9570 = vunpack.c.l.b16 %v9088
        %v9571 = vunpack.c.l.b16 %v9089
        %v9572 = vunpack.c.h.b16 %v9089
        %v9573 = vunpack.c.l.b16 %v9090
        %v9574 = vunpack.c.l.b16 %v9091
        %v9575 = vunpack.c.h.b16 %v9091
        %v9576 = vunpack.c.l.b16 %v9092
        %v9577 = vunpack.c.l.b16 %v9093
        %v9578 = vunpack.c.h.b16 %v9093
        %v9579 = vunpack.c.l.b16 %v9094
        %v9580 = vunpack.c.l.b16 %v9095
        %v9581 = vunpack.c.h.b16 %v9095
        %v9582 = vunpack.c.l.b16 %v9096
        %v9583 = vunpack.c.l.b16 %v9097
        %v9584 = vunpack.c.h.b16 %v9097
        %v9585 = vunpack.c.l.b16 %v9098
        %v9586 = vunpack.c.l.b16 %v9099
        %v9587 = vunpack.c.h.b16 %v9099
        %v9588 = vunpack.c.l.b16 %v9100
        %v9589 = vunpack.c.l.b16 %v9101
        %v9590 = vunpack.c.h.b16 %v9101
        %v9591 = vunpack.c.l.b16 %v9102
        %v9592 = vunpack.c.l.b16 %v9103
        %v9593 = vunpack.c.h.b16 %v9103
        %v9594 = vunpack.c.l.b16 %v9104
        %v9595 = vunpack.c.l.b16 %v9105
        %v9596 = vunpack.c.h.b16 %v9105
        %v9597 = vunpack.c.l.b16 %v9106
        %v9598 = vunpack.c.l.b16 %v9107
        %v9599 = vunpack.c.h.b16 %v9107
        %v9600 = vunpack.c.l.b16 %v9108
        %v9601 = vunpack.c.l.b16 %v9109
        %v9602 = vunpack.c.h.b16 %v9109
        %v9603 = vunpack.c.l.b16 %v9110
        %v9604 = vunpack.c.l.b16 %v9111
        %v9605 = vunpack.c.h.b16 %v9111
        %v9606 = vunpack.c.l.b16 %v9112
        %v9607 = vunpack.c.l.b16 %v9113
        %v9608 = vunpack.c.h.b16 %v9113
        %v9609 = vunpack.c.l.b16 %v9114
        %v9610 = vunpack.c.l.b16 %v9115
        %v9611 = vunpack.c.h.b16 %v9115
        %v9612 = vunpack.c.l.b16 %v9116
        %v9613 = vunpack.c.l.b16 %v9117
        %v9614 = vunpack.c.h.b16 %v9117
        %v9615 = vunpack.c.l.b16 %v9118
        %v9616 = vunpack.c.l.b16 %v9119
        %v9617 = vunpack.c.h.b16 %v9119
        %v9618 = vunpack.c.l.b16 %v9120
        %v9619 = vunpack.c.l.b16 %v9121
        %v9620 = vunpack.c.h.b16 %v9121
        %v9621 = vunpack.c.l.b16 %v9122
        %v9622 = vunpack.c.l.b16 %v9123
        %v9623 = vunpack.c.h.b16 %v9123
        %v9624 = vunpack.c.l.b16 %v9124
        %v9625 = vunpack.c.l.b16 %v9125
        %v9626 = vunpack.c.h.b16 %v9125
        %v9627 = vunpack.c.l.b16 %v9126
        %v9628 = vunpack.c.l.b16 %v9127
        %v9629 = vunpack.c.h.b16 %v9127
        %v9630 = vunpack.c.l.b16 %v9128
        %v9631 = vunpack.c.l.b16 %v9129
        %v9632 = vunpack.c.h.b16 %v9129
        %v9633 = vunpack.c.l.b16 %v9130
        %v9634 = vunpack.c.l.b16 %v9131
        %v9635 = vunpack.c.h.b16 %v9131
        %v9636 = vunpack.c.l.b16 %v9132
        %v9637 = vunpack.c.l.b16 %v9133
        %v9638 = vunpack.c.h.b16 %v9133
        %v9639 = vunpack.c.l.b16 %v9134
        %v9640 = vunpack.c.l.b16 %v9135
        %v9641 = vunpack.c.h.b16 %v9135
        %v9642 = vunpack.c.l.b16 %v9136
        %v9643 = vunpack.c.l.b16 %v9137
        %v9644 = vunpack.c.h.b16 %v9137
        %v9645 = vunpack.c.l.b16 %v9138
        %v9646 = vunpack.c.l.b16 %v9139
        %v9647 = vunpack.c.h.b16 %v9139
        %v9648 = vunpack.c.l.b16 %v9140
        %v9649 = vunpack.c.l.b16 %v9141
        %v9650 = vunpack.c.h.b16 %v9141
        %v9651 = vunpack.c.l.b16 %v9142
        %v9652 = vunpack.c.l.b16 %v9143
        %v9653 = vunpack.c.h.b16 %v9143
        %v9654 = vunpack.c.l.b16 %v9144
        %v9655 = vunpack.c.l.b16 %v9145
        %v9656 = vunpack.c.h.b16 %v9145
        %v9657 = vunpack.c.l.b16 %v9146
        %v9658 = vunpack.c.l.b16 %v9147
        %v9659 = vunpack.c.h.b16 %v9147
        %v9660 = vunpack.c.l.b16 %v9148
        %v9661 = vunpack.c.l.b16 %v9149
        %v9662 = vunpack.c.h.b16 %v9149
        %v9663 = vunpack.c.l.b16 %v9150
        %v9664 = vunpack.c.l.b16 %v9151
        %v9665 = vunpack.c.h.b16 %v9151
        %v9666 = vunpack.c.l.b16 %v9152
        %v9667 = vunpack.c.l.b16 %v9153
        %v9668 = vunpack.c.h.b16 %v9153
        %v9669 = vunpack.c.l.b16 %v9154
        %v9670 = vunpack.c.l.b16 %v9155
        %v9671 = vunpack.c.h.b16 %v9155
        %v9672 = vunpack.c.l.b16 %v9156
        %v9673 = vunpack.c.l.b16 %v9157
        %v9674 = vunpack.c.h.b16 %v9157
        %v9675 = vunpack.c.l.b16 %v9158
        %v9676 = vunpack.c.l.b16 %v9159
        %v9677 = vunpack.c.h.b16 %v9159
        %v9678 = vunpack.c.l.b16 %v9160
        %v9679 = vunpack.c.l.b16 %v9161
        %v9680 = vunpack.c.h.b16 %v9161
        %v9681 = vunpack.c.l.b16 %v9162
        %v9682 = vunpack.c.l.b16 %v9163
        %v9683 = vunpack.c.h.b16 %v9163
        %v9684 = vunpack.c.l.b16 %v9164
        %v9685 = vunpack.c.l.b16 %v9165
        %v9686 = vunpack.c.h.b16 %v9165
        %v9687 = vunpack.c.l.b16 %v9166
        %v9688 = vunpack.c.l.b16 %v9167
        %v9689 = vunpack.c.h.b16 %v9167
        %v9690 = vunpack.c.l.b16 %v9168
        %v9691 = vunpack.c.l.b16 %v9169
        %v9692 = vunpack.c.h.b16 %v9169
        %v9693 = vunpack.c.l.b16 %v9170
        %v9694 = vunpack.c.l.b16 %v9171
        %v9695 = vunpack.c.h.b16 %v9171
        %v9696 = vunpack.c.l.b16 %v9172
        %v9697 = vunpack.c.l.b16 %v9173
        %v9698 = vunpack.c.h.b16 %v9173
        %v9699 = vunpack.c.l.b16 %v9174
        %v9700 = vunpack.c.l.b16 %v9175
        %v9701 = vunpack.c.h.b16 %v9175
        %v9702 = vunpack.c.l.b16 %v9176
        %v9703 = vunpack.c.l.b16 %v9177
        %v9704 = vunpack.c.h.b16 %v9177
        %v9705 = vunpack.c.l.b16 %v9178
        %v9706 = vunpack.c.l.b16 %v9179
        %v9707 = vunpack.c.h.b16 %v9179
        %v9708 = vunpack.c.l.b16 %v9180
        %v9709 = vunpack.c.l.b16 %v9181
        %v9710 = vunpack.c.h.b16 %v9181
        %v9711 = vunpack.c.l.b16 %v9182
        %v9712 = vunpack.c.l.b16 %v9183
        %v9713 = vunpack.c.h.b16 %v9183
        %v9714 = vunpack.c.l.b16 %v9184
        %v9715 = vunpack.c.l.b16 %v9185
        %v9716 = vunpack.c.h.b16 %v9185
        %v9717 = vunpack.c.l.b16 %v9186
        %v9718 = vunpack.c.l.b16 %v9187
        %v9719 = vunpack.c.h.b16 %v9187
        %v9720 = vunpack.c.l.b16 %v9188
        %v9721 = vunpack.c.l.b16 %v9189
        %v9722 = vunpack.c.h.b16 %v9189
        %v9723 = vunpack.c.l.b16 %v9190
        %v9724 = vunpack.c.l.b16 %v9191
        %v9725 = vunpack.c.h.b16 %v9191
        %v9726 = vunpack.c.l.b16 %v9192
        %v9727 = vunpack.c.l.b16 %v9193
        %v9728 = vunpack.c.h.b16 %v9193
        %v9729 = vunpack.c.l.b16 %v9194
        %v9730 = vunpack.c.l.b16 %v9195
        %v9731 = vunpack.c.h.b16 %v9195
        %v9732 = vunpack.c.l.b16 %v9196
        %v9733 = vunpack.c.l.b16 %v9197
        %v9734 = vunpack.c.h.b16 %v9197
        %v9735 = vunpack.c.l.b16 %v9198
        %v9736 = vunpack.c.l.b16 %v9199
        %v9737 = vunpack.c.h.b16 %v9199
        %v9738 = vunpack.c.l.b16 %v9200
        %v9739 = vunpack.c.l.b16 %v9201
        %v9740 = vunpack.c.h.b16 %v9201
        %v9741 = vunpack.c.l.b16 %v9202
        %v9742 = vunpack.c.l.b16 %v9203
        %v9743 = vunpack.c.h.b16 %v9203
        %v9744 = vunpack.c.l.b16 %v9204
        %v9745 = vunpack.c.l.b16 %v9205
        %v9746 = vunpack.c.h.b16 %v9205
        %v9747 = vunpack.c.l.b16 %v9206
        %v9748 = vunpack.c.l.b16 %v9207
        %v9749 = vunpack.c.h.b16 %v9207
        %v9750 = vunpack.c.l.b16 %v9208
        %v9751 = vunpack.c.l.b16 %v9209
        %v9752 = vunpack.c.h.b16 %v9209
        %v9753 = vunpack.c.l.b16 %v9210
        %v9754 = vunpack.c.l.b16 %v9211
        %v9755 = vunpack.c.h.b16 %v9211
        %v9756 = vunpack.c.l.b16 %v9212
        %v9757 = vunpack.c.l.b16 %v9213
        %v9758 = vunpack.c.h.b16 %v9213
        %v9759 = vunpack.c.l.b16 %v9214
        %v9760 = vunpack.c.l.b16 %v9215
        %v9761 = vunpack.c.h.b16 %v9215
        %v9762 = vunpack.c.l.b16 %v9216
        %v9763 = vunpack.c.l.b16 %v9217
        %v9764 = vunpack.c.h.b16 %v9217
        %v9765 = vunpack.c.l.b16 %v9218
        %v9766 = vunpack.c.l.b16 %v9219
        %v9767 = vunpack.c.h.b16 %v9219
        %v9768 = vunpack.c.l.b16 %v9220
        %v9769 = vunpack.c.l.b16 %v9221
        %v9770 = vunpack.c.h.b16 %v9221
        %v9771 = vunpack.c.l.b16 %v9222
        %v9772 = vunpack.c.l.b16 %v9223
        %v9773 = vunpack.c.h.b16 %v9223
        %v9774 = vunpack.c.l.b16 %v9224
        %v9775 = vunpack.c.l.b16 %v9225
        %v9776 = vunpack.c.h.b16 %v9225
        %v9777 = vunpack.c.l.b16 %v9226
        %v9778 = vunpack.c.l.b16 %v9227
        %v9779 = vunpack.c.h.b16 %v9227
        %v9780 = vunpack.c.l.b16 %v9228
        %v9781 = vunpack.c.l.b16 %v9229
        %v9782 = vunpack.c.h.b16 %v9229
        %v9783 = vunpack.c.l.b16 %v9230
        %v9784 = vunpack.c.l.b16 %v9231
        %v9785 = vunpack.c.h.b16 %v9231
        %v9786 = vunpack.c.l.b16 %v9232
        %v9787 = vunpack.c.l.b16 %v9233
        %v9788 = vunpack.c.h.b16 %v9233
        %v9789 = vunpack.c.l.b16 %v9234
        %v9790 = vunpack.c.l.b16 %v9235
        %v9791 = vunpack.c.h.b16 %v9235
        %v9792 = vunpack.c.l.b16 %v9236
        %v9793 = vunpack.c.l.b16 %v9237
        %v9794 = vunpack.c.h.b16 %v9237
        %v9795 = vunpack.c.l.b16 %v9238
        %v9796 = vunpack.c.l.b16 %v9239
        %v9797 = vunpack.c.h.b16 %v9239
        %v9798 = vunpack.c.l.b16 %v9240
        %v9799 = vunpack.c.l.b16 %v9241
        %v9800 = vunpack.c.h.b16 %v9241
        %v9801 = vunpack.c.l.b16 %v9242
        %v9802 = vunpack.c.l.b16 %v9243
        %v9803 = vunpack.c.h.b16 %v9243
        %v9804 = vunpack.c.l.b16 %v9244
        %v9805 = vpack.c.b16 %v9472, %v9469
        %v9806 = vpack.c.b16 %v9473, %v9470
        %v9807 = vpack.c.b16 %v9474, %v9471
        %v9808 = vpack.c.b16 %v9478, %v9475
        %v9809 = vpack.c.b16 %v9479, %v9476
        %v9810 = vpack.c.b16 %v9480, %v9477
        %v9811 = vpack.c.b16 %v9484, %v9481
        %v9812 = vpack.c.b16 %v9485, %v9482
        %v9813 = vpack.c.b16 %v9486, %v9483
        %v9814 = vpack.c.b16 %v9490, %v9487
        %v9815 = vpack.c.b16 %v9491, %v9488
        %v9816 = vpack.c.b16 %v9492, %v9489
        %v9817 = vpack.c.b16 %v9496, %v9493
        %v9818 = vpack.c.b16 %v9497, %v9494
        %v9819 = vpack.c.b16 %v9498, %v9495
        %v9820 = vpack.c.b16 %v9502, %v9499
        %v9821 = vpack.c.b16 %v9503, %v9500
        %v9822 = vpack.c.b16 %v9504, %v9501
        %v9823 = vpack.c.b16 %v9508, %v9505
        %v9824 = vpack.c.b16 %v9509, %v9506
        %v9825 = vpack.c.b16 %v9510, %v9507
        %v9826 = vpack.c.b16 %v9514, %v9511
        %v9827 = vpack.c.b16 %v9515, %v9512
        %v9828 = vpack.c.b16 %v9516, %v9513
        %v9829 = vpack.c.b16 %v9520, %v9517
        %v9830 = vpack.c.b16 %v9521, %v9518
        %v9831 = vpack.c.b16 %v9522, %v9519
        %v9832 = vpack.c.b16 %v9526, %v9523
        %v9833 = vpack.c.b16 %v9527, %v9524
        %v9834 = vpack.c.b16 %v9528, %v9525
        %v9835 = vpack.c.b16 %v9532, %v9529
        %v9836 = vpack.c.b16 %v9533, %v9530
        %v9837 = vpack.c.b16 %v9534, %v9531
        %v9838 = vpack.c.b16 %v9538, %v9535
        %v9839 = vpack.c.b16 %v9539, %v9536
        %v9840 = vpack.c.b16 %v9540, %v9537
        %v9841 = vpack.c.b16 %v9544, %v9541
        %v9842 = vpack.c.b16 %v9545, %v9542
        %v9843 = vpack.c.b16 %v9546, %v9543
        %v9844 = vpack.c.b16 %v9550, %v9547
        %v9845 = vpack.c.b16 %v9551, %v9548
        %v9846 = vpack.c.b16 %v9552, %v9549
        %v9847 = vpack.c.b16 %v9556, %v9553
        %v9848 = vpack.c.b16 %v9557, %v9554
        %v9849 = vpack.c.b16 %v9558, %v9555
        %v9850 = vpack.c.b16 %v9562, %v9559
        %v9851 = vpack.c.b16 %v9563, %v9560
        %v9852 = vpack.c.b16 %v9564, %v9561
        %v9853 = vpack.c.b16 %v9568, %v9565
        %v9854 = vpack.c.b16 %v9569, %v9566
        %v9855 = vpack.c.b16 %v9570, %v9567
        %v9856 = vpack.c.b16 %v9574, %v9571
        %v9857 = vpack.c.b16 %v9575, %v9572
        %v9858 = vpack.c.b16 %v9576, %v9573
        %v9859 = vpack.c.b16 %v9580, %v9577
        %v9860 = vpack.c.b16 %v9581, %v9578
        %v9861 = vpack.c.b16 %v9582, %v9579
        %v9862 = vpack.c.b16 %v9586, %v9583
        %v9863 = vpack.c.b16 %v9587, %v9584
        %v9864 = vpack.c.b16 %v9588, %v9585
        %v9865 = vpack.c.b16 %v9592, %v9589
        %v9866 = vpack.c.b16 %v9593, %v9590
        %v9867 = vpack.c.b16 %v9594, %v9591
        %v9868 = vpack.c.b16 %v9598, %v9595
        %v9869 = vpack.c.b16 %v9599, %v9596
        %v9870 = vpack.c.b16 %v9600, %v9597
        %v9871 = vpack.c.b16 %v9604, %v9601
        %v9872 = vpack.c.b16 %v9605, %v9602
        %v9873 = vpack.c.b16 %v9606, %v9603
        %v9874 = vpack.c.b16 %v9610, %v9607
        %v9875 = vpack.c.b16 %v9611, %v9608
        %v9876 = vpack.c.b16 %v9612, %v9609
        %v9877 = vpack.c.b16 %v9616, %v9613
        %v9878 = vpack.c.b16 %v9617, %v9614
        %v9879 = vpack.c.b16 %v9618, %v9615
        %v9880 = vpack.c.b16 %v9622, %v9619
        %v9881 = vpack.c.b16 %v9623, %v9620
        %v9882 = vpack.c.b16 %v9624, %v9621
        %v9883 = vpack.c.b16 %v9628, %v9625
        %v9884 = vpack.c.b16 %v9629, %v9626
        %v9885 = vpack.c.b16 %v9630, %v9627
        %v9886 = vpack.c.b16 %v9634, %v9631
        %v9887 = vpack.c.b16 %v9635, %v9632
        %v9888 = vpack.c.b16 %v9636, %v9633
        %v9889 = vpack.c.b16 %v9640, %v9637
        %v9890 = vpack.c.b16 %v9641, %v9638
        %v9891 = vpack.c.b16 %v9642, %v9639
        %v9892 = vpack.c.b16 %v9646, %v9643
        %v9893 = vpack.c.b16 %v9647, %v9644
        %v9894 = vpack.c.b16 %v9648, %v9645
        %v9895 = vpack.c.b16 %v9652, %v9649
        %v9896 = vpack.c.b16 %v9653, %v9650
        %v9897 = vpack.c.b16 %v9654, %v9651
        %v9898 = vpack.c.b16 %v9658, %v9655
        %v9899 = vpack.c.b16 %v9659, %v9656
        %v9900 = vpack.c.b16 %v9660, %v9657
        %v9901 = vpack.c.b16 %v9664, %v9661
        %v9902 = vpack.c.b16 %v9665, %v9662
        %v9903 = vpack.c.b16 %v9666, %v9663
        %v9904 = vpack.c.b16 %v9670, %v9667
        %v9905 = vpack.c.b16 %v9671, %v9668
        %v9906 = vpack.c.b16 %v9672, %v9669
        %v9907 = vpack.c.b16 %v9676, %v9673
        %v9908 = vpack.c.b16 %v9677, %v9674
        %v9909 = vpack.c.b16 %v9678, %v9675
        %v9910 = vpack.c.b16 %v9682, %v9679
        %v9911 = vpack.c.b16 %v9683, %v9680
        %v9912 = vpack.c.b16 %v9684, %v9681
        %v9913 = vpack.c.b16 %v9688, %v9685
        %v9914 = vpack.c.b16 %v9689, %v9686
        %v9915 = vpack.c.b16 %v9690, %v9687
        %v9916 = vpack.c.b16 %v9694, %v9691
        %v9917 = vpack.c.b16 %v9695, %v9692
        %v9918 = vpack.c.b16 %v9696, %v9693
        %v9919 = vpack.c.b16 %v9700, %v9697
        %v9920 = vpack.c.b16 %v9701, %v9698
        %v9921 = vpack.c.b16 %v9702, %v9699
        %v9922 = vpack.c.b16 %v9706, %v9703
        %v9923 = vpack.c.b16 %v9707, %v9704
        %v9924 = vpack.c.b16 %v9708, %v9705
        %v9925 = vpack.c.b16 %v9712, %v9709
        %v9926 = vpack.c.b16 %v9713, %v9710
        %v9927 = vpack.c.b16 %v9714, %v9711
        %v9928 = vpack.c.b16 %v9718, %v9715
        %v9929 = vpack.c.b16 %v9719, %v9716
        %v9930 = vpack.c.b16 %v9720, %v9717
        %v9931 = vpack.c.b16 %v9724, %v9721
        %v9932 = vpack.c.b16 %v9725, %v9722
        %v9933 = vpack.c.b16 %v9726, %v9723
        %v9934 = vpack.c.b16 %v9730, %v9727
        %v9935 = vpack.c.b16 %v9731, %v9728
        %v9936 = vpack.c.b16 %v9732, %v9729
        %v9937 = vpack.c.b16 %v9736, %v9733
        %v9938 = vpack.c.b16 %v9737, %v9734
        %v9939 = vpack.c.b16 %v9738, %v9735
        %v9940 = vpack.c.b16 %v9742, %v9739
        %v9941 = vpack.c.b16 %v9743, %v9740
        %v9942 = vpack.c.b16 %v9744, %v9741
        %v9943 = vpack.c.b16 %v9748, %v9745
        %v9944 = vpack.c.b16 %v9749, %v9746
        %v9945 = vpack.c.b16 %v9750, %v9747
        %v9946 = vpack.c.b16 %v9754, %v9751
        %v9947 = vpack.c.b16 %v9755, %v9752
        %v9948 = vpack.c.b16 %v9756, %v9753
        %v9949 = vpack.c.b16 %v9760, %v9757
        %v9950 = vpack.c.b16 %v9761, %v9758
        %v9951 = vpack.c.b16 %v9762, %v9759
        %v9952 = vpack.c.b16 %v9766, %v9763
        %v9953 = vpack.c.b16 %v9767, %v9764
        %v9954 = vpack.c.b16 %v9768, %v9765
        %v9955 = vpack.c.b16 %v9772, %v9769
        %v9956 = vpack.c.b16 %v9773, %v9770
        %v9957 = vpack.c.b16 %v9774, %v9771
        %v9958 = vpack.c.b16 %v9778, %v9775
        %v9959 = vpack.c.b16 %v9779, %v9776
        %v9960 = vpack.c.b16 %v9780, %v9777
        %v9961 = vpack.c.b16 %v9784, %v9781
        %v9962 = vpack.c.b16 %v9785, %v9782
        %v9963 = vpack.c.b16 %v9786, %v9783
        %v9964 = vpack.c.b16 %v9790, %v9787
        %v9965 = vpack.c.b16 %v9791, %v9788
        %v9966 = vpack.c.b16 %v9792, %v9789
        %v9967 = vpack.c.b16 %v9796, %v9793
        %v9968 = vpack.c.b16 %v9797, %v9794
        %v9969 = vpack.c.b16 %v9798, %v9795
        %v9970 = vpack.c.b16 %v9802, %v9799
        %v9971 = vpack.c.b16 %v9803, %v9800
        %v9972 = vpack.c.b16 %v9804, %v9801
        %10141 = vmatpush.bf16.msra.mxu0 %v9826
        %10142 = vmatpush.bf16.msra.mxu0 %v9823
        %10143 = vmatpush.bf16.msra.mxu0 %v9820
        %10144 = vmatpush.bf16.msra.mxu0 %v9817
        %10145 = vmatpush.bf16.msra.mxu0 %v9814
        %10146 = vmatpush.bf16.msra.mxu0 %v9811
        %10147 = vmatpush.bf16.msra.mxu0 %v9808
        %10148 = vmatpush.bf16.msra.mxu0 %v9805
        %10149 = vmatmul.bf16.gmra.mxu0 %v9007
        %v10150 = vpop.f32.mrf.mxu0
        %v10151 = vadd.f32 0.0, %v10150
        %v10152 = vpop.f32.mrf.mxu0
        %v10153 = vadd.f32 0.0, %v10152
        %10154 = vmatmul.bf16.gmra.mxu0 %v9014
        %v10155 = vpop.f32.mrf.mxu0
        %v10156 = vadd.f32 0.0, %v10155
        %v10157 = vpop.f32.mrf.mxu0
        %v10158 = vadd.f32 0.0, %v10157
        %10159 = vdwg.mxu0
        %10160 = vmatpush.bf16.msra.mxu0 %v9850
        %10161 = vmatpush.bf16.msra.mxu0 %v9847
        %10162 = vmatpush.bf16.msra.mxu0 %v9844
        %10163 = vmatpush.bf16.msra.mxu0 %v9841
        %10164 = vmatpush.bf16.msra.mxu0 %v9838
        %10165 = vmatpush.bf16.msra.mxu0 %v9835
        %10166 = vmatpush.bf16.msra.mxu0 %v9832
        %10167 = vmatpush.bf16.msra.mxu0 %v9829
        %10168 = vmatmul.bf16.gmra.mxu0 %v9008
        %v10169 = vpop.f32.mrf.mxu0
        %v10170 = vadd.f32 %v10151, %v10169
        %v10171 = vpop.f32.mrf.mxu0
        %v10172 = vadd.f32 %v10153, %v10171
        %10173 = vmatmul.bf16.gmra.mxu0 %v9015
        %v10174 = vpop.f32.mrf.mxu0
        %v10175 = vadd.f32 %v10156, %v10174
        %v10176 = vpop.f32.mrf.mxu0
        %v10177 = vadd.f32 %v10158, %v10176
        %10178 = vdwg.mxu0
        %10179 = vmatpush.bf16.msra.mxu0 %v9874
        %10180 = vmatpush.bf16.msra.mxu0 %v9871
        %10181 = vmatpush.bf16.msra.mxu0 %v9868
        %10182 = vmatpush.bf16.msra.mxu0 %v9865
        %10183 = vmatpush.bf16.msra.mxu0 %v9862
        %10184 = vmatpush.bf16.msra.mxu0 %v9859
        %10185 = vmatpush.bf16.msra.mxu0 %v9856
        %10186 = vmatpush.bf16.msra.mxu0 %v9853
        %10187 = vmatmul.bf16.gmra.mxu0 %v9009
        %v10188 = vpop.f32.mrf.mxu0
        %v10189 = vadd.f32 %v10170, %v10188
        %v10190 = vpop.f32.mrf.mxu0
        %v10191 = vadd.f32 %v10172, %v10190
        %10192 = vmatmul.bf16.gmra.mxu0 %v9016
        %v10193 = vpop.f32.mrf.mxu0
        %v10194 = vadd.f32 %v10175, %v10193
        %v10195 = vpop.f32.mrf.mxu0
        %v10196 = vadd.f32 %v10177, %v10195
        %10197 = vdwg.mxu0
        %10198 = vmatpush.bf16.msra.mxu0 %v9898
        %10199 = vmatpush.bf16.msra.mxu0 %v9895
        %10200 = vmatpush.bf16.msra.mxu0 %v9892
        %10201 = vmatpush.bf16.msra.mxu0 %v9889
        %10202 = vmatpush.bf16.msra.mxu0 %v9886
        %10203 = vmatpush.bf16.msra.mxu0 %v9883
        %10204 = vmatpush.bf16.msra.mxu0 %v9880
        %10205 = vmatpush.bf16.msra.mxu0 %v9877
        %10206 = vmatmul.bf16.gmra.mxu0 %v9010
        %v10207 = vpop.f32.mrf.mxu0
        %v10208 = vadd.f32 %v10189, %v10207
        %v10209 = vpop.f32.mrf.mxu0
        %v10210 = vadd.f32 %v10191, %v10209
        %10211 = vmatmul.bf16.gmra.mxu0 %v9017
        %v10212 = vpop.f32.mrf.mxu0
        %v10213 = vadd.f32 %v10194, %v10212
        %v10214 = vpop.f32.mrf.mxu0
        %v10215 = vadd.f32 %v10196, %v10214
        %10216 = vdwg.mxu0
        %10217 = vmatpush.bf16.msra.mxu0 %v9922
        %10218 = vmatpush.bf16.msra.mxu0 %v9919
        %10219 = vmatpush.bf16.msra.mxu0 %v9916
        %10220 = vmatpush.bf16.msra.mxu0 %v9913
        %10221 = vmatpush.bf16.msra.mxu0 %v9910
        %10222 = vmatpush.bf16.msra.mxu0 %v9907
        %10223 = vmatpush.bf16.msra.mxu0 %v9904
        %10224 = vmatpush.bf16.msra.mxu0 %v9901
        %10225 = vmatmul.bf16.gmra.mxu0 %v9011
        %v10226 = vpop.f32.mrf.mxu0
        %v10227 = vadd.f32 %v10208, %v10226
        %v10228 = vpop.f32.mrf.mxu0
        %v10229 = vadd.f32 %v10210, %v10228
        %10230 = vmatmul.bf16.gmra.mxu0 %v9018
        %v10231 = vpop.f32.mrf.mxu0
        %v10232 = vadd.f32 %v10213, %v10231
        %v10233 = vpop.f32.mrf.mxu0
        %v10234 = vadd.f32 %v10215, %v10233
        %10235 = vdwg.mxu0
        %10236 = vmatpush.bf16.msra.mxu0 %v9946
        %10237 = vmatpush.bf16.msra.mxu0 %v9943
        %10238 = vmatpush.bf16.msra.mxu0 %v9940
        %10239 = vmatpush.bf16.msra.mxu0 %v9937
        %10240 = vmatpush.bf16.msra.mxu0 %v9934
        %10241 = vmatpush.bf16.msra.mxu0 %v9931
        %10242 = vmatpush.bf16.msra.mxu0 %v9928
        %10243 = vmatpush.bf16.msra.mxu0 %v9925
        %10244 = vmatmul.bf16.gmra.mxu0 %v9012
        %v10245 = vpop.f32.mrf.mxu0
        %v10246 = vadd.f32 %v10227, %v10245
        %v10247 = vpop.f32.mrf.mxu0
        %v10248 = vadd.f32 %v10229, %v10247
        %10249 = vmatmul.bf16.gmra.mxu0 %v9019
        %v10250 = vpop.f32.mrf.mxu0
        %v10251 = vadd.f32 %v10232, %v10250
        %v10252 = vpop.f32.mrf.mxu0
        %v10253 = vadd.f32 %v10234, %v10252
        %10254 = vdwg.mxu0
        %10255 = vmatpush.bf16.msra.mxu0 %v9970
        %10256 = vmatpush.bf16.msra.mxu0 %v9967
        %10257 = vmatpush.bf16.msra.mxu0 %v9964
        %10258 = vmatpush.bf16.msra.mxu0 %v9961
        %10259 = vmatpush.bf16.msra.mxu0 %v9958
        %10260 = vmatpush.bf16.msra.mxu0 %v9955
        %10261 = vmatpush.bf16.msra.mxu0 %v9952
        %10262 = vmatpush.bf16.msra.mxu0 %v9949
        %10263 = vmatmul.bf16.gmra.mxu0 %v9013
        %v10264 = vpop.f32.mrf.mxu0
        %v10265 = vadd.f32 %v10246, %v10264
        %v10266 = vpop.f32.mrf.mxu0
        %v10267 = vadd.f32 %v10248, %v10266
        %10268 = vmatmul.bf16.gmra.mxu0 %v9020
        %v10269 = vpop.f32.mrf.mxu0
        %v10270 = vadd.f32 %v10251, %v10269
        %v10271 = vpop.f32.mrf.mxu0
        %v10272 = vadd.f32 %v10253, %v10271
        %10273 = vdwg.mxu0
        %10274 = vmatpush.bf16.msra.mxu0 %v9827
        %10275 = vmatpush.bf16.msra.mxu0 %v9824
        %10276 = vmatpush.bf16.msra.mxu0 %v9821
        %10277 = vmatpush.bf16.msra.mxu0 %v9818
        %10278 = vmatpush.bf16.msra.mxu0 %v9815
        %10279 = vmatpush.bf16.msra.mxu0 %v9812
        %10280 = vmatpush.bf16.msra.mxu0 %v9809
        %10281 = vmatpush.bf16.msra.mxu0 %v9806
        %10282 = vmatmul.bf16.gmra.mxu0 %v9007
        %v10283 = vpop.f32.mrf.mxu0
        %v10284 = vadd.f32 0.0, %v10283
        %v10285 = vpop.f32.mrf.mxu0
        %v10286 = vadd.f32 0.0, %v10285
        %10287 = vmatmul.bf16.gmra.mxu0 %v9014
        %v10288 = vpop.f32.mrf.mxu0
        %v10289 = vadd.f32 0.0, %v10288
        %v10290 = vpop.f32.mrf.mxu0
        %v10291 = vadd.f32 0.0, %v10290
        %10292 = vdwg.mxu0
        %10293 = vmatpush.bf16.msra.mxu0 %v9851
        %10294 = vmatpush.bf16.msra.mxu0 %v9848
        %10295 = vmatpush.bf16.msra.mxu0 %v9845
        %10296 = vmatpush.bf16.msra.mxu0 %v9842
        %10297 = vmatpush.bf16.msra.mxu0 %v9839
        %10298 = vmatpush.bf16.msra.mxu0 %v9836
        %10299 = vmatpush.bf16.msra.mxu0 %v9833
        %10300 = vmatpush.bf16.msra.mxu0 %v9830
        %10301 = vmatmul.bf16.gmra.mxu0 %v9008
        %v10302 = vpop.f32.mrf.mxu0
        %v10303 = vadd.f32 %v10284, %v10302
        %v10304 = vpop.f32.mrf.mxu0
        %v10305 = vadd.f32 %v10286, %v10304
        %10306 = vmatmul.bf16.gmra.mxu0 %v9015
        %v10307 = vpop.f32.mrf.mxu0
        %v10308 = vadd.f32 %v10289, %v10307
        %v10309 = vpop.f32.mrf.mxu0
        %v10310 = vadd.f32 %v10291, %v10309
        %10311 = vdwg.mxu0
        %10312 = vmatpush.bf16.msra.mxu0 %v9875
        %10313 = vmatpush.bf16.msra.mxu0 %v9872
        %10314 = vmatpush.bf16.msra.mxu0 %v9869
        %10315 = vmatpush.bf16.msra.mxu0 %v9866
        %10316 = vmatpush.bf16.msra.mxu0 %v9863
        %10317 = vmatpush.bf16.msra.mxu0 %v9860
        %10318 = vmatpush.bf16.msra.mxu0 %v9857
        %10319 = vmatpush.bf16.msra.mxu0 %v9854
        %10320 = vmatmul.bf16.gmra.mxu0 %v9009
        %v10321 = vpop.f32.mrf.mxu0
        %v10322 = vadd.f32 %v10303, %v10321
        %v10323 = vpop.f32.mrf.mxu0
        %v10324 = vadd.f32 %v10305, %v10323
        %10325 = vmatmul.bf16.gmra.mxu0 %v9016
        %v10326 = vpop.f32.mrf.mxu0
        %v10327 = vadd.f32 %v10308, %v10326
        %v10328 = vpop.f32.mrf.mxu0
        %v10329 = vadd.f32 %v10310, %v10328
        %10330 = vdwg.mxu0
        %10331 = vmatpush.bf16.msra.mxu0 %v9899
        %10332 = vmatpush.bf16.msra.mxu0 %v9896
        %10333 = vmatpush.bf16.msra.mxu0 %v9893
        %10334 = vmatpush.bf16.msra.mxu0 %v9890
        %10335 = vmatpush.bf16.msra.mxu0 %v9887
        %10336 = vmatpush.bf16.msra.mxu0 %v9884
        %10337 = vmatpush.bf16.msra.mxu0 %v9881
        %10338 = vmatpush.bf16.msra.mxu0 %v9878
        %10339 = vmatmul.bf16.gmra.mxu0 %v9010
        %v10340 = vpop.f32.mrf.mxu0
        %v10341 = vadd.f32 %v10322, %v10340
        %v10342 = vpop.f32.mrf.mxu0
        %v10343 = vadd.f32 %v10324, %v10342
        %10344 = vmatmul.bf16.gmra.mxu0 %v9017
        %v10345 = vpop.f32.mrf.mxu0
        %v10346 = vadd.f32 %v10327, %v10345
        %v10347 = vpop.f32.mrf.mxu0
        %v10348 = vadd.f32 %v10329, %v10347
        %10349 = vdwg.mxu0
        %10350 = vmatpush.bf16.msra.mxu0 %v9923
        %10351 = vmatpush.bf16.msra.mxu0 %v9920
        %10352 = vmatpush.bf16.msra.mxu0 %v9917
        %10353 = vmatpush.bf16.msra.mxu0 %v9914
        %10354 = vmatpush.bf16.msra.mxu0 %v9911
        %10355 = vmatpush.bf16.msra.mxu0 %v9908
        %10356 = vmatpush.bf16.msra.mxu0 %v9905
        %10357 = vmatpush.bf16.msra.mxu0 %v9902
        %10358 = vmatmul.bf16.gmra.mxu0 %v9011
        %v10359 = vpop.f32.mrf.mxu0
        %v10360 = vadd.f32 %v10341, %v10359
        %v10361 = vpop.f32.mrf.mxu0
        %v10362 = vadd.f32 %v10343, %v10361
        %10363 = vmatmul.bf16.gmra.mxu0 %v9018
        %v10364 = vpop.f32.mrf.mxu0
        %v10365 = vadd.f32 %v10346, %v10364
        %v10366 = vpop.f32.mrf.mxu0
        %v10367 = vadd.f32 %v10348, %v10366
        %10368 = vdwg.mxu0
        %10369 = vmatpush.bf16.msra.mxu0 %v9947
        %10370 = vmatpush.bf16.msra.mxu0 %v9944
        %10371 = vmatpush.bf16.msra.mxu0 %v9941
        %10372 = vmatpush.bf16.msra.mxu0 %v9938
        %10373 = vmatpush.bf16.msra.mxu0 %v9935
        %10374 = vmatpush.bf16.msra.mxu0 %v9932
        %10375 = vmatpush.bf16.msra.mxu0 %v9929
        %10376 = vmatpush.bf16.msra.mxu0 %v9926
        %10377 = vmatmul.bf16.gmra.mxu0 %v9012
        %v10378 = vpop.f32.mrf.mxu0
        %v10379 = vadd.f32 %v10360, %v10378
        %v10380 = vpop.f32.mrf.mxu0
        %v10381 = vadd.f32 %v10362, %v10380
        %10382 = vmatmul.bf16.gmra.mxu0 %v9019
        %v10383 = vpop.f32.mrf.mxu0
        %v10384 = vadd.f32 %v10365, %v10383
        %v10385 = vpop.f32.mrf.mxu0
        %v10386 = vadd.f32 %v10367, %v10385
        %10387 = vdwg.mxu0
        %10388 = vmatpush.bf16.msra.mxu0 %v9971
        %10389 = vmatpush.bf16.msra.mxu0 %v9968
        %10390 = vmatpush.bf16.msra.mxu0 %v9965
        %10391 = vmatpush.bf16.msra.mxu0 %v9962
        %10392 = vmatpush.bf16.msra.mxu0 %v9959
        %10393 = vmatpush.bf16.msra.mxu0 %v9956
        %10394 = vmatpush.bf16.msra.mxu0 %v9953
        %10395 = vmatpush.bf16.msra.mxu0 %v9950
        %10396 = vmatmul.bf16.gmra.mxu0 %v9013
        %v10397 = vpop.f32.mrf.mxu0
        %v10398 = vadd.f32 %v10379, %v10397
        %v10399 = vpop.f32.mrf.mxu0
        %v10400 = vadd.f32 %v10381, %v10399
        %10401 = vmatmul.bf16.gmra.mxu0 %v9020
        %v10402 = vpop.f32.mrf.mxu0
        %v10403 = vadd.f32 %v10384, %v10402
        %v10404 = vpop.f32.mrf.mxu0
        %v10405 = vadd.f32 %v10386, %v10404
        %10406 = vdwg.mxu0
        %10407 = vmatpush.bf16.msra.mxu0 %v9828
        %10408 = vmatpush.bf16.msra.mxu0 %v9825
        %10409 = vmatpush.bf16.msra.mxu0 %v9822
        %10410 = vmatpush.bf16.msra.mxu0 %v9819
        %10411 = vmatpush.bf16.msra.mxu0 %v9816
        %10412 = vmatpush.bf16.msra.mxu0 %v9813
        %10413 = vmatpush.bf16.msra.mxu0 %v9810
        %10414 = vmatpush.bf16.msra.mxu0 %v9807
        %10415 = vmatmul.bf16.gmra.mxu0 %v9007
        %v10416 = vpop.f32.mrf.mxu0
        %v10417 = vadd.f32 0.0, %v10416
        %v10418 = vpop.f32.mrf.mxu0
        %v10419 = vadd.f32 0.0, %v10418
        %10420 = vmatmul.bf16.gmra.mxu0 %v9014
        %v10421 = vpop.f32.mrf.mxu0
        %v10422 = vadd.f32 0.0, %v10421
        %v10423 = vpop.f32.mrf.mxu0
        %v10424 = vadd.f32 0.0, %v10423
        %10425 = vdwg.mxu0
        %10426 = vmatpush.bf16.msra.mxu0 %v9852
        %10427 = vmatpush.bf16.msra.mxu0 %v9849
        %10428 = vmatpush.bf16.msra.mxu0 %v9846
        %10429 = vmatpush.bf16.msra.mxu0 %v9843
        %10430 = vmatpush.bf16.msra.mxu0 %v9840
        %10431 = vmatpush.bf16.msra.mxu0 %v9837
        %10432 = vmatpush.bf16.msra.mxu0 %v9834
        %10433 = vmatpush.bf16.msra.mxu0 %v9831
        %10434 = vmatmul.bf16.gmra.mxu0 %v9008
        %v10435 = vpop.f32.mrf.mxu0
        %v10436 = vadd.f32 %v10417, %v10435
        %v10437 = vpop.f32.mrf.mxu0
        %v10438 = vadd.f32 %v10419, %v10437
        %10439 = vmatmul.bf16.gmra.mxu0 %v9015
        %v10440 = vpop.f32.mrf.mxu0
        %v10441 = vadd.f32 %v10422, %v10440
        %v10442 = vpop.f32.mrf.mxu0
        %v10443 = vadd.f32 %v10424, %v10442
        %10444 = vdwg.mxu0
        %10445 = vmatpush.bf16.msra.mxu0 %v9876
        %10446 = vmatpush.bf16.msra.mxu0 %v9873
        %10447 = vmatpush.bf16.msra.mxu0 %v9870
        %10448 = vmatpush.bf16.msra.mxu0 %v9867
        %10449 = vmatpush.bf16.msra.mxu0 %v9864
        %10450 = vmatpush.bf16.msra.mxu0 %v9861
        %10451 = vmatpush.bf16.msra.mxu0 %v9858
        %10452 = vmatpush.bf16.msra.mxu0 %v9855
        %10453 = vmatmul.bf16.gmra.mxu0 %v9009
        %v10454 = vpop.f32.mrf.mxu0
        %v10455 = vadd.f32 %v10436, %v10454
        %v10456 = vpop.f32.mrf.mxu0
        %v10457 = vadd.f32 %v10438, %v10456
        %10458 = vmatmul.bf16.gmra.mxu0 %v9016
        %v10459 = vpop.f32.mrf.mxu0
        %v10460 = vadd.f32 %v10441, %v10459
        %v10461 = vpop.f32.mrf.mxu0
        %v10462 = vadd.f32 %v10443, %v10461
        %10463 = vdwg.mxu0
        %10464 = vmatpush.bf16.msra.mxu0 %v9900
        %10465 = vmatpush.bf16.msra.mxu0 %v9897
        %10466 = vmatpush.bf16.msra.mxu0 %v9894
        %10467 = vmatpush.bf16.msra.mxu0 %v9891
        %10468 = vmatpush.bf16.msra.mxu0 %v9888
        %10469 = vmatpush.bf16.msra.mxu0 %v9885
        %10470 = vmatpush.bf16.msra.mxu0 %v9882
        %10471 = vmatpush.bf16.msra.mxu0 %v9879
        %10472 = vmatmul.bf16.gmra.mxu0 %v9010
        %v10473 = vpop.f32.mrf.mxu0
        %v10474 = vadd.f32 %v10455, %v10473
        %v10475 = vpop.f32.mrf.mxu0
        %v10476 = vadd.f32 %v10457, %v10475
        %10477 = vmatmul.bf16.gmra.mxu0 %v9017
        %v10478 = vpop.f32.mrf.mxu0
        %v10479 = vadd.f32 %v10460, %v10478
        %v10480 = vpop.f32.mrf.mxu0
        %v10481 = vadd.f32 %v10462, %v10480
        %10482 = vdwg.mxu0
        %10483 = vmatpush.bf16.msra.mxu0 %v9924
        %10484 = vmatpush.bf16.msra.mxu0 %v9921
        %10485 = vmatpush.bf16.msra.mxu0 %v9918
        %10486 = vmatpush.bf16.msra.mxu0 %v9915
        %10487 = vmatpush.bf16.msra.mxu0 %v9912
        %10488 = vmatpush.bf16.msra.mxu0 %v9909
        %10489 = vmatpush.bf16.msra.mxu0 %v9906
        %10490 = vmatpush.bf16.msra.mxu0 %v9903
        %10491 = vmatmul.bf16.gmra.mxu0 %v9011
        %v10492 = vpop.f32.mrf.mxu0
        %v10493 = vadd.f32 %v10474, %v10492
        %v10494 = vpop.f32.mrf.mxu0
        %v10495 = vadd.f32 %v10476, %v10494
        %10496 = vmatmul.bf16.gmra.mxu0 %v9018
        %v10497 = vpop.f32.mrf.mxu0
        %v10498 = vadd.f32 %v10479, %v10497
        %v10499 = vpop.f32.mrf.mxu0
        %v10500 = vadd.f32 %v10481, %v10499
        %10501 = vdwg.mxu0
        %10502 = vmatpush.bf16.msra.mxu0 %v9948
        %10503 = vmatpush.bf16.msra.mxu0 %v9945
        %10504 = vmatpush.bf16.msra.mxu0 %v9942
        %10505 = vmatpush.bf16.msra.mxu0 %v9939
        %10506 = vmatpush.bf16.msra.mxu0 %v9936
        %10507 = vmatpush.bf16.msra.mxu0 %v9933
        %10508 = vmatpush.bf16.msra.mxu0 %v9930
        %10509 = vmatpush.bf16.msra.mxu0 %v9927
        %10510 = vmatmul.bf16.gmra.mxu0 %v9012
        %v10511 = vpop.f32.mrf.mxu0
        %v10512 = vadd.f32 %v10493, %v10511
        %v10513 = vpop.f32.mrf.mxu0
        %v10514 = vadd.f32 %v10495, %v10513
        %10515 = vmatmul.bf16.gmra.mxu0 %v9019
        %v10516 = vpop.f32.mrf.mxu0
        %v10517 = vadd.f32 %v10498, %v10516
        %v10518 = vpop.f32.mrf.mxu0
        %v10519 = vadd.f32 %v10500, %v10518
        %10520 = vdwg.mxu0
        %10521 = vmatpush.bf16.msra.mxu0 %v9972
        %10522 = vmatpush.bf16.msra.mxu0 %v9969
        %10523 = vmatpush.bf16.msra.mxu0 %v9966
        %10524 = vmatpush.bf16.msra.mxu0 %v9963
        %10525 = vmatpush.bf16.msra.mxu0 %v9960
        %10526 = vmatpush.bf16.msra.mxu0 %v9957
        %10527 = vmatpush.bf16.msra.mxu0 %v9954
        %10528 = vmatpush.bf16.msra.mxu0 %v9951
        %10529 = vmatmul.bf16.gmra.mxu0 %v9013
        %v10530 = vpop.f32.mrf.mxu0
        %v10531 = vadd.f32 %v10512, %v10530
        %v10532 = vpop.f32.mrf.mxu0
        %v10533 = vadd.f32 %v10514, %v10532
        %10534 = vmatmul.bf16.gmra.mxu0 %v9020
        %v10535 = vpop.f32.mrf.mxu0
        %v10536 = vadd.f32 %v10517, %v10535
        %v10537 = vpop.f32.mrf.mxu0
        %v10538 = vadd.f32 %v10519, %v10537
        %10539 = vdwg.mxu0
        %v10540 = vld [vmem:[%s7] sm:$0xff]
        %v10541 = vld [vmem:[%s7 + $0x8] sm:$0xff]
        %v10542 = vld [vmem:[%s7 + $0x10] sm:$0xff]
        %v10543 = vld [vmem:[%s7 + $0x18] sm:$0xff]
        %v10544 = vld [vmem:[%s7 + $0x20] sm:$0xff]
        %v10545 = vld [vmem:[%s7 + $0x28] sm:$0xff]
        %v10546 = vld [vmem:[%s7 + $0x30] sm:$0xff]
        %v10547 = vld [vmem:[%s7 + $0x38] sm:$0xff]
        %v10548 = vld [vmem:[%s7 + $0x40] sm:$0xff]
        %v10549 = vld [vmem:[%s7 + $0x48] sm:$0xff]
        %v10550 = vld [vmem:[%s7 + $0x50] sm:$0xff]
        %v10551 = vld [vmem:[%s7 + $0x58] sm:$0xff]
        %v10552 = vmul.f32 %v10265, %v10540
        %v10553 = vmul.f32 %v10398, %v10541
        %v10554 = vmul.f32 %v10531, %v10542
        %v10555 = vmul.f32 %v10267, %v10543
        %v10556 = vmul.f32 %v10400, %v10544
        %v10557 = vmul.f32 %v10533, %v10545
        %v10558 = vmul.f32 %v10270, %v10546
        %v10559 = vmul.f32 %v10403, %v10547
        %v10560 = vmul.f32 %v10536, %v10548
        %v10561 = vmul.f32 %v10272, %v10549
        %v10562 = vmul.f32 %v10405, %v10550
        %v10563 = vmul.f32 %v10538, %v10551
        %v10564 = vld [vmem:[%s8] sm:$0xff]
        %v10565 = vld [vmem:[%s8 + $0x8] sm:$0xff]
        %v10566 = vld [vmem:[%s8 + $0x10] sm:$0xff]
        %v10567 = vld [vmem:[%s8 + $0x18] sm:$0xff]
        %v10568 = vld [vmem:[%s8 + $0x20] sm:$0xff]
        %v10569 = vld [vmem:[%s8 + $0x28] sm:$0xff]
        %v10570 = vld [vmem:[%s8 + $0x30] sm:$0xff]
        %v10571 = vld [vmem:[%s8 + $0x38] sm:$0xff]
        %v10572 = vld [vmem:[%s8 + $0x40] sm:$0xff]
        %v10573 = vld [vmem:[%s8 + $0x48] sm:$0xff]
        %v10574 = vld [vmem:[%s8 + $0x50] sm:$0xff]
        %v10575 = vld [vmem:[%s8 + $0x58] sm:$0xff]
        %v10576 = vld [vmem:[%s8 + $0x60] sm:$0xff]
        %v10577 = vld [vmem:[%s8 + $0x68] sm:$0xff]
        %v10578 = vld [vmem:[%s8 + $0x70] sm:$0xff]
        %v10579 = vld [vmem:[%s8 + $0x78] sm:$0xff]
        %v10580 = vld [vmem:[%s8 + $0x80] sm:$0xff]
        %v10581 = vld [vmem:[%s8 + $0x88] sm:$0xff]
        %v10582 = vld [vmem:[%s8 + $0x90] sm:$0xff]
        %v10583 = vld [vmem:[%s8 + $0x98] sm:$0xff]
        %v10584 = vld [vmem:[%s8 + $0xa0] sm:$0xff]
        %v10585 = vld [vmem:[%s8 + $0xa8] sm:$0xff]
        %v10586 = vld [vmem:[%s8 + $0xb0] sm:$0xff]
        %v10587 = vld [vmem:[%s8 + $0xb8] sm:$0xff]
        %v10588 = vld [vmem:[%s8 + $0xc0] sm:$0xff]
        %v10589 = vld [vmem:[%s8 + $0xc8] sm:$0xff]
        %v10590 = vld [vmem:[%s8 + $0xd0] sm:$0xff]
        %v10591 = vld [vmem:[%s8 + $0xd8] sm:$0xff]
        %v10592 = vld [vmem:[%s8 + $0xe0] sm:$0xff]
        %v10593 = vld [vmem:[%s8 + $0xe8] sm:$0xff]
        %v10594 = vld [vmem:[%s8 + $0xf0] sm:$0xff]
        %v10595 = vld [vmem:[%s8 + $0xf8] sm:$0xff]
        %v10596 = vld [vmem:[%s8 + $0x100] sm:$0xff]
        %v10597 = vld [vmem:[%s8 + $0x108] sm:$0xff]
        %v10598 = vld [vmem:[%s8 + $0x110] sm:$0xff]
        %v10599 = vld [vmem:[%s8 + $0x118] sm:$0xff]
        %v10600 = vld [vmem:[%s8 + $0x120] sm:$0xff]
        %v10601 = vld [vmem:[%s8 + $0x128] sm:$0xff]
        %v10602 = vld [vmem:[%s8 + $0x130] sm:$0xff]
        %v10603 = vld [vmem:[%s8 + $0x138] sm:$0xff]
        %v10605 = vsel %vm1292, %v10554, 0
        %v10608 = vsel %vm1292, %v10557, 0
        %v10611 = vsel %vm1292, %v10560, 0
        %v10614 = vsel %vm1292, %v10563, 0
        %10616 = vmatpush.msra.mxu0 %v10579
        %10617 = vmatpush.msra.mxu0 %v10578
        %10618 = vmatpush.msra.mxu0 %v10577
        %10619 = vmatpush.msra.mxu0 %v10576
        %10620 = vmatpush.msra.mxu0 %v10575
        %10621 = vmatpush.msra.mxu0 %v10574
        %10622 = vmatpush.msra.mxu0 %v10573
        %10623 = vmatpush.msra.mxu0 %v10572
        %10624 = vmatpush.msra.mxu0 %v10571
        %10625 = vmatpush.msra.mxu0 %v10570
        %10626 = vmatpush.msra.mxu0 %v10569
        %10627 = vmatpush.msra.mxu0 %v10568
        %10628 = vmatpush.msra.mxu0 %v10567
        %10629 = vmatpush.msra.mxu0 %v10566
        %10630 = vmatpush.msra.mxu0 %v10565
        %10631 = vmatpush.msra.mxu0 %v10564
        %10632 = vmatmul.f32.gmra.mxu0 %v10552
        %v10633 = vpop.f32.mrf.mxu0
        %v10634 = vadd.f32 0.0, %v10633
        %10635 = vmatmul.f32.gmra.mxu0 %v10555
        %v10636 = vpop.f32.mrf.mxu0
        %v10637 = vadd.f32 0.0, %v10636
        %10638 = vmatmul.f32.gmra.mxu0 %v10558
        %v10639 = vpop.f32.mrf.mxu0
        %v10640 = vadd.f32 0.0, %v10639
        %10641 = vmatmul.f32.gmra.mxu0 %v10561
        %v10642 = vpop.f32.mrf.mxu0
        %v10643 = vadd.f32 0.0, %v10642
        %10644 = vdwg.mxu0
        %10645 = vmatpush.msra.mxu0 %v10595
        %10646 = vmatpush.msra.mxu0 %v10594
        %10647 = vmatpush.msra.mxu0 %v10593
        %10648 = vmatpush.msra.mxu0 %v10592
        %10649 = vmatpush.msra.mxu0 %v10591
        %10650 = vmatpush.msra.mxu0 %v10590
        %10651 = vmatpush.msra.mxu0 %v10589
        %10652 = vmatpush.msra.mxu0 %v10588
        %10653 = vmatpush.msra.mxu0 %v10587
        %10654 = vmatpush.msra.mxu0 %v10586
        %10655 = vmatpush.msra.mxu0 %v10585
        %10656 = vmatpush.msra.mxu0 %v10584
        %10657 = vmatpush.msra.mxu0 %v10583
        %10658 = vmatpush.msra.mxu0 %v10582
        %10659 = vmatpush.msra.mxu0 %v10581
        %10660 = vmatpush.msra.mxu0 %v10580
        %10661 = vmatmul.f32.gmra.mxu0 %v10553
        %v10662 = vpop.f32.mrf.mxu0
        %v10663 = vadd.f32 %v10634, %v10662
        %10664 = vmatmul.f32.gmra.mxu0 %v10556
        %v10665 = vpop.f32.mrf.mxu0
        %v10666 = vadd.f32 %v10637, %v10665
        %10667 = vmatmul.f32.gmra.mxu0 %v10559
        %v10668 = vpop.f32.mrf.mxu0
        %v10669 = vadd.f32 %v10640, %v10668
        %10670 = vmatmul.f32.gmra.mxu0 %v10562
        %v10671 = vpop.f32.mrf.mxu0
        %v10672 = vadd.f32 %v10643, %v10671
        %10673 = vdwg.mxu0
        %10674 = vmatpush.msra.mxu0 0.0
        %10675 = vmatpush.msra.mxu0 0.0
        %10676 = vmatpush.msra.mxu0 0.0
        %10677 = vmatpush.msra.mxu0 0.0
        %10678 = vmatpush.msra.mxu0 0.0
        %10679 = vmatpush.msra.mxu0 0.0
        %10680 = vmatpush.msra.mxu0 0.0
        %10681 = vmatpush.msra.mxu0 0.0
        %10682 = vmatpush.msra.mxu0 %v10603
        %10683 = vmatpush.msra.mxu0 %v10602
        %10684 = vmatpush.msra.mxu0 %v10601
        %10685 = vmatpush.msra.mxu0 %v10600
        %10686 = vmatpush.msra.mxu0 %v10599
        %10687 = vmatpush.msra.mxu0 %v10598
        %10688 = vmatpush.msra.mxu0 %v10597
        %10689 = vmatpush.msra.mxu0 %v10596
        %10690 = vmatmul.f32.gmra.mxu0 %v10605
        %v10691 = vpop.f32.mrf.mxu0
        %v10692 = vadd.f32 %v10663, %v10691
        %10693 = vmatmul.f32.gmra.mxu0 %v10608
        %v10694 = vpop.f32.mrf.mxu0
        %v10695 = vadd.f32 %v10666, %v10694
        %10696 = vmatmul.f32.gmra.mxu0 %v10611
        %v10697 = vpop.f32.mrf.mxu0
        %v10698 = vadd.f32 %v10669, %v10697
        %10699 = vmatmul.f32.gmra.mxu0 %v10614
        %v10700 = vpop.f32.mrf.mxu0
        %v10701 = vadd.f32 %v10672, %v10700
        %10702 = vdwg.mxu0
        %v10703 = vsel %vm7952, %v10692, 0.0
        %v10704 = vsel %vm7952, %v10695, 0.0
        %v10705 = vadd.f32 %v10703, %v10704
        %v10706 = vsel %vm7952, %v10698, 0.0
        %v10707 = vadd.f32 %v10705, %v10706
        %v10708 = vsel %vm7952, %v10701, 0.0
        %v10709 = vadd.f32 %v10707, %v10708
        %v10710 = vrot.slane %v10709, 4
        %v10711 = vadd.f32 %v10709, %v10710
        %v10712 = vrot.slane %v10711, 2
        %v10713 = vadd.f32 %v10711, %v10712
        %v10714 = vrot.slane %v10713, 1
        %v10715 = vadd.f32 %v10713, %v10714
        %v10716 = vld [vmem:[%s9] sm:$0x1]
        %v10717 = vadd.f32 %v10715, %v10716
        %vm10718 = vcmask 122880
        %10719 = vst.msk [vmem:[%s349] sm:$0x1] %vm10718, %v10717
        %s10720 = sand.u32 %s247, 1
        %s10721 = scalar_lea.sflag [#allocation7], %s10720
        %s10722 = sand.u32 %s247, 1
        %s10723 = scalar_lea.vmem [#allocation6], %s10722
        // Predicated region
        $region61: #{simple_net_forward.1} parent=59 // pred_check
          %p10724 = pneg %p257
        $region62: #{simple_net_forward.1} parent=59 // pred_check_branch
          %10726 = sbr.rel (%p10724) target = $region64
        $region63: #{simple_net_forward.1} parent=59 // pred_region
          %10728 = vsyncadd %s10721, 0
          %s10729 = scalar_lea.hbm %s10, %s24
          %s10731 = sshll.u32 %s10723, 4
          %s10732 = int_to_ptr.vmem [resolvable:$true] %s10731
          %s10733 = sshll.u32 %s10729, 4
          %s10734 = int_to_ptr.hbm [resolvable:$true] %s10733
          %10736 = dma.vmem_to_hbm [thread:$0]  %s10732, 16, %s10734, %s10721
        $region64: #{simple_net_forward.1} parent=59 // pred_fallthru
          _
      $region60: #{simple_net_forward.1} parent=5 // pred_fallthru
        _
      %p10737 = scmp.le.s32.totalorder 2, %s19
      // Predicated region
      $region65: #{simple_net_forward.1} parent=5 // pred_check
        %p10738 = pneg %p10737
      $region66: #{simple_net_forward.1} parent=5 // pred_check_branch
        %10740 = sbr.rel (%p10738) target = $region68
      $region67: #{simple_net_forward.1} parent=5 // pred_region
        %s10741 = ssub.s32 %s19, 2
        // Predicated region
        $region69: #{simple_net_forward.1} parent=67 // pred_check
          %p10742 = pneg %p263
        $region70: #{simple_net_forward.1} parent=67 // pred_check_branch
          %10744 = sbr.rel (%p10742) target = $region72
        $region71: #{simple_net_forward.1} parent=67 // pred_region
          %s10745 = sand.u32 %s248, 1
          %s10746 = scalar_lea.sflag [#allocation7], %s10745
          %s10747 = sand.u32 %s248, 1
          %s10748 = scalar_lea.vmem [#allocation6], %s10747
          %10750 = dma.done %s10746, 16
        $region72: #{simple_net_forward.1} parent=67 // pred_fallthru
          _
      $region68: #{simple_net_forward.1} parent=5 // pred_fallthru
        _
    $region6: #{simple_net_forward.1} parent=1 // loop_footer
      %s23 = sadd.s32 1, %s19
    $region7: #{simple_net_forward.1} parent=1 // loop_footer_branch
      %18 = sbr.rel target = $region3
    $region8: #{simple_net_forward.1} parent=1 // loop_exit
      _
    %10751 = vsyncpa [#allocation7], 1
    %s10752 = scalar_lea.sflag [#allocation7], 1
    %10753 = vsyncpa %s10752, 1

</llo_original>
